<compile_context>
chip_gen: v5e
topology: v5e:2x2
jax: 0.10.0
libtpu: 0.0.40
codegen_flags: <defaults>
</compile_context>

<pallas_src>
import functools

import jax
import jax.numpy as jnp
from jax import lax
from jax.experimental import pallas as pl
from jax.experimental.pallas import tpu as pltpu


def _round_up(x, m):
    return (x + m - 1) // m * m


# ============================================================================
# Fused multi-layer decoder kernel
# ============================================================================

def _decoder_kernel(
        tgt_ref, qpos_ref, mem_ref, mempos_ref,
        sa_wqk_ref, sa_bqk_ref, sa_wv_ref, sa_bv_ref, sa_wo_ref, sa_bo_ref,
        ca_wq_ref, ca_bq_ref, ca_wo_ref, ca_bo_ref,
        ca_wk_all_ref, ca_bk_all_ref, ca_wv_all_ref, ca_bv_all_ref,
        ffn_w1_ref, ffn_b1_ref, ffn_w2_ref, ffn_b2_ref,
        ln_g_ref, ln_b_ref, norm_g_ref, norm_b_ref,
        out_ref,
        *, num_layers, nhead, B, T, S, d_real, dh_p, eps, mm_dtype):
    HD = nhead * dh_p
    inv_d = 1.0 / float(d_real)

    def layernorm(y, g, b):
        # Padded feature lanes of y are exactly 0 and gamma/beta are 0-padded,
        # so full-lane sums divided by the REAL feature count give the exact
        # LayerNorm statistics and keep padded lanes at 0.
        mean = jnp.sum(y, axis=-1, keepdims=True) * inv_d
        msq = jnp.sum(y * y, axis=-1, keepdims=True) * inv_d
        var = msq - mean * mean
        return (y - mean) * lax.rsqrt(var + eps) * g + b

    def mm(a, w):  # weights are pre-cast to mm_dtype in the wrapper
        return jnp.dot(a.astype(mm_dtype), w,
                       preferred_element_type=jnp.float32)

    def attention(q_flat, k_flat, v_flat, wo_heads, Lq, Lk):
        # q_flat (B*Lq, H*dh_p) f32, k_flat/v_flat (B*Lk, H*dh_p) f32,
        # wo_heads (H*dh_p, Dp) mm_dtype.
        # Batched over B with rank-3 einsums; per-head loop (small, static)
        # uses lane-dense 128-wide head slabs and NO concatenates: the head
        # merge is an accumulated per-head output projection.
        out = None
        for h in range(nhead):
            c0, c1 = h * dh_p, (h + 1) * dh_p
            q_h = q_flat[:, c0:c1].reshape(B, Lq, dh_p).astype(mm_dtype)
            k_h = k_flat[:, c0:c1].reshape(B, Lk, dh_p).astype(mm_dtype)
            v_h = v_flat[:, c0:c1].reshape(B, Lk, dh_p).astype(mm_dtype)
            s = jnp.einsum('bqe,bke->bqk', q_h, k_h,
                           preferred_element_type=jnp.float32)
            s = s - jnp.max(s, axis=-1, keepdims=True)
            p = jnp.exp(s)
            p = p / jnp.sum(p, axis=-1, keepdims=True)   # exact softmax
            o_h = jnp.einsum('bqk,bke->bqe', p.astype(mm_dtype), v_h,
                             preferred_element_type=jnp.float32)
            head_out = jnp.dot(o_h.reshape(B * Lq, dh_p).astype(mm_dtype),
                               wo_heads[c0:c1, :],
                               preferred_element_type=jnp.float32)
            out = head_out if out is None else out + head_out
        return out                                        # (B*Lq, Dp) f32

    x = tgt_ref[...]            # (B*T, Dp) f32, padded lanes are 0
    qpos = qpos_ref[...]
    norm_g = norm_g_ref[...]    # (1, Dp)
    norm_b = norm_b_ref[...]

    # Hoisted layer-invariant cross-attention K/V projections: two wide MXU
    # matmuls covering all layers instead of 2*L narrow per-layer ones.
    # TODO(synk): at production DETR scale cache these in bf16 / tile layers.
    k_all = jnp.dot(mempos_ref[...].astype(mm_dtype), ca_wk_all_ref[...],
                    preferred_element_type=jnp.float32) + ca_bk_all_ref[...]
    v_all = jnp.dot(mem_ref[...].astype(mm_dtype), ca_wv_all_ref[...],
                    preferred_element_type=jnp.float32) + ca_bv_all_ref[...]

    for l in range(num_layers):          # static unroll over decoder layers
        g3 = ln_g_ref[l]                 # (3, Dp): norm1/2/3 gamma
        b3 = ln_b_ref[l]

        # ---- self attention: q = k = x + query_pos, v = x -----------------
        q_in = x + qpos
        qk = mm(q_in, sa_wqk_ref[l]) + sa_bqk_ref[l]       # fused q|k proj
        v = mm(x, sa_wv_ref[l]) + sa_bv_ref[l]
        attn = attention(qk[:, :HD], qk[:, HD:], v,
                         sa_wo_ref[l], T, T) + sa_bo_ref[l]
        x = layernorm(x + attn, g3[0:1], b3[0:1])

        # ---- cross attention: q = x + qpos, k = mem + pos, v = mem --------
        q = mm(x + qpos, ca_wq_ref[l]) + ca_bq_ref[l]
        attn = attention(q, k_all[:, l * HD:(l + 1) * HD],
                         v_all[:, l * HD:(l + 1) * HD],
                         ca_wo_ref[l], T, S) + ca_bo_ref[l]
        x = layernorm(x + attn, g3[1:2], b3[1:2])

        # ---- feed forward ---------------------------------------------------
        hid = jnp.maximum(mm(x, ffn_w1_ref[l]) + ffn_b1_ref[l], 0.0)
        hid = mm(hid, ffn_w2_ref[l]) + ffn_b2_ref[l]
        x = layernorm(x + hid, g3[2:3], b3[2:3])

        # ---- decoder-level norm: applied after every layer (per spec) -------
        x = layernorm(x, norm_g, norm_b)

    out_ref[...] = x            # lane-dense (B*T, Dp) store


# ============================================================================
# Wrapper: pack / pad params, one pallas_call, restore torch layout
# ============================================================================

def transformer_decoder_forward(tgt, memory, params, pos, query_pos, nhead,
                                mm_dtype=jnp.bfloat16, eps=1e-5):
    T, B, D = tgt.shape
    S = memory.shape[0]
    layers = params["layers"]
    L = len(layers)
    dh = D // nhead
    dh_p = _round_up(dh, 128)           # lane-dense per-head slab width
    Dp = _round_up(D, 128)              # lane-dense model width
    F = layers[0]["ffn_w1"].shape[1]
    Fp = _round_up(F, 128)
    HD = nhead * dh_p
    scale = 1.0 / float(dh) ** 0.5

    def pad_rows_cols(w, rp, cp):
        return jnp.pad(w, ((0, rp - w.shape[0]), (0, cp - w.shape[1])))

    def pad_vec(v, cp):
        return jnp.pad(v, (0, cp - v.shape[0]))[None, :]

    def pack_in_proj(w, b, s=1.0):
        # (D, nhead*dh) -> (Dp, nhead*dh_p): head h's dh real columns land at
        # the start of its own dh_p-lane slab; optional softmax scale folded.
        w3 = (w * s).reshape(D, nhead, dh)
        w3 = jnp.pad(w3, ((0, Dp - D), (0, 0), (0, dh_p - dh)))
        b2 = jnp.pad((b * s).reshape(nhead, dh), ((0, 0), (0, dh_p - dh)))
        return w3.reshape(Dp, HD), b2.reshape(1, HD)

    def pack_out_proj(w):
        # (nhead*dh, D) -> (nhead*dh_p, Dp)
        w3 = w.reshape(nhead, dh, D)
        w3 = jnp.pad(w3, ((0, 0), (0, dh_p - dh), (0, Dp - D)))
        return w3.reshape(HD, Dp)

    sa_wqk, sa_bqk, sa_wv, sa_bv, sa_wo, sa_bo = [], [], [], [], [], []
    ca_wq, ca_bq, ca_wo, ca_bo = [], [], [], []
    ca_wk, ca_bk, ca_wv, ca_bv = [], [], [], []
    f_w1, f_b1, f_w2, f_b2, ln_g, ln_b = [], [], [], [], [], []

    for p in layers:
        sa, ca = p["self_attn"], p["cross_attn"]
        wq, bq = pack_in_proj(sa["wq"], sa["bq"], scale)   # scale folded in Q
        wk, bk = pack_in_proj(sa["wk"], sa["bk"])
        wv, bv = pack_in_proj(sa["wv"], sa["bv"])
        sa_wqk.append(jnp.concatenate([wq, wk], axis=1))   # fused q|k weights
        sa_bqk.append(jnp.concatenate([bq, bk], axis=1))
        sa_wv.append(wv); sa_bv.append(bv)
        sa_wo.append(pack_out_proj(sa["wo"]))
        sa_bo.append(pad_vec(sa["bo"], Dp))

        wq, bq = pack_in_proj(ca["wq"], ca["bq"], scale)
        wk, bk = pack_in_proj(ca["wk"], ca["bk"])
        wv, bv = pack_in_proj(ca["wv"], ca["bv"])
        ca_wq.append(wq); ca_bq.append(bq)
        ca_wk.append(wk); ca_bk.append(bk)
        ca_wv.append(wv); ca_bv.append(bv)
        ca_wo.append(pack_out_proj(ca["wo"]))
        ca_bo.append(pad_vec(ca["bo"], Dp))

        f_w1.append(pad_rows_cols(p["ffn_w1"], Dp, Fp))
        f_b1.append(pad_vec(p["ffn_b1"], Fp))
        f_w2.append(pad_rows_cols(p["ffn_w2"], Fp, Dp))
        f_b2.append(pad_vec(p["ffn_b2"], Dp))
        ln_g.append(jnp.stack([jnp.pad(p["norm1_g"], (0, Dp - D)),
                               jnp.pad(p["norm2_g"], (0, Dp - D)),
                               jnp.pad(p["norm3_g"], (0, Dp - D))]))
        ln_b.append(jnp.stack([jnp.pad(p["norm1_b"], (0, Dp - D)),
                               jnp.pad(p["norm2_b"], (0, Dp - D)),
                               jnp.pad(p["norm3_b"], (0, Dp - D))]))

    wdt = mm_dtype                                       # hoisted weight casts
    sa_wqk = jnp.stack(sa_wqk).astype(wdt); sa_bqk = jnp.stack(sa_bqk)
    sa_wv = jnp.stack(sa_wv).astype(wdt);   sa_bv = jnp.stack(sa_bv)
    sa_wo = jnp.stack(sa_wo).astype(wdt);   sa_bo = jnp.stack(sa_bo)
    ca_wq = jnp.stack(ca_wq).astype(wdt);   ca_bq = jnp.stack(ca_bq)
    ca_wo = jnp.stack(ca_wo).astype(wdt);   ca_bo = jnp.stack(ca_bo)
    # Layer-invariant cross-attn K/V weights packed side by side so the kernel
    # hoists their projections into two wide matmuls before the layer loop.
    ca_wk_all = jnp.concatenate(ca_wk, axis=1).astype(wdt)   # (Dp, L*HD)
    ca_bk_all = jnp.concatenate(ca_bk, axis=1)               # (1, L*HD)
    ca_wv_all = jnp.concatenate(ca_wv, axis=1).astype(wdt)
    ca_bv_all = jnp.concatenate(ca_bv, axis=1)
    f_w1 = jnp.stack(f_w1).astype(wdt); f_b1 = jnp.stack(f_b1)
    f_w2 = jnp.stack(f_w2).astype(wdt); f_b2 = jnp.stack(f_b2)
    ln_g = jnp.stack(ln_g); ln_b = jnp.stack(ln_b)
    norm_g = jnp.pad(params["norm_g"], (0, Dp - D))[None, :]
    norm_b = jnp.pad(params["norm_b"], (0, Dp - D))[None, :]

    # Lane-dense 2-D activations (batch-major rows), zero-padded to Dp lanes.
    # TODO(synk): a batch-first producer would remove these wrapper transposes.
    def to_rows(x_sbd):
        Ls = x_sbd.shape[0]
        x2 = jnp.transpose(x_sbd, (1, 0, 2)).reshape(B * Ls, D)
        return jnp.pad(x2, ((0, 0), (0, Dp - D)))

    tgt2 = to_rows(tgt)
    qpos2 = to_rows(query_pos)
    mem2 = to_rows(memory)
    mempos2 = to_rows(memory + pos)       # key input (memory + pos) precomputed

    inputs = (tgt2, qpos2, mem2, mempos2,
              sa_wqk, sa_bqk, sa_wv, sa_bv, sa_wo, sa_bo,
              ca_wq, ca_bq, ca_wo, ca_bo,
              ca_wk_all, ca_bk_all, ca_wv_all, ca_bv_all,
              f_w1, f_b1, f_w2, f_b2,
              ln_g, ln_b, norm_g, norm_b)

    # VMEM limit sized from actual residency (weights + activations + hoisted
    # K/V cache) with headroom; stays under v7x's 64 MiB physical VMEM.
    resident = sum(int(a.size) * a.dtype.itemsize for a in inputs)
    resident += B * T * Dp * 4 + 2 * B * S * L * HD * 4
    vmem_limit = int(min(64 * 2 ** 20, max(32 * 2 ** 20, 6 * resident)))

    kernel = functools.partial(
        _decoder_kernel, num_layers=L, nhead=nhead, B=B, T=T, S=S,
        d_real=D, dh_p=dh_p, eps=eps, mm_dtype=mm_dtype)

    out2 = pl.pallas_call(
        kernel,
        out_shape=jax.ShapeDtypeStruct((B * T, Dp), jnp.float32),
        in_specs=[pl.BlockSpec(memory_space=pltpu.MemorySpace.VMEM)
                  for _ in inputs],
        out_specs=pl.BlockSpec(memory_space=pltpu.MemorySpace.VMEM),
        compiler_params=pltpu.CompilerParams(vmem_limit_bytes=vmem_limit),
    )(*inputs)

    out = out2[:, :D].reshape(B, T, D)
    return jnp.transpose(out, (1, 0, 2))[None]        # (1, T, B, D)


# ============================================================================
# Pure-JAX reference (f32) for a correctness check
# ============================================================================

def _ref_mha(q_in, k_in, v_in, prm, nhead):
    B_, Lq, D_ = q_in.shape
    Lk = k_in.shape[1]
    dh = D_ // nhead
    q = q_in @ prm["wq"] + prm["bq"]
    k = k_in @ prm["wk"] + prm["bk"]
    v = v_in @ prm["wv"] + prm["bv"]
    q = q.reshape(B_, Lq, nhead, dh).transpose(0, 2, 1, 3)
    k = k.reshape(B_, Lk, nhead, dh).transpose(0, 2, 1, 3)
    v = v.reshape(B_, Lk, nhead, dh).transpose(0, 2, 1, 3)
    s = jnp.einsum('bhqe,bhke->bhqk', q, k) / jnp.sqrt(jnp.float32(dh))
    p = jax.nn.softmax(s, axis=-1)
    o = jnp.einsum('bhqk,bhke->bhqe', p, v)
    o = o.transpose(0, 2, 1, 3).reshape(B_, Lq, D_)
    return o @ prm["wo"] + prm["bo"]


def _reference_forward(tgt, memory, params, pos, query_pos, nhead, eps=1e-5):
    x = jnp.transpose(tgt, (1, 0, 2))
    qp = jnp.transpose(query_pos, (1, 0, 2))
    mem = jnp.transpose(memory, (1, 0, 2))
    mp = mem + jnp.transpose(pos, (1, 0, 2))

    def ln(y, g, b):
        m = jnp.mean(y, -1, keepdims=True)
        v = jnp.mean((y - m) ** 2, -1, keepdims=True)
        return (y - m) / jnp.sqrt(v + eps) * g + b

    for p in params["layers"]:
        a = _ref_mha(x + qp, x + qp, x, p["self_attn"], nhead)
        x = ln(x + a, p["norm1_g"], p["norm1_b"])
        a = _ref_mha(x + qp, mp, mem, p["cross_attn"], nhead)
        x = ln(x + a, p["norm2_g"], p["norm2_b"])
        h = jnp.maximum(x @ p["ffn_w1"] + p["ffn_b1"], 0.0)
        h = h @ p["ffn_w2"] + p["ffn_b2"]
        x = ln(x + h, p["norm3_g"], p["norm3_b"])
        x = ln(x, params["norm_g"], params["norm_b"])
    return jnp.transpose(x, (1, 0, 2))[None]


# ============================================================================
# Deterministic parameter init
# ============================================================================

def init_mha_params(key, d_model):
    ks = jax.random.split(key, 4)
    std = 0.02
    return {
        "wq": std * jax.random.normal(ks[0], (d_model, d_model), jnp.float32),
        "wk": std * jax.random.normal(ks[1], (d_model, d_model), jnp.float32),
        "wv": std * jax.random.normal(ks[2], (d_model, d_model), jnp.float32),
        "wo": std * jax.random.normal(ks[3], (d_model, d_model), jnp.float32),
        "bq": jnp.zeros((d_model,), jnp.float32),
        "bk": jnp.zeros((d_model,), jnp.float32),
        "bv": jnp.zeros((d_model,), jnp.float32),
        "bo": jnp.zeros((d_model,), jnp.float32),
    }


def init_layer_params(key, d_model, dim_ff):
    ks = jax.random.split(key, 4)
    std = 0.02
    return {
        "self_attn": init_mha_params(ks[0], d_model),
        "cross_attn": init_mha_params(ks[1], d_model),
        "ffn_w1": std * jax.random.normal(ks[2], (d_model, dim_ff), jnp.float32),
        "ffn_b1": jnp.zeros((dim_ff,), jnp.float32),
        "ffn_w2": std * jax.random.normal(ks[3], (dim_ff, d_model), jnp.float32),
        "ffn_b2": jnp.zeros((d_model,), jnp.float32),
        "norm1_g": jnp.ones((d_model,), jnp.float32),
        "norm1_b": jnp.zeros((d_model,), jnp.float32),
        "norm2_g": jnp.ones((d_model,), jnp.float32),
        "norm2_b": jnp.zeros((d_model,), jnp.float32),
        "norm3_g": jnp.ones((d_model,), jnp.float32),
        "norm3_b": jnp.zeros((d_model,), jnp.float32),
    }


def init_decoder_params(key, num_layers, d_model, dim_ff):
    ks = jax.random.split(key, num_layers)
    return {
        "layers": [init_layer_params(ks[i], d_model, dim_ff)
                   for i in range(num_layers)],
        "norm_g": jnp.ones((d_model,), jnp.float32),
        "norm_b": jnp.zeros((d_model,), jnp.float32),
    }


# ============================================================================
if __name__ == "__main__":
    # small shapes consistent with the module's forward
    B = 2          # batch
    T = 8          # number of target queries
    S = 16         # memory (encoder) sequence length
    D = 32         # d_model
    NHEAD = 4
    FFN = 64
    NUM_LAYERS = 2

    root = jax.random.PRNGKey(0)
    k_tgt, k_mem, k_pos, k_qpos, k_par = jax.random.split(root, 5)

    tgt = jax.random.normal(k_tgt, (T, B, D), jnp.float32)
    memory = jax.random.normal(k_mem, (S, B, D), jnp.float32)
    pos = jax.random.normal(k_pos, (S, B, D), jnp.float32)
    query_pos = jax.random.normal(k_qpos, (T, B, D), jnp.float32)

    params = init_decoder_params(k_par, NUM_LAYERS, D, FFN)

    fwd = jax.jit(lambda t, m, p, po, qp:
                  transformer_decoder_forward(t, m, p, po, qp, NHEAD))
    out = jax.block_until_ready(fwd(tgt, memory, params, pos, query_pos))

    assert out.shape == (1, T, B, D), out.shape
    assert bool(jnp.all(jnp.isfinite(out)))

    # sanity check against the pure-JAX f32 reference (bf16 MXU tolerance)
    ref = _reference_forward(tgt, memory, params, pos, query_pos, NHEAD)
    err = float(jnp.max(jnp.abs(out - ref)))
    assert err < 1e-1, f"max abs error vs reference: {err}"

    print("KERNEL_OK")
</pallas_src>

<mosaic_0001>
module attributes {stable_mosaic.version = 11 : i64} {
  func.func @_decoder_kernel(%arg0: memref<16x128xf32, #tpu.memory_space<vmem>>, %arg1: memref<16x128xf32, #tpu.memory_space<vmem>>, %arg2: memref<32x128xf32, #tpu.memory_space<vmem>>, %arg3: memref<32x128xf32, #tpu.memory_space<vmem>>, %arg4: memref<2x128x1024xbf16, #tpu.memory_space<vmem>>, %arg5: memref<2x1x1024xf32, #tpu.memory_space<vmem>>, %arg6: memref<2x128x512xbf16, #tpu.memory_space<vmem>>, %arg7: memref<2x1x512xf32, #tpu.memory_space<vmem>>, %arg8: memref<2x512x128xbf16, #tpu.memory_space<vmem>>, %arg9: memref<2x1x128xf32, #tpu.memory_space<vmem>>, %arg10: memref<2x128x512xbf16, #tpu.memory_space<vmem>>, %arg11: memref<2x1x512xf32, #tpu.memory_space<vmem>>, %arg12: memref<2x512x128xbf16, #tpu.memory_space<vmem>>, %arg13: memref<2x1x128xf32, #tpu.memory_space<vmem>>, %arg14: memref<128x1024xbf16, #tpu.memory_space<vmem>>, %arg15: memref<1x1024xf32, #tpu.memory_space<vmem>>, %arg16: memref<128x1024xbf16, #tpu.memory_space<vmem>>, %arg17: memref<1x1024xf32, #tpu.memory_space<vmem>>, %arg18: memref<2x128x128xbf16, #tpu.memory_space<vmem>>, %arg19: memref<2x1x128xf32, #tpu.memory_space<vmem>>, %arg20: memref<2x128x128xbf16, #tpu.memory_space<vmem>>, %arg21: memref<2x1x128xf32, #tpu.memory_space<vmem>>, %arg22: memref<2x3x128xf32, #tpu.memory_space<vmem>>, %arg23: memref<2x3x128xf32, #tpu.memory_space<vmem>>, %arg24: memref<1x128xf32, #tpu.memory_space<vmem>>, %arg25: memref<1x128xf32, #tpu.memory_space<vmem>>, %arg26: memref<16x128xf32, #tpu.memory_space<vmem>>) attributes {dimension_semantics = [], scalar_prefetch = 0 : i64, scratch_operands = 0 : i64, tpu.core_type = #tpu.core_type<tc>} {
    %c0 = arith.constant 0 : index
    %c0_0 = arith.constant 0 : index
    %0 = vector.load %arg0[%c0, %c0_0] : memref<16x128xf32, #tpu.memory_space<vmem>>, vector<16x128xf32>
    %c0_1 = arith.constant 0 : index
    %c0_2 = arith.constant 0 : index
    %1 = vector.load %arg1[%c0_1, %c0_2] : memref<16x128xf32, #tpu.memory_space<vmem>>, vector<16x128xf32>
    %c0_3 = arith.constant 0 : index
    %c0_4 = arith.constant 0 : index
    %2 = vector.load %arg24[%c0_3, %c0_4] : memref<1x128xf32, #tpu.memory_space<vmem>>, vector<1x128xf32>
    %c0_5 = arith.constant 0 : index
    %c0_6 = arith.constant 0 : index
    %3 = vector.load %arg25[%c0_5, %c0_6] : memref<1x128xf32, #tpu.memory_space<vmem>>, vector<1x128xf32>
    %c0_7 = arith.constant 0 : index
    %c0_8 = arith.constant 0 : index
    %4 = vector.load %arg3[%c0_7, %c0_8] : memref<32x128xf32, #tpu.memory_space<vmem>>, vector<32x128xf32>
    %5 = arith.truncf %4 : vector<32x128xf32> to vector<32x128xbf16>
    %c0_9 = arith.constant 0 : index
    %c0_10 = arith.constant 0 : index
    %6 = vector.load %arg14[%c0_9, %c0_10] : memref<128x1024xbf16, #tpu.memory_space<vmem>>, vector<128x1024xbf16>
    %cst = arith.constant dense<0.000000e+00> : vector<32x1024xf32>
    %7 = tpu.matmul %5, %6, %cst {dimension_numbers = #tpu.dot_dimension_numbers<[1], [0], [0], [1], [0, 0, 1, 1], [], []>} : vector<32x128xbf16>, vector<128x1024xbf16>, vector<32x1024xf32> -> vector<32x1024xf32>
    %c0_11 = arith.constant 0 : index
    %c0_12 = arith.constant 0 : index
    %8 = vector.load %arg15[%c0_11, %c0_12] : memref<1x1024xf32, #tpu.memory_space<vmem>>, vector<1x1024xf32>
    %9 = vector.broadcast %8 : vector<1x1024xf32> to vector<32x1024xf32>
    %10 = arith.addf %7, %9 : vector<32x1024xf32>
    %c0_13 = arith.constant 0 : index
    %c0_14 = arith.constant 0 : index
    %11 = vector.load %arg2[%c0_13, %c0_14] : memref<32x128xf32, #tpu.memory_space<vmem>>, vector<32x128xf32>
    %12 = arith.truncf %11 : vector<32x128xf32> to vector<32x128xbf16>
    %c0_15 = arith.constant 0 : index
    %c0_16 = arith.constant 0 : index
    %13 = vector.load %arg16[%c0_15, %c0_16] : memref<128x1024xbf16, #tpu.memory_space<vmem>>, vector<128x1024xbf16>
    %cst_17 = arith.constant dense<0.000000e+00> : vector<32x1024xf32>
    %14 = tpu.matmul %12, %13, %cst_17 {dimension_numbers = #tpu.dot_dimension_numbers<[1], [0], [0], [1], [0, 0, 1, 1], [], []>} : vector<32x128xbf16>, vector<128x1024xbf16>, vector<32x1024xf32> -> vector<32x1024xf32>
    %c0_18 = arith.constant 0 : index
    %c0_19 = arith.constant 0 : index
    %15 = vector.load %arg17[%c0_18, %c0_19] : memref<1x1024xf32, #tpu.memory_space<vmem>>, vector<1x1024xf32>
    %16 = vector.broadcast %15 : vector<1x1024xf32> to vector<32x1024xf32>
    %17 = arith.addf %14, %16 : vector<32x1024xf32>
    %c0_20 = arith.constant 0 : index
    %c0_21 = arith.constant 0 : index
    %c0_22 = arith.constant 0 : index
    %18 = vector.load %arg22[%c0_20, %c0_21, %c0_22] : memref<2x3x128xf32, #tpu.memory_space<vmem>>, vector<1x3x128xf32>
    %19 = vector.shape_cast %18 : vector<1x3x128xf32> to vector<3x128xf32>
    %c0_23 = arith.constant 0 : index
    %c0_24 = arith.constant 0 : index
    %c0_25 = arith.constant 0 : index
    %20 = vector.load %arg23[%c0_23, %c0_24, %c0_25] : memref<2x3x128xf32, #tpu.memory_space<vmem>>, vector<1x3x128xf32>
    %21 = vector.shape_cast %20 : vector<1x3x128xf32> to vector<3x128xf32>
    %22 = arith.addf %0, %1 : vector<16x128xf32>
    %c0_26 = arith.constant 0 : index
    %c0_27 = arith.constant 0 : index
    %c0_28 = arith.constant 0 : index
    %23 = vector.load %arg4[%c0_26, %c0_27, %c0_28] : memref<2x128x1024xbf16, #tpu.memory_space<vmem>>, vector<1x128x1024xbf16>
    %24 = vector.shape_cast %23 : vector<1x128x1024xbf16> to vector<128x1024xbf16>
    %25 = arith.truncf %22 : vector<16x128xf32> to vector<16x128xbf16>
    %cst_29 = arith.constant dense<0.000000e+00> : vector<16x1024xf32>
    %26 = tpu.matmul %25, %24, %cst_29 {dimension_numbers = #tpu.dot_dimension_numbers<[1], [0], [0], [1], [0, 0, 1, 1], [], []>} : vector<16x128xbf16>, vector<128x1024xbf16>, vector<16x1024xf32> -> vector<16x1024xf32>
    %c0_30 = arith.constant 0 : index
    %c0_31 = arith.constant 0 : index
    %c0_32 = arith.constant 0 : index
    %27 = vector.load %arg5[%c0_30, %c0_31, %c0_32] : memref<2x1x1024xf32, #tpu.memory_space<vmem>>, vector<1x1x1024xf32>
    %28 = vector.shape_cast %27 : vector<1x1x1024xf32> to vector<1x1024xf32>
    %29 = vector.broadcast %28 : vector<1x1024xf32> to vector<16x1024xf32>
    %30 = arith.addf %26, %29 : vector<16x1024xf32>
    %c0_33 = arith.constant 0 : index
    %c0_34 = arith.constant 0 : index
    %c0_35 = arith.constant 0 : index
    %31 = vector.load %arg6[%c0_33, %c0_34, %c0_35] : memref<2x128x512xbf16, #tpu.memory_space<vmem>>, vector<1x128x512xbf16>
    %32 = vector.shape_cast %31 : vector<1x128x512xbf16> to vector<128x512xbf16>
    %33 = arith.truncf %0 : vector<16x128xf32> to vector<16x128xbf16>
    %cst_36 = arith.constant dense<0.000000e+00> : vector<16x512xf32>
    %34 = tpu.matmul %33, %32, %cst_36 {dimension_numbers = #tpu.dot_dimension_numbers<[1], [0], [0], [1], [0, 0, 1, 1], [], []>} : vector<16x128xbf16>, vector<128x512xbf16>, vector<16x512xf32> -> vector<16x512xf32>
    %c0_37 = arith.constant 0 : index
    %c0_38 = arith.constant 0 : index
    %c0_39 = arith.constant 0 : index
    %35 = vector.load %arg7[%c0_37, %c0_38, %c0_39] : memref<2x1x512xf32, #tpu.memory_space<vmem>>, vector<1x1x512xf32>
    %36 = vector.shape_cast %35 : vector<1x1x512xf32> to vector<1x512xf32>
    %37 = vector.broadcast %36 : vector<1x512xf32> to vector<16x512xf32>
    %38 = arith.addf %34, %37 : vector<16x512xf32>
    %39 = vector.extract_strided_slice %30 {offsets = [0, 0], sizes = [16, 512], strides = [1, 1]} : vector<16x1024xf32> to vector<16x512xf32>
    %40 = vector.extract_strided_slice %30 {offsets = [0, 512], sizes = [16, 512], strides = [1, 1]} : vector<16x1024xf32> to vector<16x512xf32>
    %c0_40 = arith.constant 0 : index
    %c0_41 = arith.constant 0 : index
    %c0_42 = arith.constant 0 : index
    %41 = vector.load %arg8[%c0_40, %c0_41, %c0_42] : memref<2x512x128xbf16, #tpu.memory_space<vmem>>, vector<1x512x128xbf16>
    %42 = vector.shape_cast %41 : vector<1x512x128xbf16> to vector<512x128xbf16>
    %43 = vector.extract_strided_slice %39 {offsets = [0, 0], sizes = [16, 128], strides = [1, 1]} : vector<16x512xf32> to vector<16x128xf32>
    %44 = vector.shape_cast %43 : vector<16x128xf32> to vector<2x8x128xf32>
    %45 = arith.truncf %44 : vector<2x8x128xf32> to vector<2x8x128xbf16>
    %46 = vector.extract_strided_slice %40 {offsets = [0, 0], sizes = [16, 128], strides = [1, 1]} : vector<16x512xf32> to vector<16x128xf32>
    %47 = vector.shape_cast %46 : vector<16x128xf32> to vector<2x8x128xf32>
    %48 = arith.truncf %47 : vector<2x8x128xf32> to vector<2x8x128xbf16>
    %49 = vector.extract_strided_slice %38 {offsets = [0, 0], sizes = [16, 128], strides = [1, 1]} : vector<16x512xf32> to vector<16x128xf32>
    %50 = vector.shape_cast %49 : vector<16x128xf32> to vector<2x8x128xf32>
    %51 = arith.truncf %50 : vector<2x8x128xf32> to vector<2x8x128xbf16>
    "tpu.trace_start"() <{level = 10 : i32, message = "bqe,bke->bqk"}> : () -> ()
    %cst_43 = arith.constant dense<0.000000e+00> : vector<2x8x8xf32>
    %52 = tpu.matmul %45, %48, %cst_43 {dimension_numbers = #tpu.dot_dimension_numbers<[2], [2], [1], [1], [0, 0, 0, 1, 1, 1], [0], [0]>} : vector<2x8x128xbf16>, vector<2x8x128xbf16>, vector<2x8x8xf32> -> vector<2x8x8xf32>
    "tpu.trace_stop"() : () -> ()
    %cst_44 = arith.constant dense<0xFF800000> : vector<2x8xf32>
    %53 = vector.multi_reduction <maximumf>, %52, %cst_44 [2] : vector<2x8x8xf32> to vector<2x8xf32>
    %54 = vector.shape_cast %53 : vector<2x8xf32> to vector<2x8x1xf32>
    %55 = vector.broadcast %54 : vector<2x8x1xf32> to vector<2x8x8xf32>
    %56 = arith.subf %52, %55 : vector<2x8x8xf32>
    %57 = math.exp %56 : vector<2x8x8xf32>
    %cst_45 = arith.constant dense<0.000000e+00> : vector<2x8xf32>
    %58 = vector.multi_reduction <add>, %57, %cst_45 [2] : vector<2x8x8xf32> to vector<2x8xf32>
    %59 = vector.shape_cast %58 : vector<2x8xf32> to vector<2x8x1xf32>
    %60 = vector.broadcast %59 : vector<2x8x1xf32> to vector<2x8x8xf32>
    %61 = arith.divf %57, %60 : vector<2x8x8xf32>
    %62 = arith.truncf %61 : vector<2x8x8xf32> to vector<2x8x8xbf16>
    "tpu.trace_start"() <{level = 10 : i32, message = "bqk,bke->bqe"}> : () -> ()
    %cst_46 = arith.constant dense<0.000000e+00> : vector<2x8x128xf32>
    %63 = tpu.matmul %62, %51, %cst_46 {dimension_numbers = #tpu.dot_dimension_numbers<[2], [1], [1], [2], [0, 0, 0, 1, 1, 2], [0], [0]>} : vector<2x8x8xbf16>, vector<2x8x128xbf16>, vector<2x8x128xf32> -> vector<2x8x128xf32>
    "tpu.trace_stop"() : () -> ()
    %64 = vector.shape_cast %63 : vector<2x8x128xf32> to vector<16x128xf32>
    %65 = arith.truncf %64 : vector<16x128xf32> to vector<16x128xbf16>
    %66 = vector.extract_strided_slice %42 {offsets = [0, 0], sizes = [128, 128], strides = [1, 1]} : vector<512x128xbf16> to vector<128x128xbf16>
    %cst_47 = arith.constant dense<0.000000e+00> : vector<16x128xf32>
    %67 = tpu.matmul %65, %66, %cst_47 {dimension_numbers = #tpu.dot_dimension_numbers<[1], [0], [0], [1], [0, 0, 1, 1], [], []>} : vector<16x128xbf16>, vector<128x128xbf16>, vector<16x128xf32> -> vector<16x128xf32>
    %68 = vector.extract_strided_slice %39 {offsets = [0, 128], sizes = [16, 128], strides = [1, 1]} : vector<16x512xf32> to vector<16x128xf32>
    %69 = vector.shape_cast %68 : vector<16x128xf32> to vector<2x8x128xf32>
    %70 = arith.truncf %69 : vector<2x8x128xf32> to vector<2x8x128xbf16>
    %71 = vector.extract_strided_slice %40 {offsets = [0, 128], sizes = [16, 128], strides = [1, 1]} : vector<16x512xf32> to vector<16x128xf32>
    %72 = vector.shape_cast %71 : vector<16x128xf32> to vector<2x8x128xf32>
    %73 = arith.truncf %72 : vector<2x8x128xf32> to vector<2x8x128xbf16>
    %74 = vector.extract_strided_slice %38 {offsets = [0, 128], sizes = [16, 128], strides = [1, 1]} : vector<16x512xf32> to vector<16x128xf32>
    %75 = vector.shape_cast %74 : vector<16x128xf32> to vector<2x8x128xf32>
    %76 = arith.truncf %75 : vector<2x8x128xf32> to vector<2x8x128xbf16>
    "tpu.trace_start"() <{level = 10 : i32, message = "bqe,bke->bqk"}> : () -> ()
    %cst_48 = arith.constant dense<0.000000e+00> : vector<2x8x8xf32>
    %77 = tpu.matmul %70, %73, %cst_48 {dimension_numbers = #tpu.dot_dimension_numbers<[2], [2], [1], [1], [0, 0, 0, 1, 1, 1], [0], [0]>} : vector<2x8x128xbf16>, vector<2x8x128xbf16>, vector<2x8x8xf32> -> vector<2x8x8xf32>
    "tpu.trace_stop"() : () -> ()
    %cst_49 = arith.constant dense<0xFF800000> : vector<2x8xf32>
    %78 = vector.multi_reduction <maximumf>, %77, %cst_49 [2] : vector<2x8x8xf32> to vector<2x8xf32>
    %79 = vector.shape_cast %78 : vector<2x8xf32> to vector<2x8x1xf32>
    %80 = vector.broadcast %79 : vector<2x8x1xf32> to vector<2x8x8xf32>
    %81 = arith.subf %77, %80 : vector<2x8x8xf32>
    %82 = math.exp %81 : vector<2x8x8xf32>
    %cst_50 = arith.constant dense<0.000000e+00> : vector<2x8xf32>
    %83 = vector.multi_reduction <add>, %82, %cst_50 [2] : vector<2x8x8xf32> to vector<2x8xf32>
    %84 = vector.shape_cast %83 : vector<2x8xf32> to vector<2x8x1xf32>
    %85 = vector.broadcast %84 : vector<2x8x1xf32> to vector<2x8x8xf32>
    %86 = arith.divf %82, %85 : vector<2x8x8xf32>
    %87 = arith.truncf %86 : vector<2x8x8xf32> to vector<2x8x8xbf16>
    "tpu.trace_start"() <{level = 10 : i32, message = "bqk,bke->bqe"}> : () -> ()
    %cst_51 = arith.constant dense<0.000000e+00> : vector<2x8x128xf32>
    %88 = tpu.matmul %87, %76, %cst_51 {dimension_numbers = #tpu.dot_dimension_numbers<[2], [1], [1], [2], [0, 0, 0, 1, 1, 2], [0], [0]>} : vector<2x8x8xbf16>, vector<2x8x128xbf16>, vector<2x8x128xf32> -> vector<2x8x128xf32>
    "tpu.trace_stop"() : () -> ()
    %89 = vector.shape_cast %88 : vector<2x8x128xf32> to vector<16x128xf32>
    %90 = arith.truncf %89 : vector<16x128xf32> to vector<16x128xbf16>
    %91 = vector.extract_strided_slice %42 {offsets = [128, 0], sizes = [128, 128], strides = [1, 1]} : vector<512x128xbf16> to vector<128x128xbf16>
    %cst_52 = arith.constant dense<0.000000e+00> : vector<16x128xf32>
    %92 = tpu.matmul %90, %91, %cst_52 {dimension_numbers = #tpu.dot_dimension_numbers<[1], [0], [0], [1], [0, 0, 1, 1], [], []>} : vector<16x128xbf16>, vector<128x128xbf16>, vector<16x128xf32> -> vector<16x128xf32>
    %93 = arith.addf %67, %92 : vector<16x128xf32>
    %94 = vector.extract_strided_slice %39 {offsets = [0, 256], sizes = [16, 128], strides = [1, 1]} : vector<16x512xf32> to vector<16x128xf32>
    %95 = vector.shape_cast %94 : vector<16x128xf32> to vector<2x8x128xf32>
    %96 = arith.truncf %95 : vector<2x8x128xf32> to vector<2x8x128xbf16>
    %97 = vector.extract_strided_slice %40 {offsets = [0, 256], sizes = [16, 128], strides = [1, 1]} : vector<16x512xf32> to vector<16x128xf32>
    %98 = vector.shape_cast %97 : vector<16x128xf32> to vector<2x8x128xf32>
    %99 = arith.truncf %98 : vector<2x8x128xf32> to vector<2x8x128xbf16>
    %100 = vector.extract_strided_slice %38 {offsets = [0, 256], sizes = [16, 128], strides = [1, 1]} : vector<16x512xf32> to vector<16x128xf32>
    %101 = vector.shape_cast %100 : vector<16x128xf32> to vector<2x8x128xf32>
    %102 = arith.truncf %101 : vector<2x8x128xf32> to vector<2x8x128xbf16>
    "tpu.trace_start"() <{level = 10 : i32, message = "bqe,bke->bqk"}> : () -> ()
    %cst_53 = arith.constant dense<0.000000e+00> : vector<2x8x8xf32>
    %103 = tpu.matmul %96, %99, %cst_53 {dimension_numbers = #tpu.dot_dimension_numbers<[2], [2], [1], [1], [0, 0, 0, 1, 1, 1], [0], [0]>} : vector<2x8x128xbf16>, vector<2x8x128xbf16>, vector<2x8x8xf32> -> vector<2x8x8xf32>
    "tpu.trace_stop"() : () -> ()
    %cst_54 = arith.constant dense<0xFF800000> : vector<2x8xf32>
    %104 = vector.multi_reduction <maximumf>, %103, %cst_54 [2] : vector<2x8x8xf32> to vector<2x8xf32>
    %105 = vector.shape_cast %104 : vector<2x8xf32> to vector<2x8x1xf32>
    %106 = vector.broadcast %105 : vector<2x8x1xf32> to vector<2x8x8xf32>
    %107 = arith.subf %103, %106 : vector<2x8x8xf32>
    %108 = math.exp %107 : vector<2x8x8xf32>
    %cst_55 = arith.constant dense<0.000000e+00> : vector<2x8xf32>
    %109 = vector.multi_reduction <add>, %108, %cst_55 [2] : vector<2x8x8xf32> to vector<2x8xf32>
    %110 = vector.shape_cast %109 : vector<2x8xf32> to vector<2x8x1xf32>
    %111 = vector.broadcast %110 : vector<2x8x1xf32> to vector<2x8x8xf32>
    %112 = arith.divf %108, %111 : vector<2x8x8xf32>
    %113 = arith.truncf %112 : vector<2x8x8xf32> to vector<2x8x8xbf16>
    "tpu.trace_start"() <{level = 10 : i32, message = "bqk,bke->bqe"}> : () -> ()
    %cst_56 = arith.constant dense<0.000000e+00> : vector<2x8x128xf32>
    %114 = tpu.matmul %113, %102, %cst_56 {dimension_numbers = #tpu.dot_dimension_numbers<[2], [1], [1], [2], [0, 0, 0, 1, 1, 2], [0], [0]>} : vector<2x8x8xbf16>, vector<2x8x128xbf16>, vector<2x8x128xf32> -> vector<2x8x128xf32>
    "tpu.trace_stop"() : () -> ()
    %115 = vector.shape_cast %114 : vector<2x8x128xf32> to vector<16x128xf32>
    %116 = arith.truncf %115 : vector<16x128xf32> to vector<16x128xbf16>
    %117 = vector.extract_strided_slice %42 {offsets = [256, 0], sizes = [128, 128], strides = [1, 1]} : vector<512x128xbf16> to vector<128x128xbf16>
    %cst_57 = arith.constant dense<0.000000e+00> : vector<16x128xf32>
    %118 = tpu.matmul %116, %117, %cst_57 {dimension_numbers = #tpu.dot_dimension_numbers<[1], [0], [0], [1], [0, 0, 1, 1], [], []>} : vector<16x128xbf16>, vector<128x128xbf16>, vector<16x128xf32> -> vector<16x128xf32>
    %119 = arith.addf %93, %118 : vector<16x128xf32>
    %120 = vector.extract_strided_slice %39 {offsets = [0, 384], sizes = [16, 128], strides = [1, 1]} : vector<16x512xf32> to vector<16x128xf32>
    %121 = vector.shape_cast %120 : vector<16x128xf32> to vector<2x8x128xf32>
    %122 = arith.truncf %121 : vector<2x8x128xf32> to vector<2x8x128xbf16>
    %123 = vector.extract_strided_slice %40 {offsets = [0, 384], sizes = [16, 128], strides = [1, 1]} : vector<16x512xf32> to vector<16x128xf32>
    %124 = vector.shape_cast %123 : vector<16x128xf32> to vector<2x8x128xf32>
    %125 = arith.truncf %124 : vector<2x8x128xf32> to vector<2x8x128xbf16>
    %126 = vector.extract_strided_slice %38 {offsets = [0, 384], sizes = [16, 128], strides = [1, 1]} : vector<16x512xf32> to vector<16x128xf32>
    %127 = vector.shape_cast %126 : vector<16x128xf32> to vector<2x8x128xf32>
    %128 = arith.truncf %127 : vector<2x8x128xf32> to vector<2x8x128xbf16>
    "tpu.trace_start"() <{level = 10 : i32, message = "bqe,bke->bqk"}> : () -> ()
    %cst_58 = arith.constant dense<0.000000e+00> : vector<2x8x8xf32>
    %129 = tpu.matmul %122, %125, %cst_58 {dimension_numbers = #tpu.dot_dimension_numbers<[2], [2], [1], [1], [0, 0, 0, 1, 1, 1], [0], [0]>} : vector<2x8x128xbf16>, vector<2x8x128xbf16>, vector<2x8x8xf32> -> vector<2x8x8xf32>
    "tpu.trace_stop"() : () -> ()
    %cst_59 = arith.constant dense<0xFF800000> : vector<2x8xf32>
    %130 = vector.multi_reduction <maximumf>, %129, %cst_59 [2] : vector<2x8x8xf32> to vector<2x8xf32>
    %131 = vector.shape_cast %130 : vector<2x8xf32> to vector<2x8x1xf32>
    %132 = vector.broadcast %131 : vector<2x8x1xf32> to vector<2x8x8xf32>
    %133 = arith.subf %129, %132 : vector<2x8x8xf32>
    %134 = math.exp %133 : vector<2x8x8xf32>
    %cst_60 = arith.constant dense<0.000000e+00> : vector<2x8xf32>
    %135 = vector.multi_reduction <add>, %134, %cst_60 [2] : vector<2x8x8xf32> to vector<2x8xf32>
    %136 = vector.shape_cast %135 : vector<2x8xf32> to vector<2x8x1xf32>
    %137 = vector.broadcast %136 : vector<2x8x1xf32> to vector<2x8x8xf32>
    %138 = arith.divf %134, %137 : vector<2x8x8xf32>
    %139 = arith.truncf %138 : vector<2x8x8xf32> to vector<2x8x8xbf16>
    "tpu.trace_start"() <{level = 10 : i32, message = "bqk,bke->bqe"}> : () -> ()
    %cst_61 = arith.constant dense<0.000000e+00> : vector<2x8x128xf32>
    %140 = tpu.matmul %139, %128, %cst_61 {dimension_numbers = #tpu.dot_dimension_numbers<[2], [1], [1], [2], [0, 0, 0, 1, 1, 2], [0], [0]>} : vector<2x8x8xbf16>, vector<2x8x128xbf16>, vector<2x8x128xf32> -> vector<2x8x128xf32>
    "tpu.trace_stop"() : () -> ()
    %141 = vector.shape_cast %140 : vector<2x8x128xf32> to vector<16x128xf32>
    %142 = arith.truncf %141 : vector<16x128xf32> to vector<16x128xbf16>
    %143 = vector.extract_strided_slice %42 {offsets = [384, 0], sizes = [128, 128], strides = [1, 1]} : vector<512x128xbf16> to vector<128x128xbf16>
    %cst_62 = arith.constant dense<0.000000e+00> : vector<16x128xf32>
    %144 = tpu.matmul %142, %143, %cst_62 {dimension_numbers = #tpu.dot_dimension_numbers<[1], [0], [0], [1], [0, 0, 1, 1], [], []>} : vector<16x128xbf16>, vector<128x128xbf16>, vector<16x128xf32> -> vector<16x128xf32>
    %145 = arith.addf %119, %144 : vector<16x128xf32>
    %c0_63 = arith.constant 0 : index
    %c0_64 = arith.constant 0 : index
    %c0_65 = arith.constant 0 : index
    %146 = vector.load %arg9[%c0_63, %c0_64, %c0_65] : memref<2x1x128xf32, #tpu.memory_space<vmem>>, vector<1x1x128xf32>
    %147 = vector.shape_cast %146 : vector<1x1x128xf32> to vector<1x128xf32>
    %148 = vector.broadcast %147 : vector<1x128xf32> to vector<16x128xf32>
    %149 = arith.addf %145, %148 : vector<16x128xf32>
    %150 = arith.addf %0, %149 : vector<16x128xf32>
    %151 = vector.extract_strided_slice %19 {offsets = [0, 0], sizes = [1, 128], strides = [1, 1]} : vector<3x128xf32> to vector<1x128xf32>
    %152 = vector.extract_strided_slice %21 {offsets = [0, 0], sizes = [1, 128], strides = [1, 1]} : vector<3x128xf32> to vector<1x128xf32>
    %cst_66 = arith.constant dense<0.000000e+00> : vector<16xf32>
    %153 = vector.multi_reduction <add>, %150, %cst_66 [1] : vector<16x128xf32> to vector<16xf32>
    %154 = vector.shape_cast %153 : vector<16xf32> to vector<16x1xf32>
    %cst_67 = arith.constant 3.125000e-02 : f32
    %155 = vector.broadcast %cst_67 : f32 to vector<16x1xf32>
    %156 = arith.mulf %154, %155 : vector<16x1xf32>
    %157 = arith.mulf %150, %150 : vector<16x128xf32>
    %cst_68 = arith.constant dense<0.000000e+00> : vector<16xf32>
    %158 = vector.multi_reduction <add>, %157, %cst_68 [1] : vector<16x128xf32> to vector<16xf32>
    %159 = vector.shape_cast %158 : vector<16xf32> to vector<16x1xf32>
    %cst_69 = arith.constant 3.125000e-02 : f32
    %160 = vector.broadcast %cst_69 : f32 to vector<16x1xf32>
    %161 = arith.mulf %159, %160 : vector<16x1xf32>
    %162 = arith.mulf %156, %156 : vector<16x1xf32>
    %163 = arith.subf %161, %162 : vector<16x1xf32>
    %164 = vector.broadcast %156 : vector<16x1xf32> to vector<16x128xf32>
    %165 = arith.subf %150, %164 : vector<16x128xf32>
    %cst_70 = arith.constant 9.99999974E-6 : f32
    %166 = vector.broadcast %cst_70 : f32 to vector<16x1xf32>
    %167 = arith.addf %163, %166 : vector<16x1xf32>
    %168 = math.rsqrt %167 : vector<16x1xf32>
    %169 = vector.broadcast %168 : vector<16x1xf32> to vector<16x128xf32>
    %170 = arith.mulf %165, %169 : vector<16x128xf32>
    %171 = vector.broadcast %151 : vector<1x128xf32> to vector<16x128xf32>
    %172 = arith.mulf %170, %171 : vector<16x128xf32>
    %173 = vector.broadcast %152 : vector<1x128xf32> to vector<16x128xf32>
    %174 = arith.addf %172, %173 : vector<16x128xf32>
    %175 = arith.addf %174, %1 : vector<16x128xf32>
    %c0_71 = arith.constant 0 : index
    %c0_72 = arith.constant 0 : index
    %c0_73 = arith.constant 0 : index
    %176 = vector.load %arg10[%c0_71, %c0_72, %c0_73] : memref<2x128x512xbf16, #tpu.memory_space<vmem>>, vector<1x128x512xbf16>
    %177 = vector.shape_cast %176 : vector<1x128x512xbf16> to vector<128x512xbf16>
    %178 = arith.truncf %175 : vector<16x128xf32> to vector<16x128xbf16>
    %cst_74 = arith.constant dense<0.000000e+00> : vector<16x512xf32>
    %179 = tpu.matmul %178, %177, %cst_74 {dimension_numbers = #tpu.dot_dimension_numbers<[1], [0], [0], [1], [0, 0, 1, 1], [], []>} : vector<16x128xbf16>, vector<128x512xbf16>, vector<16x512xf32> -> vector<16x512xf32>
    %c0_75 = arith.constant 0 : index
    %c0_76 = arith.constant 0 : index
    %c0_77 = arith.constant 0 : index
    %180 = vector.load %arg11[%c0_75, %c0_76, %c0_77] : memref<2x1x512xf32, #tpu.memory_space<vmem>>, vector<1x1x512xf32>
    %181 = vector.shape_cast %180 : vector<1x1x512xf32> to vector<1x512xf32>
    %182 = vector.broadcast %181 : vector<1x512xf32> to vector<16x512xf32>
    %183 = arith.addf %179, %182 : vector<16x512xf32>
    %184 = vector.extract_strided_slice %10 {offsets = [0, 0], sizes = [32, 512], strides = [1, 1]} : vector<32x1024xf32> to vector<32x512xf32>
    %185 = vector.extract_strided_slice %17 {offsets = [0, 0], sizes = [32, 512], strides = [1, 1]} : vector<32x1024xf32> to vector<32x512xf32>
    %c0_78 = arith.constant 0 : index
    %c0_79 = arith.constant 0 : index
    %c0_80 = arith.constant 0 : index
    %186 = vector.load %arg12[%c0_78, %c0_79, %c0_80] : memref<2x512x128xbf16, #tpu.memory_space<vmem>>, vector<1x512x128xbf16>
    %187 = vector.shape_cast %186 : vector<1x512x128xbf16> to vector<512x128xbf16>
    %188 = vector.extract_strided_slice %183 {offsets = [0, 0], sizes = [16, 128], strides = [1, 1]} : vector<16x512xf32> to vector<16x128xf32>
    %189 = vector.shape_cast %188 : vector<16x128xf32> to vector<2x8x128xf32>
    %190 = arith.truncf %189 : vector<2x8x128xf32> to vector<2x8x128xbf16>
    %191 = vector.extract_strided_slice %184 {offsets = [0, 0], sizes = [32, 128], strides = [1, 1]} : vector<32x512xf32> to vector<32x128xf32>
    %192 = vector.shape_cast %191 : vector<32x128xf32> to vector<2x16x128xf32>
    %193 = arith.truncf %192 : vector<2x16x128xf32> to vector<2x16x128xbf16>
    %194 = vector.extract_strided_slice %185 {offsets = [0, 0], sizes = [32, 128], strides = [1, 1]} : vector<32x512xf32> to vector<32x128xf32>
    %195 = vector.shape_cast %194 : vector<32x128xf32> to vector<2x16x128xf32>
    %196 = arith.truncf %195 : vector<2x16x128xf32> to vector<2x16x128xbf16>
    "tpu.trace_start"() <{level = 10 : i32, message = "bqe,bke->bqk"}> : () -> ()
    %cst_81 = arith.constant dense<0.000000e+00> : vector<2x8x16xf32>
    %197 = tpu.matmul %190, %193, %cst_81 {dimension_numbers = #tpu.dot_dimension_numbers<[2], [2], [1], [1], [0, 0, 0, 1, 1, 1], [0], [0]>} : vector<2x8x128xbf16>, vector<2x16x128xbf16>, vector<2x8x16xf32> -> vector<2x8x16xf32>
    "tpu.trace_stop"() : () -> ()
    %cst_82 = arith.constant dense<0xFF800000> : vector<2x8xf32>
    %198 = vector.multi_reduction <maximumf>, %197, %cst_82 [2] : vector<2x8x16xf32> to vector<2x8xf32>
    %199 = vector.shape_cast %198 : vector<2x8xf32> to vector<2x8x1xf32>
    %200 = vector.broadcast %199 : vector<2x8x1xf32> to vector<2x8x16xf32>
    %201 = arith.subf %197, %200 : vector<2x8x16xf32>
    %202 = math.exp %201 : vector<2x8x16xf32>
    %cst_83 = arith.constant dense<0.000000e+00> : vector<2x8xf32>
    %203 = vector.multi_reduction <add>, %202, %cst_83 [2] : vector<2x8x16xf32> to vector<2x8xf32>
    %204 = vector.shape_cast %203 : vector<2x8xf32> to vector<2x8x1xf32>
    %205 = vector.broadcast %204 : vector<2x8x1xf32> to vector<2x8x16xf32>
    %206 = arith.divf %202, %205 : vector<2x8x16xf32>
    %207 = arith.truncf %206 : vector<2x8x16xf32> to vector<2x8x16xbf16>
    "tpu.trace_start"() <{level = 10 : i32, message = "bqk,bke->bqe"}> : () -> ()
    %cst_84 = arith.constant dense<0.000000e+00> : vector<2x8x128xf32>
    %208 = tpu.matmul %207, %196, %cst_84 {dimension_numbers = #tpu.dot_dimension_numbers<[2], [1], [1], [2], [0, 0, 0, 1, 1, 2], [0], [0]>} : vector<2x8x16xbf16>, vector<2x16x128xbf16>, vector<2x8x128xf32> -> vector<2x8x128xf32>
    "tpu.trace_stop"() : () -> ()
    %209 = vector.shape_cast %208 : vector<2x8x128xf32> to vector<16x128xf32>
    %210 = arith.truncf %209 : vector<16x128xf32> to vector<16x128xbf16>
    %211 = vector.extract_strided_slice %187 {offsets = [0, 0], sizes = [128, 128], strides = [1, 1]} : vector<512x128xbf16> to vector<128x128xbf16>
    %cst_85 = arith.constant dense<0.000000e+00> : vector<16x128xf32>
    %212 = tpu.matmul %210, %211, %cst_85 {dimension_numbers = #tpu.dot_dimension_numbers<[1], [0], [0], [1], [0, 0, 1, 1], [], []>} : vector<16x128xbf16>, vector<128x128xbf16>, vector<16x128xf32> -> vector<16x128xf32>
    %213 = vector.extract_strided_slice %183 {offsets = [0, 128], sizes = [16, 128], strides = [1, 1]} : vector<16x512xf32> to vector<16x128xf32>
    %214 = vector.shape_cast %213 : vector<16x128xf32> to vector<2x8x128xf32>
    %215 = arith.truncf %214 : vector<2x8x128xf32> to vector<2x8x128xbf16>
    %216 = vector.extract_strided_slice %184 {offsets = [0, 128], sizes = [32, 128], strides = [1, 1]} : vector<32x512xf32> to vector<32x128xf32>
    %217 = vector.shape_cast %216 : vector<32x128xf32> to vector<2x16x128xf32>
    %218 = arith.truncf %217 : vector<2x16x128xf32> to vector<2x16x128xbf16>
    %219 = vector.extract_strided_slice %185 {offsets = [0, 128], sizes = [32, 128], strides = [1, 1]} : vector<32x512xf32> to vector<32x128xf32>
    %220 = vector.shape_cast %219 : vector<32x128xf32> to vector<2x16x128xf32>
    %221 = arith.truncf %220 : vector<2x16x128xf32> to vector<2x16x128xbf16>
    "tpu.trace_start"() <{level = 10 : i32, message = "bqe,bke->bqk"}> : () -> ()
    %cst_86 = arith.constant dense<0.000000e+00> : vector<2x8x16xf32>
    %222 = tpu.matmul %215, %218, %cst_86 {dimension_numbers = #tpu.dot_dimension_numbers<[2], [2], [1], [1], [0, 0, 0, 1, 1, 1], [0], [0]>} : vector<2x8x128xbf16>, vector<2x16x128xbf16>, vector<2x8x16xf32> -> vector<2x8x16xf32>
    "tpu.trace_stop"() : () -> ()
    %cst_87 = arith.constant dense<0xFF800000> : vector<2x8xf32>
    %223 = vector.multi_reduction <maximumf>, %222, %cst_87 [2] : vector<2x8x16xf32> to vector<2x8xf32>
    %224 = vector.shape_cast %223 : vector<2x8xf32> to vector<2x8x1xf32>
    %225 = vector.broadcast %224 : vector<2x8x1xf32> to vector<2x8x16xf32>
    %226 = arith.subf %222, %225 : vector<2x8x16xf32>
    %227 = math.exp %226 : vector<2x8x16xf32>
    %cst_88 = arith.constant dense<0.000000e+00> : vector<2x8xf32>
    %228 = vector.multi_reduction <add>, %227, %cst_88 [2] : vector<2x8x16xf32> to vector<2x8xf32>
    %229 = vector.shape_cast %228 : vector<2x8xf32> to vector<2x8x1xf32>
    %230 = vector.broadcast %229 : vector<2x8x1xf32> to vector<2x8x16xf32>
    %231 = arith.divf %227, %230 : vector<2x8x16xf32>
    %232 = arith.truncf %231 : vector<2x8x16xf32> to vector<2x8x16xbf16>
    "tpu.trace_start"() <{level = 10 : i32, message = "bqk,bke->bqe"}> : () -> ()
    %cst_89 = arith.constant dense<0.000000e+00> : vector<2x8x128xf32>
    %233 = tpu.matmul %232, %221, %cst_89 {dimension_numbers = #tpu.dot_dimension_numbers<[2], [1], [1], [2], [0, 0, 0, 1, 1, 2], [0], [0]>} : vector<2x8x16xbf16>, vector<2x16x128xbf16>, vector<2x8x128xf32> -> vector<2x8x128xf32>
    "tpu.trace_stop"() : () -> ()
    %234 = vector.shape_cast %233 : vector<2x8x128xf32> to vector<16x128xf32>
    %235 = arith.truncf %234 : vector<16x128xf32> to vector<16x128xbf16>
    %236 = vector.extract_strided_slice %187 {offsets = [128, 0], sizes = [128, 128], strides = [1, 1]} : vector<512x128xbf16> to vector<128x128xbf16>
    %cst_90 = arith.constant dense<0.000000e+00> : vector<16x128xf32>
    %237 = tpu.matmul %235, %236, %cst_90 {dimension_numbers = #tpu.dot_dimension_numbers<[1], [0], [0], [1], [0, 0, 1, 1], [], []>} : vector<16x128xbf16>, vector<128x128xbf16>, vector<16x128xf32> -> vector<16x128xf32>
    %238 = arith.addf %212, %237 : vector<16x128xf32>
    %239 = vector.extract_strided_slice %183 {offsets = [0, 256], sizes = [16, 128], strides = [1, 1]} : vector<16x512xf32> to vector<16x128xf32>
    %240 = vector.shape_cast %239 : vector<16x128xf32> to vector<2x8x128xf32>
    %241 = arith.truncf %240 : vector<2x8x128xf32> to vector<2x8x128xbf16>
    %242 = vector.extract_strided_slice %184 {offsets = [0, 256], sizes = [32, 128], strides = [1, 1]} : vector<32x512xf32> to vector<32x128xf32>
    %243 = vector.shape_cast %242 : vector<32x128xf32> to vector<2x16x128xf32>
    %244 = arith.truncf %243 : vector<2x16x128xf32> to vector<2x16x128xbf16>
    %245 = vector.extract_strided_slice %185 {offsets = [0, 256], sizes = [32, 128], strides = [1, 1]} : vector<32x512xf32> to vector<32x128xf32>
    %246 = vector.shape_cast %245 : vector<32x128xf32> to vector<2x16x128xf32>
    %247 = arith.truncf %246 : vector<2x16x128xf32> to vector<2x16x128xbf16>
    "tpu.trace_start"() <{level = 10 : i32, message = "bqe,bke->bqk"}> : () -> ()
    %cst_91 = arith.constant dense<0.000000e+00> : vector<2x8x16xf32>
    %248 = tpu.matmul %241, %244, %cst_91 {dimension_numbers = #tpu.dot_dimension_numbers<[2], [2], [1], [1], [0, 0, 0, 1, 1, 1], [0], [0]>} : vector<2x8x128xbf16>, vector<2x16x128xbf16>, vector<2x8x16xf32> -> vector<2x8x16xf32>
    "tpu.trace_stop"() : () -> ()
    %cst_92 = arith.constant dense<0xFF800000> : vector<2x8xf32>
    %249 = vector.multi_reduction <maximumf>, %248, %cst_92 [2] : vector<2x8x16xf32> to vector<2x8xf32>
    %250 = vector.shape_cast %249 : vector<2x8xf32> to vector<2x8x1xf32>
    %251 = vector.broadcast %250 : vector<2x8x1xf32> to vector<2x8x16xf32>
    %252 = arith.subf %248, %251 : vector<2x8x16xf32>
    %253 = math.exp %252 : vector<2x8x16xf32>
    %cst_93 = arith.constant dense<0.000000e+00> : vector<2x8xf32>
    %254 = vector.multi_reduction <add>, %253, %cst_93 [2] : vector<2x8x16xf32> to vector<2x8xf32>
    %255 = vector.shape_cast %254 : vector<2x8xf32> to vector<2x8x1xf32>
    %256 = vector.broadcast %255 : vector<2x8x1xf32> to vector<2x8x16xf32>
    %257 = arith.divf %253, %256 : vector<2x8x16xf32>
    %258 = arith.truncf %257 : vector<2x8x16xf32> to vector<2x8x16xbf16>
    "tpu.trace_start"() <{level = 10 : i32, message = "bqk,bke->bqe"}> : () -> ()
    %cst_94 = arith.constant dense<0.000000e+00> : vector<2x8x128xf32>
    %259 = tpu.matmul %258, %247, %cst_94 {dimension_numbers = #tpu.dot_dimension_numbers<[2], [1], [1], [2], [0, 0, 0, 1, 1, 2], [0], [0]>} : vector<2x8x16xbf16>, vector<2x16x128xbf16>, vector<2x8x128xf32> -> vector<2x8x128xf32>
    "tpu.trace_stop"() : () -> ()
    %260 = vector.shape_cast %259 : vector<2x8x128xf32> to vector<16x128xf32>
    %261 = arith.truncf %260 : vector<16x128xf32> to vector<16x128xbf16>
    %262 = vector.extract_strided_slice %187 {offsets = [256, 0], sizes = [128, 128], strides = [1, 1]} : vector<512x128xbf16> to vector<128x128xbf16>
    %cst_95 = arith.constant dense<0.000000e+00> : vector<16x128xf32>
    %263 = tpu.matmul %261, %262, %cst_95 {dimension_numbers = #tpu.dot_dimension_numbers<[1], [0], [0], [1], [0, 0, 1, 1], [], []>} : vector<16x128xbf16>, vector<128x128xbf16>, vector<16x128xf32> -> vector<16x128xf32>
    %264 = arith.addf %238, %263 : vector<16x128xf32>
    %265 = vector.extract_strided_slice %183 {offsets = [0, 384], sizes = [16, 128], strides = [1, 1]} : vector<16x512xf32> to vector<16x128xf32>
    %266 = vector.shape_cast %265 : vector<16x128xf32> to vector<2x8x128xf32>
    %267 = arith.truncf %266 : vector<2x8x128xf32> to vector<2x8x128xbf16>
    %268 = vector.extract_strided_slice %184 {offsets = [0, 384], sizes = [32, 128], strides = [1, 1]} : vector<32x512xf32> to vector<32x128xf32>
    %269 = vector.shape_cast %268 : vector<32x128xf32> to vector<2x16x128xf32>
    %270 = arith.truncf %269 : vector<2x16x128xf32> to vector<2x16x128xbf16>
    %271 = vector.extract_strided_slice %185 {offsets = [0, 384], sizes = [32, 128], strides = [1, 1]} : vector<32x512xf32> to vector<32x128xf32>
    %272 = vector.shape_cast %271 : vector<32x128xf32> to vector<2x16x128xf32>
    %273 = arith.truncf %272 : vector<2x16x128xf32> to vector<2x16x128xbf16>
    "tpu.trace_start"() <{level = 10 : i32, message = "bqe,bke->bqk"}> : () -> ()
    %cst_96 = arith.constant dense<0.000000e+00> : vector<2x8x16xf32>
    %274 = tpu.matmul %267, %270, %cst_96 {dimension_numbers = #tpu.dot_dimension_numbers<[2], [2], [1], [1], [0, 0, 0, 1, 1, 1], [0], [0]>} : vector<2x8x128xbf16>, vector<2x16x128xbf16>, vector<2x8x16xf32> -> vector<2x8x16xf32>
    "tpu.trace_stop"() : () -> ()
    %cst_97 = arith.constant dense<0xFF800000> : vector<2x8xf32>
    %275 = vector.multi_reduction <maximumf>, %274, %cst_97 [2] : vector<2x8x16xf32> to vector<2x8xf32>
    %276 = vector.shape_cast %275 : vector<2x8xf32> to vector<2x8x1xf32>
    %277 = vector.broadcast %276 : vector<2x8x1xf32> to vector<2x8x16xf32>
    %278 = arith.subf %274, %277 : vector<2x8x16xf32>
    %279 = math.exp %278 : vector<2x8x16xf32>
    %cst_98 = arith.constant dense<0.000000e+00> : vector<2x8xf32>
    %280 = vector.multi_reduction <add>, %279, %cst_98 [2] : vector<2x8x16xf32> to vector<2x8xf32>
    %281 = vector.shape_cast %280 : vector<2x8xf32> to vector<2x8x1xf32>
    %282 = vector.broadcast %281 : vector<2x8x1xf32> to vector<2x8x16xf32>
    %283 = arith.divf %279, %282 : vector<2x8x16xf32>
    %284 = arith.truncf %283 : vector<2x8x16xf32> to vector<2x8x16xbf16>
    "tpu.trace_start"() <{level = 10 : i32, message = "bqk,bke->bqe"}> : () -> ()
    %cst_99 = arith.constant dense<0.000000e+00> : vector<2x8x128xf32>
    %285 = tpu.matmul %284, %273, %cst_99 {dimension_numbers = #tpu.dot_dimension_numbers<[2], [1], [1], [2], [0, 0, 0, 1, 1, 2], [0], [0]>} : vector<2x8x16xbf16>, vector<2x16x128xbf16>, vector<2x8x128xf32> -> vector<2x8x128xf32>
    "tpu.trace_stop"() : () -> ()
    %286 = vector.shape_cast %285 : vector<2x8x128xf32> to vector<16x128xf32>
    %287 = arith.truncf %286 : vector<16x128xf32> to vector<16x128xbf16>
    %288 = vector.extract_strided_slice %187 {offsets = [384, 0], sizes = [128, 128], strides = [1, 1]} : vector<512x128xbf16> to vector<128x128xbf16>
    %cst_100 = arith.constant dense<0.000000e+00> : vector<16x128xf32>
    %289 = tpu.matmul %287, %288, %cst_100 {dimension_numbers = #tpu.dot_dimension_numbers<[1], [0], [0], [1], [0, 0, 1, 1], [], []>} : vector<16x128xbf16>, vector<128x128xbf16>, vector<16x128xf32> -> vector<16x128xf32>
    %290 = arith.addf %264, %289 : vector<16x128xf32>
    %c0_101 = arith.constant 0 : index
    %c0_102 = arith.constant 0 : index
    %c0_103 = arith.constant 0 : index
    %291 = vector.load %arg13[%c0_101, %c0_102, %c0_103] : memref<2x1x128xf32, #tpu.memory_space<vmem>>, vector<1x1x128xf32>
    %292 = vector.shape_cast %291 : vector<1x1x128xf32> to vector<1x128xf32>
    %293 = vector.broadcast %292 : vector<1x128xf32> to vector<16x128xf32>
    %294 = arith.addf %290, %293 : vector<16x128xf32>
    %295 = arith.addf %174, %294 : vector<16x128xf32>
    %296 = vector.extract_strided_slice %19 {offsets = [1, 0], sizes = [1, 128], strides = [1, 1]} : vector<3x128xf32> to vector<1x128xf32>
    %297 = vector.extract_strided_slice %21 {offsets = [1, 0], sizes = [1, 128], strides = [1, 1]} : vector<3x128xf32> to vector<1x128xf32>
    %cst_104 = arith.constant dense<0.000000e+00> : vector<16xf32>
    %298 = vector.multi_reduction <add>, %295, %cst_104 [1] : vector<16x128xf32> to vector<16xf32>
    %299 = vector.shape_cast %298 : vector<16xf32> to vector<16x1xf32>
    %cst_105 = arith.constant 3.125000e-02 : f32
    %300 = vector.broadcast %cst_105 : f32 to vector<16x1xf32>
    %301 = arith.mulf %299, %300 : vector<16x1xf32>
    %302 = arith.mulf %295, %295 : vector<16x128xf32>
    %cst_106 = arith.constant dense<0.000000e+00> : vector<16xf32>
    %303 = vector.multi_reduction <add>, %302, %cst_106 [1] : vector<16x128xf32> to vector<16xf32>
    %304 = vector.shape_cast %303 : vector<16xf32> to vector<16x1xf32>
    %cst_107 = arith.constant 3.125000e-02 : f32
    %305 = vector.broadcast %cst_107 : f32 to vector<16x1xf32>
    %306 = arith.mulf %304, %305 : vector<16x1xf32>
    %307 = arith.mulf %301, %301 : vector<16x1xf32>
    %308 = arith.subf %306, %307 : vector<16x1xf32>
    %309 = vector.broadcast %301 : vector<16x1xf32> to vector<16x128xf32>
    %310 = arith.subf %295, %309 : vector<16x128xf32>
    %cst_108 = arith.constant 9.99999974E-6 : f32
    %311 = vector.broadcast %cst_108 : f32 to vector<16x1xf32>
    %312 = arith.addf %308, %311 : vector<16x1xf32>
    %313 = math.rsqrt %312 : vector<16x1xf32>
    %314 = vector.broadcast %313 : vector<16x1xf32> to vector<16x128xf32>
    %315 = arith.mulf %310, %314 : vector<16x128xf32>
    %316 = vector.broadcast %296 : vector<1x128xf32> to vector<16x128xf32>
    %317 = arith.mulf %315, %316 : vector<16x128xf32>
    %318 = vector.broadcast %297 : vector<1x128xf32> to vector<16x128xf32>
    %319 = arith.addf %317, %318 : vector<16x128xf32>
    %c0_109 = arith.constant 0 : index
    %c0_110 = arith.constant 0 : index
    %c0_111 = arith.constant 0 : index
    %320 = vector.load %arg18[%c0_109, %c0_110, %c0_111] : memref<2x128x128xbf16, #tpu.memory_space<vmem>>, vector<1x128x128xbf16>
    %321 = vector.shape_cast %320 : vector<1x128x128xbf16> to vector<128x128xbf16>
    %322 = arith.truncf %319 : vector<16x128xf32> to vector<16x128xbf16>
    %cst_112 = arith.constant dense<0.000000e+00> : vector<16x128xf32>
    %323 = tpu.matmul %322, %321, %cst_112 {dimension_numbers = #tpu.dot_dimension_numbers<[1], [0], [0], [1], [0, 0, 1, 1], [], []>} : vector<16x128xbf16>, vector<128x128xbf16>, vector<16x128xf32> -> vector<16x128xf32>
    %c0_113 = arith.constant 0 : index
    %c0_114 = arith.constant 0 : index
    %c0_115 = arith.constant 0 : index
    %324 = vector.load %arg19[%c0_113, %c0_114, %c0_115] : memref<2x1x128xf32, #tpu.memory_space<vmem>>, vector<1x1x128xf32>
    %325 = vector.shape_cast %324 : vector<1x1x128xf32> to vector<1x128xf32>
    %326 = vector.broadcast %325 : vector<1x128xf32> to vector<16x128xf32>
    %327 = arith.addf %323, %326 : vector<16x128xf32>
    %cst_116 = arith.constant 0.000000e+00 : f32
    %328 = vector.broadcast %cst_116 : f32 to vector<16x128xf32>
    %329 = arith.maximumf %327, %328 : vector<16x128xf32>
    %c0_117 = arith.constant 0 : index
    %c0_118 = arith.constant 0 : index
    %c0_119 = arith.constant 0 : index
    %330 = vector.load %arg20[%c0_117, %c0_118, %c0_119] : memref<2x128x128xbf16, #tpu.memory_space<vmem>>, vector<1x128x128xbf16>
    %331 = vector.shape_cast %330 : vector<1x128x128xbf16> to vector<128x128xbf16>
    %332 = arith.truncf %329 : vector<16x128xf32> to vector<16x128xbf16>
    %cst_120 = arith.constant dense<0.000000e+00> : vector<16x128xf32>
    %333 = tpu.matmul %332, %331, %cst_120 {dimension_numbers = #tpu.dot_dimension_numbers<[1], [0], [0], [1], [0, 0, 1, 1], [], []>} : vector<16x128xbf16>, vector<128x128xbf16>, vector<16x128xf32> -> vector<16x128xf32>
    %c0_121 = arith.constant 0 : index
    %c0_122 = arith.constant 0 : index
    %c0_123 = arith.constant 0 : index
    %334 = vector.load %arg21[%c0_121, %c0_122, %c0_123] : memref<2x1x128xf32, #tpu.memory_space<vmem>>, vector<1x1x128xf32>
    %335 = vector.shape_cast %334 : vector<1x1x128xf32> to vector<1x128xf32>
    %336 = vector.broadcast %335 : vector<1x128xf32> to vector<16x128xf32>
    %337 = arith.addf %333, %336 : vector<16x128xf32>
    %338 = arith.addf %319, %337 : vector<16x128xf32>
    %339 = vector.extract_strided_slice %19 {offsets = [2, 0], sizes = [1, 128], strides = [1, 1]} : vector<3x128xf32> to vector<1x128xf32>
    %340 = vector.extract_strided_slice %21 {offsets = [2, 0], sizes = [1, 128], strides = [1, 1]} : vector<3x128xf32> to vector<1x128xf32>
    %cst_124 = arith.constant dense<0.000000e+00> : vector<16xf32>
    %341 = vector.multi_reduction <add>, %338, %cst_124 [1] : vector<16x128xf32> to vector<16xf32>
    %342 = vector.shape_cast %341 : vector<16xf32> to vector<16x1xf32>
    %cst_125 = arith.constant 3.125000e-02 : f32
    %343 = vector.broadcast %cst_125 : f32 to vector<16x1xf32>
    %344 = arith.mulf %342, %343 : vector<16x1xf32>
    %345 = arith.mulf %338, %338 : vector<16x128xf32>
    %cst_126 = arith.constant dense<0.000000e+00> : vector<16xf32>
    %346 = vector.multi_reduction <add>, %345, %cst_126 [1] : vector<16x128xf32> to vector<16xf32>
    %347 = vector.shape_cast %346 : vector<16xf32> to vector<16x1xf32>
    %cst_127 = arith.constant 3.125000e-02 : f32
    %348 = vector.broadcast %cst_127 : f32 to vector<16x1xf32>
    %349 = arith.mulf %347, %348 : vector<16x1xf32>
    %350 = arith.mulf %344, %344 : vector<16x1xf32>
    %351 = arith.subf %349, %350 : vector<16x1xf32>
    %352 = vector.broadcast %344 : vector<16x1xf32> to vector<16x128xf32>
    %353 = arith.subf %338, %352 : vector<16x128xf32>
    %cst_128 = arith.constant 9.99999974E-6 : f32
    %354 = vector.broadcast %cst_128 : f32 to vector<16x1xf32>
    %355 = arith.addf %351, %354 : vector<16x1xf32>
    %356 = math.rsqrt %355 : vector<16x1xf32>
    %357 = vector.broadcast %356 : vector<16x1xf32> to vector<16x128xf32>
    %358 = arith.mulf %353, %357 : vector<16x128xf32>
    %359 = vector.broadcast %339 : vector<1x128xf32> to vector<16x128xf32>
    %360 = arith.mulf %358, %359 : vector<16x128xf32>
    %361 = vector.broadcast %340 : vector<1x128xf32> to vector<16x128xf32>
    %362 = arith.addf %360, %361 : vector<16x128xf32>
    %cst_129 = arith.constant dense<0.000000e+00> : vector<16xf32>
    %363 = vector.multi_reduction <add>, %362, %cst_129 [1] : vector<16x128xf32> to vector<16xf32>
    %364 = vector.shape_cast %363 : vector<16xf32> to vector<16x1xf32>
    %cst_130 = arith.constant 3.125000e-02 : f32
    %365 = vector.broadcast %cst_130 : f32 to vector<16x1xf32>
    %366 = arith.mulf %364, %365 : vector<16x1xf32>
    %367 = arith.mulf %362, %362 : vector<16x128xf32>
    %cst_131 = arith.constant dense<0.000000e+00> : vector<16xf32>
    %368 = vector.multi_reduction <add>, %367, %cst_131 [1] : vector<16x128xf32> to vector<16xf32>
    %369 = vector.shape_cast %368 : vector<16xf32> to vector<16x1xf32>
    %cst_132 = arith.constant 3.125000e-02 : f32
    %370 = vector.broadcast %cst_132 : f32 to vector<16x1xf32>
    %371 = arith.mulf %369, %370 : vector<16x1xf32>
    %372 = arith.mulf %366, %366 : vector<16x1xf32>
    %373 = arith.subf %371, %372 : vector<16x1xf32>
    %374 = vector.broadcast %366 : vector<16x1xf32> to vector<16x128xf32>
    %375 = arith.subf %362, %374 : vector<16x128xf32>
    %cst_133 = arith.constant 9.99999974E-6 : f32
    %376 = vector.broadcast %cst_133 : f32 to vector<16x1xf32>
    %377 = arith.addf %373, %376 : vector<16x1xf32>
    %378 = math.rsqrt %377 : vector<16x1xf32>
    %379 = vector.broadcast %378 : vector<16x1xf32> to vector<16x128xf32>
    %380 = arith.mulf %375, %379 : vector<16x128xf32>
    %381 = vector.broadcast %2 : vector<1x128xf32> to vector<16x128xf32>
    %382 = arith.mulf %380, %381 : vector<16x128xf32>
    %383 = vector.broadcast %3 : vector<1x128xf32> to vector<16x128xf32>
    %384 = arith.addf %382, %383 : vector<16x128xf32>
    %c1 = arith.constant 1 : index
    %c0_134 = arith.constant 0 : index
    %c0_135 = arith.constant 0 : index
    %385 = vector.load %arg22[%c1, %c0_134, %c0_135] : memref<2x3x128xf32, #tpu.memory_space<vmem>>, vector<1x3x128xf32>
    %386 = vector.shape_cast %385 : vector<1x3x128xf32> to vector<3x128xf32>
    %c1_136 = arith.constant 1 : index
    %c0_137 = arith.constant 0 : index
    %c0_138 = arith.constant 0 : index
    %387 = vector.load %arg23[%c1_136, %c0_137, %c0_138] : memref<2x3x128xf32, #tpu.memory_space<vmem>>, vector<1x3x128xf32>
    %388 = vector.shape_cast %387 : vector<1x3x128xf32> to vector<3x128xf32>
    %389 = arith.addf %384, %1 : vector<16x128xf32>
    %c1_139 = arith.constant 1 : index
    %c0_140 = arith.constant 0 : index
    %c0_141 = arith.constant 0 : index
    %390 = vector.load %arg4[%c1_139, %c0_140, %c0_141] : memref<2x128x1024xbf16, #tpu.memory_space<vmem>>, vector<1x128x1024xbf16>
    %391 = vector.shape_cast %390 : vector<1x128x1024xbf16> to vector<128x1024xbf16>
    %392 = arith.truncf %389 : vector<16x128xf32> to vector<16x128xbf16>
    %cst_142 = arith.constant dense<0.000000e+00> : vector<16x1024xf32>
    %393 = tpu.matmul %392, %391, %cst_142 {dimension_numbers = #tpu.dot_dimension_numbers<[1], [0], [0], [1], [0, 0, 1, 1], [], []>} : vector<16x128xbf16>, vector<128x1024xbf16>, vector<16x1024xf32> -> vector<16x1024xf32>
    %c1_143 = arith.constant 1 : index
    %c0_144 = arith.constant 0 : index
    %c0_145 = arith.constant 0 : index
    %394 = vector.load %arg5[%c1_143, %c0_144, %c0_145] : memref<2x1x1024xf32, #tpu.memory_space<vmem>>, vector<1x1x1024xf32>
    %395 = vector.shape_cast %394 : vector<1x1x1024xf32> to vector<1x1024xf32>
    %396 = vector.broadcast %395 : vector<1x1024xf32> to vector<16x1024xf32>
    %397 = arith.addf %393, %396 : vector<16x1024xf32>
    %c1_146 = arith.constant 1 : index
    %c0_147 = arith.constant 0 : index
    %c0_148 = arith.constant 0 : index
    %398 = vector.load %arg6[%c1_146, %c0_147, %c0_148] : memref<2x128x512xbf16, #tpu.memory_space<vmem>>, vector<1x128x512xbf16>
    %399 = vector.shape_cast %398 : vector<1x128x512xbf16> to vector<128x512xbf16>
    %400 = arith.truncf %384 : vector<16x128xf32> to vector<16x128xbf16>
    %cst_149 = arith.constant dense<0.000000e+00> : vector<16x512xf32>
    %401 = tpu.matmul %400, %399, %cst_149 {dimension_numbers = #tpu.dot_dimension_numbers<[1], [0], [0], [1], [0, 0, 1, 1], [], []>} : vector<16x128xbf16>, vector<128x512xbf16>, vector<16x512xf32> -> vector<16x512xf32>
    %c1_150 = arith.constant 1 : index
    %c0_151 = arith.constant 0 : index
    %c0_152 = arith.constant 0 : index
    %402 = vector.load %arg7[%c1_150, %c0_151, %c0_152] : memref<2x1x512xf32, #tpu.memory_space<vmem>>, vector<1x1x512xf32>
    %403 = vector.shape_cast %402 : vector<1x1x512xf32> to vector<1x512xf32>
    %404 = vector.broadcast %403 : vector<1x512xf32> to vector<16x512xf32>
    %405 = arith.addf %401, %404 : vector<16x512xf32>
    %406 = vector.extract_strided_slice %397 {offsets = [0, 0], sizes = [16, 512], strides = [1, 1]} : vector<16x1024xf32> to vector<16x512xf32>
    %407 = vector.extract_strided_slice %397 {offsets = [0, 512], sizes = [16, 512], strides = [1, 1]} : vector<16x1024xf32> to vector<16x512xf32>
    %c1_153 = arith.constant 1 : index
    %c0_154 = arith.constant 0 : index
    %c0_155 = arith.constant 0 : index
    %408 = vector.load %arg8[%c1_153, %c0_154, %c0_155] : memref<2x512x128xbf16, #tpu.memory_space<vmem>>, vector<1x512x128xbf16>
    %409 = vector.shape_cast %408 : vector<1x512x128xbf16> to vector<512x128xbf16>
    %410 = vector.extract_strided_slice %406 {offsets = [0, 0], sizes = [16, 128], strides = [1, 1]} : vector<16x512xf32> to vector<16x128xf32>
    %411 = vector.shape_cast %410 : vector<16x128xf32> to vector<2x8x128xf32>
    %412 = arith.truncf %411 : vector<2x8x128xf32> to vector<2x8x128xbf16>
    %413 = vector.extract_strided_slice %407 {offsets = [0, 0], sizes = [16, 128], strides = [1, 1]} : vector<16x512xf32> to vector<16x128xf32>
    %414 = vector.shape_cast %413 : vector<16x128xf32> to vector<2x8x128xf32>
    %415 = arith.truncf %414 : vector<2x8x128xf32> to vector<2x8x128xbf16>
    %416 = vector.extract_strided_slice %405 {offsets = [0, 0], sizes = [16, 128], strides = [1, 1]} : vector<16x512xf32> to vector<16x128xf32>
    %417 = vector.shape_cast %416 : vector<16x128xf32> to vector<2x8x128xf32>
    %418 = arith.truncf %417 : vector<2x8x128xf32> to vector<2x8x128xbf16>
    "tpu.trace_start"() <{level = 10 : i32, message = "bqe,bke->bqk"}> : () -> ()
    %cst_156 = arith.constant dense<0.000000e+00> : vector<2x8x8xf32>
    %419 = tpu.matmul %412, %415, %cst_156 {dimension_numbers = #tpu.dot_dimension_numbers<[2], [2], [1], [1], [0, 0, 0, 1, 1, 1], [0], [0]>} : vector<2x8x128xbf16>, vector<2x8x128xbf16>, vector<2x8x8xf32> -> vector<2x8x8xf32>
    "tpu.trace_stop"() : () -> ()
    %cst_157 = arith.constant dense<0xFF800000> : vector<2x8xf32>
    %420 = vector.multi_reduction <maximumf>, %419, %cst_157 [2] : vector<2x8x8xf32> to vector<2x8xf32>
    %421 = vector.shape_cast %420 : vector<2x8xf32> to vector<2x8x1xf32>
    %422 = vector.broadcast %421 : vector<2x8x1xf32> to vector<2x8x8xf32>
    %423 = arith.subf %419, %422 : vector<2x8x8xf32>
    %424 = math.exp %423 : vector<2x8x8xf32>
    %cst_158 = arith.constant dense<0.000000e+00> : vector<2x8xf32>
    %425 = vector.multi_reduction <add>, %424, %cst_158 [2] : vector<2x8x8xf32> to vector<2x8xf32>
    %426 = vector.shape_cast %425 : vector<2x8xf32> to vector<2x8x1xf32>
    %427 = vector.broadcast %426 : vector<2x8x1xf32> to vector<2x8x8xf32>
    %428 = arith.divf %424, %427 : vector<2x8x8xf32>
    %429 = arith.truncf %428 : vector<2x8x8xf32> to vector<2x8x8xbf16>
    "tpu.trace_start"() <{level = 10 : i32, message = "bqk,bke->bqe"}> : () -> ()
    %cst_159 = arith.constant dense<0.000000e+00> : vector<2x8x128xf32>
    %430 = tpu.matmul %429, %418, %cst_159 {dimension_numbers = #tpu.dot_dimension_numbers<[2], [1], [1], [2], [0, 0, 0, 1, 1, 2], [0], [0]>} : vector<2x8x8xbf16>, vector<2x8x128xbf16>, vector<2x8x128xf32> -> vector<2x8x128xf32>
    "tpu.trace_stop"() : () -> ()
    %431 = vector.shape_cast %430 : vector<2x8x128xf32> to vector<16x128xf32>
    %432 = arith.truncf %431 : vector<16x128xf32> to vector<16x128xbf16>
    %433 = vector.extract_strided_slice %409 {offsets = [0, 0], sizes = [128, 128], strides = [1, 1]} : vector<512x128xbf16> to vector<128x128xbf16>
    %cst_160 = arith.constant dense<0.000000e+00> : vector<16x128xf32>
    %434 = tpu.matmul %432, %433, %cst_160 {dimension_numbers = #tpu.dot_dimension_numbers<[1], [0], [0], [1], [0, 0, 1, 1], [], []>} : vector<16x128xbf16>, vector<128x128xbf16>, vector<16x128xf32> -> vector<16x128xf32>
    %435 = vector.extract_strided_slice %406 {offsets = [0, 128], sizes = [16, 128], strides = [1, 1]} : vector<16x512xf32> to vector<16x128xf32>
    %436 = vector.shape_cast %435 : vector<16x128xf32> to vector<2x8x128xf32>
    %437 = arith.truncf %436 : vector<2x8x128xf32> to vector<2x8x128xbf16>
    %438 = vector.extract_strided_slice %407 {offsets = [0, 128], sizes = [16, 128], strides = [1, 1]} : vector<16x512xf32> to vector<16x128xf32>
    %439 = vector.shape_cast %438 : vector<16x128xf32> to vector<2x8x128xf32>
    %440 = arith.truncf %439 : vector<2x8x128xf32> to vector<2x8x128xbf16>
    %441 = vector.extract_strided_slice %405 {offsets = [0, 128], sizes = [16, 128], strides = [1, 1]} : vector<16x512xf32> to vector<16x128xf32>
    %442 = vector.shape_cast %441 : vector<16x128xf32> to vector<2x8x128xf32>
    %443 = arith.truncf %442 : vector<2x8x128xf32> to vector<2x8x128xbf16>
    "tpu.trace_start"() <{level = 10 : i32, message = "bqe,bke->bqk"}> : () -> ()
    %cst_161 = arith.constant dense<0.000000e+00> : vector<2x8x8xf32>
    %444 = tpu.matmul %437, %440, %cst_161 {dimension_numbers = #tpu.dot_dimension_numbers<[2], [2], [1], [1], [0, 0, 0, 1, 1, 1], [0], [0]>} : vector<2x8x128xbf16>, vector<2x8x128xbf16>, vector<2x8x8xf32> -> vector<2x8x8xf32>
    "tpu.trace_stop"() : () -> ()
    %cst_162 = arith.constant dense<0xFF800000> : vector<2x8xf32>
    %445 = vector.multi_reduction <maximumf>, %444, %cst_162 [2] : vector<2x8x8xf32> to vector<2x8xf32>
    %446 = vector.shape_cast %445 : vector<2x8xf32> to vector<2x8x1xf32>
    %447 = vector.broadcast %446 : vector<2x8x1xf32> to vector<2x8x8xf32>
    %448 = arith.subf %444, %447 : vector<2x8x8xf32>
    %449 = math.exp %448 : vector<2x8x8xf32>
    %cst_163 = arith.constant dense<0.000000e+00> : vector<2x8xf32>
    %450 = vector.multi_reduction <add>, %449, %cst_163 [2] : vector<2x8x8xf32> to vector<2x8xf32>
    %451 = vector.shape_cast %450 : vector<2x8xf32> to vector<2x8x1xf32>
    %452 = vector.broadcast %451 : vector<2x8x1xf32> to vector<2x8x8xf32>
    %453 = arith.divf %449, %452 : vector<2x8x8xf32>
    %454 = arith.truncf %453 : vector<2x8x8xf32> to vector<2x8x8xbf16>
    "tpu.trace_start"() <{level = 10 : i32, message = "bqk,bke->bqe"}> : () -> ()
    %cst_164 = arith.constant dense<0.000000e+00> : vector<2x8x128xf32>
    %455 = tpu.matmul %454, %443, %cst_164 {dimension_numbers = #tpu.dot_dimension_numbers<[2], [1], [1], [2], [0, 0, 0, 1, 1, 2], [0], [0]>} : vector<2x8x8xbf16>, vector<2x8x128xbf16>, vector<2x8x128xf32> -> vector<2x8x128xf32>
    "tpu.trace_stop"() : () -> ()
    %456 = vector.shape_cast %455 : vector<2x8x128xf32> to vector<16x128xf32>
    %457 = arith.truncf %456 : vector<16x128xf32> to vector<16x128xbf16>
    %458 = vector.extract_strided_slice %409 {offsets = [128, 0], sizes = [128, 128], strides = [1, 1]} : vector<512x128xbf16> to vector<128x128xbf16>
    %cst_165 = arith.constant dense<0.000000e+00> : vector<16x128xf32>
    %459 = tpu.matmul %457, %458, %cst_165 {dimension_numbers = #tpu.dot_dimension_numbers<[1], [0], [0], [1], [0, 0, 1, 1], [], []>} : vector<16x128xbf16>, vector<128x128xbf16>, vector<16x128xf32> -> vector<16x128xf32>
    %460 = arith.addf %434, %459 : vector<16x128xf32>
    %461 = vector.extract_strided_slice %406 {offsets = [0, 256], sizes = [16, 128], strides = [1, 1]} : vector<16x512xf32> to vector<16x128xf32>
    %462 = vector.shape_cast %461 : vector<16x128xf32> to vector<2x8x128xf32>
    %463 = arith.truncf %462 : vector<2x8x128xf32> to vector<2x8x128xbf16>
    %464 = vector.extract_strided_slice %407 {offsets = [0, 256], sizes = [16, 128], strides = [1, 1]} : vector<16x512xf32> to vector<16x128xf32>
    %465 = vector.shape_cast %464 : vector<16x128xf32> to vector<2x8x128xf32>
    %466 = arith.truncf %465 : vector<2x8x128xf32> to vector<2x8x128xbf16>
    %467 = vector.extract_strided_slice %405 {offsets = [0, 256], sizes = [16, 128], strides = [1, 1]} : vector<16x512xf32> to vector<16x128xf32>
    %468 = vector.shape_cast %467 : vector<16x128xf32> to vector<2x8x128xf32>
    %469 = arith.truncf %468 : vector<2x8x128xf32> to vector<2x8x128xbf16>
    "tpu.trace_start"() <{level = 10 : i32, message = "bqe,bke->bqk"}> : () -> ()
    %cst_166 = arith.constant dense<0.000000e+00> : vector<2x8x8xf32>
    %470 = tpu.matmul %463, %466, %cst_166 {dimension_numbers = #tpu.dot_dimension_numbers<[2], [2], [1], [1], [0, 0, 0, 1, 1, 1], [0], [0]>} : vector<2x8x128xbf16>, vector<2x8x128xbf16>, vector<2x8x8xf32> -> vector<2x8x8xf32>
    "tpu.trace_stop"() : () -> ()
    %cst_167 = arith.constant dense<0xFF800000> : vector<2x8xf32>
    %471 = vector.multi_reduction <maximumf>, %470, %cst_167 [2] : vector<2x8x8xf32> to vector<2x8xf32>
    %472 = vector.shape_cast %471 : vector<2x8xf32> to vector<2x8x1xf32>
    %473 = vector.broadcast %472 : vector<2x8x1xf32> to vector<2x8x8xf32>
    %474 = arith.subf %470, %473 : vector<2x8x8xf32>
    %475 = math.exp %474 : vector<2x8x8xf32>
    %cst_168 = arith.constant dense<0.000000e+00> : vector<2x8xf32>
    %476 = vector.multi_reduction <add>, %475, %cst_168 [2] : vector<2x8x8xf32> to vector<2x8xf32>
    %477 = vector.shape_cast %476 : vector<2x8xf32> to vector<2x8x1xf32>
    %478 = vector.broadcast %477 : vector<2x8x1xf32> to vector<2x8x8xf32>
    %479 = arith.divf %475, %478 : vector<2x8x8xf32>
    %480 = arith.truncf %479 : vector<2x8x8xf32> to vector<2x8x8xbf16>
    "tpu.trace_start"() <{level = 10 : i32, message = "bqk,bke->bqe"}> : () -> ()
    %cst_169 = arith.constant dense<0.000000e+00> : vector<2x8x128xf32>
    %481 = tpu.matmul %480, %469, %cst_169 {dimension_numbers = #tpu.dot_dimension_numbers<[2], [1], [1], [2], [0, 0, 0, 1, 1, 2], [0], [0]>} : vector<2x8x8xbf16>, vector<2x8x128xbf16>, vector<2x8x128xf32> -> vector<2x8x128xf32>
    "tpu.trace_stop"() : () -> ()
    %482 = vector.shape_cast %481 : vector<2x8x128xf32> to vector<16x128xf32>
    %483 = arith.truncf %482 : vector<16x128xf32> to vector<16x128xbf16>
    %484 = vector.extract_strided_slice %409 {offsets = [256, 0], sizes = [128, 128], strides = [1, 1]} : vector<512x128xbf16> to vector<128x128xbf16>
    %cst_170 = arith.constant dense<0.000000e+00> : vector<16x128xf32>
    %485 = tpu.matmul %483, %484, %cst_170 {dimension_numbers = #tpu.dot_dimension_numbers<[1], [0], [0], [1], [0, 0, 1, 1], [], []>} : vector<16x128xbf16>, vector<128x128xbf16>, vector<16x128xf32> -> vector<16x128xf32>
    %486 = arith.addf %460, %485 : vector<16x128xf32>
    %487 = vector.extract_strided_slice %406 {offsets = [0, 384], sizes = [16, 128], strides = [1, 1]} : vector<16x512xf32> to vector<16x128xf32>
    %488 = vector.shape_cast %487 : vector<16x128xf32> to vector<2x8x128xf32>
    %489 = arith.truncf %488 : vector<2x8x128xf32> to vector<2x8x128xbf16>
    %490 = vector.extract_strided_slice %407 {offsets = [0, 384], sizes = [16, 128], strides = [1, 1]} : vector<16x512xf32> to vector<16x128xf32>
    %491 = vector.shape_cast %490 : vector<16x128xf32> to vector<2x8x128xf32>
    %492 = arith.truncf %491 : vector<2x8x128xf32> to vector<2x8x128xbf16>
    %493 = vector.extract_strided_slice %405 {offsets = [0, 384], sizes = [16, 128], strides = [1, 1]} : vector<16x512xf32> to vector<16x128xf32>
    %494 = vector.shape_cast %493 : vector<16x128xf32> to vector<2x8x128xf32>
    %495 = arith.truncf %494 : vector<2x8x128xf32> to vector<2x8x128xbf16>
    "tpu.trace_start"() <{level = 10 : i32, message = "bqe,bke->bqk"}> : () -> ()
    %cst_171 = arith.constant dense<0.000000e+00> : vector<2x8x8xf32>
    %496 = tpu.matmul %489, %492, %cst_171 {dimension_numbers = #tpu.dot_dimension_numbers<[2], [2], [1], [1], [0, 0, 0, 1, 1, 1], [0], [0]>} : vector<2x8x128xbf16>, vector<2x8x128xbf16>, vector<2x8x8xf32> -> vector<2x8x8xf32>
    "tpu.trace_stop"() : () -> ()
    %cst_172 = arith.constant dense<0xFF800000> : vector<2x8xf32>
    %497 = vector.multi_reduction <maximumf>, %496, %cst_172 [2] : vector<2x8x8xf32> to vector<2x8xf32>
    %498 = vector.shape_cast %497 : vector<2x8xf32> to vector<2x8x1xf32>
    %499 = vector.broadcast %498 : vector<2x8x1xf32> to vector<2x8x8xf32>
    %500 = arith.subf %496, %499 : vector<2x8x8xf32>
    %501 = math.exp %500 : vector<2x8x8xf32>
    %cst_173 = arith.constant dense<0.000000e+00> : vector<2x8xf32>
    %502 = vector.multi_reduction <add>, %501, %cst_173 [2] : vector<2x8x8xf32> to vector<2x8xf32>
    %503 = vector.shape_cast %502 : vector<2x8xf32> to vector<2x8x1xf32>
    %504 = vector.broadcast %503 : vector<2x8x1xf32> to vector<2x8x8xf32>
    %505 = arith.divf %501, %504 : vector<2x8x8xf32>
    %506 = arith.truncf %505 : vector<2x8x8xf32> to vector<2x8x8xbf16>
    "tpu.trace_start"() <{level = 10 : i32, message = "bqk,bke->bqe"}> : () -> ()
    %cst_174 = arith.constant dense<0.000000e+00> : vector<2x8x128xf32>
    %507 = tpu.matmul %506, %495, %cst_174 {dimension_numbers = #tpu.dot_dimension_numbers<[2], [1], [1], [2], [0, 0, 0, 1, 1, 2], [0], [0]>} : vector<2x8x8xbf16>, vector<2x8x128xbf16>, vector<2x8x128xf32> -> vector<2x8x128xf32>
    "tpu.trace_stop"() : () -> ()
    %508 = vector.shape_cast %507 : vector<2x8x128xf32> to vector<16x128xf32>
    %509 = arith.truncf %508 : vector<16x128xf32> to vector<16x128xbf16>
    %510 = vector.extract_strided_slice %409 {offsets = [384, 0], sizes = [128, 128], strides = [1, 1]} : vector<512x128xbf16> to vector<128x128xbf16>
    %cst_175 = arith.constant dense<0.000000e+00> : vector<16x128xf32>
    %511 = tpu.matmul %509, %510, %cst_175 {dimension_numbers = #tpu.dot_dimension_numbers<[1], [0], [0], [1], [0, 0, 1, 1], [], []>} : vector<16x128xbf16>, vector<128x128xbf16>, vector<16x128xf32> -> vector<16x128xf32>
    %512 = arith.addf %486, %511 : vector<16x128xf32>
    %c1_176 = arith.constant 1 : index
    %c0_177 = arith.constant 0 : index
    %c0_178 = arith.constant 0 : index
    %513 = vector.load %arg9[%c1_176, %c0_177, %c0_178] : memref<2x1x128xf32, #tpu.memory_space<vmem>>, vector<1x1x128xf32>
    %514 = vector.shape_cast %513 : vector<1x1x128xf32> to vector<1x128xf32>
    %515 = vector.broadcast %514 : vector<1x128xf32> to vector<16x128xf32>
    %516 = arith.addf %512, %515 : vector<16x128xf32>
    %517 = arith.addf %384, %516 : vector<16x128xf32>
    %518 = vector.extract_strided_slice %386 {offsets = [0, 0], sizes = [1, 128], strides = [1, 1]} : vector<3x128xf32> to vector<1x128xf32>
    %519 = vector.extract_strided_slice %388 {offsets = [0, 0], sizes = [1, 128], strides = [1, 1]} : vector<3x128xf32> to vector<1x128xf32>
    %cst_179 = arith.constant dense<0.000000e+00> : vector<16xf32>
    %520 = vector.multi_reduction <add>, %517, %cst_179 [1] : vector<16x128xf32> to vector<16xf32>
    %521 = vector.shape_cast %520 : vector<16xf32> to vector<16x1xf32>
    %cst_180 = arith.constant 3.125000e-02 : f32
    %522 = vector.broadcast %cst_180 : f32 to vector<16x1xf32>
    %523 = arith.mulf %521, %522 : vector<16x1xf32>
    %524 = arith.mulf %517, %517 : vector<16x128xf32>
    %cst_181 = arith.constant dense<0.000000e+00> : vector<16xf32>
    %525 = vector.multi_reduction <add>, %524, %cst_181 [1] : vector<16x128xf32> to vector<16xf32>
    %526 = vector.shape_cast %525 : vector<16xf32> to vector<16x1xf32>
    %cst_182 = arith.constant 3.125000e-02 : f32
    %527 = vector.broadcast %cst_182 : f32 to vector<16x1xf32>
    %528 = arith.mulf %526, %527 : vector<16x1xf32>
    %529 = arith.mulf %523, %523 : vector<16x1xf32>
    %530 = arith.subf %528, %529 : vector<16x1xf32>
    %531 = vector.broadcast %523 : vector<16x1xf32> to vector<16x128xf32>
    %532 = arith.subf %517, %531 : vector<16x128xf32>
    %cst_183 = arith.constant 9.99999974E-6 : f32
    %533 = vector.broadcast %cst_183 : f32 to vector<16x1xf32>
    %534 = arith.addf %530, %533 : vector<16x1xf32>
    %535 = math.rsqrt %534 : vector<16x1xf32>
    %536 = vector.broadcast %535 : vector<16x1xf32> to vector<16x128xf32>
    %537 = arith.mulf %532, %536 : vector<16x128xf32>
    %538 = vector.broadcast %518 : vector<1x128xf32> to vector<16x128xf32>
    %539 = arith.mulf %537, %538 : vector<16x128xf32>
    %540 = vector.broadcast %519 : vector<1x128xf32> to vector<16x128xf32>
    %541 = arith.addf %539, %540 : vector<16x128xf32>
    %542 = arith.addf %541, %1 : vector<16x128xf32>
    %c1_184 = arith.constant 1 : index
    %c0_185 = arith.constant 0 : index
    %c0_186 = arith.constant 0 : index
    %543 = vector.load %arg10[%c1_184, %c0_185, %c0_186] : memref<2x128x512xbf16, #tpu.memory_space<vmem>>, vector<1x128x512xbf16>
    %544 = vector.shape_cast %543 : vector<1x128x512xbf16> to vector<128x512xbf16>
    %545 = arith.truncf %542 : vector<16x128xf32> to vector<16x128xbf16>
    %cst_187 = arith.constant dense<0.000000e+00> : vector<16x512xf32>
    %546 = tpu.matmul %545, %544, %cst_187 {dimension_numbers = #tpu.dot_dimension_numbers<[1], [0], [0], [1], [0, 0, 1, 1], [], []>} : vector<16x128xbf16>, vector<128x512xbf16>, vector<16x512xf32> -> vector<16x512xf32>
    %c1_188 = arith.constant 1 : index
    %c0_189 = arith.constant 0 : index
    %c0_190 = arith.constant 0 : index
    %547 = vector.load %arg11[%c1_188, %c0_189, %c0_190] : memref<2x1x512xf32, #tpu.memory_space<vmem>>, vector<1x1x512xf32>
    %548 = vector.shape_cast %547 : vector<1x1x512xf32> to vector<1x512xf32>
    %549 = vector.broadcast %548 : vector<1x512xf32> to vector<16x512xf32>
    %550 = arith.addf %546, %549 : vector<16x512xf32>
    %551 = vector.extract_strided_slice %10 {offsets = [0, 512], sizes = [32, 512], strides = [1, 1]} : vector<32x1024xf32> to vector<32x512xf32>
    %552 = vector.extract_strided_slice %17 {offsets = [0, 512], sizes = [32, 512], strides = [1, 1]} : vector<32x1024xf32> to vector<32x512xf32>
    %c1_191 = arith.constant 1 : index
    %c0_192 = arith.constant 0 : index
    %c0_193 = arith.constant 0 : index
    %553 = vector.load %arg12[%c1_191, %c0_192, %c0_193] : memref<2x512x128xbf16, #tpu.memory_space<vmem>>, vector<1x512x128xbf16>
    %554 = vector.shape_cast %553 : vector<1x512x128xbf16> to vector<512x128xbf16>
    %555 = vector.extract_strided_slice %550 {offsets = [0, 0], sizes = [16, 128], strides = [1, 1]} : vector<16x512xf32> to vector<16x128xf32>
    %556 = vector.shape_cast %555 : vector<16x128xf32> to vector<2x8x128xf32>
    %557 = arith.truncf %556 : vector<2x8x128xf32> to vector<2x8x128xbf16>
    %558 = vector.extract_strided_slice %551 {offsets = [0, 0], sizes = [32, 128], strides = [1, 1]} : vector<32x512xf32> to vector<32x128xf32>
    %559 = vector.shape_cast %558 : vector<32x128xf32> to vector<2x16x128xf32>
    %560 = arith.truncf %559 : vector<2x16x128xf32> to vector<2x16x128xbf16>
    %561 = vector.extract_strided_slice %552 {offsets = [0, 0], sizes = [32, 128], strides = [1, 1]} : vector<32x512xf32> to vector<32x128xf32>
    %562 = vector.shape_cast %561 : vector<32x128xf32> to vector<2x16x128xf32>
    %563 = arith.truncf %562 : vector<2x16x128xf32> to vector<2x16x128xbf16>
    "tpu.trace_start"() <{level = 10 : i32, message = "bqe,bke->bqk"}> : () -> ()
    %cst_194 = arith.constant dense<0.000000e+00> : vector<2x8x16xf32>
    %564 = tpu.matmul %557, %560, %cst_194 {dimension_numbers = #tpu.dot_dimension_numbers<[2], [2], [1], [1], [0, 0, 0, 1, 1, 1], [0], [0]>} : vector<2x8x128xbf16>, vector<2x16x128xbf16>, vector<2x8x16xf32> -> vector<2x8x16xf32>
    "tpu.trace_stop"() : () -> ()
    %cst_195 = arith.constant dense<0xFF800000> : vector<2x8xf32>
    %565 = vector.multi_reduction <maximumf>, %564, %cst_195 [2] : vector<2x8x16xf32> to vector<2x8xf32>
    %566 = vector.shape_cast %565 : vector<2x8xf32> to vector<2x8x1xf32>
    %567 = vector.broadcast %566 : vector<2x8x1xf32> to vector<2x8x16xf32>
    %568 = arith.subf %564, %567 : vector<2x8x16xf32>
    %569 = math.exp %568 : vector<2x8x16xf32>
    %cst_196 = arith.constant dense<0.000000e+00> : vector<2x8xf32>
    %570 = vector.multi_reduction <add>, %569, %cst_196 [2] : vector<2x8x16xf32> to vector<2x8xf32>
    %571 = vector.shape_cast %570 : vector<2x8xf32> to vector<2x8x1xf32>
    %572 = vector.broadcast %571 : vector<2x8x1xf32> to vector<2x8x16xf32>
    %573 = arith.divf %569, %572 : vector<2x8x16xf32>
    %574 = arith.truncf %573 : vector<2x8x16xf32> to vector<2x8x16xbf16>
    "tpu.trace_start"() <{level = 10 : i32, message = "bqk,bke->bqe"}> : () -> ()
    %cst_197 = arith.constant dense<0.000000e+00> : vector<2x8x128xf32>
    %575 = tpu.matmul %574, %563, %cst_197 {dimension_numbers = #tpu.dot_dimension_numbers<[2], [1], [1], [2], [0, 0, 0, 1, 1, 2], [0], [0]>} : vector<2x8x16xbf16>, vector<2x16x128xbf16>, vector<2x8x128xf32> -> vector<2x8x128xf32>
    "tpu.trace_stop"() : () -> ()
    %576 = vector.shape_cast %575 : vector<2x8x128xf32> to vector<16x128xf32>
    %577 = arith.truncf %576 : vector<16x128xf32> to vector<16x128xbf16>
    %578 = vector.extract_strided_slice %554 {offsets = [0, 0], sizes = [128, 128], strides = [1, 1]} : vector<512x128xbf16> to vector<128x128xbf16>
    %cst_198 = arith.constant dense<0.000000e+00> : vector<16x128xf32>
    %579 = tpu.matmul %577, %578, %cst_198 {dimension_numbers = #tpu.dot_dimension_numbers<[1], [0], [0], [1], [0, 0, 1, 1], [], []>} : vector<16x128xbf16>, vector<128x128xbf16>, vector<16x128xf32> -> vector<16x128xf32>
    %580 = vector.extract_strided_slice %550 {offsets = [0, 128], sizes = [16, 128], strides = [1, 1]} : vector<16x512xf32> to vector<16x128xf32>
    %581 = vector.shape_cast %580 : vector<16x128xf32> to vector<2x8x128xf32>
    %582 = arith.truncf %581 : vector<2x8x128xf32> to vector<2x8x128xbf16>
    %583 = vector.extract_strided_slice %551 {offsets = [0, 128], sizes = [32, 128], strides = [1, 1]} : vector<32x512xf32> to vector<32x128xf32>
    %584 = vector.shape_cast %583 : vector<32x128xf32> to vector<2x16x128xf32>
    %585 = arith.truncf %584 : vector<2x16x128xf32> to vector<2x16x128xbf16>
    %586 = vector.extract_strided_slice %552 {offsets = [0, 128], sizes = [32, 128], strides = [1, 1]} : vector<32x512xf32> to vector<32x128xf32>
    %587 = vector.shape_cast %586 : vector<32x128xf32> to vector<2x16x128xf32>
    %588 = arith.truncf %587 : vector<2x16x128xf32> to vector<2x16x128xbf16>
    "tpu.trace_start"() <{level = 10 : i32, message = "bqe,bke->bqk"}> : () -> ()
    %cst_199 = arith.constant dense<0.000000e+00> : vector<2x8x16xf32>
    %589 = tpu.matmul %582, %585, %cst_199 {dimension_numbers = #tpu.dot_dimension_numbers<[2], [2], [1], [1], [0, 0, 0, 1, 1, 1], [0], [0]>} : vector<2x8x128xbf16>, vector<2x16x128xbf16>, vector<2x8x16xf32> -> vector<2x8x16xf32>
    "tpu.trace_stop"() : () -> ()
    %cst_200 = arith.constant dense<0xFF800000> : vector<2x8xf32>
    %590 = vector.multi_reduction <maximumf>, %589, %cst_200 [2] : vector<2x8x16xf32> to vector<2x8xf32>
    %591 = vector.shape_cast %590 : vector<2x8xf32> to vector<2x8x1xf32>
    %592 = vector.broadcast %591 : vector<2x8x1xf32> to vector<2x8x16xf32>
    %593 = arith.subf %589, %592 : vector<2x8x16xf32>
    %594 = math.exp %593 : vector<2x8x16xf32>
    %cst_201 = arith.constant dense<0.000000e+00> : vector<2x8xf32>
    %595 = vector.multi_reduction <add>, %594, %cst_201 [2] : vector<2x8x16xf32> to vector<2x8xf32>
    %596 = vector.shape_cast %595 : vector<2x8xf32> to vector<2x8x1xf32>
    %597 = vector.broadcast %596 : vector<2x8x1xf32> to vector<2x8x16xf32>
    %598 = arith.divf %594, %597 : vector<2x8x16xf32>
    %599 = arith.truncf %598 : vector<2x8x16xf32> to vector<2x8x16xbf16>
    "tpu.trace_start"() <{level = 10 : i32, message = "bqk,bke->bqe"}> : () -> ()
    %cst_202 = arith.constant dense<0.000000e+00> : vector<2x8x128xf32>
    %600 = tpu.matmul %599, %588, %cst_202 {dimension_numbers = #tpu.dot_dimension_numbers<[2], [1], [1], [2], [0, 0, 0, 1, 1, 2], [0], [0]>} : vector<2x8x16xbf16>, vector<2x16x128xbf16>, vector<2x8x128xf32> -> vector<2x8x128xf32>
    "tpu.trace_stop"() : () -> ()
    %601 = vector.shape_cast %600 : vector<2x8x128xf32> to vector<16x128xf32>
    %602 = arith.truncf %601 : vector<16x128xf32> to vector<16x128xbf16>
    %603 = vector.extract_strided_slice %554 {offsets = [128, 0], sizes = [128, 128], strides = [1, 1]} : vector<512x128xbf16> to vector<128x128xbf16>
    %cst_203 = arith.constant dense<0.000000e+00> : vector<16x128xf32>
    %604 = tpu.matmul %602, %603, %cst_203 {dimension_numbers = #tpu.dot_dimension_numbers<[1], [0], [0], [1], [0, 0, 1, 1], [], []>} : vector<16x128xbf16>, vector<128x128xbf16>, vector<16x128xf32> -> vector<16x128xf32>
    %605 = arith.addf %579, %604 : vector<16x128xf32>
    %606 = vector.extract_strided_slice %550 {offsets = [0, 256], sizes = [16, 128], strides = [1, 1]} : vector<16x512xf32> to vector<16x128xf32>
    %607 = vector.shape_cast %606 : vector<16x128xf32> to vector<2x8x128xf32>
    %608 = arith.truncf %607 : vector<2x8x128xf32> to vector<2x8x128xbf16>
    %609 = vector.extract_strided_slice %551 {offsets = [0, 256], sizes = [32, 128], strides = [1, 1]} : vector<32x512xf32> to vector<32x128xf32>
    %610 = vector.shape_cast %609 : vector<32x128xf32> to vector<2x16x128xf32>
    %611 = arith.truncf %610 : vector<2x16x128xf32> to vector<2x16x128xbf16>
    %612 = vector.extract_strided_slice %552 {offsets = [0, 256], sizes = [32, 128], strides = [1, 1]} : vector<32x512xf32> to vector<32x128xf32>
    %613 = vector.shape_cast %612 : vector<32x128xf32> to vector<2x16x128xf32>
    %614 = arith.truncf %613 : vector<2x16x128xf32> to vector<2x16x128xbf16>
    "tpu.trace_start"() <{level = 10 : i32, message = "bqe,bke->bqk"}> : () -> ()
    %cst_204 = arith.constant dense<0.000000e+00> : vector<2x8x16xf32>
    %615 = tpu.matmul %608, %611, %cst_204 {dimension_numbers = #tpu.dot_dimension_numbers<[2], [2], [1], [1], [0, 0, 0, 1, 1, 1], [0], [0]>} : vector<2x8x128xbf16>, vector<2x16x128xbf16>, vector<2x8x16xf32> -> vector<2x8x16xf32>
    "tpu.trace_stop"() : () -> ()
    %cst_205 = arith.constant dense<0xFF800000> : vector<2x8xf32>
    %616 = vector.multi_reduction <maximumf>, %615, %cst_205 [2] : vector<2x8x16xf32> to vector<2x8xf32>
    %617 = vector.shape_cast %616 : vector<2x8xf32> to vector<2x8x1xf32>
    %618 = vector.broadcast %617 : vector<2x8x1xf32> to vector<2x8x16xf32>
    %619 = arith.subf %615, %618 : vector<2x8x16xf32>
    %620 = math.exp %619 : vector<2x8x16xf32>
    %cst_206 = arith.constant dense<0.000000e+00> : vector<2x8xf32>
    %621 = vector.multi_reduction <add>, %620, %cst_206 [2] : vector<2x8x16xf32> to vector<2x8xf32>
    %622 = vector.shape_cast %621 : vector<2x8xf32> to vector<2x8x1xf32>
    %623 = vector.broadcast %622 : vector<2x8x1xf32> to vector<2x8x16xf32>
    %624 = arith.divf %620, %623 : vector<2x8x16xf32>
    %625 = arith.truncf %624 : vector<2x8x16xf32> to vector<2x8x16xbf16>
    "tpu.trace_start"() <{level = 10 : i32, message = "bqk,bke->bqe"}> : () -> ()
    %cst_207 = arith.constant dense<0.000000e+00> : vector<2x8x128xf32>
    %626 = tpu.matmul %625, %614, %cst_207 {dimension_numbers = #tpu.dot_dimension_numbers<[2], [1], [1], [2], [0, 0, 0, 1, 1, 2], [0], [0]>} : vector<2x8x16xbf16>, vector<2x16x128xbf16>, vector<2x8x128xf32> -> vector<2x8x128xf32>
    "tpu.trace_stop"() : () -> ()
    %627 = vector.shape_cast %626 : vector<2x8x128xf32> to vector<16x128xf32>
    %628 = arith.truncf %627 : vector<16x128xf32> to vector<16x128xbf16>
    %629 = vector.extract_strided_slice %554 {offsets = [256, 0], sizes = [128, 128], strides = [1, 1]} : vector<512x128xbf16> to vector<128x128xbf16>
    %cst_208 = arith.constant dense<0.000000e+00> : vector<16x128xf32>
    %630 = tpu.matmul %628, %629, %cst_208 {dimension_numbers = #tpu.dot_dimension_numbers<[1], [0], [0], [1], [0, 0, 1, 1], [], []>} : vector<16x128xbf16>, vector<128x128xbf16>, vector<16x128xf32> -> vector<16x128xf32>
    %631 = arith.addf %605, %630 : vector<16x128xf32>
    %632 = vector.extract_strided_slice %550 {offsets = [0, 384], sizes = [16, 128], strides = [1, 1]} : vector<16x512xf32> to vector<16x128xf32>
    %633 = vector.shape_cast %632 : vector<16x128xf32> to vector<2x8x128xf32>
    %634 = arith.truncf %633 : vector<2x8x128xf32> to vector<2x8x128xbf16>
    %635 = vector.extract_strided_slice %551 {offsets = [0, 384], sizes = [32, 128], strides = [1, 1]} : vector<32x512xf32> to vector<32x128xf32>
    %636 = vector.shape_cast %635 : vector<32x128xf32> to vector<2x16x128xf32>
    %637 = arith.truncf %636 : vector<2x16x128xf32> to vector<2x16x128xbf16>
    %638 = vector.extract_strided_slice %552 {offsets = [0, 384], sizes = [32, 128], strides = [1, 1]} : vector<32x512xf32> to vector<32x128xf32>
    %639 = vector.shape_cast %638 : vector<32x128xf32> to vector<2x16x128xf32>
    %640 = arith.truncf %639 : vector<2x16x128xf32> to vector<2x16x128xbf16>
    "tpu.trace_start"() <{level = 10 : i32, message = "bqe,bke->bqk"}> : () -> ()
    %cst_209 = arith.constant dense<0.000000e+00> : vector<2x8x16xf32>
    %641 = tpu.matmul %634, %637, %cst_209 {dimension_numbers = #tpu.dot_dimension_numbers<[2], [2], [1], [1], [0, 0, 0, 1, 1, 1], [0], [0]>} : vector<2x8x128xbf16>, vector<2x16x128xbf16>, vector<2x8x16xf32> -> vector<2x8x16xf32>
    "tpu.trace_stop"() : () -> ()
    %cst_210 = arith.constant dense<0xFF800000> : vector<2x8xf32>
    %642 = vector.multi_reduction <maximumf>, %641, %cst_210 [2] : vector<2x8x16xf32> to vector<2x8xf32>
    %643 = vector.shape_cast %642 : vector<2x8xf32> to vector<2x8x1xf32>
    %644 = vector.broadcast %643 : vector<2x8x1xf32> to vector<2x8x16xf32>
    %645 = arith.subf %641, %644 : vector<2x8x16xf32>
    %646 = math.exp %645 : vector<2x8x16xf32>
    %cst_211 = arith.constant dense<0.000000e+00> : vector<2x8xf32>
    %647 = vector.multi_reduction <add>, %646, %cst_211 [2] : vector<2x8x16xf32> to vector<2x8xf32>
    %648 = vector.shape_cast %647 : vector<2x8xf32> to vector<2x8x1xf32>
    %649 = vector.broadcast %648 : vector<2x8x1xf32> to vector<2x8x16xf32>
    %650 = arith.divf %646, %649 : vector<2x8x16xf32>
    %651 = arith.truncf %650 : vector<2x8x16xf32> to vector<2x8x16xbf16>
    "tpu.trace_start"() <{level = 10 : i32, message = "bqk,bke->bqe"}> : () -> ()
    %cst_212 = arith.constant dense<0.000000e+00> : vector<2x8x128xf32>
    %652 = tpu.matmul %651, %640, %cst_212 {dimension_numbers = #tpu.dot_dimension_numbers<[2], [1], [1], [2], [0, 0, 0, 1, 1, 2], [0], [0]>} : vector<2x8x16xbf16>, vector<2x16x128xbf16>, vector<2x8x128xf32> -> vector<2x8x128xf32>
    "tpu.trace_stop"() : () -> ()
    %653 = vector.shape_cast %652 : vector<2x8x128xf32> to vector<16x128xf32>
    %654 = arith.truncf %653 : vector<16x128xf32> to vector<16x128xbf16>
    %655 = vector.extract_strided_slice %554 {offsets = [384, 0], sizes = [128, 128], strides = [1, 1]} : vector<512x128xbf16> to vector<128x128xbf16>
    %cst_213 = arith.constant dense<0.000000e+00> : vector<16x128xf32>
    %656 = tpu.matmul %654, %655, %cst_213 {dimension_numbers = #tpu.dot_dimension_numbers<[1], [0], [0], [1], [0, 0, 1, 1], [], []>} : vector<16x128xbf16>, vector<128x128xbf16>, vector<16x128xf32> -> vector<16x128xf32>
    %657 = arith.addf %631, %656 : vector<16x128xf32>
    %c1_214 = arith.constant 1 : index
    %c0_215 = arith.constant 0 : index
    %c0_216 = arith.constant 0 : index
    %658 = vector.load %arg13[%c1_214, %c0_215, %c0_216] : memref<2x1x128xf32, #tpu.memory_space<vmem>>, vector<1x1x128xf32>
    %659 = vector.shape_cast %658 : vector<1x1x128xf32> to vector<1x128xf32>
    %660 = vector.broadcast %659 : vector<1x128xf32> to vector<16x128xf32>
    %661 = arith.addf %657, %660 : vector<16x128xf32>
    %662 = arith.addf %541, %661 : vector<16x128xf32>
    %663 = vector.extract_strided_slice %386 {offsets = [1, 0], sizes = [1, 128], strides = [1, 1]} : vector<3x128xf32> to vector<1x128xf32>
    %664 = vector.extract_strided_slice %388 {offsets = [1, 0], sizes = [1, 128], strides = [1, 1]} : vector<3x128xf32> to vector<1x128xf32>
    %cst_217 = arith.constant dense<0.000000e+00> : vector<16xf32>
    %665 = vector.multi_reduction <add>, %662, %cst_217 [1] : vector<16x128xf32> to vector<16xf32>
    %666 = vector.shape_cast %665 : vector<16xf32> to vector<16x1xf32>
    %cst_218 = arith.constant 3.125000e-02 : f32
    %667 = vector.broadcast %cst_218 : f32 to vector<16x1xf32>
    %668 = arith.mulf %666, %667 : vector<16x1xf32>
    %669 = arith.mulf %662, %662 : vector<16x128xf32>
    %cst_219 = arith.constant dense<0.000000e+00> : vector<16xf32>
    %670 = vector.multi_reduction <add>, %669, %cst_219 [1] : vector<16x128xf32> to vector<16xf32>
    %671 = vector.shape_cast %670 : vector<16xf32> to vector<16x1xf32>
    %cst_220 = arith.constant 3.125000e-02 : f32
    %672 = vector.broadcast %cst_220 : f32 to vector<16x1xf32>
    %673 = arith.mulf %671, %672 : vector<16x1xf32>
    %674 = arith.mulf %668, %668 : vector<16x1xf32>
    %675 = arith.subf %673, %674 : vector<16x1xf32>
    %676 = vector.broadcast %668 : vector<16x1xf32> to vector<16x128xf32>
    %677 = arith.subf %662, %676 : vector<16x128xf32>
    %cst_221 = arith.constant 9.99999974E-6 : f32
    %678 = vector.broadcast %cst_221 : f32 to vector<16x1xf32>
    %679 = arith.addf %675, %678 : vector<16x1xf32>
    %680 = math.rsqrt %679 : vector<16x1xf32>
    %681 = vector.broadcast %680 : vector<16x1xf32> to vector<16x128xf32>
    %682 = arith.mulf %677, %681 : vector<16x128xf32>
    %683 = vector.broadcast %663 : vector<1x128xf32> to vector<16x128xf32>
    %684 = arith.mulf %682, %683 : vector<16x128xf32>
    %685 = vector.broadcast %664 : vector<1x128xf32> to vector<16x128xf32>
    %686 = arith.addf %684, %685 : vector<16x128xf32>
    %c1_222 = arith.constant 1 : index
    %c0_223 = arith.constant 0 : index
    %c0_224 = arith.constant 0 : index
    %687 = vector.load %arg18[%c1_222, %c0_223, %c0_224] : memref<2x128x128xbf16, #tpu.memory_space<vmem>>, vector<1x128x128xbf16>
    %688 = vector.shape_cast %687 : vector<1x128x128xbf16> to vector<128x128xbf16>
    %689 = arith.truncf %686 : vector<16x128xf32> to vector<16x128xbf16>
    %cst_225 = arith.constant dense<0.000000e+00> : vector<16x128xf32>
    %690 = tpu.matmul %689, %688, %cst_225 {dimension_numbers = #tpu.dot_dimension_numbers<[1], [0], [0], [1], [0, 0, 1, 1], [], []>} : vector<16x128xbf16>, vector<128x128xbf16>, vector<16x128xf32> -> vector<16x128xf32>
    %c1_226 = arith.constant 1 : index
    %c0_227 = arith.constant 0 : index
    %c0_228 = arith.constant 0 : index
    %691 = vector.load %arg19[%c1_226, %c0_227, %c0_228] : memref<2x1x128xf32, #tpu.memory_space<vmem>>, vector<1x1x128xf32>
    %692 = vector.shape_cast %691 : vector<1x1x128xf32> to vector<1x128xf32>
    %693 = vector.broadcast %692 : vector<1x128xf32> to vector<16x128xf32>
    %694 = arith.addf %690, %693 : vector<16x128xf32>
    %cst_229 = arith.constant 0.000000e+00 : f32
    %695 = vector.broadcast %cst_229 : f32 to vector<16x128xf32>
    %696 = arith.maximumf %694, %695 : vector<16x128xf32>
    %c1_230 = arith.constant 1 : index
    %c0_231 = arith.constant 0 : index
    %c0_232 = arith.constant 0 : index
    %697 = vector.load %arg20[%c1_230, %c0_231, %c0_232] : memref<2x128x128xbf16, #tpu.memory_space<vmem>>, vector<1x128x128xbf16>
    %698 = vector.shape_cast %697 : vector<1x128x128xbf16> to vector<128x128xbf16>
    %699 = arith.truncf %696 : vector<16x128xf32> to vector<16x128xbf16>
    %cst_233 = arith.constant dense<0.000000e+00> : vector<16x128xf32>
    %700 = tpu.matmul %699, %698, %cst_233 {dimension_numbers = #tpu.dot_dimension_numbers<[1], [0], [0], [1], [0, 0, 1, 1], [], []>} : vector<16x128xbf16>, vector<128x128xbf16>, vector<16x128xf32> -> vector<16x128xf32>
    %c1_234 = arith.constant 1 : index
    %c0_235 = arith.constant 0 : index
    %c0_236 = arith.constant 0 : index
    %701 = vector.load %arg21[%c1_234, %c0_235, %c0_236] : memref<2x1x128xf32, #tpu.memory_space<vmem>>, vector<1x1x128xf32>
    %702 = vector.shape_cast %701 : vector<1x1x128xf32> to vector<1x128xf32>
    %703 = vector.broadcast %702 : vector<1x128xf32> to vector<16x128xf32>
    %704 = arith.addf %700, %703 : vector<16x128xf32>
    %705 = arith.addf %686, %704 : vector<16x128xf32>
    %706 = vector.extract_strided_slice %386 {offsets = [2, 0], sizes = [1, 128], strides = [1, 1]} : vector<3x128xf32> to vector<1x128xf32>
    %707 = vector.extract_strided_slice %388 {offsets = [2, 0], sizes = [1, 128], strides = [1, 1]} : vector<3x128xf32> to vector<1x128xf32>
    %cst_237 = arith.constant dense<0.000000e+00> : vector<16xf32>
    %708 = vector.multi_reduction <add>, %705, %cst_237 [1] : vector<16x128xf32> to vector<16xf32>
    %709 = vector.shape_cast %708 : vector<16xf32> to vector<16x1xf32>
    %cst_238 = arith.constant 3.125000e-02 : f32
    %710 = vector.broadcast %cst_238 : f32 to vector<16x1xf32>
    %711 = arith.mulf %709, %710 : vector<16x1xf32>
    %712 = arith.mulf %705, %705 : vector<16x128xf32>
    %cst_239 = arith.constant dense<0.000000e+00> : vector<16xf32>
    %713 = vector.multi_reduction <add>, %712, %cst_239 [1] : vector<16x128xf32> to vector<16xf32>
    %714 = vector.shape_cast %713 : vector<16xf32> to vector<16x1xf32>
    %cst_240 = arith.constant 3.125000e-02 : f32
    %715 = vector.broadcast %cst_240 : f32 to vector<16x1xf32>
    %716 = arith.mulf %714, %715 : vector<16x1xf32>
    %717 = arith.mulf %711, %711 : vector<16x1xf32>
    %718 = arith.subf %716, %717 : vector<16x1xf32>
    %719 = vector.broadcast %711 : vector<16x1xf32> to vector<16x128xf32>
    %720 = arith.subf %705, %719 : vector<16x128xf32>
    %cst_241 = arith.constant 9.99999974E-6 : f32
    %721 = vector.broadcast %cst_241 : f32 to vector<16x1xf32>
    %722 = arith.addf %718, %721 : vector<16x1xf32>
    %723 = math.rsqrt %722 : vector<16x1xf32>
    %724 = vector.broadcast %723 : vector<16x1xf32> to vector<16x128xf32>
    %725 = arith.mulf %720, %724 : vector<16x128xf32>
    %726 = vector.broadcast %706 : vector<1x128xf32> to vector<16x128xf32>
    %727 = arith.mulf %725, %726 : vector<16x128xf32>
    %728 = vector.broadcast %707 : vector<1x128xf32> to vector<16x128xf32>
    %729 = arith.addf %727, %728 : vector<16x128xf32>
    %cst_242 = arith.constant dense<0.000000e+00> : vector<16xf32>
    %730 = vector.multi_reduction <add>, %729, %cst_242 [1] : vector<16x128xf32> to vector<16xf32>
    %731 = vector.shape_cast %730 : vector<16xf32> to vector<16x1xf32>
    %cst_243 = arith.constant 3.125000e-02 : f32
    %732 = vector.broadcast %cst_243 : f32 to vector<16x1xf32>
    %733 = arith.mulf %731, %732 : vector<16x1xf32>
    %734 = arith.mulf %729, %729 : vector<16x128xf32>
    %cst_244 = arith.constant dense<0.000000e+00> : vector<16xf32>
    %735 = vector.multi_reduction <add>, %734, %cst_244 [1] : vector<16x128xf32> to vector<16xf32>
    %736 = vector.shape_cast %735 : vector<16xf32> to vector<16x1xf32>
    %cst_245 = arith.constant 3.125000e-02 : f32
    %737 = vector.broadcast %cst_245 : f32 to vector<16x1xf32>
    %738 = arith.mulf %736, %737 : vector<16x1xf32>
    %739 = arith.mulf %733, %733 : vector<16x1xf32>
    %740 = arith.subf %738, %739 : vector<16x1xf32>
    %741 = vector.broadcast %733 : vector<16x1xf32> to vector<16x128xf32>
    %742 = arith.subf %729, %741 : vector<16x128xf32>
    %cst_246 = arith.constant 9.99999974E-6 : f32
    %743 = vector.broadcast %cst_246 : f32 to vector<16x1xf32>
    %744 = arith.addf %740, %743 : vector<16x1xf32>
    %745 = math.rsqrt %744 : vector<16x1xf32>
    %746 = vector.broadcast %745 : vector<16x1xf32> to vector<16x128xf32>
    %747 = arith.mulf %742, %746 : vector<16x128xf32>
    %748 = vector.broadcast %2 : vector<1x128xf32> to vector<16x128xf32>
    %749 = arith.mulf %747, %748 : vector<16x128xf32>
    %750 = vector.broadcast %3 : vector<1x128xf32> to vector<16x128xf32>
    %751 = arith.addf %749, %750 : vector<16x128xf32>
    %c0_247 = arith.constant 0 : index
    %c0_248 = arith.constant 0 : index
    %752 = vector.load %arg26[%c0_247, %c0_248] : memref<16x128xf32, #tpu.memory_space<vmem>>, vector<16x128xf32>
    tpu.vector_store %arg26[%c0_247, %c0_248], %751 {strides = array<i32>} : memref<16x128xf32, #tpu.memory_space<vmem>>, vector<16x128xf32>,
    return
  }
}

</mosaic_0001>

<llo_original>
// kernel: _lambda_.1
$region0: #{_lambda_.1}
  #allocation0 [shape = 'u32[]', space=smem, size = 0x4, offset = 0x4, fixed_abs, tag = 'smem constant byte address 0x4 - core index']
  #allocation1 [shape = 'u32[72,128]{1,0:T(1,128)}', space=vmem, size = 0x9000, scoped, tag = 'internal scratch']
  %s0 = inlined_call_operand.vmem [shape: f32[16,128], index: 0, kind: input, shape index: {}]
  %s1 = inlined_call_operand.vmem [shape: f32[16,128], index: 1, kind: input, shape index: {}]
  %s2 = inlined_call_operand.vmem [shape: f32[32,128], index: 2, kind: input, shape index: {}]
  %s3 = inlined_call_operand.vmem [shape: f32[32,128], index: 3, kind: input, shape index: {}]
  %s4 = inlined_call_operand.vmem [shape: bf16[2,128,1024], index: 4, kind: input, shape index: {}]
  %s5 = inlined_call_operand.vmem [shape: f32[2,1,1024], index: 5, kind: input, shape index: {}]
  %s6 = inlined_call_operand.vmem [shape: bf16[2,128,512], index: 6, kind: input, shape index: {}]
  %s7 = inlined_call_operand.vmem [shape: f32[2,1,512], index: 7, kind: input, shape index: {}]
  %s8 = inlined_call_operand.vmem [shape: bf16[2,512,128], index: 8, kind: input, shape index: {}]
  %s9 = inlined_call_operand.vmem [shape: f32[2,1,128], index: 9, kind: input, shape index: {}]
  %s10 = inlined_call_operand.vmem [shape: bf16[2,128,512], index: 10, kind: input, shape index: {}]
  %s11 = inlined_call_operand.vmem [shape: f32[2,1,512], index: 11, kind: input, shape index: {}]
  %s12 = inlined_call_operand.vmem [shape: bf16[2,512,128], index: 12, kind: input, shape index: {}]
  %s13 = inlined_call_operand.vmem [shape: f32[2,1,128], index: 13, kind: input, shape index: {}]
  %s14 = inlined_call_operand.vmem [shape: bf16[128,1024], index: 14, kind: input, shape index: {}]
  %s15 = inlined_call_operand.vmem [shape: f32[1,1024], index: 15, kind: input, shape index: {}]
  %s16 = inlined_call_operand.vmem [shape: bf16[128,1024], index: 16, kind: input, shape index: {}]
  %s17 = inlined_call_operand.vmem [shape: f32[1,1024], index: 17, kind: input, shape index: {}]
  %s18 = inlined_call_operand.vmem [shape: bf16[2,128,128], index: 18, kind: input, shape index: {}]
  %s19 = inlined_call_operand.vmem [shape: f32[2,1,128], index: 19, kind: input, shape index: {}]
  %s20 = inlined_call_operand.vmem [shape: bf16[2,128,128], index: 20, kind: input, shape index: {}]
  %s21 = inlined_call_operand.vmem [shape: f32[2,1,128], index: 21, kind: input, shape index: {}]
  %s22 = inlined_call_operand.vmem [shape: f32[2,3,128], index: 22, kind: input, shape index: {}]
  %s23 = inlined_call_operand.vmem [shape: f32[2,3,128], index: 23, kind: input, shape index: {}]
  %s24 = inlined_call_operand.vmem [shape: f32[1,128], index: 24, kind: input, shape index: {}]
  %s25 = inlined_call_operand.vmem [shape: f32[1,128], index: 25, kind: input, shape index: {}]
  %s26 = inlined_call_operand.vmem [shape: f32[16,128], index: 26, kind: output, shape index: {}]
  %s27 = sld [smem:[#allocation0]]
  $region114: #{_lambda_.1} parent=0
    _
  %s29 = ssub.s32 1, %s27
  %s30 = scalar_select 0, %s29, %s27
  // Predicated region
  $region2: #{_lambda_.1} parent=0 // pred_check
    _
  $region3: #{_lambda_.1} parent=0 // pred_check_branch
    %32 = sbr.rel (0) target = $region5
  $region4: #{_lambda_.1} parent=0 // pred_region
    _
  $region5: #{_lambda_.1} parent=0 // pred_fallthru
    _
  // Predicated region
  $region6: #{_lambda_.1} parent=0 // pred_check
    _
  $region7: #{_lambda_.1} parent=0 // pred_check_branch
    %34 = sbr.rel (0) target = $region9
  $region8: #{_lambda_.1} parent=0 // pred_region
    _
  $region9: #{_lambda_.1} parent=0 // pred_fallthru
    _
  // Predicated region
  $region10: #{_lambda_.1} parent=0 // pred_check
    _
  $region11: #{_lambda_.1} parent=0 // pred_check_branch
    %36 = sbr.rel (0) target = $region13
  $region12: #{_lambda_.1} parent=0 // pred_region
    _
  $region13: #{_lambda_.1} parent=0 // pred_fallthru
    _
  // Predicated region
  $region14: #{_lambda_.1} parent=0 // pred_check
    _
  $region15: #{_lambda_.1} parent=0 // pred_check_branch
    %38 = sbr.rel (0) target = $region17
  $region16: #{_lambda_.1} parent=0 // pred_region
    _
  $region17: #{_lambda_.1} parent=0 // pred_fallthru
    _
  // Predicated region
  $region18: #{_lambda_.1} parent=0 // pred_check
    _
  $region19: #{_lambda_.1} parent=0 // pred_check_branch
    %40 = sbr.rel (0) target = $region21
  $region20: #{_lambda_.1} parent=0 // pred_region
    _
  $region21: #{_lambda_.1} parent=0 // pred_fallthru
    _
  // Predicated region
  $region22: #{_lambda_.1} parent=0 // pred_check
    _
  $region23: #{_lambda_.1} parent=0 // pred_check_branch
    %42 = sbr.rel (0) target = $region25
  $region24: #{_lambda_.1} parent=0 // pred_region
    _
  $region25: #{_lambda_.1} parent=0 // pred_fallthru
    _
  // Predicated region
  $region26: #{_lambda_.1} parent=0 // pred_check
    _
  $region27: #{_lambda_.1} parent=0 // pred_check_branch
    %44 = sbr.rel (0) target = $region29
  $region28: #{_lambda_.1} parent=0 // pred_region
    _
  $region29: #{_lambda_.1} parent=0 // pred_fallthru
    _
  // Predicated region
  $region30: #{_lambda_.1} parent=0 // pred_check
    _
  $region31: #{_lambda_.1} parent=0 // pred_check_branch
    %46 = sbr.rel (0) target = $region33
  $region32: #{_lambda_.1} parent=0 // pred_region
    _
  $region33: #{_lambda_.1} parent=0 // pred_fallthru
    _
  // Predicated region
  $region34: #{_lambda_.1} parent=0 // pred_check
    _
  $region35: #{_lambda_.1} parent=0 // pred_check_branch
    %48 = sbr.rel (0) target = $region37
  $region36: #{_lambda_.1} parent=0 // pred_region
    _
  $region37: #{_lambda_.1} parent=0 // pred_fallthru
    _
  // Predicated region
  $region38: #{_lambda_.1} parent=0 // pred_check
    _
  $region39: #{_lambda_.1} parent=0 // pred_check_branch
    %50 = sbr.rel (0) target = $region41
  $region40: #{_lambda_.1} parent=0 // pred_region
    _
  $region41: #{_lambda_.1} parent=0 // pred_fallthru
    _
  // Predicated region
  $region42: #{_lambda_.1} parent=0 // pred_check
    _
  $region43: #{_lambda_.1} parent=0 // pred_check_branch
    %52 = sbr.rel (0) target = $region45
  $region44: #{_lambda_.1} parent=0 // pred_region
    _
  $region45: #{_lambda_.1} parent=0 // pred_fallthru
    _
  // Predicated region
  $region46: #{_lambda_.1} parent=0 // pred_check
    _
  $region47: #{_lambda_.1} parent=0 // pred_check_branch
    %54 = sbr.rel (0) target = $region49
  $region48: #{_lambda_.1} parent=0 // pred_region
    _
  $region49: #{_lambda_.1} parent=0 // pred_fallthru
    _
  // Predicated region
  $region50: #{_lambda_.1} parent=0 // pred_check
    _
  $region51: #{_lambda_.1} parent=0 // pred_check_branch
    %56 = sbr.rel (0) target = $region53
  $region52: #{_lambda_.1} parent=0 // pred_region
    _
  $region53: #{_lambda_.1} parent=0 // pred_fallthru
    _
  // Predicated region
  $region54: #{_lambda_.1} parent=0 // pred_check
    _
  $region55: #{_lambda_.1} parent=0 // pred_check_branch
    %58 = sbr.rel (0) target = $region57
  $region56: #{_lambda_.1} parent=0 // pred_region
    _
  $region57: #{_lambda_.1} parent=0 // pred_fallthru
    _
  // Predicated region
  $region58: #{_lambda_.1} parent=0 // pred_check
    _
  $region59: #{_lambda_.1} parent=0 // pred_check_branch
    %60 = sbr.rel (0) target = $region61
  $region60: #{_lambda_.1} parent=0 // pred_region
    _
  $region61: #{_lambda_.1} parent=0 // pred_fallthru
    _
  // Predicated region
  $region62: #{_lambda_.1} parent=0 // pred_check
    _
  $region63: #{_lambda_.1} parent=0 // pred_check_branch
    %62 = sbr.rel (0) target = $region65
  $region64: #{_lambda_.1} parent=0 // pred_region
    _
  $region65: #{_lambda_.1} parent=0 // pred_fallthru
    _
  // Predicated region
  $region66: #{_lambda_.1} parent=0 // pred_check
    _
  $region67: #{_lambda_.1} parent=0 // pred_check_branch
    %64 = sbr.rel (0) target = $region69
  $region68: #{_lambda_.1} parent=0 // pred_region
    _
  $region69: #{_lambda_.1} parent=0 // pred_fallthru
    _
  // Predicated region
  $region70: #{_lambda_.1} parent=0 // pred_check
    _
  $region71: #{_lambda_.1} parent=0 // pred_check_branch
    %66 = sbr.rel (0) target = $region73
  $region72: #{_lambda_.1} parent=0 // pred_region
    _
  $region73: #{_lambda_.1} parent=0 // pred_fallthru
    _
  // Predicated region
  $region74: #{_lambda_.1} parent=0 // pred_check
    _
  $region75: #{_lambda_.1} parent=0 // pred_check_branch
    %68 = sbr.rel (0) target = $region77
  $region76: #{_lambda_.1} parent=0 // pred_region
    _
  $region77: #{_lambda_.1} parent=0 // pred_fallthru
    _
  // Predicated region
  $region78: #{_lambda_.1} parent=0 // pred_check
    _
  $region79: #{_lambda_.1} parent=0 // pred_check_branch
    %70 = sbr.rel (0) target = $region81
  $region80: #{_lambda_.1} parent=0 // pred_region
    _
  $region81: #{_lambda_.1} parent=0 // pred_fallthru
    _
  // Predicated region
  $region82: #{_lambda_.1} parent=0 // pred_check
    _
  $region83: #{_lambda_.1} parent=0 // pred_check_branch
    %72 = sbr.rel (0) target = $region85
  $region84: #{_lambda_.1} parent=0 // pred_region
    _
  $region85: #{_lambda_.1} parent=0 // pred_fallthru
    _
  // Predicated region
  $region86: #{_lambda_.1} parent=0 // pred_check
    _
  $region87: #{_lambda_.1} parent=0 // pred_check_branch
    %74 = sbr.rel (0) target = $region89
  $region88: #{_lambda_.1} parent=0 // pred_region
    _
  $region89: #{_lambda_.1} parent=0 // pred_fallthru
    _
  // Predicated region
  $region90: #{_lambda_.1} parent=0 // pred_check
    _
  $region91: #{_lambda_.1} parent=0 // pred_check_branch
    %76 = sbr.rel (0) target = $region93
  $region92: #{_lambda_.1} parent=0 // pred_region
    _
  $region93: #{_lambda_.1} parent=0 // pred_fallthru
    _
  // Predicated region
  $region94: #{_lambda_.1} parent=0 // pred_check
    _
  $region95: #{_lambda_.1} parent=0 // pred_check_branch
    %78 = sbr.rel (0) target = $region97
  $region96: #{_lambda_.1} parent=0 // pred_region
    _
  $region97: #{_lambda_.1} parent=0 // pred_fallthru
    _
  // Predicated region
  $region98: #{_lambda_.1} parent=0 // pred_check
    _
  $region99: #{_lambda_.1} parent=0 // pred_check_branch
    %80 = sbr.rel (0) target = $region101
  $region100: #{_lambda_.1} parent=0 // pred_region
    _
  $region101: #{_lambda_.1} parent=0 // pred_fallthru
    _
  // Predicated region
  $region102: #{_lambda_.1} parent=0 // pred_check
    _
  $region103: #{_lambda_.1} parent=0 // pred_check_branch
    %82 = sbr.rel (0) target = $region105
  $region104: #{_lambda_.1} parent=0 // pred_region
    _
  $region105: #{_lambda_.1} parent=0 // pred_fallthru
    _
  %v84 = vld [vmem:[%s0] sm:$0xff]
  %v85 = vld [vmem:[%s0 + $0x8] sm:$0xff]
  %v86 = vld [vmem:[%s1] sm:$0xff]
  %v87 = vld [vmem:[%s1 + $0x8] sm:$0xff]
  %v88 = vld [vmem:[%s24] sm:$0x1]
  %v89 = vld [vmem:[%s25] sm:$0x1]
  %v90 = vld [vmem:[%s3] sm:$0xff]
  %v91 = vld [vmem:[%s3 + $0x8] sm:$0xff]
  %v92 = vld [vmem:[%s3 + $0x10] sm:$0xff]
  %v93 = vld [vmem:[%s3 + $0x18] sm:$0xff]
  %v94 = vpack.c.bf16 %v91, %v90
  %v95 = vpack.c.bf16 %v93, %v92
  %v96 = vld [vmem:[%s14] sm:$0xff]
  %v97 = vld [vmem:[%s14 + $0x8] sm:$0xff]
  %v98 = vld [vmem:[%s14 + $0x10] sm:$0xff]
  %v99 = vld [vmem:[%s14 + $0x18] sm:$0xff]
  %v100 = vld [vmem:[%s14 + $0x20] sm:$0xff]
  %v101 = vld [vmem:[%s14 + $0x28] sm:$0xff]
  %v102 = vld [vmem:[%s14 + $0x30] sm:$0xff]
  %v103 = vld [vmem:[%s14 + $0x38] sm:$0xff]
  %v104 = vld [vmem:[%s14 + $0x40] sm:$0xff]
  %v105 = vld [vmem:[%s14 + $0x48] sm:$0xff]
  %v106 = vld [vmem:[%s14 + $0x50] sm:$0xff]
  %v107 = vld [vmem:[%s14 + $0x58] sm:$0xff]
  %v108 = vld [vmem:[%s14 + $0x60] sm:$0xff]
  %v109 = vld [vmem:[%s14 + $0x68] sm:$0xff]
  %v110 = vld [vmem:[%s14 + $0x70] sm:$0xff]
  %v111 = vld [vmem:[%s14 + $0x78] sm:$0xff]
  %v112 = vld [vmem:[%s14 + $0x80] sm:$0xff]
  %v113 = vld [vmem:[%s14 + $0x88] sm:$0xff]
  %v114 = vld [vmem:[%s14 + $0x90] sm:$0xff]
  %v115 = vld [vmem:[%s14 + $0x98] sm:$0xff]
  %v116 = vld [vmem:[%s14 + $0xa0] sm:$0xff]
  %v117 = vld [vmem:[%s14 + $0xa8] sm:$0xff]
  %v118 = vld [vmem:[%s14 + $0xb0] sm:$0xff]
  %v119 = vld [vmem:[%s14 + $0xb8] sm:$0xff]
  %v120 = vld [vmem:[%s14 + $0xc0] sm:$0xff]
  %v121 = vld [vmem:[%s14 + $0xc8] sm:$0xff]
  %v122 = vld [vmem:[%s14 + $0xd0] sm:$0xff]
  %v123 = vld [vmem:[%s14 + $0xd8] sm:$0xff]
  %v124 = vld [vmem:[%s14 + $0xe0] sm:$0xff]
  %v125 = vld [vmem:[%s14 + $0xe8] sm:$0xff]
  %v126 = vld [vmem:[%s14 + $0xf0] sm:$0xff]
  %v127 = vld [vmem:[%s14 + $0xf8] sm:$0xff]
  %v128 = vld [vmem:[%s14 + $0x100] sm:$0xff]
  %v129 = vld [vmem:[%s14 + $0x108] sm:$0xff]
  %v130 = vld [vmem:[%s14 + $0x110] sm:$0xff]
  %v131 = vld [vmem:[%s14 + $0x118] sm:$0xff]
  %v132 = vld [vmem:[%s14 + $0x120] sm:$0xff]
  %v133 = vld [vmem:[%s14 + $0x128] sm:$0xff]
  %v134 = vld [vmem:[%s14 + $0x130] sm:$0xff]
  %v135 = vld [vmem:[%s14 + $0x138] sm:$0xff]
  %v136 = vld [vmem:[%s14 + $0x140] sm:$0xff]
  %v137 = vld [vmem:[%s14 + $0x148] sm:$0xff]
  %v138 = vld [vmem:[%s14 + $0x150] sm:$0xff]
  %v139 = vld [vmem:[%s14 + $0x158] sm:$0xff]
  %v140 = vld [vmem:[%s14 + $0x160] sm:$0xff]
  %v141 = vld [vmem:[%s14 + $0x168] sm:$0xff]
  %v142 = vld [vmem:[%s14 + $0x170] sm:$0xff]
  %v143 = vld [vmem:[%s14 + $0x178] sm:$0xff]
  %v144 = vld [vmem:[%s14 + $0x180] sm:$0xff]
  %v145 = vld [vmem:[%s14 + $0x188] sm:$0xff]
  %v146 = vld [vmem:[%s14 + $0x190] sm:$0xff]
  %v147 = vld [vmem:[%s14 + $0x198] sm:$0xff]
  %v148 = vld [vmem:[%s14 + $0x1a0] sm:$0xff]
  %v149 = vld [vmem:[%s14 + $0x1a8] sm:$0xff]
  %v150 = vld [vmem:[%s14 + $0x1b0] sm:$0xff]
  %v151 = vld [vmem:[%s14 + $0x1b8] sm:$0xff]
  %v152 = vld [vmem:[%s14 + $0x1c0] sm:$0xff]
  %v153 = vld [vmem:[%s14 + $0x1c8] sm:$0xff]
  %v154 = vld [vmem:[%s14 + $0x1d0] sm:$0xff]
  %v155 = vld [vmem:[%s14 + $0x1d8] sm:$0xff]
  %v156 = vld [vmem:[%s14 + $0x1e0] sm:$0xff]
  %v157 = vld [vmem:[%s14 + $0x1e8] sm:$0xff]
  %v158 = vld [vmem:[%s14 + $0x1f0] sm:$0xff]
  %v159 = vld [vmem:[%s14 + $0x1f8] sm:$0xff]
  %v160 = vld [vmem:[%s15] sm:$0xff]
  %v162 = vperm.slane %v160, 0
  %v163 = vperm.slane %v160, 1
  %v164 = vperm.slane %v160, 2
  %v165 = vperm.slane %v160, 3
  %v166 = vperm.slane %v160, 4
  %v167 = vperm.slane %v160, 5
  %v168 = vperm.slane %v160, 6
  %v169 = vperm.slane %v160, 7
  %v242 = vunpack.c.l.b16 %v96
  %v243 = vunpack.c.h.b16 %v96
  %v244 = vunpack.c.l.b16 %v97
  %v245 = vunpack.c.h.b16 %v97
  %v246 = vunpack.c.l.b16 %v98
  %v247 = vunpack.c.h.b16 %v98
  %v248 = vunpack.c.l.b16 %v99
  %v249 = vunpack.c.h.b16 %v99
  %v250 = vunpack.c.l.b16 %v100
  %v251 = vunpack.c.h.b16 %v100
  %v252 = vunpack.c.l.b16 %v101
  %v253 = vunpack.c.h.b16 %v101
  %v254 = vunpack.c.l.b16 %v102
  %v255 = vunpack.c.h.b16 %v102
  %v256 = vunpack.c.l.b16 %v103
  %v257 = vunpack.c.h.b16 %v103
  %v258 = vunpack.c.l.b16 %v104
  %v259 = vunpack.c.h.b16 %v104
  %v260 = vunpack.c.l.b16 %v105
  %v261 = vunpack.c.h.b16 %v105
  %v262 = vunpack.c.l.b16 %v106
  %v263 = vunpack.c.h.b16 %v106
  %v264 = vunpack.c.l.b16 %v107
  %v265 = vunpack.c.h.b16 %v107
  %v266 = vunpack.c.l.b16 %v108
  %v267 = vunpack.c.h.b16 %v108
  %v268 = vunpack.c.l.b16 %v109
  %v269 = vunpack.c.h.b16 %v109
  %v270 = vunpack.c.l.b16 %v110
  %v271 = vunpack.c.h.b16 %v110
  %v272 = vunpack.c.l.b16 %v111
  %v273 = vunpack.c.h.b16 %v111
  %v274 = vunpack.c.l.b16 %v112
  %v275 = vunpack.c.h.b16 %v112
  %v276 = vunpack.c.l.b16 %v113
  %v277 = vunpack.c.h.b16 %v113
  %v278 = vunpack.c.l.b16 %v114
  %v279 = vunpack.c.h.b16 %v114
  %v280 = vunpack.c.l.b16 %v115
  %v281 = vunpack.c.h.b16 %v115
  %v282 = vunpack.c.l.b16 %v116
  %v283 = vunpack.c.h.b16 %v116
  %v284 = vunpack.c.l.b16 %v117
  %v285 = vunpack.c.h.b16 %v117
  %v286 = vunpack.c.l.b16 %v118
  %v287 = vunpack.c.h.b16 %v118
  %v288 = vunpack.c.l.b16 %v119
  %v289 = vunpack.c.h.b16 %v119
  %v290 = vunpack.c.l.b16 %v120
  %v291 = vunpack.c.h.b16 %v120
  %v292 = vunpack.c.l.b16 %v121
  %v293 = vunpack.c.h.b16 %v121
  %v294 = vunpack.c.l.b16 %v122
  %v295 = vunpack.c.h.b16 %v122
  %v296 = vunpack.c.l.b16 %v123
  %v297 = vunpack.c.h.b16 %v123
  %v298 = vunpack.c.l.b16 %v124
  %v299 = vunpack.c.h.b16 %v124
  %v300 = vunpack.c.l.b16 %v125
  %v301 = vunpack.c.h.b16 %v125
  %v302 = vunpack.c.l.b16 %v126
  %v303 = vunpack.c.h.b16 %v126
  %v304 = vunpack.c.l.b16 %v127
  %v305 = vunpack.c.h.b16 %v127
  %v306 = vunpack.c.l.b16 %v128
  %v307 = vunpack.c.h.b16 %v128
  %v308 = vunpack.c.l.b16 %v129
  %v309 = vunpack.c.h.b16 %v129
  %v310 = vunpack.c.l.b16 %v130
  %v311 = vunpack.c.h.b16 %v130
  %v312 = vunpack.c.l.b16 %v131
  %v313 = vunpack.c.h.b16 %v131
  %v314 = vunpack.c.l.b16 %v132
  %v315 = vunpack.c.h.b16 %v132
  %v316 = vunpack.c.l.b16 %v133
  %v317 = vunpack.c.h.b16 %v133
  %v318 = vunpack.c.l.b16 %v134
  %v319 = vunpack.c.h.b16 %v134
  %v320 = vunpack.c.l.b16 %v135
  %v321 = vunpack.c.h.b16 %v135
  %v322 = vunpack.c.l.b16 %v136
  %v323 = vunpack.c.h.b16 %v136
  %v324 = vunpack.c.l.b16 %v137
  %v325 = vunpack.c.h.b16 %v137
  %v326 = vunpack.c.l.b16 %v138
  %v327 = vunpack.c.h.b16 %v138
  %v328 = vunpack.c.l.b16 %v139
  %v329 = vunpack.c.h.b16 %v139
  %v330 = vunpack.c.l.b16 %v140
  %v331 = vunpack.c.h.b16 %v140
  %v332 = vunpack.c.l.b16 %v141
  %v333 = vunpack.c.h.b16 %v141
  %v334 = vunpack.c.l.b16 %v142
  %v335 = vunpack.c.h.b16 %v142
  %v336 = vunpack.c.l.b16 %v143
  %v337 = vunpack.c.h.b16 %v143
  %v338 = vunpack.c.l.b16 %v144
  %v339 = vunpack.c.h.b16 %v144
  %v340 = vunpack.c.l.b16 %v145
  %v341 = vunpack.c.h.b16 %v145
  %v342 = vunpack.c.l.b16 %v146
  %v343 = vunpack.c.h.b16 %v146
  %v344 = vunpack.c.l.b16 %v147
  %v345 = vunpack.c.h.b16 %v147
  %v346 = vunpack.c.l.b16 %v148
  %v347 = vunpack.c.h.b16 %v148
  %v348 = vunpack.c.l.b16 %v149
  %v349 = vunpack.c.h.b16 %v149
  %v350 = vunpack.c.l.b16 %v150
  %v351 = vunpack.c.h.b16 %v150
  %v352 = vunpack.c.l.b16 %v151
  %v353 = vunpack.c.h.b16 %v151
  %v354 = vunpack.c.l.b16 %v152
  %v355 = vunpack.c.h.b16 %v152
  %v356 = vunpack.c.l.b16 %v153
  %v357 = vunpack.c.h.b16 %v153
  %v358 = vunpack.c.l.b16 %v154
  %v359 = vunpack.c.h.b16 %v154
  %v360 = vunpack.c.l.b16 %v155
  %v361 = vunpack.c.h.b16 %v155
  %v362 = vunpack.c.l.b16 %v156
  %v363 = vunpack.c.h.b16 %v156
  %v364 = vunpack.c.l.b16 %v157
  %v365 = vunpack.c.h.b16 %v157
  %v366 = vunpack.c.l.b16 %v158
  %v367 = vunpack.c.h.b16 %v158
  %v368 = vunpack.c.l.b16 %v159
  %v369 = vunpack.c.h.b16 %v159
  %v370 = vpack.c.b16 %v250, %v242
  %v371 = vpack.c.b16 %v251, %v243
  %v372 = vpack.c.b16 %v252, %v244
  %v373 = vpack.c.b16 %v253, %v245
  %v374 = vpack.c.b16 %v254, %v246
  %v375 = vpack.c.b16 %v255, %v247
  %v376 = vpack.c.b16 %v256, %v248
  %v377 = vpack.c.b16 %v257, %v249
  %v378 = vpack.c.b16 %v266, %v258
  %v379 = vpack.c.b16 %v267, %v259
  %v380 = vpack.c.b16 %v268, %v260
  %v381 = vpack.c.b16 %v269, %v261
  %v382 = vpack.c.b16 %v270, %v262
  %v383 = vpack.c.b16 %v271, %v263
  %v384 = vpack.c.b16 %v272, %v264
  %v385 = vpack.c.b16 %v273, %v265
  %v386 = vpack.c.b16 %v282, %v274
  %v387 = vpack.c.b16 %v283, %v275
  %v388 = vpack.c.b16 %v284, %v276
  %v389 = vpack.c.b16 %v285, %v277
  %v390 = vpack.c.b16 %v286, %v278
  %v391 = vpack.c.b16 %v287, %v279
  %v392 = vpack.c.b16 %v288, %v280
  %v393 = vpack.c.b16 %v289, %v281
  %v394 = vpack.c.b16 %v298, %v290
  %v395 = vpack.c.b16 %v299, %v291
  %v396 = vpack.c.b16 %v300, %v292
  %v397 = vpack.c.b16 %v301, %v293
  %v398 = vpack.c.b16 %v302, %v294
  %v399 = vpack.c.b16 %v303, %v295
  %v400 = vpack.c.b16 %v304, %v296
  %v401 = vpack.c.b16 %v305, %v297
  %v402 = vpack.c.b16 %v314, %v306
  %v403 = vpack.c.b16 %v315, %v307
  %v404 = vpack.c.b16 %v316, %v308
  %v405 = vpack.c.b16 %v317, %v309
  %v406 = vpack.c.b16 %v318, %v310
  %v407 = vpack.c.b16 %v319, %v311
  %v408 = vpack.c.b16 %v320, %v312
  %v409 = vpack.c.b16 %v321, %v313
  %v410 = vpack.c.b16 %v330, %v322
  %v411 = vpack.c.b16 %v331, %v323
  %v412 = vpack.c.b16 %v332, %v324
  %v413 = vpack.c.b16 %v333, %v325
  %v414 = vpack.c.b16 %v334, %v326
  %v415 = vpack.c.b16 %v335, %v327
  %v416 = vpack.c.b16 %v336, %v328
  %v417 = vpack.c.b16 %v337, %v329
  %v418 = vpack.c.b16 %v346, %v338
  %v419 = vpack.c.b16 %v347, %v339
  %v420 = vpack.c.b16 %v348, %v340
  %v421 = vpack.c.b16 %v349, %v341
  %v422 = vpack.c.b16 %v350, %v342
  %v423 = vpack.c.b16 %v351, %v343
  %v424 = vpack.c.b16 %v352, %v344
  %v425 = vpack.c.b16 %v353, %v345
  %v426 = vpack.c.b16 %v362, %v354
  %v427 = vpack.c.b16 %v363, %v355
  %v428 = vpack.c.b16 %v364, %v356
  %v429 = vpack.c.b16 %v365, %v357
  %v430 = vpack.c.b16 %v366, %v358
  %v431 = vpack.c.b16 %v367, %v359
  %v432 = vpack.c.b16 %v368, %v360
  %v433 = vpack.c.b16 %v369, %v361
  %498 = vmatpush.bf16.msra.mxu0 %v426
  %499 = vmatpush.bf16.msra.mxu0 %v418
  %500 = vmatpush.bf16.msra.mxu0 %v410
  %501 = vmatpush.bf16.msra.mxu0 %v402
  %502 = vmatpush.bf16.msra.mxu0 %v394
  %503 = vmatpush.bf16.msra.mxu0 %v386
  %504 = vmatpush.bf16.msra.mxu0 %v378
  %505 = vmatpush.bf16.msra.mxu0 %v370
  %506 = vmatmul.bf16.gmra.mxu0 %v94
  %v507 = vpop.f32.mrf.mxu0
  %v508 = vadd.f32 %v162, %v507
  %v509 = vpop.f32.mrf.mxu0
  %v510 = vadd.f32 %v162, %v509
  %511 = vmatmul.bf16.gmra.mxu0 %v95
  %v512 = vpop.f32.mrf.mxu0
  %v513 = vadd.f32 %v162, %v512
  %v514 = vpop.f32.mrf.mxu0
  %v515 = vadd.f32 %v162, %v514
  %516 = vdwg.mxu0
  %517 = vmatpush.bf16.msra.mxu0 %v427
  %518 = vmatpush.bf16.msra.mxu0 %v419
  %519 = vmatpush.bf16.msra.mxu0 %v411
  %520 = vmatpush.bf16.msra.mxu0 %v403
  %521 = vmatpush.bf16.msra.mxu0 %v395
  %522 = vmatpush.bf16.msra.mxu0 %v387
  %523 = vmatpush.bf16.msra.mxu0 %v379
  %524 = vmatpush.bf16.msra.mxu0 %v371
  %525 = vmatmul.bf16.gmra.mxu0 %v94
  %v526 = vpop.f32.mrf.mxu0
  %v527 = vadd.f32 %v163, %v526
  %v528 = vpop.f32.mrf.mxu0
  %v529 = vadd.f32 %v163, %v528
  %530 = vmatmul.bf16.gmra.mxu0 %v95
  %v531 = vpop.f32.mrf.mxu0
  %v532 = vadd.f32 %v163, %v531
  %v533 = vpop.f32.mrf.mxu0
  %v534 = vadd.f32 %v163, %v533
  %535 = vdwg.mxu0
  %536 = vmatpush.bf16.msra.mxu0 %v428
  %537 = vmatpush.bf16.msra.mxu0 %v420
  %538 = vmatpush.bf16.msra.mxu0 %v412
  %539 = vmatpush.bf16.msra.mxu0 %v404
  %540 = vmatpush.bf16.msra.mxu0 %v396
  %541 = vmatpush.bf16.msra.mxu0 %v388
  %542 = vmatpush.bf16.msra.mxu0 %v380
  %543 = vmatpush.bf16.msra.mxu0 %v372
  %544 = vmatmul.bf16.gmra.mxu0 %v94
  %v545 = vpop.f32.mrf.mxu0
  %v546 = vadd.f32 %v164, %v545
  %v547 = vpop.f32.mrf.mxu0
  %v548 = vadd.f32 %v164, %v547
  %549 = vmatmul.bf16.gmra.mxu0 %v95
  %v550 = vpop.f32.mrf.mxu0
  %v551 = vadd.f32 %v164, %v550
  %v552 = vpop.f32.mrf.mxu0
  %v553 = vadd.f32 %v164, %v552
  %554 = vdwg.mxu0
  %555 = vmatpush.bf16.msra.mxu0 %v429
  %556 = vmatpush.bf16.msra.mxu0 %v421
  %557 = vmatpush.bf16.msra.mxu0 %v413
  %558 = vmatpush.bf16.msra.mxu0 %v405
  %559 = vmatpush.bf16.msra.mxu0 %v397
  %560 = vmatpush.bf16.msra.mxu0 %v389
  %561 = vmatpush.bf16.msra.mxu0 %v381
  %562 = vmatpush.bf16.msra.mxu0 %v373
  %563 = vmatmul.bf16.gmra.mxu0 %v94
  %v564 = vpop.f32.mrf.mxu0
  %v565 = vadd.f32 %v165, %v564
  %v566 = vpop.f32.mrf.mxu0
  %v567 = vadd.f32 %v165, %v566
  %568 = vmatmul.bf16.gmra.mxu0 %v95
  %v569 = vpop.f32.mrf.mxu0
  %v570 = vadd.f32 %v165, %v569
  %v571 = vpop.f32.mrf.mxu0
  %v572 = vadd.f32 %v165, %v571
  %573 = vdwg.mxu0
  %574 = vmatpush.bf16.msra.mxu0 %v430
  %575 = vmatpush.bf16.msra.mxu0 %v422
  %576 = vmatpush.bf16.msra.mxu0 %v414
  %577 = vmatpush.bf16.msra.mxu0 %v406
  %578 = vmatpush.bf16.msra.mxu0 %v398
  %579 = vmatpush.bf16.msra.mxu0 %v390
  %580 = vmatpush.bf16.msra.mxu0 %v382
  %581 = vmatpush.bf16.msra.mxu0 %v374
  %582 = vmatmul.bf16.gmra.mxu0 %v94
  %v583 = vpop.f32.mrf.mxu0
  %v584 = vadd.f32 %v166, %v583
  %v585 = vpop.f32.mrf.mxu0
  %v586 = vadd.f32 %v166, %v585
  %587 = vmatmul.bf16.gmra.mxu0 %v95
  %v588 = vpop.f32.mrf.mxu0
  %v589 = vadd.f32 %v166, %v588
  %v590 = vpop.f32.mrf.mxu0
  %v591 = vadd.f32 %v166, %v590
  %592 = vdwg.mxu0
  %593 = vmatpush.bf16.msra.mxu0 %v431
  %594 = vmatpush.bf16.msra.mxu0 %v423
  %595 = vmatpush.bf16.msra.mxu0 %v415
  %596 = vmatpush.bf16.msra.mxu0 %v407
  %597 = vmatpush.bf16.msra.mxu0 %v399
  %598 = vmatpush.bf16.msra.mxu0 %v391
  %599 = vmatpush.bf16.msra.mxu0 %v383
  %600 = vmatpush.bf16.msra.mxu0 %v375
  %601 = vmatmul.bf16.gmra.mxu0 %v94
  %v602 = vpop.f32.mrf.mxu0
  %v603 = vadd.f32 %v167, %v602
  %v604 = vpop.f32.mrf.mxu0
  %v605 = vadd.f32 %v167, %v604
  %606 = vmatmul.bf16.gmra.mxu0 %v95
  %v607 = vpop.f32.mrf.mxu0
  %v608 = vadd.f32 %v167, %v607
  %v609 = vpop.f32.mrf.mxu0
  %v610 = vadd.f32 %v167, %v609
  %611 = vdwg.mxu0
  %612 = vmatpush.bf16.msra.mxu0 %v432
  %613 = vmatpush.bf16.msra.mxu0 %v424
  %614 = vmatpush.bf16.msra.mxu0 %v416
  %615 = vmatpush.bf16.msra.mxu0 %v408
  %616 = vmatpush.bf16.msra.mxu0 %v400
  %617 = vmatpush.bf16.msra.mxu0 %v392
  %618 = vmatpush.bf16.msra.mxu0 %v384
  %619 = vmatpush.bf16.msra.mxu0 %v376
  %620 = vmatmul.bf16.gmra.mxu0 %v94
  %v621 = vpop.f32.mrf.mxu0
  %v622 = vadd.f32 %v168, %v621
  %v623 = vpop.f32.mrf.mxu0
  %v624 = vadd.f32 %v168, %v623
  %625 = vmatmul.bf16.gmra.mxu0 %v95
  %v626 = vpop.f32.mrf.mxu0
  %v627 = vadd.f32 %v168, %v626
  %v628 = vpop.f32.mrf.mxu0
  %v629 = vadd.f32 %v168, %v628
  %630 = vdwg.mxu0
  %631 = vmatpush.bf16.msra.mxu0 %v433
  %632 = vmatpush.bf16.msra.mxu0 %v425
  %633 = vmatpush.bf16.msra.mxu0 %v417
  %634 = vmatpush.bf16.msra.mxu0 %v409
  %635 = vmatpush.bf16.msra.mxu0 %v401
  %636 = vmatpush.bf16.msra.mxu0 %v393
  %637 = vmatpush.bf16.msra.mxu0 %v385
  %638 = vmatpush.bf16.msra.mxu0 %v377
  %639 = vmatmul.bf16.gmra.mxu0 %v94
  %v640 = vpop.f32.mrf.mxu0
  %v641 = vadd.f32 %v169, %v640
  %v642 = vpop.f32.mrf.mxu0
  %v643 = vadd.f32 %v169, %v642
  %644 = vmatmul.bf16.gmra.mxu0 %v95
  %v645 = vpop.f32.mrf.mxu0
  %v646 = vadd.f32 %v169, %v645
  %v647 = vpop.f32.mrf.mxu0
  %v648 = vadd.f32 %v169, %v647
  %649 = vdwg.mxu0
  %v650 = vld [vmem:[%s2] sm:$0xff]
  %v651 = vld [vmem:[%s2 + $0x8] sm:$0xff]
  %v652 = vld [vmem:[%s2 + $0x10] sm:$0xff]
  %v653 = vld [vmem:[%s2 + $0x18] sm:$0xff]
  %v654 = vpack.c.bf16 %v651, %v650
  %v655 = vpack.c.bf16 %v653, %v652
  %v656 = vld [vmem:[%s16] sm:$0xff]
  %v657 = vld [vmem:[%s16 + $0x8] sm:$0xff]
  %v658 = vld [vmem:[%s16 + $0x10] sm:$0xff]
  %v659 = vld [vmem:[%s16 + $0x18] sm:$0xff]
  %v660 = vld [vmem:[%s16 + $0x20] sm:$0xff]
  %v661 = vld [vmem:[%s16 + $0x28] sm:$0xff]
  %v662 = vld [vmem:[%s16 + $0x30] sm:$0xff]
  %v663 = vld [vmem:[%s16 + $0x38] sm:$0xff]
  %v664 = vld [vmem:[%s16 + $0x40] sm:$0xff]
  %v665 = vld [vmem:[%s16 + $0x48] sm:$0xff]
  %v666 = vld [vmem:[%s16 + $0x50] sm:$0xff]
  %v667 = vld [vmem:[%s16 + $0x58] sm:$0xff]
  %v668 = vld [vmem:[%s16 + $0x60] sm:$0xff]
  %v669 = vld [vmem:[%s16 + $0x68] sm:$0xff]
  %v670 = vld [vmem:[%s16 + $0x70] sm:$0xff]
  %v671 = vld [vmem:[%s16 + $0x78] sm:$0xff]
  %v672 = vld [vmem:[%s16 + $0x80] sm:$0xff]
  %v673 = vld [vmem:[%s16 + $0x88] sm:$0xff]
  %v674 = vld [vmem:[%s16 + $0x90] sm:$0xff]
  %v675 = vld [vmem:[%s16 + $0x98] sm:$0xff]
  %v676 = vld [vmem:[%s16 + $0xa0] sm:$0xff]
  %v677 = vld [vmem:[%s16 + $0xa8] sm:$0xff]
  %v678 = vld [vmem:[%s16 + $0xb0] sm:$0xff]
  %v679 = vld [vmem:[%s16 + $0xb8] sm:$0xff]
  %v680 = vld [vmem:[%s16 + $0xc0] sm:$0xff]
  %v681 = vld [vmem:[%s16 + $0xc8] sm:$0xff]
  %v682 = vld [vmem:[%s16 + $0xd0] sm:$0xff]
  %v683 = vld [vmem:[%s16 + $0xd8] sm:$0xff]
  %v684 = vld [vmem:[%s16 + $0xe0] sm:$0xff]
  %v685 = vld [vmem:[%s16 + $0xe8] sm:$0xff]
  %v686 = vld [vmem:[%s16 + $0xf0] sm:$0xff]
  %v687 = vld [vmem:[%s16 + $0xf8] sm:$0xff]
  %v688 = vld [vmem:[%s16 + $0x100] sm:$0xff]
  %v689 = vld [vmem:[%s16 + $0x108] sm:$0xff]
  %v690 = vld [vmem:[%s16 + $0x110] sm:$0xff]
  %v691 = vld [vmem:[%s16 + $0x118] sm:$0xff]
  %v692 = vld [vmem:[%s16 + $0x120] sm:$0xff]
  %v693 = vld [vmem:[%s16 + $0x128] sm:$0xff]
  %v694 = vld [vmem:[%s16 + $0x130] sm:$0xff]
  %v695 = vld [vmem:[%s16 + $0x138] sm:$0xff]
  %v696 = vld [vmem:[%s16 + $0x140] sm:$0xff]
  %v697 = vld [vmem:[%s16 + $0x148] sm:$0xff]
  %v698 = vld [vmem:[%s16 + $0x150] sm:$0xff]
  %v699 = vld [vmem:[%s16 + $0x158] sm:$0xff]
  %v700 = vld [vmem:[%s16 + $0x160] sm:$0xff]
  %v701 = vld [vmem:[%s16 + $0x168] sm:$0xff]
  %v702 = vld [vmem:[%s16 + $0x170] sm:$0xff]
  %v703 = vld [vmem:[%s16 + $0x178] sm:$0xff]
  %v704 = vld [vmem:[%s16 + $0x180] sm:$0xff]
  %v705 = vld [vmem:[%s16 + $0x188] sm:$0xff]
  %v706 = vld [vmem:[%s16 + $0x190] sm:$0xff]
  %v707 = vld [vmem:[%s16 + $0x198] sm:$0xff]
  %v708 = vld [vmem:[%s16 + $0x1a0] sm:$0xff]
  %v709 = vld [vmem:[%s16 + $0x1a8] sm:$0xff]
  %v710 = vld [vmem:[%s16 + $0x1b0] sm:$0xff]
  %v711 = vld [vmem:[%s16 + $0x1b8] sm:$0xff]
  %v712 = vld [vmem:[%s16 + $0x1c0] sm:$0xff]
  %v713 = vld [vmem:[%s16 + $0x1c8] sm:$0xff]
  %v714 = vld [vmem:[%s16 + $0x1d0] sm:$0xff]
  %v715 = vld [vmem:[%s16 + $0x1d8] sm:$0xff]
  %v716 = vld [vmem:[%s16 + $0x1e0] sm:$0xff]
  %v717 = vld [vmem:[%s16 + $0x1e8] sm:$0xff]
  %v718 = vld [vmem:[%s16 + $0x1f0] sm:$0xff]
  %v719 = vld [vmem:[%s16 + $0x1f8] sm:$0xff]
  %v720 = vld [vmem:[%s17] sm:$0xff]
  %v722 = vperm.slane %v720, 0
  %v723 = vperm.slane %v720, 1
  %v724 = vperm.slane %v720, 2
  %v725 = vperm.slane %v720, 3
  %v726 = vperm.slane %v720, 4
  %v727 = vperm.slane %v720, 5
  %v728 = vperm.slane %v720, 6
  %v729 = vperm.slane %v720, 7
  %v802 = vunpack.c.l.b16 %v656
  %v803 = vunpack.c.h.b16 %v656
  %v804 = vunpack.c.l.b16 %v657
  %v805 = vunpack.c.h.b16 %v657
  %v806 = vunpack.c.l.b16 %v658
  %v807 = vunpack.c.h.b16 %v658
  %v808 = vunpack.c.l.b16 %v659
  %v809 = vunpack.c.h.b16 %v659
  %v810 = vunpack.c.l.b16 %v660
  %v811 = vunpack.c.h.b16 %v660
  %v812 = vunpack.c.l.b16 %v661
  %v813 = vunpack.c.h.b16 %v661
  %v814 = vunpack.c.l.b16 %v662
  %v815 = vunpack.c.h.b16 %v662
  %v816 = vunpack.c.l.b16 %v663
  %v817 = vunpack.c.h.b16 %v663
  %v818 = vunpack.c.l.b16 %v664
  %v819 = vunpack.c.h.b16 %v664
  %v820 = vunpack.c.l.b16 %v665
  %v821 = vunpack.c.h.b16 %v665
  %v822 = vunpack.c.l.b16 %v666
  %v823 = vunpack.c.h.b16 %v666
  %v824 = vunpack.c.l.b16 %v667
  %v825 = vunpack.c.h.b16 %v667
  %v826 = vunpack.c.l.b16 %v668
  %v827 = vunpack.c.h.b16 %v668
  %v828 = vunpack.c.l.b16 %v669
  %v829 = vunpack.c.h.b16 %v669
  %v830 = vunpack.c.l.b16 %v670
  %v831 = vunpack.c.h.b16 %v670
  %v832 = vunpack.c.l.b16 %v671
  %v833 = vunpack.c.h.b16 %v671
  %v834 = vunpack.c.l.b16 %v672
  %v835 = vunpack.c.h.b16 %v672
  %v836 = vunpack.c.l.b16 %v673
  %v837 = vunpack.c.h.b16 %v673
  %v838 = vunpack.c.l.b16 %v674
  %v839 = vunpack.c.h.b16 %v674
  %v840 = vunpack.c.l.b16 %v675
  %v841 = vunpack.c.h.b16 %v675
  %v842 = vunpack.c.l.b16 %v676
  %v843 = vunpack.c.h.b16 %v676
  %v844 = vunpack.c.l.b16 %v677
  %v845 = vunpack.c.h.b16 %v677
  %v846 = vunpack.c.l.b16 %v678
  %v847 = vunpack.c.h.b16 %v678
  %v848 = vunpack.c.l.b16 %v679
  %v849 = vunpack.c.h.b16 %v679
  %v850 = vunpack.c.l.b16 %v680
  %v851 = vunpack.c.h.b16 %v680
  %v852 = vunpack.c.l.b16 %v681
  %v853 = vunpack.c.h.b16 %v681
  %v854 = vunpack.c.l.b16 %v682
  %v855 = vunpack.c.h.b16 %v682
  %v856 = vunpack.c.l.b16 %v683
  %v857 = vunpack.c.h.b16 %v683
  %v858 = vunpack.c.l.b16 %v684
  %v859 = vunpack.c.h.b16 %v684
  %v860 = vunpack.c.l.b16 %v685
  %v861 = vunpack.c.h.b16 %v685
  %v862 = vunpack.c.l.b16 %v686
  %v863 = vunpack.c.h.b16 %v686
  %v864 = vunpack.c.l.b16 %v687
  %v865 = vunpack.c.h.b16 %v687
  %v866 = vunpack.c.l.b16 %v688
  %v867 = vunpack.c.h.b16 %v688
  %v868 = vunpack.c.l.b16 %v689
  %v869 = vunpack.c.h.b16 %v689
  %v870 = vunpack.c.l.b16 %v690
  %v871 = vunpack.c.h.b16 %v690
  %v872 = vunpack.c.l.b16 %v691
  %v873 = vunpack.c.h.b16 %v691
  %v874 = vunpack.c.l.b16 %v692
  %v875 = vunpack.c.h.b16 %v692
  %v876 = vunpack.c.l.b16 %v693
  %v877 = vunpack.c.h.b16 %v693
  %v878 = vunpack.c.l.b16 %v694
  %v879 = vunpack.c.h.b16 %v694
  %v880 = vunpack.c.l.b16 %v695
  %v881 = vunpack.c.h.b16 %v695
  %v882 = vunpack.c.l.b16 %v696
  %v883 = vunpack.c.h.b16 %v696
  %v884 = vunpack.c.l.b16 %v697
  %v885 = vunpack.c.h.b16 %v697
  %v886 = vunpack.c.l.b16 %v698
  %v887 = vunpack.c.h.b16 %v698
  %v888 = vunpack.c.l.b16 %v699
  %v889 = vunpack.c.h.b16 %v699
  %v890 = vunpack.c.l.b16 %v700
  %v891 = vunpack.c.h.b16 %v700
  %v892 = vunpack.c.l.b16 %v701
  %v893 = vunpack.c.h.b16 %v701
  %v894 = vunpack.c.l.b16 %v702
  %v895 = vunpack.c.h.b16 %v702
  %v896 = vunpack.c.l.b16 %v703
  %v897 = vunpack.c.h.b16 %v703
  %v898 = vunpack.c.l.b16 %v704
  %v899 = vunpack.c.h.b16 %v704
  %v900 = vunpack.c.l.b16 %v705
  %v901 = vunpack.c.h.b16 %v705
  %v902 = vunpack.c.l.b16 %v706
  %v903 = vunpack.c.h.b16 %v706
  %v904 = vunpack.c.l.b16 %v707
  %v905 = vunpack.c.h.b16 %v707
  %v906 = vunpack.c.l.b16 %v708
  %v907 = vunpack.c.h.b16 %v708
  %v908 = vunpack.c.l.b16 %v709
  %v909 = vunpack.c.h.b16 %v709
  %v910 = vunpack.c.l.b16 %v710
  %v911 = vunpack.c.h.b16 %v710
  %v912 = vunpack.c.l.b16 %v711
  %v913 = vunpack.c.h.b16 %v711
  %v914 = vunpack.c.l.b16 %v712
  %v915 = vunpack.c.h.b16 %v712
  %v916 = vunpack.c.l.b16 %v713
  %v917 = vunpack.c.h.b16 %v713
  %v918 = vunpack.c.l.b16 %v714
  %v919 = vunpack.c.h.b16 %v714
  %v920 = vunpack.c.l.b16 %v715
  %v921 = vunpack.c.h.b16 %v715
  %v922 = vunpack.c.l.b16 %v716
  %v923 = vunpack.c.h.b16 %v716
  %v924 = vunpack.c.l.b16 %v717
  %v925 = vunpack.c.h.b16 %v717
  %v926 = vunpack.c.l.b16 %v718
  %v927 = vunpack.c.h.b16 %v718
  %v928 = vunpack.c.l.b16 %v719
  %v929 = vunpack.c.h.b16 %v719
  %v930 = vpack.c.b16 %v810, %v802
  %v931 = vpack.c.b16 %v811, %v803
  %v932 = vpack.c.b16 %v812, %v804
  %v933 = vpack.c.b16 %v813, %v805
  %v934 = vpack.c.b16 %v814, %v806
  %v935 = vpack.c.b16 %v815, %v807
  %v936 = vpack.c.b16 %v816, %v808
  %v937 = vpack.c.b16 %v817, %v809
  %v938 = vpack.c.b16 %v826, %v818
  %v939 = vpack.c.b16 %v827, %v819
  %v940 = vpack.c.b16 %v828, %v820
  %v941 = vpack.c.b16 %v829, %v821
  %v942 = vpack.c.b16 %v830, %v822
  %v943 = vpack.c.b16 %v831, %v823
  %v944 = vpack.c.b16 %v832, %v824
  %v945 = vpack.c.b16 %v833, %v825
  %v946 = vpack.c.b16 %v842, %v834
  %v947 = vpack.c.b16 %v843, %v835
  %v948 = vpack.c.b16 %v844, %v836
  %v949 = vpack.c.b16 %v845, %v837
  %v950 = vpack.c.b16 %v846, %v838
  %v951 = vpack.c.b16 %v847, %v839
  %v952 = vpack.c.b16 %v848, %v840
  %v953 = vpack.c.b16 %v849, %v841
  %v954 = vpack.c.b16 %v858, %v850
  %v955 = vpack.c.b16 %v859, %v851
  %v956 = vpack.c.b16 %v860, %v852
  %v957 = vpack.c.b16 %v861, %v853
  %v958 = vpack.c.b16 %v862, %v854
  %v959 = vpack.c.b16 %v863, %v855
  %v960 = vpack.c.b16 %v864, %v856
  %v961 = vpack.c.b16 %v865, %v857
  %v962 = vpack.c.b16 %v874, %v866
  %v963 = vpack.c.b16 %v875, %v867
  %v964 = vpack.c.b16 %v876, %v868
  %v965 = vpack.c.b16 %v877, %v869
  %v966 = vpack.c.b16 %v878, %v870
  %v967 = vpack.c.b16 %v879, %v871
  %v968 = vpack.c.b16 %v880, %v872
  %v969 = vpack.c.b16 %v881, %v873
  %v970 = vpack.c.b16 %v890, %v882
  %v971 = vpack.c.b16 %v891, %v883
  %v972 = vpack.c.b16 %v892, %v884
  %v973 = vpack.c.b16 %v893, %v885
  %v974 = vpack.c.b16 %v894, %v886
  %v975 = vpack.c.b16 %v895, %v887
  %v976 = vpack.c.b16 %v896, %v888
  %v977 = vpack.c.b16 %v897, %v889
  %v978 = vpack.c.b16 %v906, %v898
  %v979 = vpack.c.b16 %v907, %v899
  %v980 = vpack.c.b16 %v908, %v900
  %v981 = vpack.c.b16 %v909, %v901
  %v982 = vpack.c.b16 %v910, %v902
  %v983 = vpack.c.b16 %v911, %v903
  %v984 = vpack.c.b16 %v912, %v904
  %v985 = vpack.c.b16 %v913, %v905
  %v986 = vpack.c.b16 %v922, %v914
  %v987 = vpack.c.b16 %v923, %v915
  %v988 = vpack.c.b16 %v924, %v916
  %v989 = vpack.c.b16 %v925, %v917
  %v990 = vpack.c.b16 %v926, %v918
  %v991 = vpack.c.b16 %v927, %v919
  %v992 = vpack.c.b16 %v928, %v920
  %v993 = vpack.c.b16 %v929, %v921
  %1058 = vmatpush.bf16.msra.mxu0 %v986
  %1059 = vmatpush.bf16.msra.mxu0 %v978
  %1060 = vmatpush.bf16.msra.mxu0 %v970
  %1061 = vmatpush.bf16.msra.mxu0 %v962
  %1062 = vmatpush.bf16.msra.mxu0 %v954
  %1063 = vmatpush.bf16.msra.mxu0 %v946
  %1064 = vmatpush.bf16.msra.mxu0 %v938
  %1065 = vmatpush.bf16.msra.mxu0 %v930
  %1066 = vmatmul.bf16.gmra.mxu0 %v654
  %v1067 = vpop.f32.mrf.mxu0
  %v1068 = vadd.f32 %v722, %v1067
  %v1069 = vpop.f32.mrf.mxu0
  %v1070 = vadd.f32 %v722, %v1069
  %1071 = vmatmul.bf16.gmra.mxu0 %v655
  %v1072 = vpop.f32.mrf.mxu0
  %v1073 = vadd.f32 %v722, %v1072
  %v1074 = vpop.f32.mrf.mxu0
  %v1075 = vadd.f32 %v722, %v1074
  %1076 = vdwg.mxu0
  %1077 = vmatpush.bf16.msra.mxu0 %v987
  %1078 = vmatpush.bf16.msra.mxu0 %v979
  %1079 = vmatpush.bf16.msra.mxu0 %v971
  %1080 = vmatpush.bf16.msra.mxu0 %v963
  %1081 = vmatpush.bf16.msra.mxu0 %v955
  %1082 = vmatpush.bf16.msra.mxu0 %v947
  %1083 = vmatpush.bf16.msra.mxu0 %v939
  %1084 = vmatpush.bf16.msra.mxu0 %v931
  %1085 = vmatmul.bf16.gmra.mxu0 %v654
  %v1086 = vpop.f32.mrf.mxu0
  %v1087 = vadd.f32 %v723, %v1086
  %v1088 = vpop.f32.mrf.mxu0
  %v1089 = vadd.f32 %v723, %v1088
  %1090 = vmatmul.bf16.gmra.mxu0 %v655
  %v1091 = vpop.f32.mrf.mxu0
  %v1092 = vadd.f32 %v723, %v1091
  %v1093 = vpop.f32.mrf.mxu0
  %v1094 = vadd.f32 %v723, %v1093
  %1095 = vdwg.mxu0
  %1096 = vmatpush.bf16.msra.mxu0 %v988
  %1097 = vmatpush.bf16.msra.mxu0 %v980
  %1098 = vmatpush.bf16.msra.mxu0 %v972
  %1099 = vmatpush.bf16.msra.mxu0 %v964
  %1100 = vmatpush.bf16.msra.mxu0 %v956
  %1101 = vmatpush.bf16.msra.mxu0 %v948
  %1102 = vmatpush.bf16.msra.mxu0 %v940
  %1103 = vmatpush.bf16.msra.mxu0 %v932
  %1104 = vmatmul.bf16.gmra.mxu0 %v654
  %v1105 = vpop.f32.mrf.mxu0
  %v1106 = vadd.f32 %v724, %v1105
  %v1107 = vpop.f32.mrf.mxu0
  %v1108 = vadd.f32 %v724, %v1107
  %1109 = vmatmul.bf16.gmra.mxu0 %v655
  %v1110 = vpop.f32.mrf.mxu0
  %v1111 = vadd.f32 %v724, %v1110
  %v1112 = vpop.f32.mrf.mxu0
  %v1113 = vadd.f32 %v724, %v1112
  %1114 = vdwg.mxu0
  %1115 = vmatpush.bf16.msra.mxu0 %v989
  %1116 = vmatpush.bf16.msra.mxu0 %v981
  %1117 = vmatpush.bf16.msra.mxu0 %v973
  %1118 = vmatpush.bf16.msra.mxu0 %v965
  %1119 = vmatpush.bf16.msra.mxu0 %v957
  %1120 = vmatpush.bf16.msra.mxu0 %v949
  %1121 = vmatpush.bf16.msra.mxu0 %v941
  %1122 = vmatpush.bf16.msra.mxu0 %v933
  %1123 = vmatmul.bf16.gmra.mxu0 %v654
  %v1124 = vpop.f32.mrf.mxu0
  %v1125 = vadd.f32 %v725, %v1124
  %v1126 = vpop.f32.mrf.mxu0
  %v1127 = vadd.f32 %v725, %v1126
  %1128 = vmatmul.bf16.gmra.mxu0 %v655
  %v1129 = vpop.f32.mrf.mxu0
  %v1130 = vadd.f32 %v725, %v1129
  %v1131 = vpop.f32.mrf.mxu0
  %v1132 = vadd.f32 %v725, %v1131
  %1133 = vdwg.mxu0
  %1134 = vmatpush.bf16.msra.mxu0 %v990
  %1135 = vmatpush.bf16.msra.mxu0 %v982
  %1136 = vmatpush.bf16.msra.mxu0 %v974
  %1137 = vmatpush.bf16.msra.mxu0 %v966
  %1138 = vmatpush.bf16.msra.mxu0 %v958
  %1139 = vmatpush.bf16.msra.mxu0 %v950
  %1140 = vmatpush.bf16.msra.mxu0 %v942
  %1141 = vmatpush.bf16.msra.mxu0 %v934
  %1142 = vmatmul.bf16.gmra.mxu0 %v654
  %v1143 = vpop.f32.mrf.mxu0
  %v1144 = vadd.f32 %v726, %v1143
  %v1145 = vpop.f32.mrf.mxu0
  %v1146 = vadd.f32 %v726, %v1145
  %1147 = vmatmul.bf16.gmra.mxu0 %v655
  %v1148 = vpop.f32.mrf.mxu0
  %v1149 = vadd.f32 %v726, %v1148
  %v1150 = vpop.f32.mrf.mxu0
  %v1151 = vadd.f32 %v726, %v1150
  %1152 = vdwg.mxu0
  %1153 = vmatpush.bf16.msra.mxu0 %v991
  %1154 = vmatpush.bf16.msra.mxu0 %v983
  %1155 = vmatpush.bf16.msra.mxu0 %v975
  %1156 = vmatpush.bf16.msra.mxu0 %v967
  %1157 = vmatpush.bf16.msra.mxu0 %v959
  %1158 = vmatpush.bf16.msra.mxu0 %v951
  %1159 = vmatpush.bf16.msra.mxu0 %v943
  %1160 = vmatpush.bf16.msra.mxu0 %v935
  %1161 = vmatmul.bf16.gmra.mxu0 %v654
  %v1162 = vpop.f32.mrf.mxu0
  %v1163 = vadd.f32 %v727, %v1162
  %v1164 = vpop.f32.mrf.mxu0
  %v1165 = vadd.f32 %v727, %v1164
  %1166 = vmatmul.bf16.gmra.mxu0 %v655
  %v1167 = vpop.f32.mrf.mxu0
  %v1168 = vadd.f32 %v727, %v1167
  %v1169 = vpop.f32.mrf.mxu0
  %v1170 = vadd.f32 %v727, %v1169
  %1171 = vdwg.mxu0
  %1172 = vmatpush.bf16.msra.mxu0 %v992
  %1173 = vmatpush.bf16.msra.mxu0 %v984
  %1174 = vmatpush.bf16.msra.mxu0 %v976
  %1175 = vmatpush.bf16.msra.mxu0 %v968
  %1176 = vmatpush.bf16.msra.mxu0 %v960
  %1177 = vmatpush.bf16.msra.mxu0 %v952
  %1178 = vmatpush.bf16.msra.mxu0 %v944
  %1179 = vmatpush.bf16.msra.mxu0 %v936
  %1180 = vmatmul.bf16.gmra.mxu0 %v654
  %v1181 = vpop.f32.mrf.mxu0
  %v1182 = vadd.f32 %v728, %v1181
  %v1183 = vpop.f32.mrf.mxu0
  %v1184 = vadd.f32 %v728, %v1183
  %1185 = vmatmul.bf16.gmra.mxu0 %v655
  %v1186 = vpop.f32.mrf.mxu0
  %v1187 = vadd.f32 %v728, %v1186
  %v1188 = vpop.f32.mrf.mxu0
  %v1189 = vadd.f32 %v728, %v1188
  %1190 = vdwg.mxu0
  %1191 = vmatpush.bf16.msra.mxu0 %v993
  %1192 = vmatpush.bf16.msra.mxu0 %v985
  %1193 = vmatpush.bf16.msra.mxu0 %v977
  %1194 = vmatpush.bf16.msra.mxu0 %v969
  %1195 = vmatpush.bf16.msra.mxu0 %v961
  %1196 = vmatpush.bf16.msra.mxu0 %v953
  %1197 = vmatpush.bf16.msra.mxu0 %v945
  %1198 = vmatpush.bf16.msra.mxu0 %v937
  %1199 = vmatmul.bf16.gmra.mxu0 %v654
  %v1200 = vpop.f32.mrf.mxu0
  %v1201 = vadd.f32 %v729, %v1200
  %v1202 = vpop.f32.mrf.mxu0
  %v1203 = vadd.f32 %v729, %v1202
  %1204 = vmatmul.bf16.gmra.mxu0 %v655
  %v1205 = vpop.f32.mrf.mxu0
  %v1206 = vadd.f32 %v729, %v1205
  %v1207 = vpop.f32.mrf.mxu0
  %v1208 = vadd.f32 %v729, %v1207
  %1209 = vdwg.mxu0
  %v1210 = vld [vmem:[%s22] sm:$0x7]
  %v1211 = vld [vmem:[%s23] sm:$0x7]
  %v1212 = vadd.f32 %v84, %v86
  %v1213 = vadd.f32 %v85, %v87
  %v1214 = vld [vmem:[%s4] sm:$0xff]
  %v1215 = vld [vmem:[%s4 + $0x8] sm:$0xff]
  %v1216 = vld [vmem:[%s4 + $0x10] sm:$0xff]
  %v1217 = vld [vmem:[%s4 + $0x18] sm:$0xff]
  %v1218 = vld [vmem:[%s4 + $0x20] sm:$0xff]
  %v1219 = vld [vmem:[%s4 + $0x28] sm:$0xff]
  %v1220 = vld [vmem:[%s4 + $0x30] sm:$0xff]
  %v1221 = vld [vmem:[%s4 + $0x38] sm:$0xff]
  %v1222 = vld [vmem:[%s4 + $0x40] sm:$0xff]
  %v1223 = vld [vmem:[%s4 + $0x48] sm:$0xff]
  %v1224 = vld [vmem:[%s4 + $0x50] sm:$0xff]
  %v1225 = vld [vmem:[%s4 + $0x58] sm:$0xff]
  %v1226 = vld [vmem:[%s4 + $0x60] sm:$0xff]
  %v1227 = vld [vmem:[%s4 + $0x68] sm:$0xff]
  %v1228 = vld [vmem:[%s4 + $0x70] sm:$0xff]
  %v1229 = vld [vmem:[%s4 + $0x78] sm:$0xff]
  %v1230 = vld [vmem:[%s4 + $0x80] sm:$0xff]
  %v1231 = vld [vmem:[%s4 + $0x88] sm:$0xff]
  %v1232 = vld [vmem:[%s4 + $0x90] sm:$0xff]
  %v1233 = vld [vmem:[%s4 + $0x98] sm:$0xff]
  %v1234 = vld [vmem:[%s4 + $0xa0] sm:$0xff]
  %v1235 = vld [vmem:[%s4 + $0xa8] sm:$0xff]
  %v1236 = vld [vmem:[%s4 + $0xb0] sm:$0xff]
  %v1237 = vld [vmem:[%s4 + $0xb8] sm:$0xff]
  %v1238 = vld [vmem:[%s4 + $0xc0] sm:$0xff]
  %v1239 = vld [vmem:[%s4 + $0xc8] sm:$0xff]
  %v1240 = vld [vmem:[%s4 + $0xd0] sm:$0xff]
  %v1241 = vld [vmem:[%s4 + $0xd8] sm:$0xff]
  %v1242 = vld [vmem:[%s4 + $0xe0] sm:$0xff]
  %v1243 = vld [vmem:[%s4 + $0xe8] sm:$0xff]
  %v1244 = vld [vmem:[%s4 + $0xf0] sm:$0xff]
  %v1245 = vld [vmem:[%s4 + $0xf8] sm:$0xff]
  %v1246 = vld [vmem:[%s4 + $0x100] sm:$0xff]
  %v1247 = vld [vmem:[%s4 + $0x108] sm:$0xff]
  %v1248 = vld [vmem:[%s4 + $0x110] sm:$0xff]
  %v1249 = vld [vmem:[%s4 + $0x118] sm:$0xff]
  %v1250 = vld [vmem:[%s4 + $0x120] sm:$0xff]
  %v1251 = vld [vmem:[%s4 + $0x128] sm:$0xff]
  %v1252 = vld [vmem:[%s4 + $0x130] sm:$0xff]
  %v1253 = vld [vmem:[%s4 + $0x138] sm:$0xff]
  %v1254 = vld [vmem:[%s4 + $0x140] sm:$0xff]
  %v1255 = vld [vmem:[%s4 + $0x148] sm:$0xff]
  %v1256 = vld [vmem:[%s4 + $0x150] sm:$0xff]
  %v1257 = vld [vmem:[%s4 + $0x158] sm:$0xff]
  %v1258 = vld [vmem:[%s4 + $0x160] sm:$0xff]
  %v1259 = vld [vmem:[%s4 + $0x168] sm:$0xff]
  %v1260 = vld [vmem:[%s4 + $0x170] sm:$0xff]
  %v1261 = vld [vmem:[%s4 + $0x178] sm:$0xff]
  %v1262 = vld [vmem:[%s4 + $0x180] sm:$0xff]
  %v1263 = vld [vmem:[%s4 + $0x188] sm:$0xff]
  %v1264 = vld [vmem:[%s4 + $0x190] sm:$0xff]
  %v1265 = vld [vmem:[%s4 + $0x198] sm:$0xff]
  %v1266 = vld [vmem:[%s4 + $0x1a0] sm:$0xff]
  %v1267 = vld [vmem:[%s4 + $0x1a8] sm:$0xff]
  %v1268 = vld [vmem:[%s4 + $0x1b0] sm:$0xff]
  %v1269 = vld [vmem:[%s4 + $0x1b8] sm:$0xff]
  %v1270 = vld [vmem:[%s4 + $0x1c0] sm:$0xff]
  %v1271 = vld [vmem:[%s4 + $0x1c8] sm:$0xff]
  %v1272 = vld [vmem:[%s4 + $0x1d0] sm:$0xff]
  %v1273 = vld [vmem:[%s4 + $0x1d8] sm:$0xff]
  %v1274 = vld [vmem:[%s4 + $0x1e0] sm:$0xff]
  %v1275 = vld [vmem:[%s4 + $0x1e8] sm:$0xff]
  %v1276 = vld [vmem:[%s4 + $0x1f0] sm:$0xff]
  %v1277 = vld [vmem:[%s4 + $0x1f8] sm:$0xff]
  %v1278 = vpack.c.bf16 %v1213, %v1212
  %v1279 = vld [vmem:[%s5] sm:$0xff]
  %v1281 = vperm.slane %v1279, 0
  %v1282 = vperm.slane %v1279, 1
  %v1283 = vperm.slane %v1279, 2
  %v1284 = vperm.slane %v1279, 3
  %v1285 = vperm.slane %v1279, 4
  %v1286 = vperm.slane %v1279, 5
  %v1287 = vperm.slane %v1279, 6
  %v1288 = vperm.slane %v1279, 7
  %v1361 = vunpack.c.l.b16 %v1214
  %v1362 = vunpack.c.h.b16 %v1214
  %v1363 = vunpack.c.l.b16 %v1215
  %v1364 = vunpack.c.h.b16 %v1215
  %v1365 = vunpack.c.l.b16 %v1216
  %v1366 = vunpack.c.h.b16 %v1216
  %v1367 = vunpack.c.l.b16 %v1217
  %v1368 = vunpack.c.h.b16 %v1217
  %v1369 = vunpack.c.l.b16 %v1218
  %v1370 = vunpack.c.h.b16 %v1218
  %v1371 = vunpack.c.l.b16 %v1219
  %v1372 = vunpack.c.h.b16 %v1219
  %v1373 = vunpack.c.l.b16 %v1220
  %v1374 = vunpack.c.h.b16 %v1220
  %v1375 = vunpack.c.l.b16 %v1221
  %v1376 = vunpack.c.h.b16 %v1221
  %v1377 = vunpack.c.l.b16 %v1222
  %v1378 = vunpack.c.h.b16 %v1222
  %v1379 = vunpack.c.l.b16 %v1223
  %v1380 = vunpack.c.h.b16 %v1223
  %v1381 = vunpack.c.l.b16 %v1224
  %v1382 = vunpack.c.h.b16 %v1224
  %v1383 = vunpack.c.l.b16 %v1225
  %v1384 = vunpack.c.h.b16 %v1225
  %v1385 = vunpack.c.l.b16 %v1226
  %v1386 = vunpack.c.h.b16 %v1226
  %v1387 = vunpack.c.l.b16 %v1227
  %v1388 = vunpack.c.h.b16 %v1227
  %v1389 = vunpack.c.l.b16 %v1228
  %v1390 = vunpack.c.h.b16 %v1228
  %v1391 = vunpack.c.l.b16 %v1229
  %v1392 = vunpack.c.h.b16 %v1229
  %v1393 = vunpack.c.l.b16 %v1230
  %v1394 = vunpack.c.h.b16 %v1230
  %v1395 = vunpack.c.l.b16 %v1231
  %v1396 = vunpack.c.h.b16 %v1231
  %v1397 = vunpack.c.l.b16 %v1232
  %v1398 = vunpack.c.h.b16 %v1232
  %v1399 = vunpack.c.l.b16 %v1233
  %v1400 = vunpack.c.h.b16 %v1233
  %v1401 = vunpack.c.l.b16 %v1234
  %v1402 = vunpack.c.h.b16 %v1234
  %v1403 = vunpack.c.l.b16 %v1235
  %v1404 = vunpack.c.h.b16 %v1235
  %v1405 = vunpack.c.l.b16 %v1236
  %v1406 = vunpack.c.h.b16 %v1236
  %v1407 = vunpack.c.l.b16 %v1237
  %v1408 = vunpack.c.h.b16 %v1237
  %v1409 = vunpack.c.l.b16 %v1238
  %v1410 = vunpack.c.h.b16 %v1238
  %v1411 = vunpack.c.l.b16 %v1239
  %v1412 = vunpack.c.h.b16 %v1239
  %v1413 = vunpack.c.l.b16 %v1240
  %v1414 = vunpack.c.h.b16 %v1240
  %v1415 = vunpack.c.l.b16 %v1241
  %v1416 = vunpack.c.h.b16 %v1241
  %v1417 = vunpack.c.l.b16 %v1242
  %v1418 = vunpack.c.h.b16 %v1242
  %v1419 = vunpack.c.l.b16 %v1243
  %v1420 = vunpack.c.h.b16 %v1243
  %v1421 = vunpack.c.l.b16 %v1244
  %v1422 = vunpack.c.h.b16 %v1244
  %v1423 = vunpack.c.l.b16 %v1245
  %v1424 = vunpack.c.h.b16 %v1245
  %v1425 = vunpack.c.l.b16 %v1246
  %v1426 = vunpack.c.h.b16 %v1246
  %v1427 = vunpack.c.l.b16 %v1247
  %v1428 = vunpack.c.h.b16 %v1247
  %v1429 = vunpack.c.l.b16 %v1248
  %v1430 = vunpack.c.h.b16 %v1248
  %v1431 = vunpack.c.l.b16 %v1249
  %v1432 = vunpack.c.h.b16 %v1249
  %v1433 = vunpack.c.l.b16 %v1250
  %v1434 = vunpack.c.h.b16 %v1250
  %v1435 = vunpack.c.l.b16 %v1251
  %v1436 = vunpack.c.h.b16 %v1251
  %v1437 = vunpack.c.l.b16 %v1252
  %v1438 = vunpack.c.h.b16 %v1252
  %v1439 = vunpack.c.l.b16 %v1253
  %v1440 = vunpack.c.h.b16 %v1253
  %v1441 = vunpack.c.l.b16 %v1254
  %v1442 = vunpack.c.h.b16 %v1254
  %v1443 = vunpack.c.l.b16 %v1255
  %v1444 = vunpack.c.h.b16 %v1255
  %v1445 = vunpack.c.l.b16 %v1256
  %v1446 = vunpack.c.h.b16 %v1256
  %v1447 = vunpack.c.l.b16 %v1257
  %v1448 = vunpack.c.h.b16 %v1257
  %v1449 = vunpack.c.l.b16 %v1258
  %v1450 = vunpack.c.h.b16 %v1258
  %v1451 = vunpack.c.l.b16 %v1259
  %v1452 = vunpack.c.h.b16 %v1259
  %v1453 = vunpack.c.l.b16 %v1260
  %v1454 = vunpack.c.h.b16 %v1260
  %v1455 = vunpack.c.l.b16 %v1261
  %v1456 = vunpack.c.h.b16 %v1261
  %v1457 = vunpack.c.l.b16 %v1262
  %v1458 = vunpack.c.h.b16 %v1262
  %v1459 = vunpack.c.l.b16 %v1263
  %v1460 = vunpack.c.h.b16 %v1263
  %v1461 = vunpack.c.l.b16 %v1264
  %v1462 = vunpack.c.h.b16 %v1264
  %v1463 = vunpack.c.l.b16 %v1265
  %v1464 = vunpack.c.h.b16 %v1265
  %v1465 = vunpack.c.l.b16 %v1266
  %v1466 = vunpack.c.h.b16 %v1266
  %v1467 = vunpack.c.l.b16 %v1267
  %v1468 = vunpack.c.h.b16 %v1267
  %v1469 = vunpack.c.l.b16 %v1268
  %v1470 = vunpack.c.h.b16 %v1268
  %v1471 = vunpack.c.l.b16 %v1269
  %v1472 = vunpack.c.h.b16 %v1269
  %v1473 = vunpack.c.l.b16 %v1270
  %v1474 = vunpack.c.h.b16 %v1270
  %v1475 = vunpack.c.l.b16 %v1271
  %v1476 = vunpack.c.h.b16 %v1271
  %v1477 = vunpack.c.l.b16 %v1272
  %v1478 = vunpack.c.h.b16 %v1272
  %v1479 = vunpack.c.l.b16 %v1273
  %v1480 = vunpack.c.h.b16 %v1273
  %v1481 = vunpack.c.l.b16 %v1274
  %v1482 = vunpack.c.h.b16 %v1274
  %v1483 = vunpack.c.l.b16 %v1275
  %v1484 = vunpack.c.h.b16 %v1275
  %v1485 = vunpack.c.l.b16 %v1276
  %v1486 = vunpack.c.h.b16 %v1276
  %v1487 = vunpack.c.l.b16 %v1277
  %v1488 = vunpack.c.h.b16 %v1277
  %v1489 = vpack.c.b16 %v1369, %v1361
  %v1490 = vpack.c.b16 %v1370, %v1362
  %v1491 = vpack.c.b16 %v1371, %v1363
  %v1492 = vpack.c.b16 %v1372, %v1364
  %v1493 = vpack.c.b16 %v1373, %v1365
  %v1494 = vpack.c.b16 %v1374, %v1366
  %v1495 = vpack.c.b16 %v1375, %v1367
  %v1496 = vpack.c.b16 %v1376, %v1368
  %v1497 = vpack.c.b16 %v1385, %v1377
  %v1498 = vpack.c.b16 %v1386, %v1378
  %v1499 = vpack.c.b16 %v1387, %v1379
  %v1500 = vpack.c.b16 %v1388, %v1380
  %v1501 = vpack.c.b16 %v1389, %v1381
  %v1502 = vpack.c.b16 %v1390, %v1382
  %v1503 = vpack.c.b16 %v1391, %v1383
  %v1504 = vpack.c.b16 %v1392, %v1384
  %v1505 = vpack.c.b16 %v1401, %v1393
  %v1506 = vpack.c.b16 %v1402, %v1394
  %v1507 = vpack.c.b16 %v1403, %v1395
  %v1508 = vpack.c.b16 %v1404, %v1396
  %v1509 = vpack.c.b16 %v1405, %v1397
  %v1510 = vpack.c.b16 %v1406, %v1398
  %v1511 = vpack.c.b16 %v1407, %v1399
  %v1512 = vpack.c.b16 %v1408, %v1400
  %v1513 = vpack.c.b16 %v1417, %v1409
  %v1514 = vpack.c.b16 %v1418, %v1410
  %v1515 = vpack.c.b16 %v1419, %v1411
  %v1516 = vpack.c.b16 %v1420, %v1412
  %v1517 = vpack.c.b16 %v1421, %v1413
  %v1518 = vpack.c.b16 %v1422, %v1414
  %v1519 = vpack.c.b16 %v1423, %v1415
  %v1520 = vpack.c.b16 %v1424, %v1416
  %v1521 = vpack.c.b16 %v1433, %v1425
  %v1522 = vpack.c.b16 %v1434, %v1426
  %v1523 = vpack.c.b16 %v1435, %v1427
  %v1524 = vpack.c.b16 %v1436, %v1428
  %v1525 = vpack.c.b16 %v1437, %v1429
  %v1526 = vpack.c.b16 %v1438, %v1430
  %v1527 = vpack.c.b16 %v1439, %v1431
  %v1528 = vpack.c.b16 %v1440, %v1432
  %v1529 = vpack.c.b16 %v1449, %v1441
  %v1530 = vpack.c.b16 %v1450, %v1442
  %v1531 = vpack.c.b16 %v1451, %v1443
  %v1532 = vpack.c.b16 %v1452, %v1444
  %v1533 = vpack.c.b16 %v1453, %v1445
  %v1534 = vpack.c.b16 %v1454, %v1446
  %v1535 = vpack.c.b16 %v1455, %v1447
  %v1536 = vpack.c.b16 %v1456, %v1448
  %v1537 = vpack.c.b16 %v1465, %v1457
  %v1538 = vpack.c.b16 %v1466, %v1458
  %v1539 = vpack.c.b16 %v1467, %v1459
  %v1540 = vpack.c.b16 %v1468, %v1460
  %v1541 = vpack.c.b16 %v1469, %v1461
  %v1542 = vpack.c.b16 %v1470, %v1462
  %v1543 = vpack.c.b16 %v1471, %v1463
  %v1544 = vpack.c.b16 %v1472, %v1464
  %v1545 = vpack.c.b16 %v1481, %v1473
  %v1546 = vpack.c.b16 %v1482, %v1474
  %v1547 = vpack.c.b16 %v1483, %v1475
  %v1548 = vpack.c.b16 %v1484, %v1476
  %v1549 = vpack.c.b16 %v1485, %v1477
  %v1550 = vpack.c.b16 %v1486, %v1478
  %v1551 = vpack.c.b16 %v1487, %v1479
  %v1552 = vpack.c.b16 %v1488, %v1480
  %1617 = vmatpush.bf16.msra.mxu0 %v1545
  %1618 = vmatpush.bf16.msra.mxu0 %v1537
  %1619 = vmatpush.bf16.msra.mxu0 %v1529
  %1620 = vmatpush.bf16.msra.mxu0 %v1521
  %1621 = vmatpush.bf16.msra.mxu0 %v1513
  %1622 = vmatpush.bf16.msra.mxu0 %v1505
  %1623 = vmatpush.bf16.msra.mxu0 %v1497
  %1624 = vmatpush.bf16.msra.mxu0 %v1489
  %1625 = vmatmul.bf16.gmra.mxu0 %v1278
  %v1626 = vpop.f32.mrf.mxu0
  %v1627 = vadd.f32 %v1281, %v1626
  %v1628 = vpop.f32.mrf.mxu0
  %v1629 = vadd.f32 %v1281, %v1628
  %1630 = vdwg.mxu0
  %1631 = vmatpush.bf16.msra.mxu0 %v1546
  %1632 = vmatpush.bf16.msra.mxu0 %v1538
  %1633 = vmatpush.bf16.msra.mxu0 %v1530
  %1634 = vmatpush.bf16.msra.mxu0 %v1522
  %1635 = vmatpush.bf16.msra.mxu0 %v1514
  %1636 = vmatpush.bf16.msra.mxu0 %v1506
  %1637 = vmatpush.bf16.msra.mxu0 %v1498
  %1638 = vmatpush.bf16.msra.mxu0 %v1490
  %1639 = vmatmul.bf16.gmra.mxu0 %v1278
  %v1640 = vpop.f32.mrf.mxu0
  %v1641 = vadd.f32 %v1282, %v1640
  %v1642 = vpop.f32.mrf.mxu0
  %v1643 = vadd.f32 %v1282, %v1642
  %1644 = vdwg.mxu0
  %1645 = vmatpush.bf16.msra.mxu0 %v1547
  %1646 = vmatpush.bf16.msra.mxu0 %v1539
  %1647 = vmatpush.bf16.msra.mxu0 %v1531
  %1648 = vmatpush.bf16.msra.mxu0 %v1523
  %1649 = vmatpush.bf16.msra.mxu0 %v1515
  %1650 = vmatpush.bf16.msra.mxu0 %v1507
  %1651 = vmatpush.bf16.msra.mxu0 %v1499
  %1652 = vmatpush.bf16.msra.mxu0 %v1491
  %1653 = vmatmul.bf16.gmra.mxu0 %v1278
  %v1654 = vpop.f32.mrf.mxu0
  %v1655 = vadd.f32 %v1283, %v1654
  %v1656 = vpop.f32.mrf.mxu0
  %v1657 = vadd.f32 %v1283, %v1656
  %1658 = vdwg.mxu0
  %1659 = vmatpush.bf16.msra.mxu0 %v1548
  %1660 = vmatpush.bf16.msra.mxu0 %v1540
  %1661 = vmatpush.bf16.msra.mxu0 %v1532
  %1662 = vmatpush.bf16.msra.mxu0 %v1524
  %1663 = vmatpush.bf16.msra.mxu0 %v1516
  %1664 = vmatpush.bf16.msra.mxu0 %v1508
  %1665 = vmatpush.bf16.msra.mxu0 %v1500
  %1666 = vmatpush.bf16.msra.mxu0 %v1492
  %1667 = vmatmul.bf16.gmra.mxu0 %v1278
  %v1668 = vpop.f32.mrf.mxu0
  %v1669 = vadd.f32 %v1284, %v1668
  %v1670 = vpop.f32.mrf.mxu0
  %v1671 = vadd.f32 %v1284, %v1670
  %1672 = vdwg.mxu0
  %1673 = vmatpush.bf16.msra.mxu0 %v1549
  %1674 = vmatpush.bf16.msra.mxu0 %v1541
  %1675 = vmatpush.bf16.msra.mxu0 %v1533
  %1676 = vmatpush.bf16.msra.mxu0 %v1525
  %1677 = vmatpush.bf16.msra.mxu0 %v1517
  %1678 = vmatpush.bf16.msra.mxu0 %v1509
  %1679 = vmatpush.bf16.msra.mxu0 %v1501
  %1680 = vmatpush.bf16.msra.mxu0 %v1493
  %1681 = vmatmul.bf16.gmra.mxu0 %v1278
  %v1682 = vpop.f32.mrf.mxu0
  %v1683 = vadd.f32 %v1285, %v1682
  %v1684 = vpop.f32.mrf.mxu0
  %v1685 = vadd.f32 %v1285, %v1684
  %1686 = vdwg.mxu0
  %1687 = vmatpush.bf16.msra.mxu0 %v1550
  %1688 = vmatpush.bf16.msra.mxu0 %v1542
  %1689 = vmatpush.bf16.msra.mxu0 %v1534
  %1690 = vmatpush.bf16.msra.mxu0 %v1526
  %1691 = vmatpush.bf16.msra.mxu0 %v1518
  %1692 = vmatpush.bf16.msra.mxu0 %v1510
  %1693 = vmatpush.bf16.msra.mxu0 %v1502
  %1694 = vmatpush.bf16.msra.mxu0 %v1494
  %1695 = vmatmul.bf16.gmra.mxu0 %v1278
  %v1696 = vpop.f32.mrf.mxu0
  %v1697 = vadd.f32 %v1286, %v1696
  %v1698 = vpop.f32.mrf.mxu0
  %v1699 = vadd.f32 %v1286, %v1698
  %1700 = vdwg.mxu0
  %1701 = vmatpush.bf16.msra.mxu0 %v1551
  %1702 = vmatpush.bf16.msra.mxu0 %v1543
  %1703 = vmatpush.bf16.msra.mxu0 %v1535
  %1704 = vmatpush.bf16.msra.mxu0 %v1527
  %1705 = vmatpush.bf16.msra.mxu0 %v1519
  %1706 = vmatpush.bf16.msra.mxu0 %v1511
  %1707 = vmatpush.bf16.msra.mxu0 %v1503
  %1708 = vmatpush.bf16.msra.mxu0 %v1495
  %1709 = vmatmul.bf16.gmra.mxu0 %v1278
  %v1710 = vpop.f32.mrf.mxu0
  %v1711 = vadd.f32 %v1287, %v1710
  %v1712 = vpop.f32.mrf.mxu0
  %v1713 = vadd.f32 %v1287, %v1712
  %1714 = vdwg.mxu0
  %1715 = vmatpush.bf16.msra.mxu0 %v1552
  %1716 = vmatpush.bf16.msra.mxu0 %v1544
  %1717 = vmatpush.bf16.msra.mxu0 %v1536
  %1718 = vmatpush.bf16.msra.mxu0 %v1528
  %1719 = vmatpush.bf16.msra.mxu0 %v1520
  %1720 = vmatpush.bf16.msra.mxu0 %v1512
  %1721 = vmatpush.bf16.msra.mxu0 %v1504
  %1722 = vmatpush.bf16.msra.mxu0 %v1496
  %1723 = vmatmul.bf16.gmra.mxu0 %v1278
  %v1724 = vpop.f32.mrf.mxu0
  %v1725 = vadd.f32 %v1288, %v1724
  %v1726 = vpop.f32.mrf.mxu0
  %v1727 = vadd.f32 %v1288, %v1726
  %1728 = vdwg.mxu0
  %v1729 = vld [vmem:[%s6] sm:$0xff]
  %v1730 = vld [vmem:[%s6 + $0x8] sm:$0xff]
  %v1731 = vld [vmem:[%s6 + $0x10] sm:$0xff]
  %v1732 = vld [vmem:[%s6 + $0x18] sm:$0xff]
  %v1733 = vld [vmem:[%s6 + $0x20] sm:$0xff]
  %v1734 = vld [vmem:[%s6 + $0x28] sm:$0xff]
  %v1735 = vld [vmem:[%s6 + $0x30] sm:$0xff]
  %v1736 = vld [vmem:[%s6 + $0x38] sm:$0xff]
  %v1737 = vld [vmem:[%s6 + $0x40] sm:$0xff]
  %v1738 = vld [vmem:[%s6 + $0x48] sm:$0xff]
  %v1739 = vld [vmem:[%s6 + $0x50] sm:$0xff]
  %v1740 = vld [vmem:[%s6 + $0x58] sm:$0xff]
  %v1741 = vld [vmem:[%s6 + $0x60] sm:$0xff]
  %v1742 = vld [vmem:[%s6 + $0x68] sm:$0xff]
  %v1743 = vld [vmem:[%s6 + $0x70] sm:$0xff]
  %v1744 = vld [vmem:[%s6 + $0x78] sm:$0xff]
  %v1745 = vld [vmem:[%s6 + $0x80] sm:$0xff]
  %v1746 = vld [vmem:[%s6 + $0x88] sm:$0xff]
  %v1747 = vld [vmem:[%s6 + $0x90] sm:$0xff]
  %v1748 = vld [vmem:[%s6 + $0x98] sm:$0xff]
  %v1749 = vld [vmem:[%s6 + $0xa0] sm:$0xff]
  %v1750 = vld [vmem:[%s6 + $0xa8] sm:$0xff]
  %v1751 = vld [vmem:[%s6 + $0xb0] sm:$0xff]
  %v1752 = vld [vmem:[%s6 + $0xb8] sm:$0xff]
  %v1753 = vld [vmem:[%s6 + $0xc0] sm:$0xff]
  %v1754 = vld [vmem:[%s6 + $0xc8] sm:$0xff]
  %v1755 = vld [vmem:[%s6 + $0xd0] sm:$0xff]
  %v1756 = vld [vmem:[%s6 + $0xd8] sm:$0xff]
  %v1757 = vld [vmem:[%s6 + $0xe0] sm:$0xff]
  %v1758 = vld [vmem:[%s6 + $0xe8] sm:$0xff]
  %v1759 = vld [vmem:[%s6 + $0xf0] sm:$0xff]
  %v1760 = vld [vmem:[%s6 + $0xf8] sm:$0xff]
  %v1761 = vpack.c.bf16 %v85, %v84
  %v1762 = vld [vmem:[%s7] sm:$0xf]
  %v1764 = vperm.slane %v1762, 0
  %v1765 = vperm.slane %v1762, 1
  %v1766 = vperm.slane %v1762, 2
  %v1767 = vperm.slane %v1762, 3
  %v1804 = vunpack.c.l.b16 %v1729
  %v1805 = vunpack.c.h.b16 %v1729
  %v1806 = vunpack.c.l.b16 %v1730
  %v1807 = vunpack.c.h.b16 %v1730
  %v1808 = vunpack.c.l.b16 %v1731
  %v1809 = vunpack.c.h.b16 %v1731
  %v1810 = vunpack.c.l.b16 %v1732
  %v1811 = vunpack.c.h.b16 %v1732
  %v1812 = vunpack.c.l.b16 %v1733
  %v1813 = vunpack.c.h.b16 %v1733
  %v1814 = vunpack.c.l.b16 %v1734
  %v1815 = vunpack.c.h.b16 %v1734
  %v1816 = vunpack.c.l.b16 %v1735
  %v1817 = vunpack.c.h.b16 %v1735
  %v1818 = vunpack.c.l.b16 %v1736
  %v1819 = vunpack.c.h.b16 %v1736
  %v1820 = vunpack.c.l.b16 %v1737
  %v1821 = vunpack.c.h.b16 %v1737
  %v1822 = vunpack.c.l.b16 %v1738
  %v1823 = vunpack.c.h.b16 %v1738
  %v1824 = vunpack.c.l.b16 %v1739
  %v1825 = vunpack.c.h.b16 %v1739
  %v1826 = vunpack.c.l.b16 %v1740
  %v1827 = vunpack.c.h.b16 %v1740
  %v1828 = vunpack.c.l.b16 %v1741
  %v1829 = vunpack.c.h.b16 %v1741
  %v1830 = vunpack.c.l.b16 %v1742
  %v1831 = vunpack.c.h.b16 %v1742
  %v1832 = vunpack.c.l.b16 %v1743
  %v1833 = vunpack.c.h.b16 %v1743
  %v1834 = vunpack.c.l.b16 %v1744
  %v1835 = vunpack.c.h.b16 %v1744
  %v1836 = vunpack.c.l.b16 %v1745
  %v1837 = vunpack.c.h.b16 %v1745
  %v1838 = vunpack.c.l.b16 %v1746
  %v1839 = vunpack.c.h.b16 %v1746
  %v1840 = vunpack.c.l.b16 %v1747
  %v1841 = vunpack.c.h.b16 %v1747
  %v1842 = vunpack.c.l.b16 %v1748
  %v1843 = vunpack.c.h.b16 %v1748
  %v1844 = vunpack.c.l.b16 %v1749
  %v1845 = vunpack.c.h.b16 %v1749
  %v1846 = vunpack.c.l.b16 %v1750
  %v1847 = vunpack.c.h.b16 %v1750
  %v1848 = vunpack.c.l.b16 %v1751
  %v1849 = vunpack.c.h.b16 %v1751
  %v1850 = vunpack.c.l.b16 %v1752
  %v1851 = vunpack.c.h.b16 %v1752
  %v1852 = vunpack.c.l.b16 %v1753
  %v1853 = vunpack.c.h.b16 %v1753
  %v1854 = vunpack.c.l.b16 %v1754
  %v1855 = vunpack.c.h.b16 %v1754
  %v1856 = vunpack.c.l.b16 %v1755
  %v1857 = vunpack.c.h.b16 %v1755
  %v1858 = vunpack.c.l.b16 %v1756
  %v1859 = vunpack.c.h.b16 %v1756
  %v1860 = vunpack.c.l.b16 %v1757
  %v1861 = vunpack.c.h.b16 %v1757
  %v1862 = vunpack.c.l.b16 %v1758
  %v1863 = vunpack.c.h.b16 %v1758
  %v1864 = vunpack.c.l.b16 %v1759
  %v1865 = vunpack.c.h.b16 %v1759
  %v1866 = vunpack.c.l.b16 %v1760
  %v1867 = vunpack.c.h.b16 %v1760
  %v1868 = vpack.c.b16 %v1808, %v1804
  %v1869 = vpack.c.b16 %v1809, %v1805
  %v1870 = vpack.c.b16 %v1810, %v1806
  %v1871 = vpack.c.b16 %v1811, %v1807
  %v1872 = vpack.c.b16 %v1816, %v1812
  %v1873 = vpack.c.b16 %v1817, %v1813
  %v1874 = vpack.c.b16 %v1818, %v1814
  %v1875 = vpack.c.b16 %v1819, %v1815
  %v1876 = vpack.c.b16 %v1824, %v1820
  %v1877 = vpack.c.b16 %v1825, %v1821
  %v1878 = vpack.c.b16 %v1826, %v1822
  %v1879 = vpack.c.b16 %v1827, %v1823
  %v1880 = vpack.c.b16 %v1832, %v1828
  %v1881 = vpack.c.b16 %v1833, %v1829
  %v1882 = vpack.c.b16 %v1834, %v1830
  %v1883 = vpack.c.b16 %v1835, %v1831
  %v1884 = vpack.c.b16 %v1840, %v1836
  %v1885 = vpack.c.b16 %v1841, %v1837
  %v1886 = vpack.c.b16 %v1842, %v1838
  %v1887 = vpack.c.b16 %v1843, %v1839
  %v1888 = vpack.c.b16 %v1848, %v1844
  %v1889 = vpack.c.b16 %v1849, %v1845
  %v1890 = vpack.c.b16 %v1850, %v1846
  %v1891 = vpack.c.b16 %v1851, %v1847
  %v1892 = vpack.c.b16 %v1856, %v1852
  %v1893 = vpack.c.b16 %v1857, %v1853
  %v1894 = vpack.c.b16 %v1858, %v1854
  %v1895 = vpack.c.b16 %v1859, %v1855
  %v1896 = vpack.c.b16 %v1864, %v1860
  %v1897 = vpack.c.b16 %v1865, %v1861
  %v1898 = vpack.c.b16 %v1866, %v1862
  %v1899 = vpack.c.b16 %v1867, %v1863
  %1932 = vmatpush.bf16.msra.mxu0 %v1896
  %1933 = vmatpush.bf16.msra.mxu0 %v1892
  %1934 = vmatpush.bf16.msra.mxu0 %v1888
  %1935 = vmatpush.bf16.msra.mxu0 %v1884
  %1936 = vmatpush.bf16.msra.mxu0 %v1880
  %1937 = vmatpush.bf16.msra.mxu0 %v1876
  %1938 = vmatpush.bf16.msra.mxu0 %v1872
  %1939 = vmatpush.bf16.msra.mxu0 %v1868
  %1940 = vmatmul.bf16.gmra.mxu0 %v1761
  %v1941 = vpop.f32.mrf.mxu0
  %v1942 = vadd.f32 %v1764, %v1941
  %v1943 = vpop.f32.mrf.mxu0
  %v1944 = vadd.f32 %v1764, %v1943
  %1945 = vdwg.mxu0
  %1946 = vmatpush.bf16.msra.mxu0 %v1897
  %1947 = vmatpush.bf16.msra.mxu0 %v1893
  %1948 = vmatpush.bf16.msra.mxu0 %v1889
  %1949 = vmatpush.bf16.msra.mxu0 %v1885
  %1950 = vmatpush.bf16.msra.mxu0 %v1881
  %1951 = vmatpush.bf16.msra.mxu0 %v1877
  %1952 = vmatpush.bf16.msra.mxu0 %v1873
  %1953 = vmatpush.bf16.msra.mxu0 %v1869
  %1954 = vmatmul.bf16.gmra.mxu0 %v1761
  %v1955 = vpop.f32.mrf.mxu0
  %v1956 = vadd.f32 %v1765, %v1955
  %v1957 = vpop.f32.mrf.mxu0
  %v1958 = vadd.f32 %v1765, %v1957
  %1959 = vdwg.mxu0
  %1960 = vmatpush.bf16.msra.mxu0 %v1898
  %1961 = vmatpush.bf16.msra.mxu0 %v1894
  %1962 = vmatpush.bf16.msra.mxu0 %v1890
  %1963 = vmatpush.bf16.msra.mxu0 %v1886
  %1964 = vmatpush.bf16.msra.mxu0 %v1882
  %1965 = vmatpush.bf16.msra.mxu0 %v1878
  %1966 = vmatpush.bf16.msra.mxu0 %v1874
  %1967 = vmatpush.bf16.msra.mxu0 %v1870
  %1968 = vmatmul.bf16.gmra.mxu0 %v1761
  %v1969 = vpop.f32.mrf.mxu0
  %v1970 = vadd.f32 %v1766, %v1969
  %v1971 = vpop.f32.mrf.mxu0
  %v1972 = vadd.f32 %v1766, %v1971
  %1973 = vdwg.mxu0
  %1974 = vmatpush.bf16.msra.mxu0 %v1899
  %1975 = vmatpush.bf16.msra.mxu0 %v1895
  %1976 = vmatpush.bf16.msra.mxu0 %v1891
  %1977 = vmatpush.bf16.msra.mxu0 %v1887
  %1978 = vmatpush.bf16.msra.mxu0 %v1883
  %1979 = vmatpush.bf16.msra.mxu0 %v1879
  %1980 = vmatpush.bf16.msra.mxu0 %v1875
  %1981 = vmatpush.bf16.msra.mxu0 %v1871
  %1982 = vmatmul.bf16.gmra.mxu0 %v1761
  %v1983 = vpop.f32.mrf.mxu0
  %v1984 = vadd.f32 %v1767, %v1983
  %v1985 = vpop.f32.mrf.mxu0
  %v1986 = vadd.f32 %v1767, %v1985
  %1987 = vdwg.mxu0
  %v1988 = vld [vmem:[%s8] sm:$0xf]
  %v1989 = vld [vmem:[%s8 + $0x4] sm:$0xf]
  %v1990 = vld [vmem:[%s8 + $0x8] sm:$0xf]
  %v1991 = vld [vmem:[%s8 + $0xc] sm:$0xf]
  %v1992 = vld [vmem:[%s8 + $0x10] sm:$0xf]
  %v1993 = vld [vmem:[%s8 + $0x14] sm:$0xf]
  %v1994 = vld [vmem:[%s8 + $0x18] sm:$0xf]
  %v1995 = vld [vmem:[%s8 + $0x1c] sm:$0xf]
  %v1996 = vld [vmem:[%s8 + $0x20] sm:$0xf]
  %v1997 = vld [vmem:[%s8 + $0x24] sm:$0xf]
  %v1998 = vld [vmem:[%s8 + $0x28] sm:$0xf]
  %v1999 = vld [vmem:[%s8 + $0x2c] sm:$0xf]
  %v2000 = vld [vmem:[%s8 + $0x30] sm:$0xf]
  %v2001 = vld [vmem:[%s8 + $0x34] sm:$0xf]
  %v2002 = vld [vmem:[%s8 + $0x38] sm:$0xf]
  %v2003 = vld [vmem:[%s8 + $0x3c] sm:$0xf]
  %v2004 = vld [vmem:[%s8 + $0x40] sm:$0xf]
  %v2005 = vld [vmem:[%s8 + $0x44] sm:$0xf]
  %v2006 = vld [vmem:[%s8 + $0x48] sm:$0xf]
  %v2007 = vld [vmem:[%s8 + $0x4c] sm:$0xf]
  %v2008 = vld [vmem:[%s8 + $0x50] sm:$0xf]
  %v2009 = vld [vmem:[%s8 + $0x54] sm:$0xf]
  %v2010 = vld [vmem:[%s8 + $0x58] sm:$0xf]
  %v2011 = vld [vmem:[%s8 + $0x5c] sm:$0xf]
  %v2012 = vld [vmem:[%s8 + $0x60] sm:$0xf]
  %v2013 = vld [vmem:[%s8 + $0x64] sm:$0xf]
  %v2014 = vld [vmem:[%s8 + $0x68] sm:$0xf]
  %v2015 = vld [vmem:[%s8 + $0x6c] sm:$0xf]
  %v2016 = vld [vmem:[%s8 + $0x70] sm:$0xf]
  %v2017 = vld [vmem:[%s8 + $0x74] sm:$0xf]
  %v2018 = vld [vmem:[%s8 + $0x78] sm:$0xf]
  %v2019 = vld [vmem:[%s8 + $0x7c] sm:$0xf]
  %v2020 = vld [vmem:[%s8 + $0x80] sm:$0xf]
  %v2021 = vld [vmem:[%s8 + $0x84] sm:$0xf]
  %v2022 = vld [vmem:[%s8 + $0x88] sm:$0xf]
  %v2023 = vld [vmem:[%s8 + $0x8c] sm:$0xf]
  %v2024 = vld [vmem:[%s8 + $0x90] sm:$0xf]
  %v2025 = vld [vmem:[%s8 + $0x94] sm:$0xf]
  %v2026 = vld [vmem:[%s8 + $0x98] sm:$0xf]
  %v2027 = vld [vmem:[%s8 + $0x9c] sm:$0xf]
  %v2028 = vld [vmem:[%s8 + $0xa0] sm:$0xf]
  %v2029 = vld [vmem:[%s8 + $0xa4] sm:$0xf]
  %v2030 = vld [vmem:[%s8 + $0xa8] sm:$0xf]
  %v2031 = vld [vmem:[%s8 + $0xac] sm:$0xf]
  %v2032 = vld [vmem:[%s8 + $0xb0] sm:$0xf]
  %v2033 = vld [vmem:[%s8 + $0xb4] sm:$0xf]
  %v2034 = vld [vmem:[%s8 + $0xb8] sm:$0xf]
  %v2035 = vld [vmem:[%s8 + $0xbc] sm:$0xf]
  %v2036 = vld [vmem:[%s8 + $0xc0] sm:$0xf]
  %v2037 = vld [vmem:[%s8 + $0xc4] sm:$0xf]
  %v2038 = vld [vmem:[%s8 + $0xc8] sm:$0xf]
  %v2039 = vld [vmem:[%s8 + $0xcc] sm:$0xf]
  %v2040 = vld [vmem:[%s8 + $0xd0] sm:$0xf]
  %v2041 = vld [vmem:[%s8 + $0xd4] sm:$0xf]
  %v2042 = vld [vmem:[%s8 + $0xd8] sm:$0xf]
  %v2043 = vld [vmem:[%s8 + $0xdc] sm:$0xf]
  %v2044 = vld [vmem:[%s8 + $0xe0] sm:$0xf]
  %v2045 = vld [vmem:[%s8 + $0xe4] sm:$0xf]
  %v2046 = vld [vmem:[%s8 + $0xe8] sm:$0xf]
  %v2047 = vld [vmem:[%s8 + $0xec] sm:$0xf]
  %v2048 = vld [vmem:[%s8 + $0xf0] sm:$0xf]
  %v2049 = vld [vmem:[%s8 + $0xf4] sm:$0xf]
  %v2050 = vld [vmem:[%s8 + $0xf8] sm:$0xf]
  %v2051 = vld [vmem:[%s8 + $0xfc] sm:$0xf]
  %v2052 = vpack.c.bf16 %v1627, %v1627
  %v2053 = vpack.c.bf16 %v1629, %v1629
  %v2054 = vpack.c.bf16 %v1683, %v1683
  %v2055 = vpack.c.bf16 %v1685, %v1685
  %v2056 = vpack.c.bf16 %v1942, %v1942
  %v2057 = vpack.c.bf16 %v1944, %v1944
  %2058 = vmatpush.bf16.xpose.msra.mxu0 0
  %2059 = vmatpush.bf16.xpose.msra.mxu0 0
  %2060 = vmatpush.bf16.xpose.msra.mxu0 0
  %2061 = vmatpush.bf16.xpose.msra.mxu0 0
  %2062 = vmatpush.bf16.xpose.msra.mxu0 0
  %2063 = vmatpush.bf16.xpose.msra.mxu0 0
  %2064 = vmatpush.bf16.xpose.msra.mxu0 0
  %2065 = vmatpush.bf16.xpose.msra.mxu0 %v2054
  %2066 = vmatmul.bf16.gmra.mxu0 %v2052
  %v2067 = vpop.f32.mrf.mxu0
  %v2068 = vadd.f32 0.0, %v2067
  %v2069 = vpop.f32.mrf.mxu0
  %2070 = vdwg.mxu0
  %2071 = vmatpush.bf16.xpose.msra.mxu0 0
  %2072 = vmatpush.bf16.xpose.msra.mxu0 0
  %2073 = vmatpush.bf16.xpose.msra.mxu0 0
  %2074 = vmatpush.bf16.xpose.msra.mxu0 0
  %2075 = vmatpush.bf16.xpose.msra.mxu0 0
  %2076 = vmatpush.bf16.xpose.msra.mxu0 0
  %2077 = vmatpush.bf16.xpose.msra.mxu0 0
  %2078 = vmatpush.bf16.xpose.msra.mxu0 %v2055
  %2079 = vmatmul.bf16.gmra.mxu0 %v2053
  %v2080 = vpop.f32.mrf.mxu0
  %v2081 = vadd.f32 0.0, %v2080
  %v2082 = vpop.f32.mrf.mxu0
  %2083 = vdwg.mxu0
  %vm2084 = vcmask 64512
  %v2085 = vsel %vm2084, %v2068, -inf
  %2086 = vmax.xlane.f32.xlu0 %v2085
  %v2087 = vpop.xlane.xlu0 %2086
  %v2088 = vsel %vm2084, %v2081, -inf
  %2089 = vmax.xlane.f32.xlu0 %v2088
  %v2090 = vpop.xlane.xlu0 %2089
  %v2091 = vsub.f32 %v2068, %v2087
  %v2092 = vsub.f32 %v2081, %v2090
  %v2093 = vmul.f32 %v2091, 1.442695
  %v2094 = vpow.pop %v2093
  %v2095 = vmul.f32 %v2092, 1.442695
  %v2096 = vpow.pop %v2095
  %v2097 = vsel %vm2084, %v2094, 0.0
  %2098 = vadd.xlane.f32.xlu0 %v2097
  %v2099 = vpop.xlane.xlu0 %2098
  %v2100 = vsel %vm2084, %v2096, 0.0
  %2101 = vadd.xlane.f32.xlu0 %v2100
  %v2102 = vpop.xlane.xlu0 %2101
  %v2103 = vrcp.pop %v2099
  %v2104 = vmul.f32 %v2099, %v2103
  %v2105 = vsub.f32 1.0, %v2104
  %v2106 = vmul.f32 %v2103, %v2105
  %v2107 = vadd.f32 %v2103, %v2106
  %vm2108 = vweird.f32 %v2099
  %vm2109 = vweird.f32 %v2103
  %vm2110 = vmor %vm2108, %vm2109
  %v2111 = vsel %vm2110, %v2103, %v2107
  %v2112 = vand.u32 2147483647, %v2099
  %vm2113 = vcmp.eq.f32.partialorder %v2112, 8.507059e+37
  %v2114 = vand.u32 %v2099, 2147483648
  %v2115 = vor.u32 1.1754944e-38, %v2114
  %v2116 = vsel %vm2113, %v2115, %v2111
  %v2117 = vmul.f32 %v2094, %v2116
  %v2118 = vrcp.pop %v2102
  %v2119 = vmul.f32 %v2102, %v2118
  %v2120 = vsub.f32 1.0, %v2119
  %v2121 = vmul.f32 %v2118, %v2120
  %v2122 = vadd.f32 %v2118, %v2121
  %vm2123 = vweird.f32 %v2102
  %vm2124 = vweird.f32 %v2118
  %vm2125 = vmor %vm2123, %vm2124
  %v2126 = vsel %vm2125, %v2118, %v2122
  %v2127 = vand.u32 2147483647, %v2102
  %vm2128 = vcmp.eq.f32.partialorder %v2127, 8.507059e+37
  %v2129 = vand.u32 %v2102, 2147483648
  %v2130 = vor.u32 1.1754944e-38, %v2129
  %v2131 = vsel %vm2128, %v2130, %v2126
  %v2132 = vmul.f32 %v2096, %v2131
  %v2133 = vpack.c.bf16 %v2117, %v2117
  %v2134 = vpack.c.bf16 %v2132, %v2132
  %v2136 = vsel %vm2084, %v2133, 0
  %vm2138 = vcmask 1043456
  %v2140 = vsel %vm2138, %v2056, 0
  %2142 = vmatpush.bf16.msra.mxu0 0
  %2143 = vmatpush.bf16.msra.mxu0 0
  %2144 = vmatpush.bf16.msra.mxu0 0
  %2145 = vmatpush.bf16.msra.mxu0 0
  %2146 = vmatpush.bf16.msra.mxu0 0
  %2147 = vmatpush.bf16.msra.mxu0 0
  %2148 = vmatpush.bf16.msra.mxu0 0
  %2149 = vmatpush.bf16.msra.mxu0 %v2140
  %2150 = vmatmul.bf16.gmra.mxu0 %v2136
  %v2151 = vpop.f32.mrf.mxu0
  %v2152 = vadd.f32 0.0, %v2151
  %v2153 = vpop.f32.mrf.mxu0
  %2154 = vdwg.mxu0
  %v2156 = vsel %vm2084, %v2134, 0
  %v2159 = vsel %vm2138, %v2057, 0
  %2161 = vmatpush.bf16.msra.mxu0 0
  %2162 = vmatpush.bf16.msra.mxu0 0
  %2163 = vmatpush.bf16.msra.mxu0 0
  %2164 = vmatpush.bf16.msra.mxu0 0
  %2165 = vmatpush.bf16.msra.mxu0 0
  %2166 = vmatpush.bf16.msra.mxu0 0
  %2167 = vmatpush.bf16.msra.mxu0 0
  %2168 = vmatpush.bf16.msra.mxu0 %v2159
  %2169 = vmatmul.bf16.gmra.mxu0 %v2156
  %v2170 = vpop.f32.mrf.mxu0
  %v2171 = vadd.f32 0.0, %v2170
  %v2172 = vpop.f32.mrf.mxu0
  %2173 = vdwg.mxu0
  %v2174 = vpack.c.bf16 %v2171, %v2152
  %v2175 = vpack.c.bf16 %v1641, %v1641
  %v2176 = vpack.c.bf16 %v1643, %v1643
  %v2177 = vpack.c.bf16 %v1697, %v1697
  %v2178 = vpack.c.bf16 %v1699, %v1699
  %v2179 = vpack.c.bf16 %v1956, %v1956
  %v2180 = vpack.c.bf16 %v1958, %v1958
  %2181 = vmatpush.bf16.xpose.msra.mxu0 0
  %2182 = vmatpush.bf16.xpose.msra.mxu0 0
  %2183 = vmatpush.bf16.xpose.msra.mxu0 0
  %2184 = vmatpush.bf16.xpose.msra.mxu0 0
  %2185 = vmatpush.bf16.xpose.msra.mxu0 0
  %2186 = vmatpush.bf16.xpose.msra.mxu0 0
  %2187 = vmatpush.bf16.xpose.msra.mxu0 0
  %2188 = vmatpush.bf16.xpose.msra.mxu0 %v2177
  %2189 = vmatmul.bf16.gmra.mxu0 %v2175
  %v2190 = vpop.f32.mrf.mxu0
  %v2191 = vadd.f32 0.0, %v2190
  %v2192 = vpop.f32.mrf.mxu0
  %2193 = vdwg.mxu0
  %2194 = vmatpush.bf16.xpose.msra.mxu0 0
  %2195 = vmatpush.bf16.xpose.msra.mxu0 0
  %2196 = vmatpush.bf16.xpose.msra.mxu0 0
  %2197 = vmatpush.bf16.xpose.msra.mxu0 0
  %2198 = vmatpush.bf16.xpose.msra.mxu0 0
  %2199 = vmatpush.bf16.xpose.msra.mxu0 0
  %2200 = vmatpush.bf16.xpose.msra.mxu0 0
  %2201 = vmatpush.bf16.xpose.msra.mxu0 %v2178
  %2202 = vmatmul.bf16.gmra.mxu0 %v2176
  %v2203 = vpop.f32.mrf.mxu0
  %v2204 = vadd.f32 0.0, %v2203
  %v2205 = vpop.f32.mrf.mxu0
  %2206 = vdwg.mxu0
  %v2207 = vsel %vm2084, %v2191, -inf
  %2208 = vmax.xlane.f32.xlu0 %v2207
  %v2209 = vpop.xlane.xlu0 %2208
  %v2210 = vsel %vm2084, %v2204, -inf
  %2211 = vmax.xlane.f32.xlu0 %v2210
  %v2212 = vpop.xlane.xlu0 %2211
  %v2213 = vsub.f32 %v2191, %v2209
  %v2214 = vsub.f32 %v2204, %v2212
  %v2215 = vmul.f32 %v2213, 1.442695
  %v2216 = vpow.pop %v2215
  %v2217 = vmul.f32 %v2214, 1.442695
  %v2218 = vpow.pop %v2217
  %v2219 = vsel %vm2084, %v2216, 0.0
  %2220 = vadd.xlane.f32.xlu0 %v2219
  %v2221 = vpop.xlane.xlu0 %2220
  %v2222 = vsel %vm2084, %v2218, 0.0
  %2223 = vadd.xlane.f32.xlu0 %v2222
  %v2224 = vpop.xlane.xlu0 %2223
  %v2225 = vrcp.pop %v2221
  %v2226 = vmul.f32 %v2221, %v2225
  %v2227 = vsub.f32 1.0, %v2226
  %v2228 = vmul.f32 %v2225, %v2227
  %v2229 = vadd.f32 %v2225, %v2228
  %vm2230 = vweird.f32 %v2221
  %vm2231 = vweird.f32 %v2225
  %vm2232 = vmor %vm2230, %vm2231
  %v2233 = vsel %vm2232, %v2225, %v2229
  %v2234 = vand.u32 2147483647, %v2221
  %vm2235 = vcmp.eq.f32.partialorder %v2234, 8.507059e+37
  %v2236 = vand.u32 %v2221, 2147483648
  %v2237 = vor.u32 1.1754944e-38, %v2236
  %v2238 = vsel %vm2235, %v2237, %v2233
  %v2239 = vmul.f32 %v2216, %v2238
  %v2240 = vrcp.pop %v2224
  %v2241 = vmul.f32 %v2224, %v2240
  %v2242 = vsub.f32 1.0, %v2241
  %v2243 = vmul.f32 %v2240, %v2242
  %v2244 = vadd.f32 %v2240, %v2243
  %vm2245 = vweird.f32 %v2224
  %vm2246 = vweird.f32 %v2240
  %vm2247 = vmor %vm2245, %vm2246
  %v2248 = vsel %vm2247, %v2240, %v2244
  %v2249 = vand.u32 2147483647, %v2224
  %vm2250 = vcmp.eq.f32.partialorder %v2249, 8.507059e+37
  %v2251 = vand.u32 %v2224, 2147483648
  %v2252 = vor.u32 1.1754944e-38, %v2251
  %v2253 = vsel %vm2250, %v2252, %v2248
  %v2254 = vmul.f32 %v2218, %v2253
  %v2255 = vpack.c.bf16 %v2239, %v2239
  %v2256 = vpack.c.bf16 %v2254, %v2254
  %v2258 = vsel %vm2084, %v2255, 0
  %v2261 = vsel %vm2138, %v2179, 0
  %2263 = vmatpush.bf16.msra.mxu0 0
  %2264 = vmatpush.bf16.msra.mxu0 0
  %2265 = vmatpush.bf16.msra.mxu0 0
  %2266 = vmatpush.bf16.msra.mxu0 0
  %2267 = vmatpush.bf16.msra.mxu0 0
  %2268 = vmatpush.bf16.msra.mxu0 0
  %2269 = vmatpush.bf16.msra.mxu0 0
  %2270 = vmatpush.bf16.msra.mxu0 %v2261
  %2271 = vmatmul.bf16.gmra.mxu0 %v2258
  %v2272 = vpop.f32.mrf.mxu0
  %v2273 = vadd.f32 0.0, %v2272
  %v2274 = vpop.f32.mrf.mxu0
  %2275 = vdwg.mxu0
  %v2277 = vsel %vm2084, %v2256, 0
  %v2280 = vsel %vm2138, %v2180, 0
  %2282 = vmatpush.bf16.msra.mxu0 0
  %2283 = vmatpush.bf16.msra.mxu0 0
  %2284 = vmatpush.bf16.msra.mxu0 0
  %2285 = vmatpush.bf16.msra.mxu0 0
  %2286 = vmatpush.bf16.msra.mxu0 0
  %2287 = vmatpush.bf16.msra.mxu0 0
  %2288 = vmatpush.bf16.msra.mxu0 0
  %2289 = vmatpush.bf16.msra.mxu0 %v2280
  %2290 = vmatmul.bf16.gmra.mxu0 %v2277
  %v2291 = vpop.f32.mrf.mxu0
  %v2292 = vadd.f32 0.0, %v2291
  %v2293 = vpop.f32.mrf.mxu0
  %2294 = vdwg.mxu0
  %v2295 = vpack.c.bf16 %v2292, %v2273
  %v2312 = vunpack.c.l.b16 %v2004
  %v2313 = vunpack.c.l.b16 %v2005
  %v2314 = vunpack.c.l.b16 %v2006
  %v2315 = vunpack.c.l.b16 %v2007
  %v2316 = vunpack.c.l.b16 %v2008
  %v2317 = vunpack.c.l.b16 %v2009
  %v2318 = vunpack.c.l.b16 %v2010
  %v2319 = vunpack.c.l.b16 %v2011
  %v2320 = vunpack.c.l.b16 %v2012
  %v2321 = vunpack.c.l.b16 %v2013
  %v2322 = vunpack.c.l.b16 %v2014
  %v2323 = vunpack.c.l.b16 %v2015
  %v2324 = vunpack.c.l.b16 %v2016
  %v2325 = vunpack.c.l.b16 %v2017
  %v2326 = vunpack.c.l.b16 %v2018
  %v2327 = vunpack.c.l.b16 %v2019
  %v2328 = vpack.c.b16 %v2313, %v2312
  %v2329 = vpack.c.b16 %v2315, %v2314
  %v2330 = vpack.c.b16 %v2317, %v2316
  %v2331 = vpack.c.b16 %v2319, %v2318
  %v2332 = vpack.c.b16 %v2321, %v2320
  %v2333 = vpack.c.b16 %v2323, %v2322
  %v2334 = vpack.c.b16 %v2325, %v2324
  %v2335 = vpack.c.b16 %v2327, %v2326
  %2344 = vmatpush.bf16.msra.mxu0 %v2335
  %2345 = vmatpush.bf16.msra.mxu0 %v2334
  %2346 = vmatpush.bf16.msra.mxu0 %v2333
  %2347 = vmatpush.bf16.msra.mxu0 %v2332
  %2348 = vmatpush.bf16.msra.mxu0 %v2331
  %2349 = vmatpush.bf16.msra.mxu0 %v2330
  %2350 = vmatpush.bf16.msra.mxu0 %v2329
  %2351 = vmatpush.bf16.msra.mxu0 %v2328
  %2352 = vmatmul.bf16.gmra.mxu0 %v2295
  %v2353 = vpop.f32.mrf.mxu0
  %v2354 = vadd.f32 0.0, %v2353
  %v2355 = vpop.f32.mrf.mxu0
  %v2356 = vadd.f32 0.0, %v2355
  %2357 = vdwg.mxu0
  %v2374 = vunpack.c.l.b16 %v1988
  %v2375 = vunpack.c.l.b16 %v1989
  %v2376 = vunpack.c.l.b16 %v1990
  %v2377 = vunpack.c.l.b16 %v1991
  %v2378 = vunpack.c.l.b16 %v1992
  %v2379 = vunpack.c.l.b16 %v1993
  %v2380 = vunpack.c.l.b16 %v1994
  %v2381 = vunpack.c.l.b16 %v1995
  %v2382 = vunpack.c.l.b16 %v1996
  %v2383 = vunpack.c.l.b16 %v1997
  %v2384 = vunpack.c.l.b16 %v1998
  %v2385 = vunpack.c.l.b16 %v1999
  %v2386 = vunpack.c.l.b16 %v2000
  %v2387 = vunpack.c.l.b16 %v2001
  %v2388 = vunpack.c.l.b16 %v2002
  %v2389 = vunpack.c.l.b16 %v2003
  %v2390 = vpack.c.b16 %v2375, %v2374
  %v2391 = vpack.c.b16 %v2377, %v2376
  %v2392 = vpack.c.b16 %v2379, %v2378
  %v2393 = vpack.c.b16 %v2381, %v2380
  %v2394 = vpack.c.b16 %v2383, %v2382
  %v2395 = vpack.c.b16 %v2385, %v2384
  %v2396 = vpack.c.b16 %v2387, %v2386
  %v2397 = vpack.c.b16 %v2389, %v2388
  %2406 = vmatpush.bf16.msra.mxu0 %v2397
  %2407 = vmatpush.bf16.msra.mxu0 %v2396
  %2408 = vmatpush.bf16.msra.mxu0 %v2395
  %2409 = vmatpush.bf16.msra.mxu0 %v2394
  %2410 = vmatpush.bf16.msra.mxu0 %v2393
  %2411 = vmatpush.bf16.msra.mxu0 %v2392
  %2412 = vmatpush.bf16.msra.mxu0 %v2391
  %2413 = vmatpush.bf16.msra.mxu0 %v2390
  %2414 = vmatmul.bf16.gmra.mxu0 %v2174
  %v2415 = vpop.f32.mrf.mxu0
  %v2416 = vadd.f32 %v2354, %v2415
  %v2417 = vpop.f32.mrf.mxu0
  %v2418 = vadd.f32 %v2356, %v2417
  %2419 = vdwg.mxu0
  %v2420 = vpack.c.bf16 %v1655, %v1655
  %v2421 = vpack.c.bf16 %v1657, %v1657
  %v2422 = vpack.c.bf16 %v1711, %v1711
  %v2423 = vpack.c.bf16 %v1713, %v1713
  %v2424 = vpack.c.bf16 %v1970, %v1970
  %v2425 = vpack.c.bf16 %v1972, %v1972
  %2426 = vmatpush.bf16.xpose.msra.mxu0 0
  %2427 = vmatpush.bf16.xpose.msra.mxu0 0
  %2428 = vmatpush.bf16.xpose.msra.mxu0 0
  %2429 = vmatpush.bf16.xpose.msra.mxu0 0
  %2430 = vmatpush.bf16.xpose.msra.mxu0 0
  %2431 = vmatpush.bf16.xpose.msra.mxu0 0
  %2432 = vmatpush.bf16.xpose.msra.mxu0 0
  %2433 = vmatpush.bf16.xpose.msra.mxu0 %v2422
  %2434 = vmatmul.bf16.gmra.mxu0 %v2420
  %v2435 = vpop.f32.mrf.mxu0
  %v2436 = vadd.f32 0.0, %v2435
  %v2437 = vpop.f32.mrf.mxu0
  %2438 = vdwg.mxu0
  %2439 = vmatpush.bf16.xpose.msra.mxu0 0
  %2440 = vmatpush.bf16.xpose.msra.mxu0 0
  %2441 = vmatpush.bf16.xpose.msra.mxu0 0
  %2442 = vmatpush.bf16.xpose.msra.mxu0 0
  %2443 = vmatpush.bf16.xpose.msra.mxu0 0
  %2444 = vmatpush.bf16.xpose.msra.mxu0 0
  %2445 = vmatpush.bf16.xpose.msra.mxu0 0
  %2446 = vmatpush.bf16.xpose.msra.mxu0 %v2423
  %2447 = vmatmul.bf16.gmra.mxu0 %v2421
  %v2448 = vpop.f32.mrf.mxu0
  %v2449 = vadd.f32 0.0, %v2448
  %v2450 = vpop.f32.mrf.mxu0
  %2451 = vdwg.mxu0
  %v2452 = vsel %vm2084, %v2436, -inf
  %2453 = vmax.xlane.f32.xlu0 %v2452
  %v2454 = vpop.xlane.xlu0 %2453
  %v2455 = vsel %vm2084, %v2449, -inf
  %2456 = vmax.xlane.f32.xlu0 %v2455
  %v2457 = vpop.xlane.xlu0 %2456
  %v2458 = vsub.f32 %v2436, %v2454
  %v2459 = vsub.f32 %v2449, %v2457
  %v2460 = vmul.f32 %v2458, 1.442695
  %v2461 = vpow.pop %v2460
  %v2462 = vmul.f32 %v2459, 1.442695
  %v2463 = vpow.pop %v2462
  %v2464 = vsel %vm2084, %v2461, 0.0
  %2465 = vadd.xlane.f32.xlu0 %v2464
  %v2466 = vpop.xlane.xlu0 %2465
  %v2467 = vsel %vm2084, %v2463, 0.0
  %2468 = vadd.xlane.f32.xlu0 %v2467
  %v2469 = vpop.xlane.xlu0 %2468
  %v2470 = vrcp.pop %v2466
  %v2471 = vmul.f32 %v2466, %v2470
  %v2472 = vsub.f32 1.0, %v2471
  %v2473 = vmul.f32 %v2470, %v2472
  %v2474 = vadd.f32 %v2470, %v2473
  %vm2475 = vweird.f32 %v2466
  %vm2476 = vweird.f32 %v2470
  %vm2477 = vmor %vm2475, %vm2476
  %v2478 = vsel %vm2477, %v2470, %v2474
  %v2479 = vand.u32 2147483647, %v2466
  %vm2480 = vcmp.eq.f32.partialorder %v2479, 8.507059e+37
  %v2481 = vand.u32 %v2466, 2147483648
  %v2482 = vor.u32 1.1754944e-38, %v2481
  %v2483 = vsel %vm2480, %v2482, %v2478
  %v2484 = vmul.f32 %v2461, %v2483
  %v2485 = vrcp.pop %v2469
  %v2486 = vmul.f32 %v2469, %v2485
  %v2487 = vsub.f32 1.0, %v2486
  %v2488 = vmul.f32 %v2485, %v2487
  %v2489 = vadd.f32 %v2485, %v2488
  %vm2490 = vweird.f32 %v2469
  %vm2491 = vweird.f32 %v2485
  %vm2492 = vmor %vm2490, %vm2491
  %v2493 = vsel %vm2492, %v2485, %v2489
  %v2494 = vand.u32 2147483647, %v2469
  %vm2495 = vcmp.eq.f32.partialorder %v2494, 8.507059e+37
  %v2496 = vand.u32 %v2469, 2147483648
  %v2497 = vor.u32 1.1754944e-38, %v2496
  %v2498 = vsel %vm2495, %v2497, %v2493
  %v2499 = vmul.f32 %v2463, %v2498
  %v2500 = vpack.c.bf16 %v2484, %v2484
  %v2501 = vpack.c.bf16 %v2499, %v2499
  %v2503 = vsel %vm2084, %v2500, 0
  %v2506 = vsel %vm2138, %v2424, 0
  %2508 = vmatpush.bf16.msra.mxu0 0
  %2509 = vmatpush.bf16.msra.mxu0 0
  %2510 = vmatpush.bf16.msra.mxu0 0
  %2511 = vmatpush.bf16.msra.mxu0 0
  %2512 = vmatpush.bf16.msra.mxu0 0
  %2513 = vmatpush.bf16.msra.mxu0 0
  %2514 = vmatpush.bf16.msra.mxu0 0
  %2515 = vmatpush.bf16.msra.mxu0 %v2506
  %2516 = vmatmul.bf16.gmra.mxu0 %v2503
  %v2517 = vpop.f32.mrf.mxu0
  %v2518 = vadd.f32 0.0, %v2517
  %v2519 = vpop.f32.mrf.mxu0
  %2520 = vdwg.mxu0
  %v2522 = vsel %vm2084, %v2501, 0
  %v2525 = vsel %vm2138, %v2425, 0
  %2527 = vmatpush.bf16.msra.mxu0 0
  %2528 = vmatpush.bf16.msra.mxu0 0
  %2529 = vmatpush.bf16.msra.mxu0 0
  %2530 = vmatpush.bf16.msra.mxu0 0
  %2531 = vmatpush.bf16.msra.mxu0 0
  %2532 = vmatpush.bf16.msra.mxu0 0
  %2533 = vmatpush.bf16.msra.mxu0 0
  %2534 = vmatpush.bf16.msra.mxu0 %v2525
  %2535 = vmatmul.bf16.gmra.mxu0 %v2522
  %v2536 = vpop.f32.mrf.mxu0
  %v2537 = vadd.f32 0.0, %v2536
  %v2538 = vpop.f32.mrf.mxu0
  %2539 = vdwg.mxu0
  %v2540 = vpack.c.bf16 %v2537, %v2518
  %v2557 = vunpack.c.l.b16 %v2020
  %v2558 = vunpack.c.l.b16 %v2021
  %v2559 = vunpack.c.l.b16 %v2022
  %v2560 = vunpack.c.l.b16 %v2023
  %v2561 = vunpack.c.l.b16 %v2024
  %v2562 = vunpack.c.l.b16 %v2025
  %v2563 = vunpack.c.l.b16 %v2026
  %v2564 = vunpack.c.l.b16 %v2027
  %v2565 = vunpack.c.l.b16 %v2028
  %v2566 = vunpack.c.l.b16 %v2029
  %v2567 = vunpack.c.l.b16 %v2030
  %v2568 = vunpack.c.l.b16 %v2031
  %v2569 = vunpack.c.l.b16 %v2032
  %v2570 = vunpack.c.l.b16 %v2033
  %v2571 = vunpack.c.l.b16 %v2034
  %v2572 = vunpack.c.l.b16 %v2035
  %v2573 = vpack.c.b16 %v2558, %v2557
  %v2574 = vpack.c.b16 %v2560, %v2559
  %v2575 = vpack.c.b16 %v2562, %v2561
  %v2576 = vpack.c.b16 %v2564, %v2563
  %v2577 = vpack.c.b16 %v2566, %v2565
  %v2578 = vpack.c.b16 %v2568, %v2567
  %v2579 = vpack.c.b16 %v2570, %v2569
  %v2580 = vpack.c.b16 %v2572, %v2571
  %2589 = vmatpush.bf16.msra.mxu0 %v2580
  %2590 = vmatpush.bf16.msra.mxu0 %v2579
  %2591 = vmatpush.bf16.msra.mxu0 %v2578
  %2592 = vmatpush.bf16.msra.mxu0 %v2577
  %2593 = vmatpush.bf16.msra.mxu0 %v2576
  %2594 = vmatpush.bf16.msra.mxu0 %v2575
  %2595 = vmatpush.bf16.msra.mxu0 %v2574
  %2596 = vmatpush.bf16.msra.mxu0 %v2573
  %2597 = vmatmul.bf16.gmra.mxu0 %v2540
  %v2598 = vpop.f32.mrf.mxu0
  %v2599 = vadd.f32 0.0, %v2598
  %v2600 = vpop.f32.mrf.mxu0
  %v2601 = vadd.f32 0.0, %v2600
  %2602 = vdwg.mxu0
  %v2603 = vadd.f32 %v2416, %v2599
  %v2604 = vadd.f32 %v2418, %v2601
  %v2605 = vpack.c.bf16 %v1669, %v1669
  %v2606 = vpack.c.bf16 %v1671, %v1671
  %v2607 = vpack.c.bf16 %v1725, %v1725
  %v2608 = vpack.c.bf16 %v1727, %v1727
  %v2609 = vpack.c.bf16 %v1984, %v1984
  %v2610 = vpack.c.bf16 %v1986, %v1986
  %2611 = vmatpush.bf16.xpose.msra.mxu0 0
  %2612 = vmatpush.bf16.xpose.msra.mxu0 0
  %2613 = vmatpush.bf16.xpose.msra.mxu0 0
  %2614 = vmatpush.bf16.xpose.msra.mxu0 0
  %2615 = vmatpush.bf16.xpose.msra.mxu0 0
  %2616 = vmatpush.bf16.xpose.msra.mxu0 0
  %2617 = vmatpush.bf16.xpose.msra.mxu0 0
  %2618 = vmatpush.bf16.xpose.msra.mxu0 %v2607
  %2619 = vmatmul.bf16.gmra.mxu0 %v2605
  %v2620 = vpop.f32.mrf.mxu0
  %v2621 = vadd.f32 0.0, %v2620
  %v2622 = vpop.f32.mrf.mxu0
  %2623 = vdwg.mxu0
  %2624 = vmatpush.bf16.xpose.msra.mxu0 0
  %2625 = vmatpush.bf16.xpose.msra.mxu0 0
  %2626 = vmatpush.bf16.xpose.msra.mxu0 0
  %2627 = vmatpush.bf16.xpose.msra.mxu0 0
  %2628 = vmatpush.bf16.xpose.msra.mxu0 0
  %2629 = vmatpush.bf16.xpose.msra.mxu0 0
  %2630 = vmatpush.bf16.xpose.msra.mxu0 0
  %2631 = vmatpush.bf16.xpose.msra.mxu0 %v2608
  %2632 = vmatmul.bf16.gmra.mxu0 %v2606
  %v2633 = vpop.f32.mrf.mxu0
  %v2634 = vadd.f32 0.0, %v2633
  %v2635 = vpop.f32.mrf.mxu0
  %2636 = vdwg.mxu0
  %v2637 = vsel %vm2084, %v2621, -inf
  %2638 = vmax.xlane.f32.xlu0 %v2637
  %v2639 = vpop.xlane.xlu0 %2638
  %v2640 = vsel %vm2084, %v2634, -inf
  %2641 = vmax.xlane.f32.xlu0 %v2640
  %v2642 = vpop.xlane.xlu0 %2641
  %v2643 = vsub.f32 %v2621, %v2639
  %v2644 = vsub.f32 %v2634, %v2642
  %v2645 = vmul.f32 %v2643, 1.442695
  %v2646 = vpow.pop %v2645
  %v2647 = vmul.f32 %v2644, 1.442695
  %v2648 = vpow.pop %v2647
  %v2649 = vsel %vm2084, %v2646, 0.0
  %2650 = vadd.xlane.f32.xlu0 %v2649
  %v2651 = vpop.xlane.xlu0 %2650
  %v2652 = vsel %vm2084, %v2648, 0.0
  %2653 = vadd.xlane.f32.xlu0 %v2652
  %v2654 = vpop.xlane.xlu0 %2653
  %v2655 = vrcp.pop %v2651
  %v2656 = vmul.f32 %v2651, %v2655
  %v2657 = vsub.f32 1.0, %v2656
  %v2658 = vmul.f32 %v2655, %v2657
  %v2659 = vadd.f32 %v2655, %v2658
  %vm2660 = vweird.f32 %v2651
  %vm2661 = vweird.f32 %v2655
  %vm2662 = vmor %vm2660, %vm2661
  %v2663 = vsel %vm2662, %v2655, %v2659
  %v2664 = vand.u32 2147483647, %v2651
  %vm2665 = vcmp.eq.f32.partialorder %v2664, 8.507059e+37
  %v2666 = vand.u32 %v2651, 2147483648
  %v2667 = vor.u32 1.1754944e-38, %v2666
  %v2668 = vsel %vm2665, %v2667, %v2663
  %v2669 = vmul.f32 %v2646, %v2668
  %v2670 = vrcp.pop %v2654
  %v2671 = vmul.f32 %v2654, %v2670
  %v2672 = vsub.f32 1.0, %v2671
  %v2673 = vmul.f32 %v2670, %v2672
  %v2674 = vadd.f32 %v2670, %v2673
  %vm2675 = vweird.f32 %v2654
  %vm2676 = vweird.f32 %v2670
  %vm2677 = vmor %vm2675, %vm2676
  %v2678 = vsel %vm2677, %v2670, %v2674
  %v2679 = vand.u32 2147483647, %v2654
  %vm2680 = vcmp.eq.f32.partialorder %v2679, 8.507059e+37
  %v2681 = vand.u32 %v2654, 2147483648
  %v2682 = vor.u32 1.1754944e-38, %v2681
  %v2683 = vsel %vm2680, %v2682, %v2678
  %v2684 = vmul.f32 %v2648, %v2683
  %v2685 = vpack.c.bf16 %v2669, %v2669
  %v2686 = vpack.c.bf16 %v2684, %v2684
  %v2688 = vsel %vm2084, %v2685, 0
  %v2691 = vsel %vm2138, %v2609, 0
  %2693 = vmatpush.bf16.msra.mxu0 0
  %2694 = vmatpush.bf16.msra.mxu0 0
  %2695 = vmatpush.bf16.msra.mxu0 0
  %2696 = vmatpush.bf16.msra.mxu0 0
  %2697 = vmatpush.bf16.msra.mxu0 0
  %2698 = vmatpush.bf16.msra.mxu0 0
  %2699 = vmatpush.bf16.msra.mxu0 0
  %2700 = vmatpush.bf16.msra.mxu0 %v2691
  %2701 = vmatmul.bf16.gmra.mxu0 %v2688
  %v2702 = vpop.f32.mrf.mxu0
  %v2703 = vadd.f32 0.0, %v2702
  %v2704 = vpop.f32.mrf.mxu0
  %2705 = vdwg.mxu0
  %v2707 = vsel %vm2084, %v2686, 0
  %v2710 = vsel %vm2138, %v2610, 0
  %2712 = vmatpush.bf16.msra.mxu0 0
  %2713 = vmatpush.bf16.msra.mxu0 0
  %2714 = vmatpush.bf16.msra.mxu0 0
  %2715 = vmatpush.bf16.msra.mxu0 0
  %2716 = vmatpush.bf16.msra.mxu0 0
  %2717 = vmatpush.bf16.msra.mxu0 0
  %2718 = vmatpush.bf16.msra.mxu0 0
  %2719 = vmatpush.bf16.msra.mxu0 %v2710
  %2720 = vmatmul.bf16.gmra.mxu0 %v2707
  %v2721 = vpop.f32.mrf.mxu0
  %v2722 = vadd.f32 0.0, %v2721
  %v2723 = vpop.f32.mrf.mxu0
  %2724 = vdwg.mxu0
  %v2725 = vpack.c.bf16 %v2722, %v2703
  %v2742 = vunpack.c.l.b16 %v2036
  %v2743 = vunpack.c.l.b16 %v2037
  %v2744 = vunpack.c.l.b16 %v2038
  %v2745 = vunpack.c.l.b16 %v2039
  %v2746 = vunpack.c.l.b16 %v2040
  %v2747 = vunpack.c.l.b16 %v2041
  %v2748 = vunpack.c.l.b16 %v2042
  %v2749 = vunpack.c.l.b16 %v2043
  %v2750 = vunpack.c.l.b16 %v2044
  %v2751 = vunpack.c.l.b16 %v2045
  %v2752 = vunpack.c.l.b16 %v2046
  %v2753 = vunpack.c.l.b16 %v2047
  %v2754 = vunpack.c.l.b16 %v2048
  %v2755 = vunpack.c.l.b16 %v2049
  %v2756 = vunpack.c.l.b16 %v2050
  %v2757 = vunpack.c.l.b16 %v2051
  %v2758 = vpack.c.b16 %v2743, %v2742
  %v2759 = vpack.c.b16 %v2745, %v2744
  %v2760 = vpack.c.b16 %v2747, %v2746
  %v2761 = vpack.c.b16 %v2749, %v2748
  %v2762 = vpack.c.b16 %v2751, %v2750
  %v2763 = vpack.c.b16 %v2753, %v2752
  %v2764 = vpack.c.b16 %v2755, %v2754
  %v2765 = vpack.c.b16 %v2757, %v2756
  %2774 = vmatpush.bf16.msra.mxu0 %v2765
  %2775 = vmatpush.bf16.msra.mxu0 %v2764
  %2776 = vmatpush.bf16.msra.mxu0 %v2763
  %2777 = vmatpush.bf16.msra.mxu0 %v2762
  %2778 = vmatpush.bf16.msra.mxu0 %v2761
  %2779 = vmatpush.bf16.msra.mxu0 %v2760
  %2780 = vmatpush.bf16.msra.mxu0 %v2759
  %2781 = vmatpush.bf16.msra.mxu0 %v2758
  %2782 = vmatmul.bf16.gmra.mxu0 %v2725
  %v2783 = vpop.f32.mrf.mxu0
  %v2784 = vadd.f32 0.0, %v2783
  %v2785 = vpop.f32.mrf.mxu0
  %v2786 = vadd.f32 0.0, %v2785
  %2787 = vdwg.mxu0
  %v2788 = vadd.f32 %v2603, %v2784
  %v2789 = vadd.f32 %v2604, %v2786
  %v2790 = vld [vmem:[%s9] sm:$0x1]
  %v2792 = vperm.slane %v2790, 0
  %v2794 = vadd.f32 %v2788, %v2792
  %v2795 = vadd.f32 %v2789, %v2792
  %v2796 = vadd.f32 %v84, %v2794
  %v2797 = vadd.f32 %v85, %v2795
  %2798 = vadd.xlane.f32.xlu0 %v2796
  %v2799 = vpop.xlane.xlu0 %2798
  %2800 = vadd.xlane.f32.xlu0 %v2797
  %v2801 = vpop.xlane.xlu0 %2800
  %v2802 = vmul.f32 %v2799, 0.03125
  %v2803 = vmul.f32 %v2801, 0.03125
  %v2804 = vmul.f32 %v2796, %v2796
  %v2805 = vmul.f32 %v2797, %v2797
  %2806 = vadd.xlane.f32.xlu0 %v2804
  %v2807 = vpop.xlane.xlu0 %2806
  %2808 = vadd.xlane.f32.xlu0 %v2805
  %v2809 = vpop.xlane.xlu0 %2808
  %v2810 = vmul.f32 %v2807, 0.03125
  %v2811 = vmul.f32 %v2809, 0.03125
  %v2812 = vmul.f32 %v2802, %v2802
  %v2813 = vmul.f32 %v2803, %v2803
  %v2814 = vsub.f32 %v2810, %v2812
  %v2815 = vsub.f32 %v2811, %v2813
  %v2816 = vsub.f32 %v2796, %v2802
  %v2817 = vsub.f32 %v2797, %v2803
  %v2818 = vadd.f32 %v2814, 1e-05
  %v2819 = vadd.f32 %v2815, 1e-05
  %v2820 = vrsqrt.pop %v2818
  %v2821 = vmul.f32 %v2820, %v2818
  %v2822 = vmul.f32 %v2821, %v2820
  %v2823 = vmul.f32 0.5, %v2822
  %v2824 = vsub.f32 1.5, %v2823
  %v2825 = vmul.f32 %v2820, %v2824
  %vm2826 = vweird.f32 %v2818
  %vm2827 = vweird.f32 %v2820
  %vm2828 = vmor %vm2826, %vm2827
  %v2829 = vsel %vm2828, %v2820, %v2825
  %v2830 = vrsqrt.pop %v2819
  %v2831 = vmul.f32 %v2830, %v2819
  %v2832 = vmul.f32 %v2831, %v2830
  %v2833 = vmul.f32 0.5, %v2832
  %v2834 = vsub.f32 1.5, %v2833
  %v2835 = vmul.f32 %v2830, %v2834
  %vm2836 = vweird.f32 %v2819
  %vm2837 = vweird.f32 %v2830
  %vm2838 = vmor %vm2836, %vm2837
  %v2839 = vsel %vm2838, %v2830, %v2835
  %v2840 = vmul.f32 %v2816, %v2829
  %v2841 = vmul.f32 %v2817, %v2839
  %v2842 = vperm.slane %v1210, 0
  %v2843 = vmul.f32 %v2840, %v2842
  %v2844 = vmul.f32 %v2841, %v2842
  %v2845 = vperm.slane %v1211, 0
  %v2846 = vadd.f32 %v2843, %v2845
  %v2847 = vadd.f32 %v2844, %v2845
  %v2848 = vadd.f32 %v2846, %v86
  %v2849 = vadd.f32 %v2847, %v87
  %v2850 = vld [vmem:[%s10] sm:$0xff]
  %v2851 = vld [vmem:[%s10 + $0x8] sm:$0xff]
  %v2852 = vld [vmem:[%s10 + $0x10] sm:$0xff]
  %v2853 = vld [vmem:[%s10 + $0x18] sm:$0xff]
  %v2854 = vld [vmem:[%s10 + $0x20] sm:$0xff]
  %v2855 = vld [vmem:[%s10 + $0x28] sm:$0xff]
  %v2856 = vld [vmem:[%s10 + $0x30] sm:$0xff]
  %v2857 = vld [vmem:[%s10 + $0x38] sm:$0xff]
  %v2858 = vld [vmem:[%s10 + $0x40] sm:$0xff]
  %v2859 = vld [vmem:[%s10 + $0x48] sm:$0xff]
  %v2860 = vld [vmem:[%s10 + $0x50] sm:$0xff]
  %v2861 = vld [vmem:[%s10 + $0x58] sm:$0xff]
  %v2862 = vld [vmem:[%s10 + $0x60] sm:$0xff]
  %v2863 = vld [vmem:[%s10 + $0x68] sm:$0xff]
  %v2864 = vld [vmem:[%s10 + $0x70] sm:$0xff]
  %v2865 = vld [vmem:[%s10 + $0x78] sm:$0xff]
  %v2866 = vld [vmem:[%s10 + $0x80] sm:$0xff]
  %v2867 = vld [vmem:[%s10 + $0x88] sm:$0xff]
  %v2868 = vld [vmem:[%s10 + $0x90] sm:$0xff]
  %v2869 = vld [vmem:[%s10 + $0x98] sm:$0xff]
  %v2870 = vld [vmem:[%s10 + $0xa0] sm:$0xff]
  %v2871 = vld [vmem:[%s10 + $0xa8] sm:$0xff]
  %v2872 = vld [vmem:[%s10 + $0xb0] sm:$0xff]
  %v2873 = vld [vmem:[%s10 + $0xb8] sm:$0xff]
  %v2874 = vld [vmem:[%s10 + $0xc0] sm:$0xff]
  %v2875 = vld [vmem:[%s10 + $0xc8] sm:$0xff]
  %v2876 = vld [vmem:[%s10 + $0xd0] sm:$0xff]
  %v2877 = vld [vmem:[%s10 + $0xd8] sm:$0xff]
  %v2878 = vld [vmem:[%s10 + $0xe0] sm:$0xff]
  %v2879 = vld [vmem:[%s10 + $0xe8] sm:$0xff]
  %v2880 = vld [vmem:[%s10 + $0xf0] sm:$0xff]
  %v2881 = vld [vmem:[%s10 + $0xf8] sm:$0xff]
  %v2882 = vpack.c.bf16 %v2849, %v2848
  %v2883 = vld [vmem:[%s11] sm:$0xf]
  %v2885 = vperm.slane %v2883, 0
  %v2886 = vperm.slane %v2883, 1
  %v2887 = vperm.slane %v2883, 2
  %v2888 = vperm.slane %v2883, 3
  %v2925 = vunpack.c.l.b16 %v2850
  %v2926 = vunpack.c.h.b16 %v2850
  %v2927 = vunpack.c.l.b16 %v2851
  %v2928 = vunpack.c.h.b16 %v2851
  %v2929 = vunpack.c.l.b16 %v2852
  %v2930 = vunpack.c.h.b16 %v2852
  %v2931 = vunpack.c.l.b16 %v2853
  %v2932 = vunpack.c.h.b16 %v2853
  %v2933 = vunpack.c.l.b16 %v2854
  %v2934 = vunpack.c.h.b16 %v2854
  %v2935 = vunpack.c.l.b16 %v2855
  %v2936 = vunpack.c.h.b16 %v2855
  %v2937 = vunpack.c.l.b16 %v2856
  %v2938 = vunpack.c.h.b16 %v2856
  %v2939 = vunpack.c.l.b16 %v2857
  %v2940 = vunpack.c.h.b16 %v2857
  %v2941 = vunpack.c.l.b16 %v2858
  %v2942 = vunpack.c.h.b16 %v2858
  %v2943 = vunpack.c.l.b16 %v2859
  %v2944 = vunpack.c.h.b16 %v2859
  %v2945 = vunpack.c.l.b16 %v2860
  %v2946 = vunpack.c.h.b16 %v2860
  %v2947 = vunpack.c.l.b16 %v2861
  %v2948 = vunpack.c.h.b16 %v2861
  %v2949 = vunpack.c.l.b16 %v2862
  %v2950 = vunpack.c.h.b16 %v2862
  %v2951 = vunpack.c.l.b16 %v2863
  %v2952 = vunpack.c.h.b16 %v2863
  %v2953 = vunpack.c.l.b16 %v2864
  %v2954 = vunpack.c.h.b16 %v2864
  %v2955 = vunpack.c.l.b16 %v2865
  %v2956 = vunpack.c.h.b16 %v2865
  %v2957 = vunpack.c.l.b16 %v2866
  %v2958 = vunpack.c.h.b16 %v2866
  %v2959 = vunpack.c.l.b16 %v2867
  %v2960 = vunpack.c.h.b16 %v2867
  %v2961 = vunpack.c.l.b16 %v2868
  %v2962 = vunpack.c.h.b16 %v2868
  %v2963 = vunpack.c.l.b16 %v2869
  %v2964 = vunpack.c.h.b16 %v2869
  %v2965 = vunpack.c.l.b16 %v2870
  %v2966 = vunpack.c.h.b16 %v2870
  %v2967 = vunpack.c.l.b16 %v2871
  %v2968 = vunpack.c.h.b16 %v2871
  %v2969 = vunpack.c.l.b16 %v2872
  %v2970 = vunpack.c.h.b16 %v2872
  %v2971 = vunpack.c.l.b16 %v2873
  %v2972 = vunpack.c.h.b16 %v2873
  %v2973 = vunpack.c.l.b16 %v2874
  %v2974 = vunpack.c.h.b16 %v2874
  %v2975 = vunpack.c.l.b16 %v2875
  %v2976 = vunpack.c.h.b16 %v2875
  %v2977 = vunpack.c.l.b16 %v2876
  %v2978 = vunpack.c.h.b16 %v2876
  %v2979 = vunpack.c.l.b16 %v2877
  %v2980 = vunpack.c.h.b16 %v2877
  %v2981 = vunpack.c.l.b16 %v2878
  %v2982 = vunpack.c.h.b16 %v2878
  %v2983 = vunpack.c.l.b16 %v2879
  %v2984 = vunpack.c.h.b16 %v2879
  %v2985 = vunpack.c.l.b16 %v2880
  %v2986 = vunpack.c.h.b16 %v2880
  %v2987 = vunpack.c.l.b16 %v2881
  %v2988 = vunpack.c.h.b16 %v2881
  %v2989 = vpack.c.b16 %v2929, %v2925
  %v2990 = vpack.c.b16 %v2930, %v2926
  %v2991 = vpack.c.b16 %v2931, %v2927
  %v2992 = vpack.c.b16 %v2932, %v2928
  %v2993 = vpack.c.b16 %v2937, %v2933
  %v2994 = vpack.c.b16 %v2938, %v2934
  %v2995 = vpack.c.b16 %v2939, %v2935
  %v2996 = vpack.c.b16 %v2940, %v2936
  %v2997 = vpack.c.b16 %v2945, %v2941
  %v2998 = vpack.c.b16 %v2946, %v2942
  %v2999 = vpack.c.b16 %v2947, %v2943
  %v3000 = vpack.c.b16 %v2948, %v2944
  %v3001 = vpack.c.b16 %v2953, %v2949
  %v3002 = vpack.c.b16 %v2954, %v2950
  %v3003 = vpack.c.b16 %v2955, %v2951
  %v3004 = vpack.c.b16 %v2956, %v2952
  %v3005 = vpack.c.b16 %v2961, %v2957
  %v3006 = vpack.c.b16 %v2962, %v2958
  %v3007 = vpack.c.b16 %v2963, %v2959
  %v3008 = vpack.c.b16 %v2964, %v2960
  %v3009 = vpack.c.b16 %v2969, %v2965
  %v3010 = vpack.c.b16 %v2970, %v2966
  %v3011 = vpack.c.b16 %v2971, %v2967
  %v3012 = vpack.c.b16 %v2972, %v2968
  %v3013 = vpack.c.b16 %v2977, %v2973
  %v3014 = vpack.c.b16 %v2978, %v2974
  %v3015 = vpack.c.b16 %v2979, %v2975
  %v3016 = vpack.c.b16 %v2980, %v2976
  %v3017 = vpack.c.b16 %v2985, %v2981
  %v3018 = vpack.c.b16 %v2986, %v2982
  %v3019 = vpack.c.b16 %v2987, %v2983
  %v3020 = vpack.c.b16 %v2988, %v2984
  %3053 = vmatpush.bf16.msra.mxu0 %v3017
  %3054 = vmatpush.bf16.msra.mxu0 %v3013
  %3055 = vmatpush.bf16.msra.mxu0 %v3009
  %3056 = vmatpush.bf16.msra.mxu0 %v3005
  %3057 = vmatpush.bf16.msra.mxu0 %v3001
  %3058 = vmatpush.bf16.msra.mxu0 %v2997
  %3059 = vmatpush.bf16.msra.mxu0 %v2993
  %3060 = vmatpush.bf16.msra.mxu0 %v2989
  %3061 = vmatmul.bf16.gmra.mxu0 %v2882
  %v3062 = vpop.f32.mrf.mxu0
  %v3063 = vadd.f32 %v2885, %v3062
  %v3064 = vpop.f32.mrf.mxu0
  %v3065 = vadd.f32 %v2885, %v3064
  %3066 = vdwg.mxu0
  %3067 = vmatpush.bf16.msra.mxu0 %v3018
  %3068 = vmatpush.bf16.msra.mxu0 %v3014
  %3069 = vmatpush.bf16.msra.mxu0 %v3010
  %3070 = vmatpush.bf16.msra.mxu0 %v3006
  %3071 = vmatpush.bf16.msra.mxu0 %v3002
  %3072 = vmatpush.bf16.msra.mxu0 %v2998
  %3073 = vmatpush.bf16.msra.mxu0 %v2994
  %3074 = vmatpush.bf16.msra.mxu0 %v2990
  %3075 = vmatmul.bf16.gmra.mxu0 %v2882
  %v3076 = vpop.f32.mrf.mxu0
  %v3077 = vadd.f32 %v2886, %v3076
  %v3078 = vpop.f32.mrf.mxu0
  %v3079 = vadd.f32 %v2886, %v3078
  %3080 = vdwg.mxu0
  %3081 = vmatpush.bf16.msra.mxu0 %v3019
  %3082 = vmatpush.bf16.msra.mxu0 %v3015
  %3083 = vmatpush.bf16.msra.mxu0 %v3011
  %3084 = vmatpush.bf16.msra.mxu0 %v3007
  %3085 = vmatpush.bf16.msra.mxu0 %v3003
  %3086 = vmatpush.bf16.msra.mxu0 %v2999
  %3087 = vmatpush.bf16.msra.mxu0 %v2995
  %3088 = vmatpush.bf16.msra.mxu0 %v2991
  %3089 = vmatmul.bf16.gmra.mxu0 %v2882
  %v3090 = vpop.f32.mrf.mxu0
  %v3091 = vadd.f32 %v2887, %v3090
  %v3092 = vpop.f32.mrf.mxu0
  %v3093 = vadd.f32 %v2887, %v3092
  %3094 = vdwg.mxu0
  %3095 = vmatpush.bf16.msra.mxu0 %v3020
  %3096 = vmatpush.bf16.msra.mxu0 %v3016
  %3097 = vmatpush.bf16.msra.mxu0 %v3012
  %3098 = vmatpush.bf16.msra.mxu0 %v3008
  %3099 = vmatpush.bf16.msra.mxu0 %v3004
  %3100 = vmatpush.bf16.msra.mxu0 %v3000
  %3101 = vmatpush.bf16.msra.mxu0 %v2996
  %3102 = vmatpush.bf16.msra.mxu0 %v2992
  %3103 = vmatmul.bf16.gmra.mxu0 %v2882
  %v3104 = vpop.f32.mrf.mxu0
  %v3105 = vadd.f32 %v2888, %v3104
  %v3106 = vpop.f32.mrf.mxu0
  %v3107 = vadd.f32 %v2888, %v3106
  %3108 = vdwg.mxu0
  %v3109 = vld [vmem:[%s12] sm:$0xf]
  %v3110 = vld [vmem:[%s12 + $0x4] sm:$0xf]
  %v3111 = vld [vmem:[%s12 + $0x8] sm:$0xf]
  %v3112 = vld [vmem:[%s12 + $0xc] sm:$0xf]
  %v3113 = vld [vmem:[%s12 + $0x10] sm:$0xf]
  %v3114 = vld [vmem:[%s12 + $0x14] sm:$0xf]
  %v3115 = vld [vmem:[%s12 + $0x18] sm:$0xf]
  %v3116 = vld [vmem:[%s12 + $0x1c] sm:$0xf]
  %v3117 = vld [vmem:[%s12 + $0x20] sm:$0xf]
  %v3118 = vld [vmem:[%s12 + $0x24] sm:$0xf]
  %v3119 = vld [vmem:[%s12 + $0x28] sm:$0xf]
  %v3120 = vld [vmem:[%s12 + $0x2c] sm:$0xf]
  %v3121 = vld [vmem:[%s12 + $0x30] sm:$0xf]
  %v3122 = vld [vmem:[%s12 + $0x34] sm:$0xf]
  %v3123 = vld [vmem:[%s12 + $0x38] sm:$0xf]
  %v3124 = vld [vmem:[%s12 + $0x3c] sm:$0xf]
  %v3125 = vld [vmem:[%s12 + $0x40] sm:$0xf]
  %v3126 = vld [vmem:[%s12 + $0x44] sm:$0xf]
  %v3127 = vld [vmem:[%s12 + $0x48] sm:$0xf]
  %v3128 = vld [vmem:[%s12 + $0x4c] sm:$0xf]
  %v3129 = vld [vmem:[%s12 + $0x50] sm:$0xf]
  %v3130 = vld [vmem:[%s12 + $0x54] sm:$0xf]
  %v3131 = vld [vmem:[%s12 + $0x58] sm:$0xf]
  %v3132 = vld [vmem:[%s12 + $0x5c] sm:$0xf]
  %v3133 = vld [vmem:[%s12 + $0x60] sm:$0xf]
  %v3134 = vld [vmem:[%s12 + $0x64] sm:$0xf]
  %v3135 = vld [vmem:[%s12 + $0x68] sm:$0xf]
  %v3136 = vld [vmem:[%s12 + $0x6c] sm:$0xf]
  %v3137 = vld [vmem:[%s12 + $0x70] sm:$0xf]
  %v3138 = vld [vmem:[%s12 + $0x74] sm:$0xf]
  %v3139 = vld [vmem:[%s12 + $0x78] sm:$0xf]
  %v3140 = vld [vmem:[%s12 + $0x7c] sm:$0xf]
  %v3141 = vld [vmem:[%s12 + $0x80] sm:$0xf]
  %v3142 = vld [vmem:[%s12 + $0x84] sm:$0xf]
  %v3143 = vld [vmem:[%s12 + $0x88] sm:$0xf]
  %v3144 = vld [vmem:[%s12 + $0x8c] sm:$0xf]
  %v3145 = vld [vmem:[%s12 + $0x90] sm:$0xf]
  %v3146 = vld [vmem:[%s12 + $0x94] sm:$0xf]
  %v3147 = vld [vmem:[%s12 + $0x98] sm:$0xf]
  %v3148 = vld [vmem:[%s12 + $0x9c] sm:$0xf]
  %v3149 = vld [vmem:[%s12 + $0xa0] sm:$0xf]
  %v3150 = vld [vmem:[%s12 + $0xa4] sm:$0xf]
  %v3151 = vld [vmem:[%s12 + $0xa8] sm:$0xf]
  %v3152 = vld [vmem:[%s12 + $0xac] sm:$0xf]
  %v3153 = vld [vmem:[%s12 + $0xb0] sm:$0xf]
  %v3154 = vld [vmem:[%s12 + $0xb4] sm:$0xf]
  %v3155 = vld [vmem:[%s12 + $0xb8] sm:$0xf]
  %v3156 = vld [vmem:[%s12 + $0xbc] sm:$0xf]
  %v3157 = vld [vmem:[%s12 + $0xc0] sm:$0xf]
  %v3158 = vld [vmem:[%s12 + $0xc4] sm:$0xf]
  %v3159 = vld [vmem:[%s12 + $0xc8] sm:$0xf]
  %v3160 = vld [vmem:[%s12 + $0xcc] sm:$0xf]
  %v3161 = vld [vmem:[%s12 + $0xd0] sm:$0xf]
  %v3162 = vld [vmem:[%s12 + $0xd4] sm:$0xf]
  %v3163 = vld [vmem:[%s12 + $0xd8] sm:$0xf]
  %v3164 = vld [vmem:[%s12 + $0xdc] sm:$0xf]
  %v3165 = vld [vmem:[%s12 + $0xe0] sm:$0xf]
  %v3166 = vld [vmem:[%s12 + $0xe4] sm:$0xf]
  %v3167 = vld [vmem:[%s12 + $0xe8] sm:$0xf]
  %v3168 = vld [vmem:[%s12 + $0xec] sm:$0xf]
  %v3169 = vld [vmem:[%s12 + $0xf0] sm:$0xf]
  %v3170 = vld [vmem:[%s12 + $0xf4] sm:$0xf]
  %v3171 = vld [vmem:[%s12 + $0xf8] sm:$0xf]
  %v3172 = vld [vmem:[%s12 + $0xfc] sm:$0xf]
  %v3173 = vpack.c.bf16 %v3063, %v3063
  %v3174 = vpack.c.bf16 %v3065, %v3065
  %v3175 = vpack.c.bf16 %v508, %v508
  %v3176 = vpack.c.bf16 %v510, %v510
  %v3177 = vpack.c.bf16 %v513, %v513
  %v3178 = vpack.c.bf16 %v515, %v515
  %v3179 = vpack.c.bf16 %v1068, %v1068
  %v3180 = vpack.c.bf16 %v1070, %v1070
  %v3181 = vpack.c.bf16 %v1073, %v1073
  %v3182 = vpack.c.bf16 %v1075, %v1075
  %v3185 = vunpack.c.l.b16 %v3175
  %v3186 = vunpack.c.l.b16 %v3176
  %v3187 = vpack.c.b16 %v3186, %v3185
  %3189 = vmatpush.bf16.xpose.msra.mxu0 0
  %3190 = vmatpush.bf16.xpose.msra.mxu0 0
  %3191 = vmatpush.bf16.xpose.msra.mxu0 0
  %3192 = vmatpush.bf16.xpose.msra.mxu0 0
  %3193 = vmatpush.bf16.xpose.msra.mxu0 0
  %3194 = vmatpush.bf16.xpose.msra.mxu0 0
  %3195 = vmatpush.bf16.xpose.msra.mxu0 0
  %3196 = vmatpush.bf16.xpose.msra.mxu0 %v3187
  %3197 = vmatmul.bf16.gmra.mxu0 %v3173
  %v3198 = vpop.f32.mrf.mxu0
  %v3199 = vadd.f32 0.0, %v3198
  %v3200 = vpop.f32.mrf.mxu0
  %3201 = vdwg.mxu0
  %v3204 = vunpack.c.l.b16 %v3177
  %v3205 = vunpack.c.l.b16 %v3178
  %v3206 = vpack.c.b16 %v3205, %v3204
  %3208 = vmatpush.bf16.xpose.msra.mxu0 0
  %3209 = vmatpush.bf16.xpose.msra.mxu0 0
  %3210 = vmatpush.bf16.xpose.msra.mxu0 0
  %3211 = vmatpush.bf16.xpose.msra.mxu0 0
  %3212 = vmatpush.bf16.xpose.msra.mxu0 0
  %3213 = vmatpush.bf16.xpose.msra.mxu0 0
  %3214 = vmatpush.bf16.xpose.msra.mxu0 0
  %3215 = vmatpush.bf16.xpose.msra.mxu0 %v3206
  %3216 = vmatmul.bf16.gmra.mxu0 %v3174
  %v3217 = vpop.f32.mrf.mxu0
  %v3218 = vadd.f32 0.0, %v3217
  %v3219 = vpop.f32.mrf.mxu0
  %3220 = vdwg.mxu0
  %vm3221 = vcmask 130048
  %v3222 = vsel %vm3221, %v3199, -inf
  %3223 = vmax.xlane.f32.xlu0 %v3222
  %v3224 = vpop.xlane.xlu0 %3223
  %v3225 = vsel %vm3221, %v3218, -inf
  %3226 = vmax.xlane.f32.xlu0 %v3225
  %v3227 = vpop.xlane.xlu0 %3226
  %v3228 = vsub.f32 %v3199, %v3224
  %v3229 = vsub.f32 %v3218, %v3227
  %v3230 = vmul.f32 %v3228, 1.442695
  %v3231 = vpow.pop %v3230
  %v3232 = vmul.f32 %v3229, 1.442695
  %v3233 = vpow.pop %v3232
  %v3234 = vsel %vm3221, %v3231, 0.0
  %3235 = vadd.xlane.f32.xlu0 %v3234
  %v3236 = vpop.xlane.xlu0 %3235
  %v3237 = vsel %vm3221, %v3233, 0.0
  %3238 = vadd.xlane.f32.xlu0 %v3237
  %v3239 = vpop.xlane.xlu0 %3238
  %v3240 = vrcp.pop %v3236
  %v3241 = vmul.f32 %v3236, %v3240
  %v3242 = vsub.f32 1.0, %v3241
  %v3243 = vmul.f32 %v3240, %v3242
  %v3244 = vadd.f32 %v3240, %v3243
  %vm3245 = vweird.f32 %v3236
  %vm3246 = vweird.f32 %v3240
  %vm3247 = vmor %vm3245, %vm3246
  %v3248 = vsel %vm3247, %v3240, %v3244
  %v3249 = vand.u32 2147483647, %v3236
  %vm3250 = vcmp.eq.f32.partialorder %v3249, 8.507059e+37
  %v3251 = vand.u32 %v3236, 2147483648
  %v3252 = vor.u32 1.1754944e-38, %v3251
  %v3253 = vsel %vm3250, %v3252, %v3248
  %v3254 = vmul.f32 %v3231, %v3253
  %v3255 = vrcp.pop %v3239
  %v3256 = vmul.f32 %v3239, %v3255
  %v3257 = vsub.f32 1.0, %v3256
  %v3258 = vmul.f32 %v3255, %v3257
  %v3259 = vadd.f32 %v3255, %v3258
  %vm3260 = vweird.f32 %v3239
  %vm3261 = vweird.f32 %v3255
  %vm3262 = vmor %vm3260, %vm3261
  %v3263 = vsel %vm3262, %v3255, %v3259
  %v3264 = vand.u32 2147483647, %v3239
  %vm3265 = vcmp.eq.f32.partialorder %v3264, 8.507059e+37
  %v3266 = vand.u32 %v3239, 2147483648
  %v3267 = vor.u32 1.1754944e-38, %v3266
  %v3268 = vsel %vm3265, %v3267, %v3263
  %v3269 = vmul.f32 %v3233, %v3268
  %v3270 = vpack.c.bf16 %v3254, %v3254
  %v3271 = vpack.c.bf16 %v3269, %v3269
  %v3274 = vunpack.c.l.b16 %v3179
  %v3275 = vunpack.c.l.b16 %v3180
  %v3276 = vpack.c.b16 %v3275, %v3274
  %v3279 = vsel %vm3221, %v3270, 0
  %3281 = vmatpush.bf16.msra.mxu0 0
  %3282 = vmatpush.bf16.msra.mxu0 0
  %3283 = vmatpush.bf16.msra.mxu0 0
  %3284 = vmatpush.bf16.msra.mxu0 0
  %3285 = vmatpush.bf16.msra.mxu0 0
  %3286 = vmatpush.bf16.msra.mxu0 0
  %3287 = vmatpush.bf16.msra.mxu0 0
  %3288 = vmatpush.bf16.msra.mxu0 %v3276
  %3289 = vmatmul.bf16.gmra.mxu0 %v3279
  %v3290 = vpop.f32.mrf.mxu0
  %v3291 = vadd.f32 0.0, %v3290
  %v3292 = vpop.f32.mrf.mxu0
  %3293 = vdwg.mxu0
  %v3296 = vunpack.c.l.b16 %v3181
  %v3297 = vunpack.c.l.b16 %v3182
  %v3298 = vpack.c.b16 %v3297, %v3296
  %v3301 = vsel %vm3221, %v3271, 0
  %3303 = vmatpush.bf16.msra.mxu0 0
  %3304 = vmatpush.bf16.msra.mxu0 0
  %3305 = vmatpush.bf16.msra.mxu0 0
  %3306 = vmatpush.bf16.msra.mxu0 0
  %3307 = vmatpush.bf16.msra.mxu0 0
  %3308 = vmatpush.bf16.msra.mxu0 0
  %3309 = vmatpush.bf16.msra.mxu0 0
  %3310 = vmatpush.bf16.msra.mxu0 %v3298
  %3311 = vmatmul.bf16.gmra.mxu0 %v3301
  %v3312 = vpop.f32.mrf.mxu0
  %v3313 = vadd.f32 0.0, %v3312
  %v3314 = vpop.f32.mrf.mxu0
  %3315 = vdwg.mxu0
  %v3316 = vpack.c.bf16 %v3313, %v3291
  %v3317 = vpack.c.bf16 %v3077, %v3077
  %v3318 = vpack.c.bf16 %v3079, %v3079
  %v3319 = vpack.c.bf16 %v527, %v527
  %v3320 = vpack.c.bf16 %v529, %v529
  %v3321 = vpack.c.bf16 %v532, %v532
  %v3322 = vpack.c.bf16 %v534, %v534
  %v3323 = vpack.c.bf16 %v1087, %v1087
  %v3324 = vpack.c.bf16 %v1089, %v1089
  %v3325 = vpack.c.bf16 %v1092, %v1092
  %v3326 = vpack.c.bf16 %v1094, %v1094
  %v3329 = vunpack.c.l.b16 %v3319
  %v3330 = vunpack.c.l.b16 %v3320
  %v3331 = vpack.c.b16 %v3330, %v3329
  %3333 = vmatpush.bf16.xpose.msra.mxu0 0
  %3334 = vmatpush.bf16.xpose.msra.mxu0 0
  %3335 = vmatpush.bf16.xpose.msra.mxu0 0
  %3336 = vmatpush.bf16.xpose.msra.mxu0 0
  %3337 = vmatpush.bf16.xpose.msra.mxu0 0
  %3338 = vmatpush.bf16.xpose.msra.mxu0 0
  %3339 = vmatpush.bf16.xpose.msra.mxu0 0
  %3340 = vmatpush.bf16.xpose.msra.mxu0 %v3331
  %3341 = vmatmul.bf16.gmra.mxu0 %v3317
  %v3342 = vpop.f32.mrf.mxu0
  %v3343 = vadd.f32 0.0, %v3342
  %v3344 = vpop.f32.mrf.mxu0
  %3345 = vdwg.mxu0
  %v3348 = vunpack.c.l.b16 %v3321
  %v3349 = vunpack.c.l.b16 %v3322
  %v3350 = vpack.c.b16 %v3349, %v3348
  %3352 = vmatpush.bf16.xpose.msra.mxu0 0
  %3353 = vmatpush.bf16.xpose.msra.mxu0 0
  %3354 = vmatpush.bf16.xpose.msra.mxu0 0
  %3355 = vmatpush.bf16.xpose.msra.mxu0 0
  %3356 = vmatpush.bf16.xpose.msra.mxu0 0
  %3357 = vmatpush.bf16.xpose.msra.mxu0 0
  %3358 = vmatpush.bf16.xpose.msra.mxu0 0
  %3359 = vmatpush.bf16.xpose.msra.mxu0 %v3350
  %3360 = vmatmul.bf16.gmra.mxu0 %v3318
  %v3361 = vpop.f32.mrf.mxu0
  %v3362 = vadd.f32 0.0, %v3361
  %v3363 = vpop.f32.mrf.mxu0
  %3364 = vdwg.mxu0
  %v3365 = vsel %vm3221, %v3343, -inf
  %3366 = vmax.xlane.f32.xlu0 %v3365
  %v3367 = vpop.xlane.xlu0 %3366
  %v3368 = vsel %vm3221, %v3362, -inf
  %3369 = vmax.xlane.f32.xlu0 %v3368
  %v3370 = vpop.xlane.xlu0 %3369
  %v3371 = vsub.f32 %v3343, %v3367
  %v3372 = vsub.f32 %v3362, %v3370
  %v3373 = vmul.f32 %v3371, 1.442695
  %v3374 = vpow.pop %v3373
  %v3375 = vmul.f32 %v3372, 1.442695
  %v3376 = vpow.pop %v3375
  %v3377 = vsel %vm3221, %v3374, 0.0
  %3378 = vadd.xlane.f32.xlu0 %v3377
  %v3379 = vpop.xlane.xlu0 %3378
  %v3380 = vsel %vm3221, %v3376, 0.0
  %3381 = vadd.xlane.f32.xlu0 %v3380
  %v3382 = vpop.xlane.xlu0 %3381
  %v3383 = vrcp.pop %v3379
  %v3384 = vmul.f32 %v3379, %v3383
  %v3385 = vsub.f32 1.0, %v3384
  %v3386 = vmul.f32 %v3383, %v3385
  %v3387 = vadd.f32 %v3383, %v3386
  %vm3388 = vweird.f32 %v3379
  %vm3389 = vweird.f32 %v3383
  %vm3390 = vmor %vm3388, %vm3389
  %v3391 = vsel %vm3390, %v3383, %v3387
  %v3392 = vand.u32 2147483647, %v3379
  %vm3393 = vcmp.eq.f32.partialorder %v3392, 8.507059e+37
  %v3394 = vand.u32 %v3379, 2147483648
  %v3395 = vor.u32 1.1754944e-38, %v3394
  %v3396 = vsel %vm3393, %v3395, %v3391
  %v3397 = vmul.f32 %v3374, %v3396
  %v3398 = vrcp.pop %v3382
  %v3399 = vmul.f32 %v3382, %v3398
  %v3400 = vsub.f32 1.0, %v3399
  %v3401 = vmul.f32 %v3398, %v3400
  %v3402 = vadd.f32 %v3398, %v3401
  %vm3403 = vweird.f32 %v3382
  %vm3404 = vweird.f32 %v3398
  %vm3405 = vmor %vm3403, %vm3404
  %v3406 = vsel %vm3405, %v3398, %v3402
  %v3407 = vand.u32 2147483647, %v3382
  %vm3408 = vcmp.eq.f32.partialorder %v3407, 8.507059e+37
  %v3409 = vand.u32 %v3382, 2147483648
  %v3410 = vor.u32 1.1754944e-38, %v3409
  %v3411 = vsel %vm3408, %v3410, %v3406
  %v3412 = vmul.f32 %v3376, %v3411
  %v3413 = vpack.c.bf16 %v3397, %v3397
  %v3414 = vpack.c.bf16 %v3412, %v3412
  %v3417 = vunpack.c.l.b16 %v3323
  %v3418 = vunpack.c.l.b16 %v3324
  %v3419 = vpack.c.b16 %v3418, %v3417
  %v3422 = vsel %vm3221, %v3413, 0
  %3424 = vmatpush.bf16.msra.mxu0 0
  %3425 = vmatpush.bf16.msra.mxu0 0
  %3426 = vmatpush.bf16.msra.mxu0 0
  %3427 = vmatpush.bf16.msra.mxu0 0
  %3428 = vmatpush.bf16.msra.mxu0 0
  %3429 = vmatpush.bf16.msra.mxu0 0
  %3430 = vmatpush.bf16.msra.mxu0 0
  %3431 = vmatpush.bf16.msra.mxu0 %v3419
  %3432 = vmatmul.bf16.gmra.mxu0 %v3422
  %v3433 = vpop.f32.mrf.mxu0
  %v3434 = vadd.f32 0.0, %v3433
  %v3435 = vpop.f32.mrf.mxu0
  %3436 = vdwg.mxu0
  %v3439 = vunpack.c.l.b16 %v3325
  %v3440 = vunpack.c.l.b16 %v3326
  %v3441 = vpack.c.b16 %v3440, %v3439
  %v3444 = vsel %vm3221, %v3414, 0
  %3446 = vmatpush.bf16.msra.mxu0 0
  %3447 = vmatpush.bf16.msra.mxu0 0
  %3448 = vmatpush.bf16.msra.mxu0 0
  %3449 = vmatpush.bf16.msra.mxu0 0
  %3450 = vmatpush.bf16.msra.mxu0 0
  %3451 = vmatpush.bf16.msra.mxu0 0
  %3452 = vmatpush.bf16.msra.mxu0 0
  %3453 = vmatpush.bf16.msra.mxu0 %v3441
  %3454 = vmatmul.bf16.gmra.mxu0 %v3444
  %v3455 = vpop.f32.mrf.mxu0
  %v3456 = vadd.f32 0.0, %v3455
  %v3457 = vpop.f32.mrf.mxu0
  %3458 = vdwg.mxu0
  %v3459 = vpack.c.bf16 %v3456, %v3434
  %v3476 = vunpack.c.l.b16 %v3125
  %v3477 = vunpack.c.l.b16 %v3126
  %v3478 = vunpack.c.l.b16 %v3127
  %v3479 = vunpack.c.l.b16 %v3128
  %v3480 = vunpack.c.l.b16 %v3129
  %v3481 = vunpack.c.l.b16 %v3130
  %v3482 = vunpack.c.l.b16 %v3131
  %v3483 = vunpack.c.l.b16 %v3132
  %v3484 = vunpack.c.l.b16 %v3133
  %v3485 = vunpack.c.l.b16 %v3134
  %v3486 = vunpack.c.l.b16 %v3135
  %v3487 = vunpack.c.l.b16 %v3136
  %v3488 = vunpack.c.l.b16 %v3137
  %v3489 = vunpack.c.l.b16 %v3138
  %v3490 = vunpack.c.l.b16 %v3139
  %v3491 = vunpack.c.l.b16 %v3140
  %v3492 = vpack.c.b16 %v3477, %v3476
  %v3493 = vpack.c.b16 %v3479, %v3478
  %v3494 = vpack.c.b16 %v3481, %v3480
  %v3495 = vpack.c.b16 %v3483, %v3482
  %v3496 = vpack.c.b16 %v3485, %v3484
  %v3497 = vpack.c.b16 %v3487, %v3486
  %v3498 = vpack.c.b16 %v3489, %v3488
  %v3499 = vpack.c.b16 %v3491, %v3490
  %3508 = vmatpush.bf16.msra.mxu0 %v3499
  %3509 = vmatpush.bf16.msra.mxu0 %v3498
  %3510 = vmatpush.bf16.msra.mxu0 %v3497
  %3511 = vmatpush.bf16.msra.mxu0 %v3496
  %3512 = vmatpush.bf16.msra.mxu0 %v3495
  %3513 = vmatpush.bf16.msra.mxu0 %v3494
  %3514 = vmatpush.bf16.msra.mxu0 %v3493
  %3515 = vmatpush.bf16.msra.mxu0 %v3492
  %3516 = vmatmul.bf16.gmra.mxu0 %v3459
  %v3517 = vpop.f32.mrf.mxu0
  %v3518 = vadd.f32 0.0, %v3517
  %v3519 = vpop.f32.mrf.mxu0
  %v3520 = vadd.f32 0.0, %v3519
  %3521 = vdwg.mxu0
  %v3538 = vunpack.c.l.b16 %v3109
  %v3539 = vunpack.c.l.b16 %v3110
  %v3540 = vunpack.c.l.b16 %v3111
  %v3541 = vunpack.c.l.b16 %v3112
  %v3542 = vunpack.c.l.b16 %v3113
  %v3543 = vunpack.c.l.b16 %v3114
  %v3544 = vunpack.c.l.b16 %v3115
  %v3545 = vunpack.c.l.b16 %v3116
  %v3546 = vunpack.c.l.b16 %v3117
  %v3547 = vunpack.c.l.b16 %v3118
  %v3548 = vunpack.c.l.b16 %v3119
  %v3549 = vunpack.c.l.b16 %v3120
  %v3550 = vunpack.c.l.b16 %v3121
  %v3551 = vunpack.c.l.b16 %v3122
  %v3552 = vunpack.c.l.b16 %v3123
  %v3553 = vunpack.c.l.b16 %v3124
  %v3554 = vpack.c.b16 %v3539, %v3538
  %v3555 = vpack.c.b16 %v3541, %v3540
  %v3556 = vpack.c.b16 %v3543, %v3542
  %v3557 = vpack.c.b16 %v3545, %v3544
  %v3558 = vpack.c.b16 %v3547, %v3546
  %v3559 = vpack.c.b16 %v3549, %v3548
  %v3560 = vpack.c.b16 %v3551, %v3550
  %v3561 = vpack.c.b16 %v3553, %v3552
  %3570 = vmatpush.bf16.msra.mxu0 %v3561
  %3571 = vmatpush.bf16.msra.mxu0 %v3560
  %3572 = vmatpush.bf16.msra.mxu0 %v3559
  %3573 = vmatpush.bf16.msra.mxu0 %v3558
  %3574 = vmatpush.bf16.msra.mxu0 %v3557
  %3575 = vmatpush.bf16.msra.mxu0 %v3556
  %3576 = vmatpush.bf16.msra.mxu0 %v3555
  %3577 = vmatpush.bf16.msra.mxu0 %v3554
  %3578 = vmatmul.bf16.gmra.mxu0 %v3316
  %v3579 = vpop.f32.mrf.mxu0
  %v3580 = vadd.f32 %v3518, %v3579
  %v3581 = vpop.f32.mrf.mxu0
  %v3582 = vadd.f32 %v3520, %v3581
  %3583 = vdwg.mxu0
  %v3584 = vpack.c.bf16 %v3091, %v3091
  %v3585 = vpack.c.bf16 %v3093, %v3093
  %v3586 = vpack.c.bf16 %v546, %v546
  %v3587 = vpack.c.bf16 %v548, %v548
  %v3588 = vpack.c.bf16 %v551, %v551
  %v3589 = vpack.c.bf16 %v553, %v553
  %v3590 = vpack.c.bf16 %v1106, %v1106
  %v3591 = vpack.c.bf16 %v1108, %v1108
  %v3592 = vpack.c.bf16 %v1111, %v1111
  %v3593 = vpack.c.bf16 %v1113, %v1113
  %v3596 = vunpack.c.l.b16 %v3586
  %v3597 = vunpack.c.l.b16 %v3587
  %v3598 = vpack.c.b16 %v3597, %v3596
  %3600 = vmatpush.bf16.xpose.msra.mxu0 0
  %3601 = vmatpush.bf16.xpose.msra.mxu0 0
  %3602 = vmatpush.bf16.xpose.msra.mxu0 0
  %3603 = vmatpush.bf16.xpose.msra.mxu0 0
  %3604 = vmatpush.bf16.xpose.msra.mxu0 0
  %3605 = vmatpush.bf16.xpose.msra.mxu0 0
  %3606 = vmatpush.bf16.xpose.msra.mxu0 0
  %3607 = vmatpush.bf16.xpose.msra.mxu0 %v3598
  %3608 = vmatmul.bf16.gmra.mxu0 %v3584
  %v3609 = vpop.f32.mrf.mxu0
  %v3610 = vadd.f32 0.0, %v3609
  %v3611 = vpop.f32.mrf.mxu0
  %3612 = vdwg.mxu0
  %v3615 = vunpack.c.l.b16 %v3588
  %v3616 = vunpack.c.l.b16 %v3589
  %v3617 = vpack.c.b16 %v3616, %v3615
  %3619 = vmatpush.bf16.xpose.msra.mxu0 0
  %3620 = vmatpush.bf16.xpose.msra.mxu0 0
  %3621 = vmatpush.bf16.xpose.msra.mxu0 0
  %3622 = vmatpush.bf16.xpose.msra.mxu0 0
  %3623 = vmatpush.bf16.xpose.msra.mxu0 0
  %3624 = vmatpush.bf16.xpose.msra.mxu0 0
  %3625 = vmatpush.bf16.xpose.msra.mxu0 0
  %3626 = vmatpush.bf16.xpose.msra.mxu0 %v3617
  %3627 = vmatmul.bf16.gmra.mxu0 %v3585
  %v3628 = vpop.f32.mrf.mxu0
  %v3629 = vadd.f32 0.0, %v3628
  %v3630 = vpop.f32.mrf.mxu0
  %3631 = vdwg.mxu0
  %v3632 = vsel %vm3221, %v3610, -inf
  %3633 = vmax.xlane.f32.xlu0 %v3632
  %v3634 = vpop.xlane.xlu0 %3633
  %v3635 = vsel %vm3221, %v3629, -inf
  %3636 = vmax.xlane.f32.xlu0 %v3635
  %v3637 = vpop.xlane.xlu0 %3636
  %v3638 = vsub.f32 %v3610, %v3634
  %v3639 = vsub.f32 %v3629, %v3637
  %v3640 = vmul.f32 %v3638, 1.442695
  %v3641 = vpow.pop %v3640
  %v3642 = vmul.f32 %v3639, 1.442695
  %v3643 = vpow.pop %v3642
  %v3644 = vsel %vm3221, %v3641, 0.0
  %3645 = vadd.xlane.f32.xlu0 %v3644
  %v3646 = vpop.xlane.xlu0 %3645
  %v3647 = vsel %vm3221, %v3643, 0.0
  %3648 = vadd.xlane.f32.xlu0 %v3647
  %v3649 = vpop.xlane.xlu0 %3648
  %v3650 = vrcp.pop %v3646
  %v3651 = vmul.f32 %v3646, %v3650
  %v3652 = vsub.f32 1.0, %v3651
  %v3653 = vmul.f32 %v3650, %v3652
  %v3654 = vadd.f32 %v3650, %v3653
  %vm3655 = vweird.f32 %v3646
  %vm3656 = vweird.f32 %v3650
  %vm3657 = vmor %vm3655, %vm3656
  %v3658 = vsel %vm3657, %v3650, %v3654
  %v3659 = vand.u32 2147483647, %v3646
  %vm3660 = vcmp.eq.f32.partialorder %v3659, 8.507059e+37
  %v3661 = vand.u32 %v3646, 2147483648
  %v3662 = vor.u32 1.1754944e-38, %v3661
  %v3663 = vsel %vm3660, %v3662, %v3658
  %v3664 = vmul.f32 %v3641, %v3663
  %v3665 = vrcp.pop %v3649
  %v3666 = vmul.f32 %v3649, %v3665
  %v3667 = vsub.f32 1.0, %v3666
  %v3668 = vmul.f32 %v3665, %v3667
  %v3669 = vadd.f32 %v3665, %v3668
  %vm3670 = vweird.f32 %v3649
  %vm3671 = vweird.f32 %v3665
  %vm3672 = vmor %vm3670, %vm3671
  %v3673 = vsel %vm3672, %v3665, %v3669
  %v3674 = vand.u32 2147483647, %v3649
  %vm3675 = vcmp.eq.f32.partialorder %v3674, 8.507059e+37
  %v3676 = vand.u32 %v3649, 2147483648
  %v3677 = vor.u32 1.1754944e-38, %v3676
  %v3678 = vsel %vm3675, %v3677, %v3673
  %v3679 = vmul.f32 %v3643, %v3678
  %v3680 = vpack.c.bf16 %v3664, %v3664
  %v3681 = vpack.c.bf16 %v3679, %v3679
  %v3684 = vunpack.c.l.b16 %v3590
  %v3685 = vunpack.c.l.b16 %v3591
  %v3686 = vpack.c.b16 %v3685, %v3684
  %v3689 = vsel %vm3221, %v3680, 0
  %3691 = vmatpush.bf16.msra.mxu0 0
  %3692 = vmatpush.bf16.msra.mxu0 0
  %3693 = vmatpush.bf16.msra.mxu0 0
  %3694 = vmatpush.bf16.msra.mxu0 0
  %3695 = vmatpush.bf16.msra.mxu0 0
  %3696 = vmatpush.bf16.msra.mxu0 0
  %3697 = vmatpush.bf16.msra.mxu0 0
  %3698 = vmatpush.bf16.msra.mxu0 %v3686
  %3699 = vmatmul.bf16.gmra.mxu0 %v3689
  %v3700 = vpop.f32.mrf.mxu0
  %v3701 = vadd.f32 0.0, %v3700
  %v3702 = vpop.f32.mrf.mxu0
  %3703 = vdwg.mxu0
  %v3706 = vunpack.c.l.b16 %v3592
  %v3707 = vunpack.c.l.b16 %v3593
  %v3708 = vpack.c.b16 %v3707, %v3706
  %v3711 = vsel %vm3221, %v3681, 0
  %3713 = vmatpush.bf16.msra.mxu0 0
  %3714 = vmatpush.bf16.msra.mxu0 0
  %3715 = vmatpush.bf16.msra.mxu0 0
  %3716 = vmatpush.bf16.msra.mxu0 0
  %3717 = vmatpush.bf16.msra.mxu0 0
  %3718 = vmatpush.bf16.msra.mxu0 0
  %3719 = vmatpush.bf16.msra.mxu0 0
  %3720 = vmatpush.bf16.msra.mxu0 %v3708
  %3721 = vmatmul.bf16.gmra.mxu0 %v3711
  %v3722 = vpop.f32.mrf.mxu0
  %v3723 = vadd.f32 0.0, %v3722
  %v3724 = vpop.f32.mrf.mxu0
  %3725 = vdwg.mxu0
  %v3726 = vpack.c.bf16 %v3723, %v3701
  %v3743 = vunpack.c.l.b16 %v3141
  %v3744 = vunpack.c.l.b16 %v3142
  %v3745 = vunpack.c.l.b16 %v3143
  %v3746 = vunpack.c.l.b16 %v3144
  %v3747 = vunpack.c.l.b16 %v3145
  %v3748 = vunpack.c.l.b16 %v3146
  %v3749 = vunpack.c.l.b16 %v3147
  %v3750 = vunpack.c.l.b16 %v3148
  %v3751 = vunpack.c.l.b16 %v3149
  %v3752 = vunpack.c.l.b16 %v3150
  %v3753 = vunpack.c.l.b16 %v3151
  %v3754 = vunpack.c.l.b16 %v3152
  %v3755 = vunpack.c.l.b16 %v3153
  %v3756 = vunpack.c.l.b16 %v3154
  %v3757 = vunpack.c.l.b16 %v3155
  %v3758 = vunpack.c.l.b16 %v3156
  %v3759 = vpack.c.b16 %v3744, %v3743
  %v3760 = vpack.c.b16 %v3746, %v3745
  %v3761 = vpack.c.b16 %v3748, %v3747
  %v3762 = vpack.c.b16 %v3750, %v3749
  %v3763 = vpack.c.b16 %v3752, %v3751
  %v3764 = vpack.c.b16 %v3754, %v3753
  %v3765 = vpack.c.b16 %v3756, %v3755
  %v3766 = vpack.c.b16 %v3758, %v3757
  %3775 = vmatpush.bf16.msra.mxu0 %v3766
  %3776 = vmatpush.bf16.msra.mxu0 %v3765
  %3777 = vmatpush.bf16.msra.mxu0 %v3764
  %3778 = vmatpush.bf16.msra.mxu0 %v3763
  %3779 = vmatpush.bf16.msra.mxu0 %v3762
  %3780 = vmatpush.bf16.msra.mxu0 %v3761
  %3781 = vmatpush.bf16.msra.mxu0 %v3760
  %3782 = vmatpush.bf16.msra.mxu0 %v3759
  %3783 = vmatmul.bf16.gmra.mxu0 %v3726
  %v3784 = vpop.f32.mrf.mxu0
  %v3785 = vadd.f32 0.0, %v3784
  %v3786 = vpop.f32.mrf.mxu0
  %v3787 = vadd.f32 0.0, %v3786
  %3788 = vdwg.mxu0
  %v3789 = vadd.f32 %v3580, %v3785
  %v3790 = vadd.f32 %v3582, %v3787
  %v3791 = vpack.c.bf16 %v3105, %v3105
  %v3792 = vpack.c.bf16 %v3107, %v3107
  %v3793 = vpack.c.bf16 %v565, %v565
  %v3794 = vpack.c.bf16 %v567, %v567
  %v3795 = vpack.c.bf16 %v570, %v570
  %v3796 = vpack.c.bf16 %v572, %v572
  %v3797 = vpack.c.bf16 %v1125, %v1125
  %v3798 = vpack.c.bf16 %v1127, %v1127
  %v3799 = vpack.c.bf16 %v1130, %v1130
  %v3800 = vpack.c.bf16 %v1132, %v1132
  %v3803 = vunpack.c.l.b16 %v3793
  %v3804 = vunpack.c.l.b16 %v3794
  %v3805 = vpack.c.b16 %v3804, %v3803
  %3807 = vmatpush.bf16.xpose.msra.mxu0 0
  %3808 = vmatpush.bf16.xpose.msra.mxu0 0
  %3809 = vmatpush.bf16.xpose.msra.mxu0 0
  %3810 = vmatpush.bf16.xpose.msra.mxu0 0
  %3811 = vmatpush.bf16.xpose.msra.mxu0 0
  %3812 = vmatpush.bf16.xpose.msra.mxu0 0
  %3813 = vmatpush.bf16.xpose.msra.mxu0 0
  %3814 = vmatpush.bf16.xpose.msra.mxu0 %v3805
  %3815 = vmatmul.bf16.gmra.mxu0 %v3791
  %v3816 = vpop.f32.mrf.mxu0
  %v3817 = vadd.f32 0.0, %v3816
  %v3818 = vpop.f32.mrf.mxu0
  %3819 = vdwg.mxu0
  %v3822 = vunpack.c.l.b16 %v3795
  %v3823 = vunpack.c.l.b16 %v3796
  %v3824 = vpack.c.b16 %v3823, %v3822
  %3826 = vmatpush.bf16.xpose.msra.mxu0 0
  %3827 = vmatpush.bf16.xpose.msra.mxu0 0
  %3828 = vmatpush.bf16.xpose.msra.mxu0 0
  %3829 = vmatpush.bf16.xpose.msra.mxu0 0
  %3830 = vmatpush.bf16.xpose.msra.mxu0 0
  %3831 = vmatpush.bf16.xpose.msra.mxu0 0
  %3832 = vmatpush.bf16.xpose.msra.mxu0 0
  %3833 = vmatpush.bf16.xpose.msra.mxu0 %v3824
  %3834 = vmatmul.bf16.gmra.mxu0 %v3792
  %v3835 = vpop.f32.mrf.mxu0
  %v3836 = vadd.f32 0.0, %v3835
  %v3837 = vpop.f32.mrf.mxu0
  %3838 = vdwg.mxu0
  %v3839 = vsel %vm3221, %v3817, -inf
  %3840 = vmax.xlane.f32.xlu0 %v3839
  %v3841 = vpop.xlane.xlu0 %3840
  %v3842 = vsel %vm3221, %v3836, -inf
  %3843 = vmax.xlane.f32.xlu0 %v3842
  %v3844 = vpop.xlane.xlu0 %3843
  %v3845 = vsub.f32 %v3817, %v3841
  %v3846 = vsub.f32 %v3836, %v3844
  %v3847 = vmul.f32 %v3845, 1.442695
  %v3848 = vpow.pop %v3847
  %v3849 = vmul.f32 %v3846, 1.442695
  %v3850 = vpow.pop %v3849
  %v3851 = vsel %vm3221, %v3848, 0.0
  %3852 = vadd.xlane.f32.xlu0 %v3851
  %v3853 = vpop.xlane.xlu0 %3852
  %v3854 = vsel %vm3221, %v3850, 0.0
  %3855 = vadd.xlane.f32.xlu0 %v3854
  %v3856 = vpop.xlane.xlu0 %3855
  %v3857 = vrcp.pop %v3853
  %v3858 = vmul.f32 %v3853, %v3857
  %v3859 = vsub.f32 1.0, %v3858
  %v3860 = vmul.f32 %v3857, %v3859
  %v3861 = vadd.f32 %v3857, %v3860
  %vm3862 = vweird.f32 %v3853
  %vm3863 = vweird.f32 %v3857
  %vm3864 = vmor %vm3862, %vm3863
  %v3865 = vsel %vm3864, %v3857, %v3861
  %v3866 = vand.u32 2147483647, %v3853
  %vm3867 = vcmp.eq.f32.partialorder %v3866, 8.507059e+37
  %v3868 = vand.u32 %v3853, 2147483648
  %v3869 = vor.u32 1.1754944e-38, %v3868
  %v3870 = vsel %vm3867, %v3869, %v3865
  %v3871 = vmul.f32 %v3848, %v3870
  %v3872 = vrcp.pop %v3856
  %v3873 = vmul.f32 %v3856, %v3872
  %v3874 = vsub.f32 1.0, %v3873
  %v3875 = vmul.f32 %v3872, %v3874
  %v3876 = vadd.f32 %v3872, %v3875
  %vm3877 = vweird.f32 %v3856
  %vm3878 = vweird.f32 %v3872
  %vm3879 = vmor %vm3877, %vm3878
  %v3880 = vsel %vm3879, %v3872, %v3876
  %v3881 = vand.u32 2147483647, %v3856
  %vm3882 = vcmp.eq.f32.partialorder %v3881, 8.507059e+37
  %v3883 = vand.u32 %v3856, 2147483648
  %v3884 = vor.u32 1.1754944e-38, %v3883
  %v3885 = vsel %vm3882, %v3884, %v3880
  %v3886 = vmul.f32 %v3850, %v3885
  %v3887 = vpack.c.bf16 %v3871, %v3871
  %v3888 = vpack.c.bf16 %v3886, %v3886
  %v3891 = vunpack.c.l.b16 %v3797
  %v3892 = vunpack.c.l.b16 %v3798
  %v3893 = vpack.c.b16 %v3892, %v3891
  %v3896 = vsel %vm3221, %v3887, 0
  %3898 = vmatpush.bf16.msra.mxu0 0
  %3899 = vmatpush.bf16.msra.mxu0 0
  %3900 = vmatpush.bf16.msra.mxu0 0
  %3901 = vmatpush.bf16.msra.mxu0 0
  %3902 = vmatpush.bf16.msra.mxu0 0
  %3903 = vmatpush.bf16.msra.mxu0 0
  %3904 = vmatpush.bf16.msra.mxu0 0
  %3905 = vmatpush.bf16.msra.mxu0 %v3893
  %3906 = vmatmul.bf16.gmra.mxu0 %v3896
  %v3907 = vpop.f32.mrf.mxu0
  %v3908 = vadd.f32 0.0, %v3907
  %v3909 = vpop.f32.mrf.mxu0
  %3910 = vdwg.mxu0
  %v3913 = vunpack.c.l.b16 %v3799
  %v3914 = vunpack.c.l.b16 %v3800
  %v3915 = vpack.c.b16 %v3914, %v3913
  %v3918 = vsel %vm3221, %v3888, 0
  %3920 = vmatpush.bf16.msra.mxu0 0
  %3921 = vmatpush.bf16.msra.mxu0 0
  %3922 = vmatpush.bf16.msra.mxu0 0
  %3923 = vmatpush.bf16.msra.mxu0 0
  %3924 = vmatpush.bf16.msra.mxu0 0
  %3925 = vmatpush.bf16.msra.mxu0 0
  %3926 = vmatpush.bf16.msra.mxu0 0
  %3927 = vmatpush.bf16.msra.mxu0 %v3915
  %3928 = vmatmul.bf16.gmra.mxu0 %v3918
  %v3929 = vpop.f32.mrf.mxu0
  %v3930 = vadd.f32 0.0, %v3929
  %v3931 = vpop.f32.mrf.mxu0
  %3932 = vdwg.mxu0
  %v3933 = vpack.c.bf16 %v3930, %v3908
  %v3950 = vunpack.c.l.b16 %v3157
  %v3951 = vunpack.c.l.b16 %v3158
  %v3952 = vunpack.c.l.b16 %v3159
  %v3953 = vunpack.c.l.b16 %v3160
  %v3954 = vunpack.c.l.b16 %v3161
  %v3955 = vunpack.c.l.b16 %v3162
  %v3956 = vunpack.c.l.b16 %v3163
  %v3957 = vunpack.c.l.b16 %v3164
  %v3958 = vunpack.c.l.b16 %v3165
  %v3959 = vunpack.c.l.b16 %v3166
  %v3960 = vunpack.c.l.b16 %v3167
  %v3961 = vunpack.c.l.b16 %v3168
  %v3962 = vunpack.c.l.b16 %v3169
  %v3963 = vunpack.c.l.b16 %v3170
  %v3964 = vunpack.c.l.b16 %v3171
  %v3965 = vunpack.c.l.b16 %v3172
  %v3966 = vpack.c.b16 %v3951, %v3950
  %v3967 = vpack.c.b16 %v3953, %v3952
  %v3968 = vpack.c.b16 %v3955, %v3954
  %v3969 = vpack.c.b16 %v3957, %v3956
  %v3970 = vpack.c.b16 %v3959, %v3958
  %v3971 = vpack.c.b16 %v3961, %v3960
  %v3972 = vpack.c.b16 %v3963, %v3962
  %v3973 = vpack.c.b16 %v3965, %v3964
  %3982 = vmatpush.bf16.msra.mxu0 %v3973
  %3983 = vmatpush.bf16.msra.mxu0 %v3972
  %3984 = vmatpush.bf16.msra.mxu0 %v3971
  %3985 = vmatpush.bf16.msra.mxu0 %v3970
  %3986 = vmatpush.bf16.msra.mxu0 %v3969
  %3987 = vmatpush.bf16.msra.mxu0 %v3968
  %3988 = vmatpush.bf16.msra.mxu0 %v3967
  %3989 = vmatpush.bf16.msra.mxu0 %v3966
  %3990 = vmatmul.bf16.gmra.mxu0 %v3933
  %v3991 = vpop.f32.mrf.mxu0
  %v3992 = vadd.f32 0.0, %v3991
  %v3993 = vpop.f32.mrf.mxu0
  %v3994 = vadd.f32 0.0, %v3993
  %3995 = vdwg.mxu0
  %v3996 = vadd.f32 %v3789, %v3992
  %v3997 = vadd.f32 %v3790, %v3994
  %v3998 = vld [vmem:[%s13] sm:$0x1]
  %v4000 = vperm.slane %v3998, 0
  %v4002 = vadd.f32 %v3996, %v4000
  %v4003 = vadd.f32 %v3997, %v4000
  %v4004 = vadd.f32 %v2846, %v4002
  %v4005 = vadd.f32 %v2847, %v4003
  %4006 = vadd.xlane.f32.xlu0 %v4004
  %v4007 = vpop.xlane.xlu0 %4006
  %4008 = vadd.xlane.f32.xlu0 %v4005
  %v4009 = vpop.xlane.xlu0 %4008
  %v4010 = vmul.f32 %v4007, 0.03125
  %v4011 = vmul.f32 %v4009, 0.03125
  %v4012 = vmul.f32 %v4004, %v4004
  %v4013 = vmul.f32 %v4005, %v4005
  %4014 = vadd.xlane.f32.xlu0 %v4012
  %v4015 = vpop.xlane.xlu0 %4014
  %4016 = vadd.xlane.f32.xlu0 %v4013
  %v4017 = vpop.xlane.xlu0 %4016
  %v4018 = vmul.f32 %v4015, 0.03125
  %v4019 = vmul.f32 %v4017, 0.03125
  %v4020 = vmul.f32 %v4010, %v4010
  %v4021 = vmul.f32 %v4011, %v4011
  %v4022 = vsub.f32 %v4018, %v4020
  %v4023 = vsub.f32 %v4019, %v4021
  %v4024 = vsub.f32 %v4004, %v4010
  %v4025 = vsub.f32 %v4005, %v4011
  %v4026 = vadd.f32 %v4022, 1e-05
  %v4027 = vadd.f32 %v4023, 1e-05
  %v4028 = vrsqrt.pop %v4026
  %v4029 = vmul.f32 %v4028, %v4026
  %v4030 = vmul.f32 %v4029, %v4028
  %v4031 = vmul.f32 0.5, %v4030
  %v4032 = vsub.f32 1.5, %v4031
  %v4033 = vmul.f32 %v4028, %v4032
  %vm4034 = vweird.f32 %v4026
  %vm4035 = vweird.f32 %v4028
  %vm4036 = vmor %vm4034, %vm4035
  %v4037 = vsel %vm4036, %v4028, %v4033
  %v4038 = vrsqrt.pop %v4027
  %v4039 = vmul.f32 %v4038, %v4027
  %v4040 = vmul.f32 %v4039, %v4038
  %v4041 = vmul.f32 0.5, %v4040
  %v4042 = vsub.f32 1.5, %v4041
  %v4043 = vmul.f32 %v4038, %v4042
  %vm4044 = vweird.f32 %v4027
  %vm4045 = vweird.f32 %v4038
  %vm4046 = vmor %vm4044, %vm4045
  %v4047 = vsel %vm4046, %v4038, %v4043
  %v4048 = vmul.f32 %v4024, %v4037
  %v4049 = vmul.f32 %v4025, %v4047
  %v4050 = vperm.slane %v1210, 1
  %v4051 = vmul.f32 %v4048, %v4050
  %v4052 = vmul.f32 %v4049, %v4050
  %v4053 = vperm.slane %v1211, 1
  %v4054 = vadd.f32 %v4051, %v4053
  %v4055 = vadd.f32 %v4052, %v4053
  %v4056 = vld [vmem:[%s18] sm:$0xf]
  %v4057 = vld [vmem:[%s18 + $0x4] sm:$0xf]
  %v4058 = vld [vmem:[%s18 + $0x8] sm:$0xf]
  %v4059 = vld [vmem:[%s18 + $0xc] sm:$0xf]
  %v4060 = vld [vmem:[%s18 + $0x10] sm:$0xf]
  %v4061 = vld [vmem:[%s18 + $0x14] sm:$0xf]
  %v4062 = vld [vmem:[%s18 + $0x18] sm:$0xf]
  %v4063 = vld [vmem:[%s18 + $0x1c] sm:$0xf]
  %v4064 = vld [vmem:[%s18 + $0x20] sm:$0xf]
  %v4065 = vld [vmem:[%s18 + $0x24] sm:$0xf]
  %v4066 = vld [vmem:[%s18 + $0x28] sm:$0xf]
  %v4067 = vld [vmem:[%s18 + $0x2c] sm:$0xf]
  %v4068 = vld [vmem:[%s18 + $0x30] sm:$0xf]
  %v4069 = vld [vmem:[%s18 + $0x34] sm:$0xf]
  %v4070 = vld [vmem:[%s18 + $0x38] sm:$0xf]
  %v4071 = vld [vmem:[%s18 + $0x3c] sm:$0xf]
  %v4072 = vpack.c.bf16 %v4055, %v4054
  %v4073 = vld [vmem:[%s19] sm:$0x1]
  %v4075 = vperm.slane %v4073, 0
  %v4093 = vunpack.c.l.b16 %v4056
  %v4094 = vunpack.c.l.b16 %v4057
  %v4095 = vunpack.c.l.b16 %v4058
  %v4096 = vunpack.c.l.b16 %v4059
  %v4097 = vunpack.c.l.b16 %v4060
  %v4098 = vunpack.c.l.b16 %v4061
  %v4099 = vunpack.c.l.b16 %v4062
  %v4100 = vunpack.c.l.b16 %v4063
  %v4101 = vunpack.c.l.b16 %v4064
  %v4102 = vunpack.c.l.b16 %v4065
  %v4103 = vunpack.c.l.b16 %v4066
  %v4104 = vunpack.c.l.b16 %v4067
  %v4105 = vunpack.c.l.b16 %v4068
  %v4106 = vunpack.c.l.b16 %v4069
  %v4107 = vunpack.c.l.b16 %v4070
  %v4108 = vunpack.c.l.b16 %v4071
  %v4109 = vpack.c.b16 %v4094, %v4093
  %v4110 = vpack.c.b16 %v4096, %v4095
  %v4111 = vpack.c.b16 %v4098, %v4097
  %v4112 = vpack.c.b16 %v4100, %v4099
  %v4113 = vpack.c.b16 %v4102, %v4101
  %v4114 = vpack.c.b16 %v4104, %v4103
  %v4115 = vpack.c.b16 %v4106, %v4105
  %v4116 = vpack.c.b16 %v4108, %v4107
  %4125 = vmatpush.bf16.msra.mxu0 %v4116
  %4126 = vmatpush.bf16.msra.mxu0 %v4115
  %4127 = vmatpush.bf16.msra.mxu0 %v4114
  %4128 = vmatpush.bf16.msra.mxu0 %v4113
  %4129 = vmatpush.bf16.msra.mxu0 %v4112
  %4130 = vmatpush.bf16.msra.mxu0 %v4111
  %4131 = vmatpush.bf16.msra.mxu0 %v4110
  %4132 = vmatpush.bf16.msra.mxu0 %v4109
  %4133 = vmatmul.bf16.gmra.mxu0 %v4072
  %v4134 = vpop.f32.mrf.mxu0
  %v4135 = vadd.f32 %v4075, %v4134
  %v4136 = vpop.f32.mrf.mxu0
  %v4137 = vadd.f32 %v4075, %v4136
  %4138 = vdwg.mxu0
  %v4139 = vmax.f32 %v4135, 0.0
  %v4140 = vmax.f32 %v4137, 0.0
  %v4141 = vld [vmem:[%s20] sm:$0xf]
  %v4142 = vld [vmem:[%s20 + $0x4] sm:$0xf]
  %v4143 = vld [vmem:[%s20 + $0x8] sm:$0xf]
  %v4144 = vld [vmem:[%s20 + $0xc] sm:$0xf]
  %v4145 = vld [vmem:[%s20 + $0x10] sm:$0xf]
  %v4146 = vld [vmem:[%s20 + $0x14] sm:$0xf]
  %v4147 = vld [vmem:[%s20 + $0x18] sm:$0xf]
  %v4148 = vld [vmem:[%s20 + $0x1c] sm:$0xf]
  %v4149 = vld [vmem:[%s20 + $0x20] sm:$0xf]
  %v4150 = vld [vmem:[%s20 + $0x24] sm:$0xf]
  %v4151 = vld [vmem:[%s20 + $0x28] sm:$0xf]
  %v4152 = vld [vmem:[%s20 + $0x2c] sm:$0xf]
  %v4153 = vld [vmem:[%s20 + $0x30] sm:$0xf]
  %v4154 = vld [vmem:[%s20 + $0x34] sm:$0xf]
  %v4155 = vld [vmem:[%s20 + $0x38] sm:$0xf]
  %v4156 = vld [vmem:[%s20 + $0x3c] sm:$0xf]
  %v4157 = vpack.c.bf16 %v4140, %v4139
  %v4158 = vld [vmem:[%s21] sm:$0x1]
  %v4160 = vperm.slane %v4158, 0
  %v4178 = vunpack.c.l.b16 %v4141
  %v4179 = vunpack.c.l.b16 %v4142
  %v4180 = vunpack.c.l.b16 %v4143
  %v4181 = vunpack.c.l.b16 %v4144
  %v4182 = vunpack.c.l.b16 %v4145
  %v4183 = vunpack.c.l.b16 %v4146
  %v4184 = vunpack.c.l.b16 %v4147
  %v4185 = vunpack.c.l.b16 %v4148
  %v4186 = vunpack.c.l.b16 %v4149
  %v4187 = vunpack.c.l.b16 %v4150
  %v4188 = vunpack.c.l.b16 %v4151
  %v4189 = vunpack.c.l.b16 %v4152
  %v4190 = vunpack.c.l.b16 %v4153
  %v4191 = vunpack.c.l.b16 %v4154
  %v4192 = vunpack.c.l.b16 %v4155
  %v4193 = vunpack.c.l.b16 %v4156
  %v4194 = vpack.c.b16 %v4179, %v4178
  %v4195 = vpack.c.b16 %v4181, %v4180
  %v4196 = vpack.c.b16 %v4183, %v4182
  %v4197 = vpack.c.b16 %v4185, %v4184
  %v4198 = vpack.c.b16 %v4187, %v4186
  %v4199 = vpack.c.b16 %v4189, %v4188
  %v4200 = vpack.c.b16 %v4191, %v4190
  %v4201 = vpack.c.b16 %v4193, %v4192
  %4210 = vmatpush.bf16.msra.mxu0 %v4201
  %4211 = vmatpush.bf16.msra.mxu0 %v4200
  %4212 = vmatpush.bf16.msra.mxu0 %v4199
  %4213 = vmatpush.bf16.msra.mxu0 %v4198
  %4214 = vmatpush.bf16.msra.mxu0 %v4197
  %4215 = vmatpush.bf16.msra.mxu0 %v4196
  %4216 = vmatpush.bf16.msra.mxu0 %v4195
  %4217 = vmatpush.bf16.msra.mxu0 %v4194
  %4218 = vmatmul.bf16.gmra.mxu0 %v4157
  %v4219 = vpop.f32.mrf.mxu0
  %v4220 = vadd.f32 %v4160, %v4219
  %v4221 = vpop.f32.mrf.mxu0
  %v4222 = vadd.f32 %v4160, %v4221
  %4223 = vdwg.mxu0
  %v4224 = vadd.f32 %v4054, %v4220
  %v4225 = vadd.f32 %v4055, %v4222
  %4226 = vadd.xlane.f32.xlu0 %v4224
  %v4227 = vpop.xlane.xlu0 %4226
  %4228 = vadd.xlane.f32.xlu0 %v4225
  %v4229 = vpop.xlane.xlu0 %4228
  %v4230 = vmul.f32 %v4227, 0.03125
  %v4231 = vmul.f32 %v4229, 0.03125
  %v4232 = vmul.f32 %v4224, %v4224
  %v4233 = vmul.f32 %v4225, %v4225
  %4234 = vadd.xlane.f32.xlu0 %v4232
  %v4235 = vpop.xlane.xlu0 %4234
  %4236 = vadd.xlane.f32.xlu0 %v4233
  %v4237 = vpop.xlane.xlu0 %4236
  %v4238 = vmul.f32 %v4235, 0.03125
  %v4239 = vmul.f32 %v4237, 0.03125
  %v4240 = vmul.f32 %v4230, %v4230
  %v4241 = vmul.f32 %v4231, %v4231
  %v4242 = vsub.f32 %v4238, %v4240
  %v4243 = vsub.f32 %v4239, %v4241
  %v4244 = vsub.f32 %v4224, %v4230
  %v4245 = vsub.f32 %v4225, %v4231
  %v4246 = vadd.f32 %v4242, 1e-05
  %v4247 = vadd.f32 %v4243, 1e-05
  %v4248 = vrsqrt.pop %v4246
  %v4249 = vmul.f32 %v4248, %v4246
  %v4250 = vmul.f32 %v4249, %v4248
  %v4251 = vmul.f32 0.5, %v4250
  %v4252 = vsub.f32 1.5, %v4251
  %v4253 = vmul.f32 %v4248, %v4252
  %vm4254 = vweird.f32 %v4246
  %vm4255 = vweird.f32 %v4248
  %vm4256 = vmor %vm4254, %vm4255
  %v4257 = vsel %vm4256, %v4248, %v4253
  %v4258 = vrsqrt.pop %v4247
  %v4259 = vmul.f32 %v4258, %v4247
  %v4260 = vmul.f32 %v4259, %v4258
  %v4261 = vmul.f32 0.5, %v4260
  %v4262 = vsub.f32 1.5, %v4261
  %v4263 = vmul.f32 %v4258, %v4262
  %vm4264 = vweird.f32 %v4247
  %vm4265 = vweird.f32 %v4258
  %vm4266 = vmor %vm4264, %vm4265
  %v4267 = vsel %vm4266, %v4258, %v4263
  %v4268 = vmul.f32 %v4244, %v4257
  %v4269 = vmul.f32 %v4245, %v4267
  %v4270 = vperm.slane %v1210, 2
  %v4271 = vmul.f32 %v4268, %v4270
  %v4272 = vmul.f32 %v4269, %v4270
  %v4273 = vperm.slane %v1211, 2
  %v4274 = vadd.f32 %v4271, %v4273
  %v4275 = vadd.f32 %v4272, %v4273
  %4276 = vadd.xlane.f32.xlu0 %v4274
  %v4277 = vpop.xlane.xlu0 %4276
  %4278 = vadd.xlane.f32.xlu0 %v4275
  %v4279 = vpop.xlane.xlu0 %4278
  %v4280 = vmul.f32 %v4277, 0.03125
  %v4281 = vmul.f32 %v4279, 0.03125
  %v4282 = vmul.f32 %v4274, %v4274
  %v4283 = vmul.f32 %v4275, %v4275
  %4284 = vadd.xlane.f32.xlu0 %v4282
  %v4285 = vpop.xlane.xlu0 %4284
  %4286 = vadd.xlane.f32.xlu0 %v4283
  %v4287 = vpop.xlane.xlu0 %4286
  %v4288 = vmul.f32 %v4285, 0.03125
  %v4289 = vmul.f32 %v4287, 0.03125
  %v4290 = vmul.f32 %v4280, %v4280
  %v4291 = vmul.f32 %v4281, %v4281
  %v4292 = vsub.f32 %v4288, %v4290
  %v4293 = vsub.f32 %v4289, %v4291
  %v4294 = vsub.f32 %v4274, %v4280
  %v4295 = vsub.f32 %v4275, %v4281
  %v4296 = vadd.f32 %v4292, 1e-05
  %v4297 = vadd.f32 %v4293, 1e-05
  %v4298 = vrsqrt.pop %v4296
  %v4299 = vmul.f32 %v4298, %v4296
  %v4300 = vmul.f32 %v4299, %v4298
  %v4301 = vmul.f32 0.5, %v4300
  %v4302 = vsub.f32 1.5, %v4301
  %v4303 = vmul.f32 %v4298, %v4302
  %vm4304 = vweird.f32 %v4296
  %vm4305 = vweird.f32 %v4298
  %vm4306 = vmor %vm4304, %vm4305
  %v4307 = vsel %vm4306, %v4298, %v4303
  %v4308 = vrsqrt.pop %v4297
  %v4309 = vmul.f32 %v4308, %v4297
  %v4310 = vmul.f32 %v4309, %v4308
  %v4311 = vmul.f32 0.5, %v4310
  %v4312 = vsub.f32 1.5, %v4311
  %v4313 = vmul.f32 %v4308, %v4312
  %vm4314 = vweird.f32 %v4297
  %vm4315 = vweird.f32 %v4308
  %vm4316 = vmor %vm4314, %vm4315
  %v4317 = vsel %vm4316, %v4308, %v4313
  %v4318 = vmul.f32 %v4294, %v4307
  %v4319 = vmul.f32 %v4295, %v4317
  %v4321 = vperm.slane %v88, 0
  %v4323 = vmul.f32 %v4318, %v4321
  %v4324 = vmul.f32 %v4319, %v4321
  %v4326 = vperm.slane %v89, 0
  %v4328 = vadd.f32 %v4323, %v4326
  %v4329 = vadd.f32 %v4324, %v4326
  %s4330 = scalar_lea.vmem %s22, 4
  %v4331 = vld [vmem:[%s4330] sm:$0x7]
  %s4332 = scalar_lea.vmem %s23, 4
  %v4333 = vld [vmem:[%s4332] sm:$0x7]
  %v4334 = vadd.f32 %v4328, %v86
  %v4335 = vadd.f32 %v4329, %v87
  %s4336 = scalar_lea.vmem %s4, 512
  %v4337 = vld [vmem:[%s4336] sm:$0xff]
  %v4338 = vld [vmem:[%s4336 + $0x8] sm:$0xff]
  %v4339 = vld [vmem:[%s4336 + $0x10] sm:$0xff]
  %v4340 = vld [vmem:[%s4336 + $0x18] sm:$0xff]
  %v4341 = vld [vmem:[%s4336 + $0x20] sm:$0xff]
  %v4342 = vld [vmem:[%s4336 + $0x28] sm:$0xff]
  %v4343 = vld [vmem:[%s4336 + $0x30] sm:$0xff]
  %v4344 = vld [vmem:[%s4336 + $0x38] sm:$0xff]
  %v4345 = vld [vmem:[%s4336 + $0x40] sm:$0xff]
  %v4346 = vld [vmem:[%s4336 + $0x48] sm:$0xff]
  %v4347 = vld [vmem:[%s4336 + $0x50] sm:$0xff]
  %v4348 = vld [vmem:[%s4336 + $0x58] sm:$0xff]
  %v4349 = vld [vmem:[%s4336 + $0x60] sm:$0xff]
  %v4350 = vld [vmem:[%s4336 + $0x68] sm:$0xff]
  %v4351 = vld [vmem:[%s4336 + $0x70] sm:$0xff]
  %v4352 = vld [vmem:[%s4336 + $0x78] sm:$0xff]
  %v4353 = vld [vmem:[%s4336 + $0x80] sm:$0xff]
  %v4354 = vld [vmem:[%s4336 + $0x88] sm:$0xff]
  %v4355 = vld [vmem:[%s4336 + $0x90] sm:$0xff]
  %v4356 = vld [vmem:[%s4336 + $0x98] sm:$0xff]
  %v4357 = vld [vmem:[%s4336 + $0xa0] sm:$0xff]
  %v4358 = vld [vmem:[%s4336 + $0xa8] sm:$0xff]
  %v4359 = vld [vmem:[%s4336 + $0xb0] sm:$0xff]
  %v4360 = vld [vmem:[%s4336 + $0xb8] sm:$0xff]
  %v4361 = vld [vmem:[%s4336 + $0xc0] sm:$0xff]
  %v4362 = vld [vmem:[%s4336 + $0xc8] sm:$0xff]
  %v4363 = vld [vmem:[%s4336 + $0xd0] sm:$0xff]
  %v4364 = vld [vmem:[%s4336 + $0xd8] sm:$0xff]
  %v4365 = vld [vmem:[%s4336 + $0xe0] sm:$0xff]
  %v4366 = vld [vmem:[%s4336 + $0xe8] sm:$0xff]
  %v4367 = vld [vmem:[%s4336 + $0xf0] sm:$0xff]
  %v4368 = vld [vmem:[%s4336 + $0xf8] sm:$0xff]
  %v4369 = vld [vmem:[%s4336 + $0x100] sm:$0xff]
  %v4370 = vld [vmem:[%s4336 + $0x108] sm:$0xff]
  %v4371 = vld [vmem:[%s4336 + $0x110] sm:$0xff]
  %v4372 = vld [vmem:[%s4336 + $0x118] sm:$0xff]
  %v4373 = vld [vmem:[%s4336 + $0x120] sm:$0xff]
  %v4374 = vld [vmem:[%s4336 + $0x128] sm:$0xff]
  %v4375 = vld [vmem:[%s4336 + $0x130] sm:$0xff]
  %v4376 = vld [vmem:[%s4336 + $0x138] sm:$0xff]
  %v4377 = vld [vmem:[%s4336 + $0x140] sm:$0xff]
  %v4378 = vld [vmem:[%s4336 + $0x148] sm:$0xff]
  %v4379 = vld [vmem:[%s4336 + $0x150] sm:$0xff]
  %v4380 = vld [vmem:[%s4336 + $0x158] sm:$0xff]
  %v4381 = vld [vmem:[%s4336 + $0x160] sm:$0xff]
  %v4382 = vld [vmem:[%s4336 + $0x168] sm:$0xff]
  %v4383 = vld [vmem:[%s4336 + $0x170] sm:$0xff]
  %v4384 = vld [vmem:[%s4336 + $0x178] sm:$0xff]
  %v4385 = vld [vmem:[%s4336 + $0x180] sm:$0xff]
  %v4386 = vld [vmem:[%s4336 + $0x188] sm:$0xff]
  %v4387 = vld [vmem:[%s4336 + $0x190] sm:$0xff]
  %v4388 = vld [vmem:[%s4336 + $0x198] sm:$0xff]
  %v4389 = vld [vmem:[%s4336 + $0x1a0] sm:$0xff]
  %v4390 = vld [vmem:[%s4336 + $0x1a8] sm:$0xff]
  %v4391 = vld [vmem:[%s4336 + $0x1b0] sm:$0xff]
  %v4392 = vld [vmem:[%s4336 + $0x1b8] sm:$0xff]
  %v4393 = vld [vmem:[%s4336 + $0x1c0] sm:$0xff]
  %v4394 = vld [vmem:[%s4336 + $0x1c8] sm:$0xff]
  %v4395 = vld [vmem:[%s4336 + $0x1d0] sm:$0xff]
  %v4396 = vld [vmem:[%s4336 + $0x1d8] sm:$0xff]
  %v4397 = vld [vmem:[%s4336 + $0x1e0] sm:$0xff]
  %v4398 = vld [vmem:[%s4336 + $0x1e8] sm:$0xff]
  %v4399 = vld [vmem:[%s4336 + $0x1f0] sm:$0xff]
  %v4400 = vld [vmem:[%s4336 + $0x1f8] sm:$0xff]
  %v4401 = vpack.c.bf16 %v4335, %v4334
  %s4402 = scalar_lea.vmem %s5, 8
  %v4403 = vld [vmem:[%s4402] sm:$0xff]
  %v4405 = vperm.slane %v4403, 0
  %v4406 = vperm.slane %v4403, 1
  %v4407 = vperm.slane %v4403, 2
  %v4408 = vperm.slane %v4403, 3
  %v4409 = vperm.slane %v4403, 4
  %v4410 = vperm.slane %v4403, 5
  %v4411 = vperm.slane %v4403, 6
  %v4412 = vperm.slane %v4403, 7
  %v4485 = vunpack.c.l.b16 %v4337
  %v4486 = vunpack.c.h.b16 %v4337
  %v4487 = vunpack.c.l.b16 %v4338
  %v4488 = vunpack.c.h.b16 %v4338
  %v4489 = vunpack.c.l.b16 %v4339
  %v4490 = vunpack.c.h.b16 %v4339
  %v4491 = vunpack.c.l.b16 %v4340
  %v4492 = vunpack.c.h.b16 %v4340
  %v4493 = vunpack.c.l.b16 %v4341
  %v4494 = vunpack.c.h.b16 %v4341
  %v4495 = vunpack.c.l.b16 %v4342
  %v4496 = vunpack.c.h.b16 %v4342
  %v4497 = vunpack.c.l.b16 %v4343
  %v4498 = vunpack.c.h.b16 %v4343
  %v4499 = vunpack.c.l.b16 %v4344
  %v4500 = vunpack.c.h.b16 %v4344
  %v4501 = vunpack.c.l.b16 %v4345
  %v4502 = vunpack.c.h.b16 %v4345
  %v4503 = vunpack.c.l.b16 %v4346
  %v4504 = vunpack.c.h.b16 %v4346
  %v4505 = vunpack.c.l.b16 %v4347
  %v4506 = vunpack.c.h.b16 %v4347
  %v4507 = vunpack.c.l.b16 %v4348
  %v4508 = vunpack.c.h.b16 %v4348
  %v4509 = vunpack.c.l.b16 %v4349
  %v4510 = vunpack.c.h.b16 %v4349
  %v4511 = vunpack.c.l.b16 %v4350
  %v4512 = vunpack.c.h.b16 %v4350
  %v4513 = vunpack.c.l.b16 %v4351
  %v4514 = vunpack.c.h.b16 %v4351
  %v4515 = vunpack.c.l.b16 %v4352
  %v4516 = vunpack.c.h.b16 %v4352
  %v4517 = vunpack.c.l.b16 %v4353
  %v4518 = vunpack.c.h.b16 %v4353
  %v4519 = vunpack.c.l.b16 %v4354
  %v4520 = vunpack.c.h.b16 %v4354
  %v4521 = vunpack.c.l.b16 %v4355
  %v4522 = vunpack.c.h.b16 %v4355
  %v4523 = vunpack.c.l.b16 %v4356
  %v4524 = vunpack.c.h.b16 %v4356
  %v4525 = vunpack.c.l.b16 %v4357
  %v4526 = vunpack.c.h.b16 %v4357
  %v4527 = vunpack.c.l.b16 %v4358
  %v4528 = vunpack.c.h.b16 %v4358
  %v4529 = vunpack.c.l.b16 %v4359
  %v4530 = vunpack.c.h.b16 %v4359
  %v4531 = vunpack.c.l.b16 %v4360
  %v4532 = vunpack.c.h.b16 %v4360
  %v4533 = vunpack.c.l.b16 %v4361
  %v4534 = vunpack.c.h.b16 %v4361
  %v4535 = vunpack.c.l.b16 %v4362
  %v4536 = vunpack.c.h.b16 %v4362
  %v4537 = vunpack.c.l.b16 %v4363
  %v4538 = vunpack.c.h.b16 %v4363
  %v4539 = vunpack.c.l.b16 %v4364
  %v4540 = vunpack.c.h.b16 %v4364
  %v4541 = vunpack.c.l.b16 %v4365
  %v4542 = vunpack.c.h.b16 %v4365
  %v4543 = vunpack.c.l.b16 %v4366
  %v4544 = vunpack.c.h.b16 %v4366
  %v4545 = vunpack.c.l.b16 %v4367
  %v4546 = vunpack.c.h.b16 %v4367
  %v4547 = vunpack.c.l.b16 %v4368
  %v4548 = vunpack.c.h.b16 %v4368
  %v4549 = vunpack.c.l.b16 %v4369
  %v4550 = vunpack.c.h.b16 %v4369
  %v4551 = vunpack.c.l.b16 %v4370
  %v4552 = vunpack.c.h.b16 %v4370
  %v4553 = vunpack.c.l.b16 %v4371
  %v4554 = vunpack.c.h.b16 %v4371
  %v4555 = vunpack.c.l.b16 %v4372
  %v4556 = vunpack.c.h.b16 %v4372
  %v4557 = vunpack.c.l.b16 %v4373
  %v4558 = vunpack.c.h.b16 %v4373
  %v4559 = vunpack.c.l.b16 %v4374
  %v4560 = vunpack.c.h.b16 %v4374
  %v4561 = vunpack.c.l.b16 %v4375
  %v4562 = vunpack.c.h.b16 %v4375
  %v4563 = vunpack.c.l.b16 %v4376
  %v4564 = vunpack.c.h.b16 %v4376
  %v4565 = vunpack.c.l.b16 %v4377
  %v4566 = vunpack.c.h.b16 %v4377
  %v4567 = vunpack.c.l.b16 %v4378
  %v4568 = vunpack.c.h.b16 %v4378
  %v4569 = vunpack.c.l.b16 %v4379
  %v4570 = vunpack.c.h.b16 %v4379
  %v4571 = vunpack.c.l.b16 %v4380
  %v4572 = vunpack.c.h.b16 %v4380
  %v4573 = vunpack.c.l.b16 %v4381
  %v4574 = vunpack.c.h.b16 %v4381
  %v4575 = vunpack.c.l.b16 %v4382
  %v4576 = vunpack.c.h.b16 %v4382
  %v4577 = vunpack.c.l.b16 %v4383
  %v4578 = vunpack.c.h.b16 %v4383
  %v4579 = vunpack.c.l.b16 %v4384
  %v4580 = vunpack.c.h.b16 %v4384
  %v4581 = vunpack.c.l.b16 %v4385
  %v4582 = vunpack.c.h.b16 %v4385
  %v4583 = vunpack.c.l.b16 %v4386
  %v4584 = vunpack.c.h.b16 %v4386
  %v4585 = vunpack.c.l.b16 %v4387
  %v4586 = vunpack.c.h.b16 %v4387
  %v4587 = vunpack.c.l.b16 %v4388
  %v4588 = vunpack.c.h.b16 %v4388
  %v4589 = vunpack.c.l.b16 %v4389
  %v4590 = vunpack.c.h.b16 %v4389
  %v4591 = vunpack.c.l.b16 %v4390
  %v4592 = vunpack.c.h.b16 %v4390
  %v4593 = vunpack.c.l.b16 %v4391
  %v4594 = vunpack.c.h.b16 %v4391
  %v4595 = vunpack.c.l.b16 %v4392
  %v4596 = vunpack.c.h.b16 %v4392
  %v4597 = vunpack.c.l.b16 %v4393
  %v4598 = vunpack.c.h.b16 %v4393
  %v4599 = vunpack.c.l.b16 %v4394
  %v4600 = vunpack.c.h.b16 %v4394
  %v4601 = vunpack.c.l.b16 %v4395
  %v4602 = vunpack.c.h.b16 %v4395
  %v4603 = vunpack.c.l.b16 %v4396
  %v4604 = vunpack.c.h.b16 %v4396
  %v4605 = vunpack.c.l.b16 %v4397
  %v4606 = vunpack.c.h.b16 %v4397
  %v4607 = vunpack.c.l.b16 %v4398
  %v4608 = vunpack.c.h.b16 %v4398
  %v4609 = vunpack.c.l.b16 %v4399
  %v4610 = vunpack.c.h.b16 %v4399
  %v4611 = vunpack.c.l.b16 %v4400
  %v4612 = vunpack.c.h.b16 %v4400
  %v4613 = vpack.c.b16 %v4493, %v4485
  %v4614 = vpack.c.b16 %v4494, %v4486
  %v4615 = vpack.c.b16 %v4495, %v4487
  %v4616 = vpack.c.b16 %v4496, %v4488
  %v4617 = vpack.c.b16 %v4497, %v4489
  %v4618 = vpack.c.b16 %v4498, %v4490
  %v4619 = vpack.c.b16 %v4499, %v4491
  %v4620 = vpack.c.b16 %v4500, %v4492
  %v4621 = vpack.c.b16 %v4509, %v4501
  %v4622 = vpack.c.b16 %v4510, %v4502
  %v4623 = vpack.c.b16 %v4511, %v4503
  %v4624 = vpack.c.b16 %v4512, %v4504
  %v4625 = vpack.c.b16 %v4513, %v4505
  %v4626 = vpack.c.b16 %v4514, %v4506
  %v4627 = vpack.c.b16 %v4515, %v4507
  %v4628 = vpack.c.b16 %v4516, %v4508
  %v4629 = vpack.c.b16 %v4525, %v4517
  %v4630 = vpack.c.b16 %v4526, %v4518
  %v4631 = vpack.c.b16 %v4527, %v4519
  %v4632 = vpack.c.b16 %v4528, %v4520
  %v4633 = vpack.c.b16 %v4529, %v4521
  %v4634 = vpack.c.b16 %v4530, %v4522
  %v4635 = vpack.c.b16 %v4531, %v4523
  %v4636 = vpack.c.b16 %v4532, %v4524
  %v4637 = vpack.c.b16 %v4541, %v4533
  %v4638 = vpack.c.b16 %v4542, %v4534
  %v4639 = vpack.c.b16 %v4543, %v4535
  %v4640 = vpack.c.b16 %v4544, %v4536
  %v4641 = vpack.c.b16 %v4545, %v4537
  %v4642 = vpack.c.b16 %v4546, %v4538
  %v4643 = vpack.c.b16 %v4547, %v4539
  %v4644 = vpack.c.b16 %v4548, %v4540
  %v4645 = vpack.c.b16 %v4557, %v4549
  %v4646 = vpack.c.b16 %v4558, %v4550
  %v4647 = vpack.c.b16 %v4559, %v4551
  %v4648 = vpack.c.b16 %v4560, %v4552
  %v4649 = vpack.c.b16 %v4561, %v4553
  %v4650 = vpack.c.b16 %v4562, %v4554
  %v4651 = vpack.c.b16 %v4563, %v4555
  %v4652 = vpack.c.b16 %v4564, %v4556
  %v4653 = vpack.c.b16 %v4573, %v4565
  %v4654 = vpack.c.b16 %v4574, %v4566
  %v4655 = vpack.c.b16 %v4575, %v4567
  %v4656 = vpack.c.b16 %v4576, %v4568
  %v4657 = vpack.c.b16 %v4577, %v4569
  %v4658 = vpack.c.b16 %v4578, %v4570
  %v4659 = vpack.c.b16 %v4579, %v4571
  %v4660 = vpack.c.b16 %v4580, %v4572
  %v4661 = vpack.c.b16 %v4589, %v4581
  %v4662 = vpack.c.b16 %v4590, %v4582
  %v4663 = vpack.c.b16 %v4591, %v4583
  %v4664 = vpack.c.b16 %v4592, %v4584
  %v4665 = vpack.c.b16 %v4593, %v4585
  %v4666 = vpack.c.b16 %v4594, %v4586
  %v4667 = vpack.c.b16 %v4595, %v4587
  %v4668 = vpack.c.b16 %v4596, %v4588
  %v4669 = vpack.c.b16 %v4605, %v4597
  %v4670 = vpack.c.b16 %v4606, %v4598
  %v4671 = vpack.c.b16 %v4607, %v4599
  %v4672 = vpack.c.b16 %v4608, %v4600
  %v4673 = vpack.c.b16 %v4609, %v4601
  %v4674 = vpack.c.b16 %v4610, %v4602
  %v4675 = vpack.c.b16 %v4611, %v4603
  %v4676 = vpack.c.b16 %v4612, %v4604
  %4741 = vmatpush.bf16.msra.mxu0 %v4669
  %4742 = vmatpush.bf16.msra.mxu0 %v4661
  %4743 = vmatpush.bf16.msra.mxu0 %v4653
  %4744 = vmatpush.bf16.msra.mxu0 %v4645
  %4745 = vmatpush.bf16.msra.mxu0 %v4637
  %4746 = vmatpush.bf16.msra.mxu0 %v4629
  %4747 = vmatpush.bf16.msra.mxu0 %v4621
  %4748 = vmatpush.bf16.msra.mxu0 %v4613
  %4749 = vmatmul.bf16.gmra.mxu0 %v4401
  %v4750 = vpop.f32.mrf.mxu0
  %v4751 = vadd.f32 %v4405, %v4750
  %v4752 = vpop.f32.mrf.mxu0
  %v4753 = vadd.f32 %v4405, %v4752
  %4754 = vdwg.mxu0
  %4755 = vmatpush.bf16.msra.mxu0 %v4670
  %4756 = vmatpush.bf16.msra.mxu0 %v4662
  %4757 = vmatpush.bf16.msra.mxu0 %v4654
  %4758 = vmatpush.bf16.msra.mxu0 %v4646
  %4759 = vmatpush.bf16.msra.mxu0 %v4638
  %4760 = vmatpush.bf16.msra.mxu0 %v4630
  %4761 = vmatpush.bf16.msra.mxu0 %v4622
  %4762 = vmatpush.bf16.msra.mxu0 %v4614
  %4763 = vmatmul.bf16.gmra.mxu0 %v4401
  %v4764 = vpop.f32.mrf.mxu0
  %v4765 = vadd.f32 %v4406, %v4764
  %v4766 = vpop.f32.mrf.mxu0
  %v4767 = vadd.f32 %v4406, %v4766
  %4768 = vdwg.mxu0
  %4769 = vmatpush.bf16.msra.mxu0 %v4671
  %4770 = vmatpush.bf16.msra.mxu0 %v4663
  %4771 = vmatpush.bf16.msra.mxu0 %v4655
  %4772 = vmatpush.bf16.msra.mxu0 %v4647
  %4773 = vmatpush.bf16.msra.mxu0 %v4639
  %4774 = vmatpush.bf16.msra.mxu0 %v4631
  %4775 = vmatpush.bf16.msra.mxu0 %v4623
  %4776 = vmatpush.bf16.msra.mxu0 %v4615
  %4777 = vmatmul.bf16.gmra.mxu0 %v4401
  %v4778 = vpop.f32.mrf.mxu0
  %v4779 = vadd.f32 %v4407, %v4778
  %v4780 = vpop.f32.mrf.mxu0
  %v4781 = vadd.f32 %v4407, %v4780
  %4782 = vdwg.mxu0
  %4783 = vmatpush.bf16.msra.mxu0 %v4672
  %4784 = vmatpush.bf16.msra.mxu0 %v4664
  %4785 = vmatpush.bf16.msra.mxu0 %v4656
  %4786 = vmatpush.bf16.msra.mxu0 %v4648
  %4787 = vmatpush.bf16.msra.mxu0 %v4640
  %4788 = vmatpush.bf16.msra.mxu0 %v4632
  %4789 = vmatpush.bf16.msra.mxu0 %v4624
  %4790 = vmatpush.bf16.msra.mxu0 %v4616
  %4791 = vmatmul.bf16.gmra.mxu0 %v4401
  %v4792 = vpop.f32.mrf.mxu0
  %v4793 = vadd.f32 %v4408, %v4792
  %v4794 = vpop.f32.mrf.mxu0
  %v4795 = vadd.f32 %v4408, %v4794
  %4796 = vdwg.mxu0
  %4797 = vmatpush.bf16.msra.mxu0 %v4673
  %4798 = vmatpush.bf16.msra.mxu0 %v4665
  %4799 = vmatpush.bf16.msra.mxu0 %v4657
  %4800 = vmatpush.bf16.msra.mxu0 %v4649
  %4801 = vmatpush.bf16.msra.mxu0 %v4641
  %4802 = vmatpush.bf16.msra.mxu0 %v4633
  %4803 = vmatpush.bf16.msra.mxu0 %v4625
  %4804 = vmatpush.bf16.msra.mxu0 %v4617
  %4805 = vmatmul.bf16.gmra.mxu0 %v4401
  %v4806 = vpop.f32.mrf.mxu0
  %v4807 = vadd.f32 %v4409, %v4806
  %v4808 = vpop.f32.mrf.mxu0
  %v4809 = vadd.f32 %v4409, %v4808
  %4810 = vdwg.mxu0
  %4811 = vmatpush.bf16.msra.mxu0 %v4674
  %4812 = vmatpush.bf16.msra.mxu0 %v4666
  %4813 = vmatpush.bf16.msra.mxu0 %v4658
  %4814 = vmatpush.bf16.msra.mxu0 %v4650
  %4815 = vmatpush.bf16.msra.mxu0 %v4642
  %4816 = vmatpush.bf16.msra.mxu0 %v4634
  %4817 = vmatpush.bf16.msra.mxu0 %v4626
  %4818 = vmatpush.bf16.msra.mxu0 %v4618
  %4819 = vmatmul.bf16.gmra.mxu0 %v4401
  %v4820 = vpop.f32.mrf.mxu0
  %v4821 = vadd.f32 %v4410, %v4820
  %v4822 = vpop.f32.mrf.mxu0
  %v4823 = vadd.f32 %v4410, %v4822
  %4824 = vdwg.mxu0
  %4825 = vmatpush.bf16.msra.mxu0 %v4675
  %4826 = vmatpush.bf16.msra.mxu0 %v4667
  %4827 = vmatpush.bf16.msra.mxu0 %v4659
  %4828 = vmatpush.bf16.msra.mxu0 %v4651
  %4829 = vmatpush.bf16.msra.mxu0 %v4643
  %4830 = vmatpush.bf16.msra.mxu0 %v4635
  %4831 = vmatpush.bf16.msra.mxu0 %v4627
  %4832 = vmatpush.bf16.msra.mxu0 %v4619
  %4833 = vmatmul.bf16.gmra.mxu0 %v4401
  %v4834 = vpop.f32.mrf.mxu0
  %v4835 = vadd.f32 %v4411, %v4834
  %v4836 = vpop.f32.mrf.mxu0
  %v4837 = vadd.f32 %v4411, %v4836
  %4838 = vdwg.mxu0
  %4839 = vmatpush.bf16.msra.mxu0 %v4676
  %4840 = vmatpush.bf16.msra.mxu0 %v4668
  %4841 = vmatpush.bf16.msra.mxu0 %v4660
  %4842 = vmatpush.bf16.msra.mxu0 %v4652
  %4843 = vmatpush.bf16.msra.mxu0 %v4644
  %4844 = vmatpush.bf16.msra.mxu0 %v4636
  %4845 = vmatpush.bf16.msra.mxu0 %v4628
  %4846 = vmatpush.bf16.msra.mxu0 %v4620
  %4847 = vmatmul.bf16.gmra.mxu0 %v4401
  %v4848 = vpop.f32.mrf.mxu0
  %v4849 = vadd.f32 %v4412, %v4848
  %v4850 = vpop.f32.mrf.mxu0
  %v4851 = vadd.f32 %v4412, %v4850
  %4852 = vdwg.mxu0
  %s4853 = scalar_lea.vmem %s6, 256
  %v4854 = vld [vmem:[%s4853] sm:$0xff]
  %v4855 = vld [vmem:[%s4853 + $0x8] sm:$0xff]
  %v4856 = vld [vmem:[%s4853 + $0x10] sm:$0xff]
  %v4857 = vld [vmem:[%s4853 + $0x18] sm:$0xff]
  %v4858 = vld [vmem:[%s4853 + $0x20] sm:$0xff]
  %v4859 = vld [vmem:[%s4853 + $0x28] sm:$0xff]
  %v4860 = vld [vmem:[%s4853 + $0x30] sm:$0xff]
  %v4861 = vld [vmem:[%s4853 + $0x38] sm:$0xff]
  %v4862 = vld [vmem:[%s4853 + $0x40] sm:$0xff]
  %v4863 = vld [vmem:[%s4853 + $0x48] sm:$0xff]
  %v4864 = vld [vmem:[%s4853 + $0x50] sm:$0xff]
  %v4865 = vld [vmem:[%s4853 + $0x58] sm:$0xff]
  %v4866 = vld [vmem:[%s4853 + $0x60] sm:$0xff]
  %v4867 = vld [vmem:[%s4853 + $0x68] sm:$0xff]
  %v4868 = vld [vmem:[%s4853 + $0x70] sm:$0xff]
  %v4869 = vld [vmem:[%s4853 + $0x78] sm:$0xff]
  %v4870 = vld [vmem:[%s4853 + $0x80] sm:$0xff]
  %v4871 = vld [vmem:[%s4853 + $0x88] sm:$0xff]
  %v4872 = vld [vmem:[%s4853 + $0x90] sm:$0xff]
  %v4873 = vld [vmem:[%s4853 + $0x98] sm:$0xff]
  %v4874 = vld [vmem:[%s4853 + $0xa0] sm:$0xff]
  %v4875 = vld [vmem:[%s4853 + $0xa8] sm:$0xff]
  %v4876 = vld [vmem:[%s4853 + $0xb0] sm:$0xff]
  %v4877 = vld [vmem:[%s4853 + $0xb8] sm:$0xff]
  %v4878 = vld [vmem:[%s4853 + $0xc0] sm:$0xff]
  %v4879 = vld [vmem:[%s4853 + $0xc8] sm:$0xff]
  %v4880 = vld [vmem:[%s4853 + $0xd0] sm:$0xff]
  %v4881 = vld [vmem:[%s4853 + $0xd8] sm:$0xff]
  %v4882 = vld [vmem:[%s4853 + $0xe0] sm:$0xff]
  %v4883 = vld [vmem:[%s4853 + $0xe8] sm:$0xff]
  %v4884 = vld [vmem:[%s4853 + $0xf0] sm:$0xff]
  %v4885 = vld [vmem:[%s4853 + $0xf8] sm:$0xff]
  %v4886 = vpack.c.bf16 %v4329, %v4328
  %s4887 = scalar_lea.vmem %s7, 4
  %v4888 = vld [vmem:[%s4887] sm:$0xf]
  %v4890 = vperm.slane %v4888, 0
  %v4891 = vperm.slane %v4888, 1
  %v4892 = vperm.slane %v4888, 2
  %v4893 = vperm.slane %v4888, 3
  %v4930 = vunpack.c.l.b16 %v4854
  %v4931 = vunpack.c.h.b16 %v4854
  %v4932 = vunpack.c.l.b16 %v4855
  %v4933 = vunpack.c.h.b16 %v4855
  %v4934 = vunpack.c.l.b16 %v4856
  %v4935 = vunpack.c.h.b16 %v4856
  %v4936 = vunpack.c.l.b16 %v4857
  %v4937 = vunpack.c.h.b16 %v4857
  %v4938 = vunpack.c.l.b16 %v4858
  %v4939 = vunpack.c.h.b16 %v4858
  %v4940 = vunpack.c.l.b16 %v4859
  %v4941 = vunpack.c.h.b16 %v4859
  %v4942 = vunpack.c.l.b16 %v4860
  %v4943 = vunpack.c.h.b16 %v4860
  %v4944 = vunpack.c.l.b16 %v4861
  %v4945 = vunpack.c.h.b16 %v4861
  %v4946 = vunpack.c.l.b16 %v4862
  %v4947 = vunpack.c.h.b16 %v4862
  %v4948 = vunpack.c.l.b16 %v4863
  %v4949 = vunpack.c.h.b16 %v4863
  %v4950 = vunpack.c.l.b16 %v4864
  %v4951 = vunpack.c.h.b16 %v4864
  %v4952 = vunpack.c.l.b16 %v4865
  %v4953 = vunpack.c.h.b16 %v4865
  %v4954 = vunpack.c.l.b16 %v4866
  %v4955 = vunpack.c.h.b16 %v4866
  %v4956 = vunpack.c.l.b16 %v4867
  %v4957 = vunpack.c.h.b16 %v4867
  %v4958 = vunpack.c.l.b16 %v4868
  %v4959 = vunpack.c.h.b16 %v4868
  %v4960 = vunpack.c.l.b16 %v4869
  %v4961 = vunpack.c.h.b16 %v4869
  %v4962 = vunpack.c.l.b16 %v4870
  %v4963 = vunpack.c.h.b16 %v4870
  %v4964 = vunpack.c.l.b16 %v4871
  %v4965 = vunpack.c.h.b16 %v4871
  %v4966 = vunpack.c.l.b16 %v4872
  %v4967 = vunpack.c.h.b16 %v4872
  %v4968 = vunpack.c.l.b16 %v4873
  %v4969 = vunpack.c.h.b16 %v4873
  %v4970 = vunpack.c.l.b16 %v4874
  %v4971 = vunpack.c.h.b16 %v4874
  %v4972 = vunpack.c.l.b16 %v4875
  %v4973 = vunpack.c.h.b16 %v4875
  %v4974 = vunpack.c.l.b16 %v4876
  %v4975 = vunpack.c.h.b16 %v4876
  %v4976 = vunpack.c.l.b16 %v4877
  %v4977 = vunpack.c.h.b16 %v4877
  %v4978 = vunpack.c.l.b16 %v4878
  %v4979 = vunpack.c.h.b16 %v4878
  %v4980 = vunpack.c.l.b16 %v4879
  %v4981 = vunpack.c.h.b16 %v4879
  %v4982 = vunpack.c.l.b16 %v4880
  %v4983 = vunpack.c.h.b16 %v4880
  %v4984 = vunpack.c.l.b16 %v4881
  %v4985 = vunpack.c.h.b16 %v4881
  %v4986 = vunpack.c.l.b16 %v4882
  %v4987 = vunpack.c.h.b16 %v4882
  %v4988 = vunpack.c.l.b16 %v4883
  %v4989 = vunpack.c.h.b16 %v4883
  %v4990 = vunpack.c.l.b16 %v4884
  %v4991 = vunpack.c.h.b16 %v4884
  %v4992 = vunpack.c.l.b16 %v4885
  %v4993 = vunpack.c.h.b16 %v4885
  %v4994 = vpack.c.b16 %v4934, %v4930
  %v4995 = vpack.c.b16 %v4935, %v4931
  %v4996 = vpack.c.b16 %v4936, %v4932
  %v4997 = vpack.c.b16 %v4937, %v4933
  %v4998 = vpack.c.b16 %v4942, %v4938
  %v4999 = vpack.c.b16 %v4943, %v4939
  %v5000 = vpack.c.b16 %v4944, %v4940
  %v5001 = vpack.c.b16 %v4945, %v4941
  %v5002 = vpack.c.b16 %v4950, %v4946
  %v5003 = vpack.c.b16 %v4951, %v4947
  %v5004 = vpack.c.b16 %v4952, %v4948
  %v5005 = vpack.c.b16 %v4953, %v4949
  %v5006 = vpack.c.b16 %v4958, %v4954
  %v5007 = vpack.c.b16 %v4959, %v4955
  %v5008 = vpack.c.b16 %v4960, %v4956
  %v5009 = vpack.c.b16 %v4961, %v4957
  %v5010 = vpack.c.b16 %v4966, %v4962
  %v5011 = vpack.c.b16 %v4967, %v4963
  %v5012 = vpack.c.b16 %v4968, %v4964
  %v5013 = vpack.c.b16 %v4969, %v4965
  %v5014 = vpack.c.b16 %v4974, %v4970
  %v5015 = vpack.c.b16 %v4975, %v4971
  %v5016 = vpack.c.b16 %v4976, %v4972
  %v5017 = vpack.c.b16 %v4977, %v4973
  %v5018 = vpack.c.b16 %v4982, %v4978
  %v5019 = vpack.c.b16 %v4983, %v4979
  %v5020 = vpack.c.b16 %v4984, %v4980
  %v5021 = vpack.c.b16 %v4985, %v4981
  %v5022 = vpack.c.b16 %v4990, %v4986
  %v5023 = vpack.c.b16 %v4991, %v4987
  %v5024 = vpack.c.b16 %v4992, %v4988
  %v5025 = vpack.c.b16 %v4993, %v4989
  %5058 = vmatpush.bf16.msra.mxu0 %v5022
  %5059 = vmatpush.bf16.msra.mxu0 %v5018
  %5060 = vmatpush.bf16.msra.mxu0 %v5014
  %5061 = vmatpush.bf16.msra.mxu0 %v5010
  %5062 = vmatpush.bf16.msra.mxu0 %v5006
  %5063 = vmatpush.bf16.msra.mxu0 %v5002
  %5064 = vmatpush.bf16.msra.mxu0 %v4998
  %5065 = vmatpush.bf16.msra.mxu0 %v4994
  %5066 = vmatmul.bf16.gmra.mxu0 %v4886
  %v5067 = vpop.f32.mrf.mxu0
  %v5068 = vadd.f32 %v4890, %v5067
  %v5069 = vpop.f32.mrf.mxu0
  %v5070 = vadd.f32 %v4890, %v5069
  %5071 = vdwg.mxu0
  %5072 = vmatpush.bf16.msra.mxu0 %v5023
  %5073 = vmatpush.bf16.msra.mxu0 %v5019
  %5074 = vmatpush.bf16.msra.mxu0 %v5015
  %5075 = vmatpush.bf16.msra.mxu0 %v5011
  %5076 = vmatpush.bf16.msra.mxu0 %v5007
  %5077 = vmatpush.bf16.msra.mxu0 %v5003
  %5078 = vmatpush.bf16.msra.mxu0 %v4999
  %5079 = vmatpush.bf16.msra.mxu0 %v4995
  %5080 = vmatmul.bf16.gmra.mxu0 %v4886
  %v5081 = vpop.f32.mrf.mxu0
  %v5082 = vadd.f32 %v4891, %v5081
  %v5083 = vpop.f32.mrf.mxu0
  %v5084 = vadd.f32 %v4891, %v5083
  %5085 = vdwg.mxu0
  %5086 = vmatpush.bf16.msra.mxu0 %v5024
  %5087 = vmatpush.bf16.msra.mxu0 %v5020
  %5088 = vmatpush.bf16.msra.mxu0 %v5016
  %5089 = vmatpush.bf16.msra.mxu0 %v5012
  %5090 = vmatpush.bf16.msra.mxu0 %v5008
  %5091 = vmatpush.bf16.msra.mxu0 %v5004
  %5092 = vmatpush.bf16.msra.mxu0 %v5000
  %5093 = vmatpush.bf16.msra.mxu0 %v4996
  %5094 = vmatmul.bf16.gmra.mxu0 %v4886
  %v5095 = vpop.f32.mrf.mxu0
  %v5096 = vadd.f32 %v4892, %v5095
  %v5097 = vpop.f32.mrf.mxu0
  %v5098 = vadd.f32 %v4892, %v5097
  %5099 = vdwg.mxu0
  %5100 = vmatpush.bf16.msra.mxu0 %v5025
  %5101 = vmatpush.bf16.msra.mxu0 %v5021
  %5102 = vmatpush.bf16.msra.mxu0 %v5017
  %5103 = vmatpush.bf16.msra.mxu0 %v5013
  %5104 = vmatpush.bf16.msra.mxu0 %v5009
  %5105 = vmatpush.bf16.msra.mxu0 %v5005
  %5106 = vmatpush.bf16.msra.mxu0 %v5001
  %5107 = vmatpush.bf16.msra.mxu0 %v4997
  %5108 = vmatmul.bf16.gmra.mxu0 %v4886
  %v5109 = vpop.f32.mrf.mxu0
  %v5110 = vadd.f32 %v4893, %v5109
  %v5111 = vpop.f32.mrf.mxu0
  %v5112 = vadd.f32 %v4893, %v5111
  %5113 = vdwg.mxu0
  %s5114 = scalar_lea.vmem %s8, 256
  %v5115 = vld [vmem:[%s5114] sm:$0xf]
  %v5116 = vld [vmem:[%s5114 + $0x4] sm:$0xf]
  %v5117 = vld [vmem:[%s5114 + $0x8] sm:$0xf]
  %v5118 = vld [vmem:[%s5114 + $0xc] sm:$0xf]
  %v5119 = vld [vmem:[%s5114 + $0x10] sm:$0xf]
  %v5120 = vld [vmem:[%s5114 + $0x14] sm:$0xf]
  %v5121 = vld [vmem:[%s5114 + $0x18] sm:$0xf]
  %v5122 = vld [vmem:[%s5114 + $0x1c] sm:$0xf]
  %v5123 = vld [vmem:[%s5114 + $0x20] sm:$0xf]
  %v5124 = vld [vmem:[%s5114 + $0x24] sm:$0xf]
  %v5125 = vld [vmem:[%s5114 + $0x28] sm:$0xf]
  %v5126 = vld [vmem:[%s5114 + $0x2c] sm:$0xf]
  %v5127 = vld [vmem:[%s5114 + $0x30] sm:$0xf]
  %v5128 = vld [vmem:[%s5114 + $0x34] sm:$0xf]
  %v5129 = vld [vmem:[%s5114 + $0x38] sm:$0xf]
  %v5130 = vld [vmem:[%s5114 + $0x3c] sm:$0xf]
  %v5131 = vld [vmem:[%s5114 + $0x40] sm:$0xf]
  %v5132 = vld [vmem:[%s5114 + $0x44] sm:$0xf]
  %v5133 = vld [vmem:[%s5114 + $0x48] sm:$0xf]
  %v5134 = vld [vmem:[%s5114 + $0x4c] sm:$0xf]
  %v5135 = vld [vmem:[%s5114 + $0x50] sm:$0xf]
  %v5136 = vld [vmem:[%s5114 + $0x54] sm:$0xf]
  %v5137 = vld [vmem:[%s5114 + $0x58] sm:$0xf]
  %v5138 = vld [vmem:[%s5114 + $0x5c] sm:$0xf]
  %v5139 = vld [vmem:[%s5114 + $0x60] sm:$0xf]
  %v5140 = vld [vmem:[%s5114 + $0x64] sm:$0xf]
  %v5141 = vld [vmem:[%s5114 + $0x68] sm:$0xf]
  %v5142 = vld [vmem:[%s5114 + $0x6c] sm:$0xf]
  %v5143 = vld [vmem:[%s5114 + $0x70] sm:$0xf]
  %v5144 = vld [vmem:[%s5114 + $0x74] sm:$0xf]
  %v5145 = vld [vmem:[%s5114 + $0x78] sm:$0xf]
  %v5146 = vld [vmem:[%s5114 + $0x7c] sm:$0xf]
  %v5147 = vld [vmem:[%s5114 + $0x80] sm:$0xf]
  %v5148 = vld [vmem:[%s5114 + $0x84] sm:$0xf]
  %v5149 = vld [vmem:[%s5114 + $0x88] sm:$0xf]
  %v5150 = vld [vmem:[%s5114 + $0x8c] sm:$0xf]
  %v5151 = vld [vmem:[%s5114 + $0x90] sm:$0xf]
  %v5152 = vld [vmem:[%s5114 + $0x94] sm:$0xf]
  %v5153 = vld [vmem:[%s5114 + $0x98] sm:$0xf]
  %v5154 = vld [vmem:[%s5114 + $0x9c] sm:$0xf]
  %v5155 = vld [vmem:[%s5114 + $0xa0] sm:$0xf]
  %v5156 = vld [vmem:[%s5114 + $0xa4] sm:$0xf]
  %v5157 = vld [vmem:[%s5114 + $0xa8] sm:$0xf]
  %v5158 = vld [vmem:[%s5114 + $0xac] sm:$0xf]
  %v5159 = vld [vmem:[%s5114 + $0xb0] sm:$0xf]
  %v5160 = vld [vmem:[%s5114 + $0xb4] sm:$0xf]
  %v5161 = vld [vmem:[%s5114 + $0xb8] sm:$0xf]
  %v5162 = vld [vmem:[%s5114 + $0xbc] sm:$0xf]
  %v5163 = vld [vmem:[%s5114 + $0xc0] sm:$0xf]
  %v5164 = vld [vmem:[%s5114 + $0xc4] sm:$0xf]
  %v5165 = vld [vmem:[%s5114 + $0xc8] sm:$0xf]
  %v5166 = vld [vmem:[%s5114 + $0xcc] sm:$0xf]
  %v5167 = vld [vmem:[%s5114 + $0xd0] sm:$0xf]
  %v5168 = vld [vmem:[%s5114 + $0xd4] sm:$0xf]
  %v5169 = vld [vmem:[%s5114 + $0xd8] sm:$0xf]
  %v5170 = vld [vmem:[%s5114 + $0xdc] sm:$0xf]
  %v5171 = vld [vmem:[%s5114 + $0xe0] sm:$0xf]
  %v5172 = vld [vmem:[%s5114 + $0xe4] sm:$0xf]
  %v5173 = vld [vmem:[%s5114 + $0xe8] sm:$0xf]
  %v5174 = vld [vmem:[%s5114 + $0xec] sm:$0xf]
  %v5175 = vld [vmem:[%s5114 + $0xf0] sm:$0xf]
  %v5176 = vld [vmem:[%s5114 + $0xf4] sm:$0xf]
  %v5177 = vld [vmem:[%s5114 + $0xf8] sm:$0xf]
  %v5178 = vld [vmem:[%s5114 + $0xfc] sm:$0xf]
  %v5179 = vpack.c.bf16 %v4751, %v4751
  %v5180 = vpack.c.bf16 %v4753, %v4753
  %v5181 = vpack.c.bf16 %v4807, %v4807
  %v5182 = vpack.c.bf16 %v4809, %v4809
  %v5183 = vpack.c.bf16 %v5068, %v5068
  %v5184 = vpack.c.bf16 %v5070, %v5070
  %5185 = vmatpush.bf16.xpose.msra.mxu0 0
  %5186 = vmatpush.bf16.xpose.msra.mxu0 0
  %5187 = vmatpush.bf16.xpose.msra.mxu0 0
  %5188 = vmatpush.bf16.xpose.msra.mxu0 0
  %5189 = vmatpush.bf16.xpose.msra.mxu0 0
  %5190 = vmatpush.bf16.xpose.msra.mxu0 0
  %5191 = vmatpush.bf16.xpose.msra.mxu0 0
  %5192 = vmatpush.bf16.xpose.msra.mxu0 %v5181
  %5193 = vmatmul.bf16.gmra.mxu0 %v5179
  %v5194 = vpop.f32.mrf.mxu0
  %v5195 = vadd.f32 0.0, %v5194
  %v5196 = vpop.f32.mrf.mxu0
  %5197 = vdwg.mxu0
  %5198 = vmatpush.bf16.xpose.msra.mxu0 0
  %5199 = vmatpush.bf16.xpose.msra.mxu0 0
  %5200 = vmatpush.bf16.xpose.msra.mxu0 0
  %5201 = vmatpush.bf16.xpose.msra.mxu0 0
  %5202 = vmatpush.bf16.xpose.msra.mxu0 0
  %5203 = vmatpush.bf16.xpose.msra.mxu0 0
  %5204 = vmatpush.bf16.xpose.msra.mxu0 0
  %5205 = vmatpush.bf16.xpose.msra.mxu0 %v5182
  %5206 = vmatmul.bf16.gmra.mxu0 %v5180
  %v5207 = vpop.f32.mrf.mxu0
  %v5208 = vadd.f32 0.0, %v5207
  %v5209 = vpop.f32.mrf.mxu0
  %5210 = vdwg.mxu0
  %v5211 = vsel %vm2084, %v5195, -inf
  %5212 = vmax.xlane.f32.xlu0 %v5211
  %v5213 = vpop.xlane.xlu0 %5212
  %v5214 = vsel %vm2084, %v5208, -inf
  %5215 = vmax.xlane.f32.xlu0 %v5214
  %v5216 = vpop.xlane.xlu0 %5215
  %v5217 = vsub.f32 %v5195, %v5213
  %v5218 = vsub.f32 %v5208, %v5216
  %v5219 = vmul.f32 %v5217, 1.442695
  %v5220 = vpow.pop %v5219
  %v5221 = vmul.f32 %v5218, 1.442695
  %v5222 = vpow.pop %v5221
  %v5223 = vsel %vm2084, %v5220, 0.0
  %5224 = vadd.xlane.f32.xlu0 %v5223
  %v5225 = vpop.xlane.xlu0 %5224
  %v5226 = vsel %vm2084, %v5222, 0.0
  %5227 = vadd.xlane.f32.xlu0 %v5226
  %v5228 = vpop.xlane.xlu0 %5227
  %v5229 = vrcp.pop %v5225
  %v5230 = vmul.f32 %v5225, %v5229
  %v5231 = vsub.f32 1.0, %v5230
  %v5232 = vmul.f32 %v5229, %v5231
  %v5233 = vadd.f32 %v5229, %v5232
  %vm5234 = vweird.f32 %v5225
  %vm5235 = vweird.f32 %v5229
  %vm5236 = vmor %vm5234, %vm5235
  %v5237 = vsel %vm5236, %v5229, %v5233
  %v5238 = vand.u32 2147483647, %v5225
  %vm5239 = vcmp.eq.f32.partialorder %v5238, 8.507059e+37
  %v5240 = vand.u32 %v5225, 2147483648
  %v5241 = vor.u32 1.1754944e-38, %v5240
  %v5242 = vsel %vm5239, %v5241, %v5237
  %v5243 = vmul.f32 %v5220, %v5242
  %v5244 = vrcp.pop %v5228
  %v5245 = vmul.f32 %v5228, %v5244
  %v5246 = vsub.f32 1.0, %v5245
  %v5247 = vmul.f32 %v5244, %v5246
  %v5248 = vadd.f32 %v5244, %v5247
  %vm5249 = vweird.f32 %v5228
  %vm5250 = vweird.f32 %v5244
  %vm5251 = vmor %vm5249, %vm5250
  %v5252 = vsel %vm5251, %v5244, %v5248
  %v5253 = vand.u32 2147483647, %v5228
  %vm5254 = vcmp.eq.f32.partialorder %v5253, 8.507059e+37
  %v5255 = vand.u32 %v5228, 2147483648
  %v5256 = vor.u32 1.1754944e-38, %v5255
  %v5257 = vsel %vm5254, %v5256, %v5252
  %v5258 = vmul.f32 %v5222, %v5257
  %v5259 = vpack.c.bf16 %v5243, %v5243
  %v5260 = vpack.c.bf16 %v5258, %v5258
  %v5262 = vsel %vm2084, %v5259, 0
  %v5265 = vsel %vm2138, %v5183, 0
  %5267 = vmatpush.bf16.msra.mxu0 0
  %5268 = vmatpush.bf16.msra.mxu0 0
  %5269 = vmatpush.bf16.msra.mxu0 0
  %5270 = vmatpush.bf16.msra.mxu0 0
  %5271 = vmatpush.bf16.msra.mxu0 0
  %5272 = vmatpush.bf16.msra.mxu0 0
  %5273 = vmatpush.bf16.msra.mxu0 0
  %5274 = vmatpush.bf16.msra.mxu0 %v5265
  %5275 = vmatmul.bf16.gmra.mxu0 %v5262
  %v5276 = vpop.f32.mrf.mxu0
  %v5277 = vadd.f32 0.0, %v5276
  %v5278 = vpop.f32.mrf.mxu0
  %5279 = vdwg.mxu0
  %v5281 = vsel %vm2084, %v5260, 0
  %v5284 = vsel %vm2138, %v5184, 0
  %5286 = vmatpush.bf16.msra.mxu0 0
  %5287 = vmatpush.bf16.msra.mxu0 0
  %5288 = vmatpush.bf16.msra.mxu0 0
  %5289 = vmatpush.bf16.msra.mxu0 0
  %5290 = vmatpush.bf16.msra.mxu0 0
  %5291 = vmatpush.bf16.msra.mxu0 0
  %5292 = vmatpush.bf16.msra.mxu0 0
  %5293 = vmatpush.bf16.msra.mxu0 %v5284
  %5294 = vmatmul.bf16.gmra.mxu0 %v5281
  %v5295 = vpop.f32.mrf.mxu0
  %v5296 = vadd.f32 0.0, %v5295
  %v5297 = vpop.f32.mrf.mxu0
  %5298 = vdwg.mxu0
  %v5299 = vpack.c.bf16 %v5296, %v5277
  %v5300 = vpack.c.bf16 %v4765, %v4765
  %v5301 = vpack.c.bf16 %v4767, %v4767
  %v5302 = vpack.c.bf16 %v4821, %v4821
  %v5303 = vpack.c.bf16 %v4823, %v4823
  %v5304 = vpack.c.bf16 %v5082, %v5082
  %v5305 = vpack.c.bf16 %v5084, %v5084
  %5306 = vmatpush.bf16.xpose.msra.mxu0 0
  %5307 = vmatpush.bf16.xpose.msra.mxu0 0
  %5308 = vmatpush.bf16.xpose.msra.mxu0 0
  %5309 = vmatpush.bf16.xpose.msra.mxu0 0
  %5310 = vmatpush.bf16.xpose.msra.mxu0 0
  %5311 = vmatpush.bf16.xpose.msra.mxu0 0
  %5312 = vmatpush.bf16.xpose.msra.mxu0 0
  %5313 = vmatpush.bf16.xpose.msra.mxu0 %v5302
  %5314 = vmatmul.bf16.gmra.mxu0 %v5300
  %v5315 = vpop.f32.mrf.mxu0
  %v5316 = vadd.f32 0.0, %v5315
  %v5317 = vpop.f32.mrf.mxu0
  %5318 = vdwg.mxu0
  %5319 = vmatpush.bf16.xpose.msra.mxu0 0
  %5320 = vmatpush.bf16.xpose.msra.mxu0 0
  %5321 = vmatpush.bf16.xpose.msra.mxu0 0
  %5322 = vmatpush.bf16.xpose.msra.mxu0 0
  %5323 = vmatpush.bf16.xpose.msra.mxu0 0
  %5324 = vmatpush.bf16.xpose.msra.mxu0 0
  %5325 = vmatpush.bf16.xpose.msra.mxu0 0
  %5326 = vmatpush.bf16.xpose.msra.mxu0 %v5303
  %5327 = vmatmul.bf16.gmra.mxu0 %v5301
  %v5328 = vpop.f32.mrf.mxu0
  %v5329 = vadd.f32 0.0, %v5328
  %v5330 = vpop.f32.mrf.mxu0
  %5331 = vdwg.mxu0
  %v5332 = vsel %vm2084, %v5316, -inf
  %5333 = vmax.xlane.f32.xlu0 %v5332
  %v5334 = vpop.xlane.xlu0 %5333
  %v5335 = vsel %vm2084, %v5329, -inf
  %5336 = vmax.xlane.f32.xlu0 %v5335
  %v5337 = vpop.xlane.xlu0 %5336
  %v5338 = vsub.f32 %v5316, %v5334
  %v5339 = vsub.f32 %v5329, %v5337
  %v5340 = vmul.f32 %v5338, 1.442695
  %v5341 = vpow.pop %v5340
  %v5342 = vmul.f32 %v5339, 1.442695
  %v5343 = vpow.pop %v5342
  %v5344 = vsel %vm2084, %v5341, 0.0
  %5345 = vadd.xlane.f32.xlu0 %v5344
  %v5346 = vpop.xlane.xlu0 %5345
  %v5347 = vsel %vm2084, %v5343, 0.0
  %5348 = vadd.xlane.f32.xlu0 %v5347
  %v5349 = vpop.xlane.xlu0 %5348
  %v5350 = vrcp.pop %v5346
  %v5351 = vmul.f32 %v5346, %v5350
  %v5352 = vsub.f32 1.0, %v5351
  %v5353 = vmul.f32 %v5350, %v5352
  %v5354 = vadd.f32 %v5350, %v5353
  %vm5355 = vweird.f32 %v5346
  %vm5356 = vweird.f32 %v5350
  %vm5357 = vmor %vm5355, %vm5356
  %v5358 = vsel %vm5357, %v5350, %v5354
  %v5359 = vand.u32 2147483647, %v5346
  %vm5360 = vcmp.eq.f32.partialorder %v5359, 8.507059e+37
  %v5361 = vand.u32 %v5346, 2147483648
  %v5362 = vor.u32 1.1754944e-38, %v5361
  %v5363 = vsel %vm5360, %v5362, %v5358
  %v5364 = vmul.f32 %v5341, %v5363
  %v5365 = vrcp.pop %v5349
  %v5366 = vmul.f32 %v5349, %v5365
  %v5367 = vsub.f32 1.0, %v5366
  %v5368 = vmul.f32 %v5365, %v5367
  %v5369 = vadd.f32 %v5365, %v5368
  %vm5370 = vweird.f32 %v5349
  %vm5371 = vweird.f32 %v5365
  %vm5372 = vmor %vm5370, %vm5371
  %v5373 = vsel %vm5372, %v5365, %v5369
  %v5374 = vand.u32 2147483647, %v5349
  %vm5375 = vcmp.eq.f32.partialorder %v5374, 8.507059e+37
  %v5376 = vand.u32 %v5349, 2147483648
  %v5377 = vor.u32 1.1754944e-38, %v5376
  %v5378 = vsel %vm5375, %v5377, %v5373
  %v5379 = vmul.f32 %v5343, %v5378
  %v5380 = vpack.c.bf16 %v5364, %v5364
  %v5381 = vpack.c.bf16 %v5379, %v5379
  %v5383 = vsel %vm2084, %v5380, 0
  %v5386 = vsel %vm2138, %v5304, 0
  %5388 = vmatpush.bf16.msra.mxu0 0
  %5389 = vmatpush.bf16.msra.mxu0 0
  %5390 = vmatpush.bf16.msra.mxu0 0
  %5391 = vmatpush.bf16.msra.mxu0 0
  %5392 = vmatpush.bf16.msra.mxu0 0
  %5393 = vmatpush.bf16.msra.mxu0 0
  %5394 = vmatpush.bf16.msra.mxu0 0
  %5395 = vmatpush.bf16.msra.mxu0 %v5386
  %5396 = vmatmul.bf16.gmra.mxu0 %v5383
  %v5397 = vpop.f32.mrf.mxu0
  %v5398 = vadd.f32 0.0, %v5397
  %v5399 = vpop.f32.mrf.mxu0
  %5400 = vdwg.mxu0
  %v5402 = vsel %vm2084, %v5381, 0
  %v5405 = vsel %vm2138, %v5305, 0
  %5407 = vmatpush.bf16.msra.mxu0 0
  %5408 = vmatpush.bf16.msra.mxu0 0
  %5409 = vmatpush.bf16.msra.mxu0 0
  %5410 = vmatpush.bf16.msra.mxu0 0
  %5411 = vmatpush.bf16.msra.mxu0 0
  %5412 = vmatpush.bf16.msra.mxu0 0
  %5413 = vmatpush.bf16.msra.mxu0 0
  %5414 = vmatpush.bf16.msra.mxu0 %v5405
  %5415 = vmatmul.bf16.gmra.mxu0 %v5402
  %v5416 = vpop.f32.mrf.mxu0
  %v5417 = vadd.f32 0.0, %v5416
  %v5418 = vpop.f32.mrf.mxu0
  %5419 = vdwg.mxu0
  %v5420 = vpack.c.bf16 %v5417, %v5398
  %v5437 = vunpack.c.l.b16 %v5131
  %v5438 = vunpack.c.l.b16 %v5132
  %v5439 = vunpack.c.l.b16 %v5133
  %v5440 = vunpack.c.l.b16 %v5134
  %v5441 = vunpack.c.l.b16 %v5135
  %v5442 = vunpack.c.l.b16 %v5136
  %v5443 = vunpack.c.l.b16 %v5137
  %v5444 = vunpack.c.l.b16 %v5138
  %v5445 = vunpack.c.l.b16 %v5139
  %v5446 = vunpack.c.l.b16 %v5140
  %v5447 = vunpack.c.l.b16 %v5141
  %v5448 = vunpack.c.l.b16 %v5142
  %v5449 = vunpack.c.l.b16 %v5143
  %v5450 = vunpack.c.l.b16 %v5144
  %v5451 = vunpack.c.l.b16 %v5145
  %v5452 = vunpack.c.l.b16 %v5146
  %v5453 = vpack.c.b16 %v5438, %v5437
  %v5454 = vpack.c.b16 %v5440, %v5439
  %v5455 = vpack.c.b16 %v5442, %v5441
  %v5456 = vpack.c.b16 %v5444, %v5443
  %v5457 = vpack.c.b16 %v5446, %v5445
  %v5458 = vpack.c.b16 %v5448, %v5447
  %v5459 = vpack.c.b16 %v5450, %v5449
  %v5460 = vpack.c.b16 %v5452, %v5451
  %5469 = vmatpush.bf16.msra.mxu0 %v5460
  %5470 = vmatpush.bf16.msra.mxu0 %v5459
  %5471 = vmatpush.bf16.msra.mxu0 %v5458
  %5472 = vmatpush.bf16.msra.mxu0 %v5457
  %5473 = vmatpush.bf16.msra.mxu0 %v5456
  %5474 = vmatpush.bf16.msra.mxu0 %v5455
  %5475 = vmatpush.bf16.msra.mxu0 %v5454
  %5476 = vmatpush.bf16.msra.mxu0 %v5453
  %5477 = vmatmul.bf16.gmra.mxu0 %v5420
  %v5478 = vpop.f32.mrf.mxu0
  %v5479 = vadd.f32 0.0, %v5478
  %v5480 = vpop.f32.mrf.mxu0
  %v5481 = vadd.f32 0.0, %v5480
  %5482 = vdwg.mxu0
  %v5499 = vunpack.c.l.b16 %v5115
  %v5500 = vunpack.c.l.b16 %v5116
  %v5501 = vunpack.c.l.b16 %v5117
  %v5502 = vunpack.c.l.b16 %v5118
  %v5503 = vunpack.c.l.b16 %v5119
  %v5504 = vunpack.c.l.b16 %v5120
  %v5505 = vunpack.c.l.b16 %v5121
  %v5506 = vunpack.c.l.b16 %v5122
  %v5507 = vunpack.c.l.b16 %v5123
  %v5508 = vunpack.c.l.b16 %v5124
  %v5509 = vunpack.c.l.b16 %v5125
  %v5510 = vunpack.c.l.b16 %v5126
  %v5511 = vunpack.c.l.b16 %v5127
  %v5512 = vunpack.c.l.b16 %v5128
  %v5513 = vunpack.c.l.b16 %v5129
  %v5514 = vunpack.c.l.b16 %v5130
  %v5515 = vpack.c.b16 %v5500, %v5499
  %v5516 = vpack.c.b16 %v5502, %v5501
  %v5517 = vpack.c.b16 %v5504, %v5503
  %v5518 = vpack.c.b16 %v5506, %v5505
  %v5519 = vpack.c.b16 %v5508, %v5507
  %v5520 = vpack.c.b16 %v5510, %v5509
  %v5521 = vpack.c.b16 %v5512, %v5511
  %v5522 = vpack.c.b16 %v5514, %v5513
  %5531 = vmatpush.bf16.msra.mxu0 %v5522
  %5532 = vmatpush.bf16.msra.mxu0 %v5521
  %5533 = vmatpush.bf16.msra.mxu0 %v5520
  %5534 = vmatpush.bf16.msra.mxu0 %v5519
  %5535 = vmatpush.bf16.msra.mxu0 %v5518
  %5536 = vmatpush.bf16.msra.mxu0 %v5517
  %5537 = vmatpush.bf16.msra.mxu0 %v5516
  %5538 = vmatpush.bf16.msra.mxu0 %v5515
  %5539 = vmatmul.bf16.gmra.mxu0 %v5299
  %v5540 = vpop.f32.mrf.mxu0
  %v5541 = vadd.f32 %v5479, %v5540
  %v5542 = vpop.f32.mrf.mxu0
  %v5543 = vadd.f32 %v5481, %v5542
  %5544 = vdwg.mxu0
  %v5545 = vpack.c.bf16 %v4779, %v4779
  %v5546 = vpack.c.bf16 %v4781, %v4781
  %v5547 = vpack.c.bf16 %v4835, %v4835
  %v5548 = vpack.c.bf16 %v4837, %v4837
  %v5549 = vpack.c.bf16 %v5096, %v5096
  %v5550 = vpack.c.bf16 %v5098, %v5098
  %5551 = vmatpush.bf16.xpose.msra.mxu0 0
  %5552 = vmatpush.bf16.xpose.msra.mxu0 0
  %5553 = vmatpush.bf16.xpose.msra.mxu0 0
  %5554 = vmatpush.bf16.xpose.msra.mxu0 0
  %5555 = vmatpush.bf16.xpose.msra.mxu0 0
  %5556 = vmatpush.bf16.xpose.msra.mxu0 0
  %5557 = vmatpush.bf16.xpose.msra.mxu0 0
  %5558 = vmatpush.bf16.xpose.msra.mxu0 %v5547
  %5559 = vmatmul.bf16.gmra.mxu0 %v5545
  %v5560 = vpop.f32.mrf.mxu0
  %v5561 = vadd.f32 0.0, %v5560
  %v5562 = vpop.f32.mrf.mxu0
  %5563 = vdwg.mxu0
  %5564 = vmatpush.bf16.xpose.msra.mxu0 0
  %5565 = vmatpush.bf16.xpose.msra.mxu0 0
  %5566 = vmatpush.bf16.xpose.msra.mxu0 0
  %5567 = vmatpush.bf16.xpose.msra.mxu0 0
  %5568 = vmatpush.bf16.xpose.msra.mxu0 0
  %5569 = vmatpush.bf16.xpose.msra.mxu0 0
  %5570 = vmatpush.bf16.xpose.msra.mxu0 0
  %5571 = vmatpush.bf16.xpose.msra.mxu0 %v5548
  %5572 = vmatmul.bf16.gmra.mxu0 %v5546
  %v5573 = vpop.f32.mrf.mxu0
  %v5574 = vadd.f32 0.0, %v5573
  %v5575 = vpop.f32.mrf.mxu0
  %5576 = vdwg.mxu0
  %v5577 = vsel %vm2084, %v5561, -inf
  %5578 = vmax.xlane.f32.xlu0 %v5577
  %v5579 = vpop.xlane.xlu0 %5578
  %v5580 = vsel %vm2084, %v5574, -inf
  %5581 = vmax.xlane.f32.xlu0 %v5580
  %v5582 = vpop.xlane.xlu0 %5581
  %v5583 = vsub.f32 %v5561, %v5579
  %v5584 = vsub.f32 %v5574, %v5582
  %v5585 = vmul.f32 %v5583, 1.442695
  %v5586 = vpow.pop %v5585
  %v5587 = vmul.f32 %v5584, 1.442695
  %v5588 = vpow.pop %v5587
  %v5589 = vsel %vm2084, %v5586, 0.0
  %5590 = vadd.xlane.f32.xlu0 %v5589
  %v5591 = vpop.xlane.xlu0 %5590
  %v5592 = vsel %vm2084, %v5588, 0.0
  %5593 = vadd.xlane.f32.xlu0 %v5592
  %v5594 = vpop.xlane.xlu0 %5593
  %v5595 = vrcp.pop %v5591
  %v5596 = vmul.f32 %v5591, %v5595
  %v5597 = vsub.f32 1.0, %v5596
  %v5598 = vmul.f32 %v5595, %v5597
  %v5599 = vadd.f32 %v5595, %v5598
  %vm5600 = vweird.f32 %v5591
  %vm5601 = vweird.f32 %v5595
  %vm5602 = vmor %vm5600, %vm5601
  %v5603 = vsel %vm5602, %v5595, %v5599
  %v5604 = vand.u32 2147483647, %v5591
  %vm5605 = vcmp.eq.f32.partialorder %v5604, 8.507059e+37
  %v5606 = vand.u32 %v5591, 2147483648
  %v5607 = vor.u32 1.1754944e-38, %v5606
  %v5608 = vsel %vm5605, %v5607, %v5603
  %v5609 = vmul.f32 %v5586, %v5608
  %v5610 = vrcp.pop %v5594
  %v5611 = vmul.f32 %v5594, %v5610
  %v5612 = vsub.f32 1.0, %v5611
  %v5613 = vmul.f32 %v5610, %v5612
  %v5614 = vadd.f32 %v5610, %v5613
  %vm5615 = vweird.f32 %v5594
  %vm5616 = vweird.f32 %v5610
  %vm5617 = vmor %vm5615, %vm5616
  %v5618 = vsel %vm5617, %v5610, %v5614
  %v5619 = vand.u32 2147483647, %v5594
  %vm5620 = vcmp.eq.f32.partialorder %v5619, 8.507059e+37
  %v5621 = vand.u32 %v5594, 2147483648
  %v5622 = vor.u32 1.1754944e-38, %v5621
  %v5623 = vsel %vm5620, %v5622, %v5618
  %v5624 = vmul.f32 %v5588, %v5623
  %v5625 = vpack.c.bf16 %v5609, %v5609
  %v5626 = vpack.c.bf16 %v5624, %v5624
  %v5628 = vsel %vm2084, %v5625, 0
  %v5631 = vsel %vm2138, %v5549, 0
  %5633 = vmatpush.bf16.msra.mxu0 0
  %5634 = vmatpush.bf16.msra.mxu0 0
  %5635 = vmatpush.bf16.msra.mxu0 0
  %5636 = vmatpush.bf16.msra.mxu0 0
  %5637 = vmatpush.bf16.msra.mxu0 0
  %5638 = vmatpush.bf16.msra.mxu0 0
  %5639 = vmatpush.bf16.msra.mxu0 0
  %5640 = vmatpush.bf16.msra.mxu0 %v5631
  %5641 = vmatmul.bf16.gmra.mxu0 %v5628
  %v5642 = vpop.f32.mrf.mxu0
  %v5643 = vadd.f32 0.0, %v5642
  %v5644 = vpop.f32.mrf.mxu0
  %5645 = vdwg.mxu0
  %v5647 = vsel %vm2084, %v5626, 0
  %v5650 = vsel %vm2138, %v5550, 0
  %5652 = vmatpush.bf16.msra.mxu0 0
  %5653 = vmatpush.bf16.msra.mxu0 0
  %5654 = vmatpush.bf16.msra.mxu0 0
  %5655 = vmatpush.bf16.msra.mxu0 0
  %5656 = vmatpush.bf16.msra.mxu0 0
  %5657 = vmatpush.bf16.msra.mxu0 0
  %5658 = vmatpush.bf16.msra.mxu0 0
  %5659 = vmatpush.bf16.msra.mxu0 %v5650
  %5660 = vmatmul.bf16.gmra.mxu0 %v5647
  %v5661 = vpop.f32.mrf.mxu0
  %v5662 = vadd.f32 0.0, %v5661
  %v5663 = vpop.f32.mrf.mxu0
  %5664 = vdwg.mxu0
  %v5665 = vpack.c.bf16 %v5662, %v5643
  %v5682 = vunpack.c.l.b16 %v5147
  %v5683 = vunpack.c.l.b16 %v5148
  %v5684 = vunpack.c.l.b16 %v5149
  %v5685 = vunpack.c.l.b16 %v5150
  %v5686 = vunpack.c.l.b16 %v5151
  %v5687 = vunpack.c.l.b16 %v5152
  %v5688 = vunpack.c.l.b16 %v5153
  %v5689 = vunpack.c.l.b16 %v5154
  %v5690 = vunpack.c.l.b16 %v5155
  %v5691 = vunpack.c.l.b16 %v5156
  %v5692 = vunpack.c.l.b16 %v5157
  %v5693 = vunpack.c.l.b16 %v5158
  %v5694 = vunpack.c.l.b16 %v5159
  %v5695 = vunpack.c.l.b16 %v5160
  %v5696 = vunpack.c.l.b16 %v5161
  %v5697 = vunpack.c.l.b16 %v5162
  %v5698 = vpack.c.b16 %v5683, %v5682
  %v5699 = vpack.c.b16 %v5685, %v5684
  %v5700 = vpack.c.b16 %v5687, %v5686
  %v5701 = vpack.c.b16 %v5689, %v5688
  %v5702 = vpack.c.b16 %v5691, %v5690
  %v5703 = vpack.c.b16 %v5693, %v5692
  %v5704 = vpack.c.b16 %v5695, %v5694
  %v5705 = vpack.c.b16 %v5697, %v5696
  %5714 = vmatpush.bf16.msra.mxu0 %v5705
  %5715 = vmatpush.bf16.msra.mxu0 %v5704
  %5716 = vmatpush.bf16.msra.mxu0 %v5703
  %5717 = vmatpush.bf16.msra.mxu0 %v5702
  %5718 = vmatpush.bf16.msra.mxu0 %v5701
  %5719 = vmatpush.bf16.msra.mxu0 %v5700
  %5720 = vmatpush.bf16.msra.mxu0 %v5699
  %5721 = vmatpush.bf16.msra.mxu0 %v5698
  %5722 = vmatmul.bf16.gmra.mxu0 %v5665
  %v5723 = vpop.f32.mrf.mxu0
  %v5724 = vadd.f32 0.0, %v5723
  %v5725 = vpop.f32.mrf.mxu0
  %v5726 = vadd.f32 0.0, %v5725
  %5727 = vdwg.mxu0
  %v5728 = vadd.f32 %v5541, %v5724
  %v5729 = vadd.f32 %v5543, %v5726
  %v5730 = vpack.c.bf16 %v4793, %v4793
  %v5731 = vpack.c.bf16 %v4795, %v4795
  %v5732 = vpack.c.bf16 %v4849, %v4849
  %v5733 = vpack.c.bf16 %v4851, %v4851
  %v5734 = vpack.c.bf16 %v5110, %v5110
  %v5735 = vpack.c.bf16 %v5112, %v5112
  %5736 = vmatpush.bf16.xpose.msra.mxu0 0
  %5737 = vmatpush.bf16.xpose.msra.mxu0 0
  %5738 = vmatpush.bf16.xpose.msra.mxu0 0
  %5739 = vmatpush.bf16.xpose.msra.mxu0 0
  %5740 = vmatpush.bf16.xpose.msra.mxu0 0
  %5741 = vmatpush.bf16.xpose.msra.mxu0 0
  %5742 = vmatpush.bf16.xpose.msra.mxu0 0
  %5743 = vmatpush.bf16.xpose.msra.mxu0 %v5732
  %5744 = vmatmul.bf16.gmra.mxu0 %v5730
  %v5745 = vpop.f32.mrf.mxu0
  %v5746 = vadd.f32 0.0, %v5745
  %v5747 = vpop.f32.mrf.mxu0
  %5748 = vdwg.mxu0
  %5749 = vmatpush.bf16.xpose.msra.mxu0 0
  %5750 = vmatpush.bf16.xpose.msra.mxu0 0
  %5751 = vmatpush.bf16.xpose.msra.mxu0 0
  %5752 = vmatpush.bf16.xpose.msra.mxu0 0
  %5753 = vmatpush.bf16.xpose.msra.mxu0 0
  %5754 = vmatpush.bf16.xpose.msra.mxu0 0
  %5755 = vmatpush.bf16.xpose.msra.mxu0 0
  %5756 = vmatpush.bf16.xpose.msra.mxu0 %v5733
  %5757 = vmatmul.bf16.gmra.mxu0 %v5731
  %v5758 = vpop.f32.mrf.mxu0
  %v5759 = vadd.f32 0.0, %v5758
  %v5760 = vpop.f32.mrf.mxu0
  %5761 = vdwg.mxu0
  %v5762 = vsel %vm2084, %v5746, -inf
  %5763 = vmax.xlane.f32.xlu0 %v5762
  %v5764 = vpop.xlane.xlu0 %5763
  %v5765 = vsel %vm2084, %v5759, -inf
  %5766 = vmax.xlane.f32.xlu0 %v5765
  %v5767 = vpop.xlane.xlu0 %5766
  %v5768 = vsub.f32 %v5746, %v5764
  %v5769 = vsub.f32 %v5759, %v5767
  %v5770 = vmul.f32 %v5768, 1.442695
  %v5771 = vpow.pop %v5770
  %v5772 = vmul.f32 %v5769, 1.442695
  %v5773 = vpow.pop %v5772
  %v5774 = vsel %vm2084, %v5771, 0.0
  %5775 = vadd.xlane.f32.xlu0 %v5774
  %v5776 = vpop.xlane.xlu0 %5775
  %v5777 = vsel %vm2084, %v5773, 0.0
  %5778 = vadd.xlane.f32.xlu0 %v5777
  %v5779 = vpop.xlane.xlu0 %5778
  %v5780 = vrcp.pop %v5776
  %v5781 = vmul.f32 %v5776, %v5780
  %v5782 = vsub.f32 1.0, %v5781
  %v5783 = vmul.f32 %v5780, %v5782
  %v5784 = vadd.f32 %v5780, %v5783
  %vm5785 = vweird.f32 %v5776
  %vm5786 = vweird.f32 %v5780
  %vm5787 = vmor %vm5785, %vm5786
  %v5788 = vsel %vm5787, %v5780, %v5784
  %v5789 = vand.u32 2147483647, %v5776
  %vm5790 = vcmp.eq.f32.partialorder %v5789, 8.507059e+37
  %v5791 = vand.u32 %v5776, 2147483648
  %v5792 = vor.u32 1.1754944e-38, %v5791
  %v5793 = vsel %vm5790, %v5792, %v5788
  %v5794 = vmul.f32 %v5771, %v5793
  %v5795 = vrcp.pop %v5779
  %v5796 = vmul.f32 %v5779, %v5795
  %v5797 = vsub.f32 1.0, %v5796
  %v5798 = vmul.f32 %v5795, %v5797
  %v5799 = vadd.f32 %v5795, %v5798
  %vm5800 = vweird.f32 %v5779
  %vm5801 = vweird.f32 %v5795
  %vm5802 = vmor %vm5800, %vm5801
  %v5803 = vsel %vm5802, %v5795, %v5799
  %v5804 = vand.u32 2147483647, %v5779
  %vm5805 = vcmp.eq.f32.partialorder %v5804, 8.507059e+37
  %v5806 = vand.u32 %v5779, 2147483648
  %v5807 = vor.u32 1.1754944e-38, %v5806
  %v5808 = vsel %vm5805, %v5807, %v5803
  %v5809 = vmul.f32 %v5773, %v5808
  %v5810 = vpack.c.bf16 %v5794, %v5794
  %v5811 = vpack.c.bf16 %v5809, %v5809
  %v5813 = vsel %vm2084, %v5810, 0
  %v5816 = vsel %vm2138, %v5734, 0
  %5818 = vmatpush.bf16.msra.mxu0 0
  %5819 = vmatpush.bf16.msra.mxu0 0
  %5820 = vmatpush.bf16.msra.mxu0 0
  %5821 = vmatpush.bf16.msra.mxu0 0
  %5822 = vmatpush.bf16.msra.mxu0 0
  %5823 = vmatpush.bf16.msra.mxu0 0
  %5824 = vmatpush.bf16.msra.mxu0 0
  %5825 = vmatpush.bf16.msra.mxu0 %v5816
  %5826 = vmatmul.bf16.gmra.mxu0 %v5813
  %v5827 = vpop.f32.mrf.mxu0
  %v5828 = vadd.f32 0.0, %v5827
  %v5829 = vpop.f32.mrf.mxu0
  %5830 = vdwg.mxu0
  %v5832 = vsel %vm2084, %v5811, 0
  %v5835 = vsel %vm2138, %v5735, 0
  %5837 = vmatpush.bf16.msra.mxu0 0
  %5838 = vmatpush.bf16.msra.mxu0 0
  %5839 = vmatpush.bf16.msra.mxu0 0
  %5840 = vmatpush.bf16.msra.mxu0 0
  %5841 = vmatpush.bf16.msra.mxu0 0
  %5842 = vmatpush.bf16.msra.mxu0 0
  %5843 = vmatpush.bf16.msra.mxu0 0
  %5844 = vmatpush.bf16.msra.mxu0 %v5835
  %5845 = vmatmul.bf16.gmra.mxu0 %v5832
  %v5846 = vpop.f32.mrf.mxu0
  %v5847 = vadd.f32 0.0, %v5846
  %v5848 = vpop.f32.mrf.mxu0
  %5849 = vdwg.mxu0
  %v5850 = vpack.c.bf16 %v5847, %v5828
  %v5867 = vunpack.c.l.b16 %v5163
  %v5868 = vunpack.c.l.b16 %v5164
  %v5869 = vunpack.c.l.b16 %v5165
  %v5870 = vunpack.c.l.b16 %v5166
  %v5871 = vunpack.c.l.b16 %v5167
  %v5872 = vunpack.c.l.b16 %v5168
  %v5873 = vunpack.c.l.b16 %v5169
  %v5874 = vunpack.c.l.b16 %v5170
  %v5875 = vunpack.c.l.b16 %v5171
  %v5876 = vunpack.c.l.b16 %v5172
  %v5877 = vunpack.c.l.b16 %v5173
  %v5878 = vunpack.c.l.b16 %v5174
  %v5879 = vunpack.c.l.b16 %v5175
  %v5880 = vunpack.c.l.b16 %v5176
  %v5881 = vunpack.c.l.b16 %v5177
  %v5882 = vunpack.c.l.b16 %v5178
  %v5883 = vpack.c.b16 %v5868, %v5867
  %v5884 = vpack.c.b16 %v5870, %v5869
  %v5885 = vpack.c.b16 %v5872, %v5871
  %v5886 = vpack.c.b16 %v5874, %v5873
  %v5887 = vpack.c.b16 %v5876, %v5875
  %v5888 = vpack.c.b16 %v5878, %v5877
  %v5889 = vpack.c.b16 %v5880, %v5879
  %v5890 = vpack.c.b16 %v5882, %v5881
  %5899 = vmatpush.bf16.msra.mxu0 %v5890
  %5900 = vmatpush.bf16.msra.mxu0 %v5889
  %5901 = vmatpush.bf16.msra.mxu0 %v5888
  %5902 = vmatpush.bf16.msra.mxu0 %v5887
  %5903 = vmatpush.bf16.msra.mxu0 %v5886
  %5904 = vmatpush.bf16.msra.mxu0 %v5885
  %5905 = vmatpush.bf16.msra.mxu0 %v5884
  %5906 = vmatpush.bf16.msra.mxu0 %v5883
  %5907 = vmatmul.bf16.gmra.mxu0 %v5850
  %v5908 = vpop.f32.mrf.mxu0
  %v5909 = vadd.f32 0.0, %v5908
  %v5910 = vpop.f32.mrf.mxu0
  %v5911 = vadd.f32 0.0, %v5910
  %5912 = vdwg.mxu0
  %v5913 = vadd.f32 %v5728, %v5909
  %v5914 = vadd.f32 %v5729, %v5911
  %s5915 = scalar_lea.vmem %s9, 1
  %v5916 = vld [vmem:[%s5915] sm:$0x1]
  %v5918 = vperm.slane %v5916, 0
  %v5920 = vadd.f32 %v5913, %v5918
  %v5921 = vadd.f32 %v5914, %v5918
  %v5922 = vadd.f32 %v4328, %v5920
  %v5923 = vadd.f32 %v4329, %v5921
  %5924 = vadd.xlane.f32.xlu0 %v5922
  %v5925 = vpop.xlane.xlu0 %5924
  %5926 = vadd.xlane.f32.xlu0 %v5923
  %v5927 = vpop.xlane.xlu0 %5926
  %v5928 = vmul.f32 %v5925, 0.03125
  %v5929 = vmul.f32 %v5927, 0.03125
  %v5930 = vmul.f32 %v5922, %v5922
  %v5931 = vmul.f32 %v5923, %v5923
  %5932 = vadd.xlane.f32.xlu0 %v5930
  %v5933 = vpop.xlane.xlu0 %5932
  %5934 = vadd.xlane.f32.xlu0 %v5931
  %v5935 = vpop.xlane.xlu0 %5934
  %v5936 = vmul.f32 %v5933, 0.03125
  %v5937 = vmul.f32 %v5935, 0.03125
  %v5938 = vmul.f32 %v5928, %v5928
  %v5939 = vmul.f32 %v5929, %v5929
  %v5940 = vsub.f32 %v5936, %v5938
  %v5941 = vsub.f32 %v5937, %v5939
  %v5942 = vsub.f32 %v5922, %v5928
  %v5943 = vsub.f32 %v5923, %v5929
  %v5944 = vadd.f32 %v5940, 1e-05
  %v5945 = vadd.f32 %v5941, 1e-05
  %v5946 = vrsqrt.pop %v5944
  %v5947 = vmul.f32 %v5946, %v5944
  %v5948 = vmul.f32 %v5947, %v5946
  %v5949 = vmul.f32 0.5, %v5948
  %v5950 = vsub.f32 1.5, %v5949
  %v5951 = vmul.f32 %v5946, %v5950
  %vm5952 = vweird.f32 %v5944
  %vm5953 = vweird.f32 %v5946
  %vm5954 = vmor %vm5952, %vm5953
  %v5955 = vsel %vm5954, %v5946, %v5951
  %v5956 = vrsqrt.pop %v5945
  %v5957 = vmul.f32 %v5956, %v5945
  %v5958 = vmul.f32 %v5957, %v5956
  %v5959 = vmul.f32 0.5, %v5958
  %v5960 = vsub.f32 1.5, %v5959
  %v5961 = vmul.f32 %v5956, %v5960
  %vm5962 = vweird.f32 %v5945
  %vm5963 = vweird.f32 %v5956
  %vm5964 = vmor %vm5962, %vm5963
  %v5965 = vsel %vm5964, %v5956, %v5961
  %v5966 = vmul.f32 %v5942, %v5955
  %v5967 = vmul.f32 %v5943, %v5965
  %v5968 = vperm.slane %v4331, 0
  %v5969 = vmul.f32 %v5966, %v5968
  %v5970 = vmul.f32 %v5967, %v5968
  %v5971 = vperm.slane %v4333, 0
  %v5972 = vadd.f32 %v5969, %v5971
  %v5973 = vadd.f32 %v5970, %v5971
  %v5974 = vadd.f32 %v5972, %v86
  %v5975 = vadd.f32 %v5973, %v87
  %s5976 = scalar_lea.vmem %s10, 256
  %v5977 = vld [vmem:[%s5976] sm:$0xff]
  %v5978 = vld [vmem:[%s5976 + $0x8] sm:$0xff]
  %v5979 = vld [vmem:[%s5976 + $0x10] sm:$0xff]
  %v5980 = vld [vmem:[%s5976 + $0x18] sm:$0xff]
  %v5981 = vld [vmem:[%s5976 + $0x20] sm:$0xff]
  %v5982 = vld [vmem:[%s5976 + $0x28] sm:$0xff]
  %v5983 = vld [vmem:[%s5976 + $0x30] sm:$0xff]
  %v5984 = vld [vmem:[%s5976 + $0x38] sm:$0xff]
  %v5985 = vld [vmem:[%s5976 + $0x40] sm:$0xff]
  %v5986 = vld [vmem:[%s5976 + $0x48] sm:$0xff]
  %v5987 = vld [vmem:[%s5976 + $0x50] sm:$0xff]
  %v5988 = vld [vmem:[%s5976 + $0x58] sm:$0xff]
  %v5989 = vld [vmem:[%s5976 + $0x60] sm:$0xff]
  %v5990 = vld [vmem:[%s5976 + $0x68] sm:$0xff]
  %v5991 = vld [vmem:[%s5976 + $0x70] sm:$0xff]
  %v5992 = vld [vmem:[%s5976 + $0x78] sm:$0xff]
  %v5993 = vld [vmem:[%s5976 + $0x80] sm:$0xff]
  %v5994 = vld [vmem:[%s5976 + $0x88] sm:$0xff]
  %v5995 = vld [vmem:[%s5976 + $0x90] sm:$0xff]
  %v5996 = vld [vmem:[%s5976 + $0x98] sm:$0xff]
  %v5997 = vld [vmem:[%s5976 + $0xa0] sm:$0xff]
  %v5998 = vld [vmem:[%s5976 + $0xa8] sm:$0xff]
  %v5999 = vld [vmem:[%s5976 + $0xb0] sm:$0xff]
  %v6000 = vld [vmem:[%s5976 + $0xb8] sm:$0xff]
  %v6001 = vld [vmem:[%s5976 + $0xc0] sm:$0xff]
  %v6002 = vld [vmem:[%s5976 + $0xc8] sm:$0xff]
  %v6003 = vld [vmem:[%s5976 + $0xd0] sm:$0xff]
  %v6004 = vld [vmem:[%s5976 + $0xd8] sm:$0xff]
  %v6005 = vld [vmem:[%s5976 + $0xe0] sm:$0xff]
  %v6006 = vld [vmem:[%s5976 + $0xe8] sm:$0xff]
  %v6007 = vld [vmem:[%s5976 + $0xf0] sm:$0xff]
  %v6008 = vld [vmem:[%s5976 + $0xf8] sm:$0xff]
  %v6009 = vpack.c.bf16 %v5975, %v5974
  %s6010 = scalar_lea.vmem %s11, 4
  %v6011 = vld [vmem:[%s6010] sm:$0xf]
  %v6013 = vperm.slane %v6011, 0
  %v6014 = vperm.slane %v6011, 1
  %v6015 = vperm.slane %v6011, 2
  %v6016 = vperm.slane %v6011, 3
  %v6053 = vunpack.c.l.b16 %v5977
  %v6054 = vunpack.c.h.b16 %v5977
  %v6055 = vunpack.c.l.b16 %v5978
  %v6056 = vunpack.c.h.b16 %v5978
  %v6057 = vunpack.c.l.b16 %v5979
  %v6058 = vunpack.c.h.b16 %v5979
  %v6059 = vunpack.c.l.b16 %v5980
  %v6060 = vunpack.c.h.b16 %v5980
  %v6061 = vunpack.c.l.b16 %v5981
  %v6062 = vunpack.c.h.b16 %v5981
  %v6063 = vunpack.c.l.b16 %v5982
  %v6064 = vunpack.c.h.b16 %v5982
  %v6065 = vunpack.c.l.b16 %v5983
  %v6066 = vunpack.c.h.b16 %v5983
  %v6067 = vunpack.c.l.b16 %v5984
  %v6068 = vunpack.c.h.b16 %v5984
  %v6069 = vunpack.c.l.b16 %v5985
  %v6070 = vunpack.c.h.b16 %v5985
  %v6071 = vunpack.c.l.b16 %v5986
  %v6072 = vunpack.c.h.b16 %v5986
  %v6073 = vunpack.c.l.b16 %v5987
  %v6074 = vunpack.c.h.b16 %v5987
  %v6075 = vunpack.c.l.b16 %v5988
  %v6076 = vunpack.c.h.b16 %v5988
  %v6077 = vunpack.c.l.b16 %v5989
  %v6078 = vunpack.c.h.b16 %v5989
  %v6079 = vunpack.c.l.b16 %v5990
  %v6080 = vunpack.c.h.b16 %v5990
  %v6081 = vunpack.c.l.b16 %v5991
  %v6082 = vunpack.c.h.b16 %v5991
  %v6083 = vunpack.c.l.b16 %v5992
  %v6084 = vunpack.c.h.b16 %v5992
  %v6085 = vunpack.c.l.b16 %v5993
  %v6086 = vunpack.c.h.b16 %v5993
  %v6087 = vunpack.c.l.b16 %v5994
  %v6088 = vunpack.c.h.b16 %v5994
  %v6089 = vunpack.c.l.b16 %v5995
  %v6090 = vunpack.c.h.b16 %v5995
  %v6091 = vunpack.c.l.b16 %v5996
  %v6092 = vunpack.c.h.b16 %v5996
  %v6093 = vunpack.c.l.b16 %v5997
  %v6094 = vunpack.c.h.b16 %v5997
  %v6095 = vunpack.c.l.b16 %v5998
  %v6096 = vunpack.c.h.b16 %v5998
  %v6097 = vunpack.c.l.b16 %v5999
  %v6098 = vunpack.c.h.b16 %v5999
  %v6099 = vunpack.c.l.b16 %v6000
  %v6100 = vunpack.c.h.b16 %v6000
  %v6101 = vunpack.c.l.b16 %v6001
  %v6102 = vunpack.c.h.b16 %v6001
  %v6103 = vunpack.c.l.b16 %v6002
  %v6104 = vunpack.c.h.b16 %v6002
  %v6105 = vunpack.c.l.b16 %v6003
  %v6106 = vunpack.c.h.b16 %v6003
  %v6107 = vunpack.c.l.b16 %v6004
  %v6108 = vunpack.c.h.b16 %v6004
  %v6109 = vunpack.c.l.b16 %v6005
  %v6110 = vunpack.c.h.b16 %v6005
  %v6111 = vunpack.c.l.b16 %v6006
  %v6112 = vunpack.c.h.b16 %v6006
  %v6113 = vunpack.c.l.b16 %v6007
  %v6114 = vunpack.c.h.b16 %v6007
  %v6115 = vunpack.c.l.b16 %v6008
  %v6116 = vunpack.c.h.b16 %v6008
  %v6117 = vpack.c.b16 %v6057, %v6053
  %v6118 = vpack.c.b16 %v6058, %v6054
  %v6119 = vpack.c.b16 %v6059, %v6055
  %v6120 = vpack.c.b16 %v6060, %v6056
  %v6121 = vpack.c.b16 %v6065, %v6061
  %v6122 = vpack.c.b16 %v6066, %v6062
  %v6123 = vpack.c.b16 %v6067, %v6063
  %v6124 = vpack.c.b16 %v6068, %v6064
  %v6125 = vpack.c.b16 %v6073, %v6069
  %v6126 = vpack.c.b16 %v6074, %v6070
  %v6127 = vpack.c.b16 %v6075, %v6071
  %v6128 = vpack.c.b16 %v6076, %v6072
  %v6129 = vpack.c.b16 %v6081, %v6077
  %v6130 = vpack.c.b16 %v6082, %v6078
  %v6131 = vpack.c.b16 %v6083, %v6079
  %v6132 = vpack.c.b16 %v6084, %v6080
  %v6133 = vpack.c.b16 %v6089, %v6085
  %v6134 = vpack.c.b16 %v6090, %v6086
  %v6135 = vpack.c.b16 %v6091, %v6087
  %v6136 = vpack.c.b16 %v6092, %v6088
  %v6137 = vpack.c.b16 %v6097, %v6093
  %v6138 = vpack.c.b16 %v6098, %v6094
  %v6139 = vpack.c.b16 %v6099, %v6095
  %v6140 = vpack.c.b16 %v6100, %v6096
  %v6141 = vpack.c.b16 %v6105, %v6101
  %v6142 = vpack.c.b16 %v6106, %v6102
  %v6143 = vpack.c.b16 %v6107, %v6103
  %v6144 = vpack.c.b16 %v6108, %v6104
  %v6145 = vpack.c.b16 %v6113, %v6109
  %v6146 = vpack.c.b16 %v6114, %v6110
  %v6147 = vpack.c.b16 %v6115, %v6111
  %v6148 = vpack.c.b16 %v6116, %v6112
  %6181 = vmatpush.bf16.msra.mxu0 %v6145
  %6182 = vmatpush.bf16.msra.mxu0 %v6141
  %6183 = vmatpush.bf16.msra.mxu0 %v6137
  %6184 = vmatpush.bf16.msra.mxu0 %v6133
  %6185 = vmatpush.bf16.msra.mxu0 %v6129
  %6186 = vmatpush.bf16.msra.mxu0 %v6125
  %6187 = vmatpush.bf16.msra.mxu0 %v6121
  %6188 = vmatpush.bf16.msra.mxu0 %v6117
  %6189 = vmatmul.bf16.gmra.mxu0 %v6009
  %v6190 = vpop.f32.mrf.mxu0
  %v6191 = vadd.f32 %v6013, %v6190
  %v6192 = vpop.f32.mrf.mxu0
  %v6193 = vadd.f32 %v6013, %v6192
  %6194 = vdwg.mxu0
  %6195 = vmatpush.bf16.msra.mxu0 %v6146
  %6196 = vmatpush.bf16.msra.mxu0 %v6142
  %6197 = vmatpush.bf16.msra.mxu0 %v6138
  %6198 = vmatpush.bf16.msra.mxu0 %v6134
  %6199 = vmatpush.bf16.msra.mxu0 %v6130
  %6200 = vmatpush.bf16.msra.mxu0 %v6126
  %6201 = vmatpush.bf16.msra.mxu0 %v6122
  %6202 = vmatpush.bf16.msra.mxu0 %v6118
  %6203 = vmatmul.bf16.gmra.mxu0 %v6009
  %v6204 = vpop.f32.mrf.mxu0
  %v6205 = vadd.f32 %v6014, %v6204
  %v6206 = vpop.f32.mrf.mxu0
  %v6207 = vadd.f32 %v6014, %v6206
  %6208 = vdwg.mxu0
  %6209 = vmatpush.bf16.msra.mxu0 %v6147
  %6210 = vmatpush.bf16.msra.mxu0 %v6143
  %6211 = vmatpush.bf16.msra.mxu0 %v6139
  %6212 = vmatpush.bf16.msra.mxu0 %v6135
  %6213 = vmatpush.bf16.msra.mxu0 %v6131
  %6214 = vmatpush.bf16.msra.mxu0 %v6127
  %6215 = vmatpush.bf16.msra.mxu0 %v6123
  %6216 = vmatpush.bf16.msra.mxu0 %v6119
  %6217 = vmatmul.bf16.gmra.mxu0 %v6009
  %v6218 = vpop.f32.mrf.mxu0
  %v6219 = vadd.f32 %v6015, %v6218
  %v6220 = vpop.f32.mrf.mxu0
  %v6221 = vadd.f32 %v6015, %v6220
  %6222 = vdwg.mxu0
  %6223 = vmatpush.bf16.msra.mxu0 %v6148
  %6224 = vmatpush.bf16.msra.mxu0 %v6144
  %6225 = vmatpush.bf16.msra.mxu0 %v6140
  %6226 = vmatpush.bf16.msra.mxu0 %v6136
  %6227 = vmatpush.bf16.msra.mxu0 %v6132
  %6228 = vmatpush.bf16.msra.mxu0 %v6128
  %6229 = vmatpush.bf16.msra.mxu0 %v6124
  %6230 = vmatpush.bf16.msra.mxu0 %v6120
  %6231 = vmatmul.bf16.gmra.mxu0 %v6009
  %v6232 = vpop.f32.mrf.mxu0
  %v6233 = vadd.f32 %v6016, %v6232
  %v6234 = vpop.f32.mrf.mxu0
  %v6235 = vadd.f32 %v6016, %v6234
  %6236 = vdwg.mxu0
  %s6237 = scalar_lea.vmem %s12, 256
  %v6238 = vld [vmem:[%s6237] sm:$0xf]
  %v6239 = vld [vmem:[%s6237 + $0x4] sm:$0xf]
  %v6240 = vld [vmem:[%s6237 + $0x8] sm:$0xf]
  %v6241 = vld [vmem:[%s6237 + $0xc] sm:$0xf]
  %v6242 = vld [vmem:[%s6237 + $0x10] sm:$0xf]
  %v6243 = vld [vmem:[%s6237 + $0x14] sm:$0xf]
  %v6244 = vld [vmem:[%s6237 + $0x18] sm:$0xf]
  %v6245 = vld [vmem:[%s6237 + $0x1c] sm:$0xf]
  %v6246 = vld [vmem:[%s6237 + $0x20] sm:$0xf]
  %v6247 = vld [vmem:[%s6237 + $0x24] sm:$0xf]
  %v6248 = vld [vmem:[%s6237 + $0x28] sm:$0xf]
  %v6249 = vld [vmem:[%s6237 + $0x2c] sm:$0xf]
  %v6250 = vld [vmem:[%s6237 + $0x30] sm:$0xf]
  %v6251 = vld [vmem:[%s6237 + $0x34] sm:$0xf]
  %v6252 = vld [vmem:[%s6237 + $0x38] sm:$0xf]
  %v6253 = vld [vmem:[%s6237 + $0x3c] sm:$0xf]
  %v6254 = vld [vmem:[%s6237 + $0x40] sm:$0xf]
  %v6255 = vld [vmem:[%s6237 + $0x44] sm:$0xf]
  %v6256 = vld [vmem:[%s6237 + $0x48] sm:$0xf]
  %v6257 = vld [vmem:[%s6237 + $0x4c] sm:$0xf]
  %v6258 = vld [vmem:[%s6237 + $0x50] sm:$0xf]
  %v6259 = vld [vmem:[%s6237 + $0x54] sm:$0xf]
  %v6260 = vld [vmem:[%s6237 + $0x58] sm:$0xf]
  %v6261 = vld [vmem:[%s6237 + $0x5c] sm:$0xf]
  %v6262 = vld [vmem:[%s6237 + $0x60] sm:$0xf]
  %v6263 = vld [vmem:[%s6237 + $0x64] sm:$0xf]
  %v6264 = vld [vmem:[%s6237 + $0x68] sm:$0xf]
  %v6265 = vld [vmem:[%s6237 + $0x6c] sm:$0xf]
  %v6266 = vld [vmem:[%s6237 + $0x70] sm:$0xf]
  %v6267 = vld [vmem:[%s6237 + $0x74] sm:$0xf]
  %v6268 = vld [vmem:[%s6237 + $0x78] sm:$0xf]
  %v6269 = vld [vmem:[%s6237 + $0x7c] sm:$0xf]
  %v6270 = vld [vmem:[%s6237 + $0x80] sm:$0xf]
  %v6271 = vld [vmem:[%s6237 + $0x84] sm:$0xf]
  %v6272 = vld [vmem:[%s6237 + $0x88] sm:$0xf]
  %v6273 = vld [vmem:[%s6237 + $0x8c] sm:$0xf]
  %v6274 = vld [vmem:[%s6237 + $0x90] sm:$0xf]
  %v6275 = vld [vmem:[%s6237 + $0x94] sm:$0xf]
  %v6276 = vld [vmem:[%s6237 + $0x98] sm:$0xf]
  %v6277 = vld [vmem:[%s6237 + $0x9c] sm:$0xf]
  %v6278 = vld [vmem:[%s6237 + $0xa0] sm:$0xf]
  %v6279 = vld [vmem:[%s6237 + $0xa4] sm:$0xf]
  %v6280 = vld [vmem:[%s6237 + $0xa8] sm:$0xf]
  %v6281 = vld [vmem:[%s6237 + $0xac] sm:$0xf]
  %v6282 = vld [vmem:[%s6237 + $0xb0] sm:$0xf]
  %v6283 = vld [vmem:[%s6237 + $0xb4] sm:$0xf]
  %v6284 = vld [vmem:[%s6237 + $0xb8] sm:$0xf]
  %v6285 = vld [vmem:[%s6237 + $0xbc] sm:$0xf]
  %v6286 = vld [vmem:[%s6237 + $0xc0] sm:$0xf]
  %v6287 = vld [vmem:[%s6237 + $0xc4] sm:$0xf]
  %v6288 = vld [vmem:[%s6237 + $0xc8] sm:$0xf]
  %v6289 = vld [vmem:[%s6237 + $0xcc] sm:$0xf]
  %v6290 = vld [vmem:[%s6237 + $0xd0] sm:$0xf]
  %v6291 = vld [vmem:[%s6237 + $0xd4] sm:$0xf]
  %v6292 = vld [vmem:[%s6237 + $0xd8] sm:$0xf]
  %v6293 = vld [vmem:[%s6237 + $0xdc] sm:$0xf]
  %v6294 = vld [vmem:[%s6237 + $0xe0] sm:$0xf]
  %v6295 = vld [vmem:[%s6237 + $0xe4] sm:$0xf]
  %v6296 = vld [vmem:[%s6237 + $0xe8] sm:$0xf]
  %v6297 = vld [vmem:[%s6237 + $0xec] sm:$0xf]
  %v6298 = vld [vmem:[%s6237 + $0xf0] sm:$0xf]
  %v6299 = vld [vmem:[%s6237 + $0xf4] sm:$0xf]
  %v6300 = vld [vmem:[%s6237 + $0xf8] sm:$0xf]
  %v6301 = vld [vmem:[%s6237 + $0xfc] sm:$0xf]
  %v6302 = vpack.c.bf16 %v6191, %v6191
  %v6303 = vpack.c.bf16 %v6193, %v6193
  %v6304 = vpack.c.bf16 %v584, %v584
  %v6305 = vpack.c.bf16 %v586, %v586
  %v6306 = vpack.c.bf16 %v589, %v589
  %v6307 = vpack.c.bf16 %v591, %v591
  %v6308 = vpack.c.bf16 %v1144, %v1144
  %v6309 = vpack.c.bf16 %v1146, %v1146
  %v6310 = vpack.c.bf16 %v1149, %v1149
  %v6311 = vpack.c.bf16 %v1151, %v1151
  %v6314 = vunpack.c.l.b16 %v6304
  %v6315 = vunpack.c.l.b16 %v6305
  %v6316 = vpack.c.b16 %v6315, %v6314
  %6318 = vmatpush.bf16.xpose.msra.mxu0 0
  %6319 = vmatpush.bf16.xpose.msra.mxu0 0
  %6320 = vmatpush.bf16.xpose.msra.mxu0 0
  %6321 = vmatpush.bf16.xpose.msra.mxu0 0
  %6322 = vmatpush.bf16.xpose.msra.mxu0 0
  %6323 = vmatpush.bf16.xpose.msra.mxu0 0
  %6324 = vmatpush.bf16.xpose.msra.mxu0 0
  %6325 = vmatpush.bf16.xpose.msra.mxu0 %v6316
  %6326 = vmatmul.bf16.gmra.mxu0 %v6302
  %v6327 = vpop.f32.mrf.mxu0
  %v6328 = vadd.f32 0.0, %v6327
  %v6329 = vpop.f32.mrf.mxu0
  %6330 = vdwg.mxu0
  %v6333 = vunpack.c.l.b16 %v6306
  %v6334 = vunpack.c.l.b16 %v6307
  %v6335 = vpack.c.b16 %v6334, %v6333
  %6337 = vmatpush.bf16.xpose.msra.mxu0 0
  %6338 = vmatpush.bf16.xpose.msra.mxu0 0
  %6339 = vmatpush.bf16.xpose.msra.mxu0 0
  %6340 = vmatpush.bf16.xpose.msra.mxu0 0
  %6341 = vmatpush.bf16.xpose.msra.mxu0 0
  %6342 = vmatpush.bf16.xpose.msra.mxu0 0
  %6343 = vmatpush.bf16.xpose.msra.mxu0 0
  %6344 = vmatpush.bf16.xpose.msra.mxu0 %v6335
  %6345 = vmatmul.bf16.gmra.mxu0 %v6303
  %v6346 = vpop.f32.mrf.mxu0
  %v6347 = vadd.f32 0.0, %v6346
  %v6348 = vpop.f32.mrf.mxu0
  %6349 = vdwg.mxu0
  %v6350 = vsel %vm3221, %v6328, -inf
  %6351 = vmax.xlane.f32.xlu0 %v6350
  %v6352 = vpop.xlane.xlu0 %6351
  %v6353 = vsel %vm3221, %v6347, -inf
  %6354 = vmax.xlane.f32.xlu0 %v6353
  %v6355 = vpop.xlane.xlu0 %6354
  %v6356 = vsub.f32 %v6328, %v6352
  %v6357 = vsub.f32 %v6347, %v6355
  %v6358 = vmul.f32 %v6356, 1.442695
  %v6359 = vpow.pop %v6358
  %v6360 = vmul.f32 %v6357, 1.442695
  %v6361 = vpow.pop %v6360
  %v6362 = vsel %vm3221, %v6359, 0.0
  %6363 = vadd.xlane.f32.xlu0 %v6362
  %v6364 = vpop.xlane.xlu0 %6363
  %v6365 = vsel %vm3221, %v6361, 0.0
  %6366 = vadd.xlane.f32.xlu0 %v6365
  %v6367 = vpop.xlane.xlu0 %6366
  %v6368 = vrcp.pop %v6364
  %v6369 = vmul.f32 %v6364, %v6368
  %v6370 = vsub.f32 1.0, %v6369
  %v6371 = vmul.f32 %v6368, %v6370
  %v6372 = vadd.f32 %v6368, %v6371
  %vm6373 = vweird.f32 %v6364
  %vm6374 = vweird.f32 %v6368
  %vm6375 = vmor %vm6373, %vm6374
  %v6376 = vsel %vm6375, %v6368, %v6372
  %v6377 = vand.u32 2147483647, %v6364
  %vm6378 = vcmp.eq.f32.partialorder %v6377, 8.507059e+37
  %v6379 = vand.u32 %v6364, 2147483648
  %v6380 = vor.u32 1.1754944e-38, %v6379
  %v6381 = vsel %vm6378, %v6380, %v6376
  %v6382 = vmul.f32 %v6359, %v6381
  %v6383 = vrcp.pop %v6367
  %v6384 = vmul.f32 %v6367, %v6383
  %v6385 = vsub.f32 1.0, %v6384
  %v6386 = vmul.f32 %v6383, %v6385
  %v6387 = vadd.f32 %v6383, %v6386
  %vm6388 = vweird.f32 %v6367
  %vm6389 = vweird.f32 %v6383
  %vm6390 = vmor %vm6388, %vm6389
  %v6391 = vsel %vm6390, %v6383, %v6387
  %v6392 = vand.u32 2147483647, %v6367
  %vm6393 = vcmp.eq.f32.partialorder %v6392, 8.507059e+37
  %v6394 = vand.u32 %v6367, 2147483648
  %v6395 = vor.u32 1.1754944e-38, %v6394
  %v6396 = vsel %vm6393, %v6395, %v6391
  %v6397 = vmul.f32 %v6361, %v6396
  %v6398 = vpack.c.bf16 %v6382, %v6382
  %v6399 = vpack.c.bf16 %v6397, %v6397
  %v6402 = vunpack.c.l.b16 %v6308
  %v6403 = vunpack.c.l.b16 %v6309
  %v6404 = vpack.c.b16 %v6403, %v6402
  %v6407 = vsel %vm3221, %v6398, 0
  %6409 = vmatpush.bf16.msra.mxu0 0
  %6410 = vmatpush.bf16.msra.mxu0 0
  %6411 = vmatpush.bf16.msra.mxu0 0
  %6412 = vmatpush.bf16.msra.mxu0 0
  %6413 = vmatpush.bf16.msra.mxu0 0
  %6414 = vmatpush.bf16.msra.mxu0 0
  %6415 = vmatpush.bf16.msra.mxu0 0
  %6416 = vmatpush.bf16.msra.mxu0 %v6404
  %6417 = vmatmul.bf16.gmra.mxu0 %v6407
  %v6418 = vpop.f32.mrf.mxu0
  %v6419 = vadd.f32 0.0, %v6418
  %v6420 = vpop.f32.mrf.mxu0
  %6421 = vdwg.mxu0
  %v6424 = vunpack.c.l.b16 %v6310
  %v6425 = vunpack.c.l.b16 %v6311
  %v6426 = vpack.c.b16 %v6425, %v6424
  %v6429 = vsel %vm3221, %v6399, 0
  %6431 = vmatpush.bf16.msra.mxu0 0
  %6432 = vmatpush.bf16.msra.mxu0 0
  %6433 = vmatpush.bf16.msra.mxu0 0
  %6434 = vmatpush.bf16.msra.mxu0 0
  %6435 = vmatpush.bf16.msra.mxu0 0
  %6436 = vmatpush.bf16.msra.mxu0 0
  %6437 = vmatpush.bf16.msra.mxu0 0
  %6438 = vmatpush.bf16.msra.mxu0 %v6426
  %6439 = vmatmul.bf16.gmra.mxu0 %v6429
  %v6440 = vpop.f32.mrf.mxu0
  %v6441 = vadd.f32 0.0, %v6440
  %v6442 = vpop.f32.mrf.mxu0
  %6443 = vdwg.mxu0
  %v6444 = vpack.c.bf16 %v6441, %v6419
  %v6445 = vpack.c.bf16 %v6205, %v6205
  %v6446 = vpack.c.bf16 %v6207, %v6207
  %v6447 = vpack.c.bf16 %v603, %v603
  %v6448 = vpack.c.bf16 %v605, %v605
  %v6449 = vpack.c.bf16 %v608, %v608
  %v6450 = vpack.c.bf16 %v610, %v610
  %v6451 = vpack.c.bf16 %v1163, %v1163
  %v6452 = vpack.c.bf16 %v1165, %v1165
  %v6453 = vpack.c.bf16 %v1168, %v1168
  %v6454 = vpack.c.bf16 %v1170, %v1170
  %v6457 = vunpack.c.l.b16 %v6447
  %v6458 = vunpack.c.l.b16 %v6448
  %v6459 = vpack.c.b16 %v6458, %v6457
  %6461 = vmatpush.bf16.xpose.msra.mxu0 0
  %6462 = vmatpush.bf16.xpose.msra.mxu0 0
  %6463 = vmatpush.bf16.xpose.msra.mxu0 0
  %6464 = vmatpush.bf16.xpose.msra.mxu0 0
  %6465 = vmatpush.bf16.xpose.msra.mxu0 0
  %6466 = vmatpush.bf16.xpose.msra.mxu0 0
  %6467 = vmatpush.bf16.xpose.msra.mxu0 0
  %6468 = vmatpush.bf16.xpose.msra.mxu0 %v6459
  %6469 = vmatmul.bf16.gmra.mxu0 %v6445
  %v6470 = vpop.f32.mrf.mxu0
  %v6471 = vadd.f32 0.0, %v6470
  %v6472 = vpop.f32.mrf.mxu0
  %6473 = vdwg.mxu0
  %v6476 = vunpack.c.l.b16 %v6449
  %v6477 = vunpack.c.l.b16 %v6450
  %v6478 = vpack.c.b16 %v6477, %v6476
  %6480 = vmatpush.bf16.xpose.msra.mxu0 0
  %6481 = vmatpush.bf16.xpose.msra.mxu0 0
  %6482 = vmatpush.bf16.xpose.msra.mxu0 0
  %6483 = vmatpush.bf16.xpose.msra.mxu0 0
  %6484 = vmatpush.bf16.xpose.msra.mxu0 0
  %6485 = vmatpush.bf16.xpose.msra.mxu0 0
  %6486 = vmatpush.bf16.xpose.msra.mxu0 0
  %6487 = vmatpush.bf16.xpose.msra.mxu0 %v6478
  %6488 = vmatmul.bf16.gmra.mxu0 %v6446
  %v6489 = vpop.f32.mrf.mxu0
  %v6490 = vadd.f32 0.0, %v6489
  %v6491 = vpop.f32.mrf.mxu0
  %6492 = vdwg.mxu0
  %v6493 = vsel %vm3221, %v6471, -inf
  %6494 = vmax.xlane.f32.xlu0 %v6493
  %v6495 = vpop.xlane.xlu0 %6494
  %v6496 = vsel %vm3221, %v6490, -inf
  %6497 = vmax.xlane.f32.xlu0 %v6496
  %v6498 = vpop.xlane.xlu0 %6497
  %v6499 = vsub.f32 %v6471, %v6495
  %v6500 = vsub.f32 %v6490, %v6498
  %v6501 = vmul.f32 %v6499, 1.442695
  %v6502 = vpow.pop %v6501
  %v6503 = vmul.f32 %v6500, 1.442695
  %v6504 = vpow.pop %v6503
  %v6505 = vsel %vm3221, %v6502, 0.0
  %6506 = vadd.xlane.f32.xlu0 %v6505
  %v6507 = vpop.xlane.xlu0 %6506
  %v6508 = vsel %vm3221, %v6504, 0.0
  %6509 = vadd.xlane.f32.xlu0 %v6508
  %v6510 = vpop.xlane.xlu0 %6509
  %v6511 = vrcp.pop %v6507
  %v6512 = vmul.f32 %v6507, %v6511
  %v6513 = vsub.f32 1.0, %v6512
  %v6514 = vmul.f32 %v6511, %v6513
  %v6515 = vadd.f32 %v6511, %v6514
  %vm6516 = vweird.f32 %v6507
  %vm6517 = vweird.f32 %v6511
  %vm6518 = vmor %vm6516, %vm6517
  %v6519 = vsel %vm6518, %v6511, %v6515
  %v6520 = vand.u32 2147483647, %v6507
  %vm6521 = vcmp.eq.f32.partialorder %v6520, 8.507059e+37
  %v6522 = vand.u32 %v6507, 2147483648
  %v6523 = vor.u32 1.1754944e-38, %v6522
  %v6524 = vsel %vm6521, %v6523, %v6519
  %v6525 = vmul.f32 %v6502, %v6524
  %v6526 = vrcp.pop %v6510
  %v6527 = vmul.f32 %v6510, %v6526
  %v6528 = vsub.f32 1.0, %v6527
  %v6529 = vmul.f32 %v6526, %v6528
  %v6530 = vadd.f32 %v6526, %v6529
  %vm6531 = vweird.f32 %v6510
  %vm6532 = vweird.f32 %v6526
  %vm6533 = vmor %vm6531, %vm6532
  %v6534 = vsel %vm6533, %v6526, %v6530
  %v6535 = vand.u32 2147483647, %v6510
  %vm6536 = vcmp.eq.f32.partialorder %v6535, 8.507059e+37
  %v6537 = vand.u32 %v6510, 2147483648
  %v6538 = vor.u32 1.1754944e-38, %v6537
  %v6539 = vsel %vm6536, %v6538, %v6534
  %v6540 = vmul.f32 %v6504, %v6539
  %v6541 = vpack.c.bf16 %v6525, %v6525
  %v6542 = vpack.c.bf16 %v6540, %v6540
  %v6545 = vunpack.c.l.b16 %v6451
  %v6546 = vunpack.c.l.b16 %v6452
  %v6547 = vpack.c.b16 %v6546, %v6545
  %v6550 = vsel %vm3221, %v6541, 0
  %6552 = vmatpush.bf16.msra.mxu0 0
  %6553 = vmatpush.bf16.msra.mxu0 0
  %6554 = vmatpush.bf16.msra.mxu0 0
  %6555 = vmatpush.bf16.msra.mxu0 0
  %6556 = vmatpush.bf16.msra.mxu0 0
  %6557 = vmatpush.bf16.msra.mxu0 0
  %6558 = vmatpush.bf16.msra.mxu0 0
  %6559 = vmatpush.bf16.msra.mxu0 %v6547
  %6560 = vmatmul.bf16.gmra.mxu0 %v6550
  %v6561 = vpop.f32.mrf.mxu0
  %v6562 = vadd.f32 0.0, %v6561
  %v6563 = vpop.f32.mrf.mxu0
  %6564 = vdwg.mxu0
  %v6567 = vunpack.c.l.b16 %v6453
  %v6568 = vunpack.c.l.b16 %v6454
  %v6569 = vpack.c.b16 %v6568, %v6567
  %v6572 = vsel %vm3221, %v6542, 0
  %6574 = vmatpush.bf16.msra.mxu0 0
  %6575 = vmatpush.bf16.msra.mxu0 0
  %6576 = vmatpush.bf16.msra.mxu0 0
  %6577 = vmatpush.bf16.msra.mxu0 0
  %6578 = vmatpush.bf16.msra.mxu0 0
  %6579 = vmatpush.bf16.msra.mxu0 0
  %6580 = vmatpush.bf16.msra.mxu0 0
  %6581 = vmatpush.bf16.msra.mxu0 %v6569
  %6582 = vmatmul.bf16.gmra.mxu0 %v6572
  %v6583 = vpop.f32.mrf.mxu0
  %v6584 = vadd.f32 0.0, %v6583
  %v6585 = vpop.f32.mrf.mxu0
  %6586 = vdwg.mxu0
  %v6587 = vpack.c.bf16 %v6584, %v6562
  %v6604 = vunpack.c.l.b16 %v6254
  %v6605 = vunpack.c.l.b16 %v6255
  %v6606 = vunpack.c.l.b16 %v6256
  %v6607 = vunpack.c.l.b16 %v6257
  %v6608 = vunpack.c.l.b16 %v6258
  %v6609 = vunpack.c.l.b16 %v6259
  %v6610 = vunpack.c.l.b16 %v6260
  %v6611 = vunpack.c.l.b16 %v6261
  %v6612 = vunpack.c.l.b16 %v6262
  %v6613 = vunpack.c.l.b16 %v6263
  %v6614 = vunpack.c.l.b16 %v6264
  %v6615 = vunpack.c.l.b16 %v6265
  %v6616 = vunpack.c.l.b16 %v6266
  %v6617 = vunpack.c.l.b16 %v6267
  %v6618 = vunpack.c.l.b16 %v6268
  %v6619 = vunpack.c.l.b16 %v6269
  %v6620 = vpack.c.b16 %v6605, %v6604
  %v6621 = vpack.c.b16 %v6607, %v6606
  %v6622 = vpack.c.b16 %v6609, %v6608
  %v6623 = vpack.c.b16 %v6611, %v6610
  %v6624 = vpack.c.b16 %v6613, %v6612
  %v6625 = vpack.c.b16 %v6615, %v6614
  %v6626 = vpack.c.b16 %v6617, %v6616
  %v6627 = vpack.c.b16 %v6619, %v6618
  %6636 = vmatpush.bf16.msra.mxu0 %v6627
  %6637 = vmatpush.bf16.msra.mxu0 %v6626
  %6638 = vmatpush.bf16.msra.mxu0 %v6625
  %6639 = vmatpush.bf16.msra.mxu0 %v6624
  %6640 = vmatpush.bf16.msra.mxu0 %v6623
  %6641 = vmatpush.bf16.msra.mxu0 %v6622
  %6642 = vmatpush.bf16.msra.mxu0 %v6621
  %6643 = vmatpush.bf16.msra.mxu0 %v6620
  %6644 = vmatmul.bf16.gmra.mxu0 %v6587
  %v6645 = vpop.f32.mrf.mxu0
  %v6646 = vadd.f32 0.0, %v6645
  %v6647 = vpop.f32.mrf.mxu0
  %v6648 = vadd.f32 0.0, %v6647
  %6649 = vdwg.mxu0
  %v6666 = vunpack.c.l.b16 %v6238
  %v6667 = vunpack.c.l.b16 %v6239
  %v6668 = vunpack.c.l.b16 %v6240
  %v6669 = vunpack.c.l.b16 %v6241
  %v6670 = vunpack.c.l.b16 %v6242
  %v6671 = vunpack.c.l.b16 %v6243
  %v6672 = vunpack.c.l.b16 %v6244
  %v6673 = vunpack.c.l.b16 %v6245
  %v6674 = vunpack.c.l.b16 %v6246
  %v6675 = vunpack.c.l.b16 %v6247
  %v6676 = vunpack.c.l.b16 %v6248
  %v6677 = vunpack.c.l.b16 %v6249
  %v6678 = vunpack.c.l.b16 %v6250
  %v6679 = vunpack.c.l.b16 %v6251
  %v6680 = vunpack.c.l.b16 %v6252
  %v6681 = vunpack.c.l.b16 %v6253
  %v6682 = vpack.c.b16 %v6667, %v6666
  %v6683 = vpack.c.b16 %v6669, %v6668
  %v6684 = vpack.c.b16 %v6671, %v6670
  %v6685 = vpack.c.b16 %v6673, %v6672
  %v6686 = vpack.c.b16 %v6675, %v6674
  %v6687 = vpack.c.b16 %v6677, %v6676
  %v6688 = vpack.c.b16 %v6679, %v6678
  %v6689 = vpack.c.b16 %v6681, %v6680
  %6698 = vmatpush.bf16.msra.mxu0 %v6689
  %6699 = vmatpush.bf16.msra.mxu0 %v6688
  %6700 = vmatpush.bf16.msra.mxu0 %v6687
  %6701 = vmatpush.bf16.msra.mxu0 %v6686
  %6702 = vmatpush.bf16.msra.mxu0 %v6685
  %6703 = vmatpush.bf16.msra.mxu0 %v6684
  %6704 = vmatpush.bf16.msra.mxu0 %v6683
  %6705 = vmatpush.bf16.msra.mxu0 %v6682
  %6706 = vmatmul.bf16.gmra.mxu0 %v6444
  %v6707 = vpop.f32.mrf.mxu0
  %v6708 = vadd.f32 %v6646, %v6707
  %v6709 = vpop.f32.mrf.mxu0
  %v6710 = vadd.f32 %v6648, %v6709
  %6711 = vdwg.mxu0
  %v6712 = vpack.c.bf16 %v6219, %v6219
  %v6713 = vpack.c.bf16 %v6221, %v6221
  %v6714 = vpack.c.bf16 %v622, %v622
  %v6715 = vpack.c.bf16 %v624, %v624
  %v6716 = vpack.c.bf16 %v627, %v627
  %v6717 = vpack.c.bf16 %v629, %v629
  %v6718 = vpack.c.bf16 %v1182, %v1182
  %v6719 = vpack.c.bf16 %v1184, %v1184
  %v6720 = vpack.c.bf16 %v1187, %v1187
  %v6721 = vpack.c.bf16 %v1189, %v1189
  %v6724 = vunpack.c.l.b16 %v6714
  %v6725 = vunpack.c.l.b16 %v6715
  %v6726 = vpack.c.b16 %v6725, %v6724
  %6728 = vmatpush.bf16.xpose.msra.mxu0 0
  %6729 = vmatpush.bf16.xpose.msra.mxu0 0
  %6730 = vmatpush.bf16.xpose.msra.mxu0 0
  %6731 = vmatpush.bf16.xpose.msra.mxu0 0
  %6732 = vmatpush.bf16.xpose.msra.mxu0 0
  %6733 = vmatpush.bf16.xpose.msra.mxu0 0
  %6734 = vmatpush.bf16.xpose.msra.mxu0 0
  %6735 = vmatpush.bf16.xpose.msra.mxu0 %v6726
  %6736 = vmatmul.bf16.gmra.mxu0 %v6712
  %v6737 = vpop.f32.mrf.mxu0
  %v6738 = vadd.f32 0.0, %v6737
  %v6739 = vpop.f32.mrf.mxu0
  %6740 = vdwg.mxu0
  %v6743 = vunpack.c.l.b16 %v6716
  %v6744 = vunpack.c.l.b16 %v6717
  %v6745 = vpack.c.b16 %v6744, %v6743
  %6747 = vmatpush.bf16.xpose.msra.mxu0 0
  %6748 = vmatpush.bf16.xpose.msra.mxu0 0
  %6749 = vmatpush.bf16.xpose.msra.mxu0 0
  %6750 = vmatpush.bf16.xpose.msra.mxu0 0
  %6751 = vmatpush.bf16.xpose.msra.mxu0 0
  %6752 = vmatpush.bf16.xpose.msra.mxu0 0
  %6753 = vmatpush.bf16.xpose.msra.mxu0 0
  %6754 = vmatpush.bf16.xpose.msra.mxu0 %v6745
  %6755 = vmatmul.bf16.gmra.mxu0 %v6713
  %v6756 = vpop.f32.mrf.mxu0
  %v6757 = vadd.f32 0.0, %v6756
  %v6758 = vpop.f32.mrf.mxu0
  %6759 = vdwg.mxu0
  %v6760 = vsel %vm3221, %v6738, -inf
  %6761 = vmax.xlane.f32.xlu0 %v6760
  %v6762 = vpop.xlane.xlu0 %6761
  %v6763 = vsel %vm3221, %v6757, -inf
  %6764 = vmax.xlane.f32.xlu0 %v6763
  %v6765 = vpop.xlane.xlu0 %6764
  %v6766 = vsub.f32 %v6738, %v6762
  %v6767 = vsub.f32 %v6757, %v6765
  %v6768 = vmul.f32 %v6766, 1.442695
  %v6769 = vpow.pop %v6768
  %v6770 = vmul.f32 %v6767, 1.442695
  %v6771 = vpow.pop %v6770
  %v6772 = vsel %vm3221, %v6769, 0.0
  %6773 = vadd.xlane.f32.xlu0 %v6772
  %v6774 = vpop.xlane.xlu0 %6773
  %v6775 = vsel %vm3221, %v6771, 0.0
  %6776 = vadd.xlane.f32.xlu0 %v6775
  %v6777 = vpop.xlane.xlu0 %6776
  %v6778 = vrcp.pop %v6774
  %v6779 = vmul.f32 %v6774, %v6778
  %v6780 = vsub.f32 1.0, %v6779
  %v6781 = vmul.f32 %v6778, %v6780
  %v6782 = vadd.f32 %v6778, %v6781
  %vm6783 = vweird.f32 %v6774
  %vm6784 = vweird.f32 %v6778
  %vm6785 = vmor %vm6783, %vm6784
  %v6786 = vsel %vm6785, %v6778, %v6782
  %v6787 = vand.u32 2147483647, %v6774
  %vm6788 = vcmp.eq.f32.partialorder %v6787, 8.507059e+37
  %v6789 = vand.u32 %v6774, 2147483648
  %v6790 = vor.u32 1.1754944e-38, %v6789
  %v6791 = vsel %vm6788, %v6790, %v6786
  %v6792 = vmul.f32 %v6769, %v6791
  %v6793 = vrcp.pop %v6777
  %v6794 = vmul.f32 %v6777, %v6793
  %v6795 = vsub.f32 1.0, %v6794
  %v6796 = vmul.f32 %v6793, %v6795
  %v6797 = vadd.f32 %v6793, %v6796
  %vm6798 = vweird.f32 %v6777
  %vm6799 = vweird.f32 %v6793
  %vm6800 = vmor %vm6798, %vm6799
  %v6801 = vsel %vm6800, %v6793, %v6797
  %v6802 = vand.u32 2147483647, %v6777
  %vm6803 = vcmp.eq.f32.partialorder %v6802, 8.507059e+37
  %v6804 = vand.u32 %v6777, 2147483648
  %v6805 = vor.u32 1.1754944e-38, %v6804
  %v6806 = vsel %vm6803, %v6805, %v6801
  %v6807 = vmul.f32 %v6771, %v6806
  %v6808 = vpack.c.bf16 %v6792, %v6792
  %v6809 = vpack.c.bf16 %v6807, %v6807
  %v6812 = vunpack.c.l.b16 %v6718
  %v6813 = vunpack.c.l.b16 %v6719
  %v6814 = vpack.c.b16 %v6813, %v6812
  %v6817 = vsel %vm3221, %v6808, 0
  %6819 = vmatpush.bf16.msra.mxu0 0
  %6820 = vmatpush.bf16.msra.mxu0 0
  %6821 = vmatpush.bf16.msra.mxu0 0
  %6822 = vmatpush.bf16.msra.mxu0 0
  %6823 = vmatpush.bf16.msra.mxu0 0
  %6824 = vmatpush.bf16.msra.mxu0 0
  %6825 = vmatpush.bf16.msra.mxu0 0
  %6826 = vmatpush.bf16.msra.mxu0 %v6814
  %6827 = vmatmul.bf16.gmra.mxu0 %v6817
  %v6828 = vpop.f32.mrf.mxu0
  %v6829 = vadd.f32 0.0, %v6828
  %v6830 = vpop.f32.mrf.mxu0
  %6831 = vdwg.mxu0
  %v6834 = vunpack.c.l.b16 %v6720
  %v6835 = vunpack.c.l.b16 %v6721
  %v6836 = vpack.c.b16 %v6835, %v6834
  %v6839 = vsel %vm3221, %v6809, 0
  %6841 = vmatpush.bf16.msra.mxu0 0
  %6842 = vmatpush.bf16.msra.mxu0 0
  %6843 = vmatpush.bf16.msra.mxu0 0
  %6844 = vmatpush.bf16.msra.mxu0 0
  %6845 = vmatpush.bf16.msra.mxu0 0
  %6846 = vmatpush.bf16.msra.mxu0 0
  %6847 = vmatpush.bf16.msra.mxu0 0
  %6848 = vmatpush.bf16.msra.mxu0 %v6836
  %6849 = vmatmul.bf16.gmra.mxu0 %v6839
  %v6850 = vpop.f32.mrf.mxu0
  %v6851 = vadd.f32 0.0, %v6850
  %v6852 = vpop.f32.mrf.mxu0
  %6853 = vdwg.mxu0
  %v6854 = vpack.c.bf16 %v6851, %v6829
  %v6871 = vunpack.c.l.b16 %v6270
  %v6872 = vunpack.c.l.b16 %v6271
  %v6873 = vunpack.c.l.b16 %v6272
  %v6874 = vunpack.c.l.b16 %v6273
  %v6875 = vunpack.c.l.b16 %v6274
  %v6876 = vunpack.c.l.b16 %v6275
  %v6877 = vunpack.c.l.b16 %v6276
  %v6878 = vunpack.c.l.b16 %v6277
  %v6879 = vunpack.c.l.b16 %v6278
  %v6880 = vunpack.c.l.b16 %v6279
  %v6881 = vunpack.c.l.b16 %v6280
  %v6882 = vunpack.c.l.b16 %v6281
  %v6883 = vunpack.c.l.b16 %v6282
  %v6884 = vunpack.c.l.b16 %v6283
  %v6885 = vunpack.c.l.b16 %v6284
  %v6886 = vunpack.c.l.b16 %v6285
  %v6887 = vpack.c.b16 %v6872, %v6871
  %v6888 = vpack.c.b16 %v6874, %v6873
  %v6889 = vpack.c.b16 %v6876, %v6875
  %v6890 = vpack.c.b16 %v6878, %v6877
  %v6891 = vpack.c.b16 %v6880, %v6879
  %v6892 = vpack.c.b16 %v6882, %v6881
  %v6893 = vpack.c.b16 %v6884, %v6883
  %v6894 = vpack.c.b16 %v6886, %v6885
  %6903 = vmatpush.bf16.msra.mxu0 %v6894
  %6904 = vmatpush.bf16.msra.mxu0 %v6893
  %6905 = vmatpush.bf16.msra.mxu0 %v6892
  %6906 = vmatpush.bf16.msra.mxu0 %v6891
  %6907 = vmatpush.bf16.msra.mxu0 %v6890
  %6908 = vmatpush.bf16.msra.mxu0 %v6889
  %6909 = vmatpush.bf16.msra.mxu0 %v6888
  %6910 = vmatpush.bf16.msra.mxu0 %v6887
  %6911 = vmatmul.bf16.gmra.mxu0 %v6854
  %v6912 = vpop.f32.mrf.mxu0
  %v6913 = vadd.f32 0.0, %v6912
  %v6914 = vpop.f32.mrf.mxu0
  %v6915 = vadd.f32 0.0, %v6914
  %6916 = vdwg.mxu0
  %v6917 = vadd.f32 %v6708, %v6913
  %v6918 = vadd.f32 %v6710, %v6915
  %v6919 = vpack.c.bf16 %v6233, %v6233
  %v6920 = vpack.c.bf16 %v6235, %v6235
  %v6921 = vpack.c.bf16 %v641, %v641
  %v6922 = vpack.c.bf16 %v643, %v643
  %v6923 = vpack.c.bf16 %v646, %v646
  %v6924 = vpack.c.bf16 %v648, %v648
  %v6925 = vpack.c.bf16 %v1201, %v1201
  %v6926 = vpack.c.bf16 %v1203, %v1203
  %v6927 = vpack.c.bf16 %v1206, %v1206
  %v6928 = vpack.c.bf16 %v1208, %v1208
  %v6931 = vunpack.c.l.b16 %v6921
  %v6932 = vunpack.c.l.b16 %v6922
  %v6933 = vpack.c.b16 %v6932, %v6931
  %6935 = vmatpush.bf16.xpose.msra.mxu0 0
  %6936 = vmatpush.bf16.xpose.msra.mxu0 0
  %6937 = vmatpush.bf16.xpose.msra.mxu0 0
  %6938 = vmatpush.bf16.xpose.msra.mxu0 0
  %6939 = vmatpush.bf16.xpose.msra.mxu0 0
  %6940 = vmatpush.bf16.xpose.msra.mxu0 0
  %6941 = vmatpush.bf16.xpose.msra.mxu0 0
  %6942 = vmatpush.bf16.xpose.msra.mxu0 %v6933
  %6943 = vmatmul.bf16.gmra.mxu0 %v6919
  %v6944 = vpop.f32.mrf.mxu0
  %v6945 = vadd.f32 0.0, %v6944
  %v6946 = vpop.f32.mrf.mxu0
  %6947 = vdwg.mxu0
  %v6950 = vunpack.c.l.b16 %v6923
  %v6951 = vunpack.c.l.b16 %v6924
  %v6952 = vpack.c.b16 %v6951, %v6950
  %6954 = vmatpush.bf16.xpose.msra.mxu0 0
  %6955 = vmatpush.bf16.xpose.msra.mxu0 0
  %6956 = vmatpush.bf16.xpose.msra.mxu0 0
  %6957 = vmatpush.bf16.xpose.msra.mxu0 0
  %6958 = vmatpush.bf16.xpose.msra.mxu0 0
  %6959 = vmatpush.bf16.xpose.msra.mxu0 0
  %6960 = vmatpush.bf16.xpose.msra.mxu0 0
  %6961 = vmatpush.bf16.xpose.msra.mxu0 %v6952
  %6962 = vmatmul.bf16.gmra.mxu0 %v6920
  %v6963 = vpop.f32.mrf.mxu0
  %v6964 = vadd.f32 0.0, %v6963
  %v6965 = vpop.f32.mrf.mxu0
  %6966 = vdwg.mxu0
  %v6967 = vsel %vm3221, %v6945, -inf
  %6968 = vmax.xlane.f32.xlu0 %v6967
  %v6969 = vpop.xlane.xlu0 %6968
  %v6970 = vsel %vm3221, %v6964, -inf
  %6971 = vmax.xlane.f32.xlu0 %v6970
  %v6972 = vpop.xlane.xlu0 %6971
  %v6973 = vsub.f32 %v6945, %v6969
  %v6974 = vsub.f32 %v6964, %v6972
  %v6975 = vmul.f32 %v6973, 1.442695
  %v6976 = vpow.pop %v6975
  %v6977 = vmul.f32 %v6974, 1.442695
  %v6978 = vpow.pop %v6977
  %v6979 = vsel %vm3221, %v6976, 0.0
  %6980 = vadd.xlane.f32.xlu0 %v6979
  %v6981 = vpop.xlane.xlu0 %6980
  %v6982 = vsel %vm3221, %v6978, 0.0
  %6983 = vadd.xlane.f32.xlu0 %v6982
  %v6984 = vpop.xlane.xlu0 %6983
  %v6985 = vrcp.pop %v6981
  %v6986 = vmul.f32 %v6981, %v6985
  %v6987 = vsub.f32 1.0, %v6986
  %v6988 = vmul.f32 %v6985, %v6987
  %v6989 = vadd.f32 %v6985, %v6988
  %vm6990 = vweird.f32 %v6981
  %vm6991 = vweird.f32 %v6985
  %vm6992 = vmor %vm6990, %vm6991
  %v6993 = vsel %vm6992, %v6985, %v6989
  %v6994 = vand.u32 2147483647, %v6981
  %vm6995 = vcmp.eq.f32.partialorder %v6994, 8.507059e+37
  %v6996 = vand.u32 %v6981, 2147483648
  %v6997 = vor.u32 1.1754944e-38, %v6996
  %v6998 = vsel %vm6995, %v6997, %v6993
  %v6999 = vmul.f32 %v6976, %v6998
  %v7000 = vrcp.pop %v6984
  %v7001 = vmul.f32 %v6984, %v7000
  %v7002 = vsub.f32 1.0, %v7001
  %v7003 = vmul.f32 %v7000, %v7002
  %v7004 = vadd.f32 %v7000, %v7003
  %vm7005 = vweird.f32 %v6984
  %vm7006 = vweird.f32 %v7000
  %vm7007 = vmor %vm7005, %vm7006
  %v7008 = vsel %vm7007, %v7000, %v7004
  %v7009 = vand.u32 2147483647, %v6984
  %vm7010 = vcmp.eq.f32.partialorder %v7009, 8.507059e+37
  %v7011 = vand.u32 %v6984, 2147483648
  %v7012 = vor.u32 1.1754944e-38, %v7011
  %v7013 = vsel %vm7010, %v7012, %v7008
  %v7014 = vmul.f32 %v6978, %v7013
  %v7015 = vpack.c.bf16 %v6999, %v6999
  %v7016 = vpack.c.bf16 %v7014, %v7014
  %v7019 = vunpack.c.l.b16 %v6925
  %v7020 = vunpack.c.l.b16 %v6926
  %v7021 = vpack.c.b16 %v7020, %v7019
  %v7024 = vsel %vm3221, %v7015, 0
  %7026 = vmatpush.bf16.msra.mxu0 0
  %7027 = vmatpush.bf16.msra.mxu0 0
  %7028 = vmatpush.bf16.msra.mxu0 0
  %7029 = vmatpush.bf16.msra.mxu0 0
  %7030 = vmatpush.bf16.msra.mxu0 0
  %7031 = vmatpush.bf16.msra.mxu0 0
  %7032 = vmatpush.bf16.msra.mxu0 0
  %7033 = vmatpush.bf16.msra.mxu0 %v7021
  %7034 = vmatmul.bf16.gmra.mxu0 %v7024
  %v7035 = vpop.f32.mrf.mxu0
  %v7036 = vadd.f32 0.0, %v7035
  %v7037 = vpop.f32.mrf.mxu0
  %7038 = vdwg.mxu0
  %v7041 = vunpack.c.l.b16 %v6927
  %v7042 = vunpack.c.l.b16 %v6928
  %v7043 = vpack.c.b16 %v7042, %v7041
  %v7046 = vsel %vm3221, %v7016, 0
  %7048 = vmatpush.bf16.msra.mxu0 0
  %7049 = vmatpush.bf16.msra.mxu0 0
  %7050 = vmatpush.bf16.msra.mxu0 0
  %7051 = vmatpush.bf16.msra.mxu0 0
  %7052 = vmatpush.bf16.msra.mxu0 0
  %7053 = vmatpush.bf16.msra.mxu0 0
  %7054 = vmatpush.bf16.msra.mxu0 0
  %7055 = vmatpush.bf16.msra.mxu0 %v7043
  %7056 = vmatmul.bf16.gmra.mxu0 %v7046
  %v7057 = vpop.f32.mrf.mxu0
  %v7058 = vadd.f32 0.0, %v7057
  %v7059 = vpop.f32.mrf.mxu0
  %7060 = vdwg.mxu0
  %v7061 = vpack.c.bf16 %v7058, %v7036
  %v7078 = vunpack.c.l.b16 %v6286
  %v7079 = vunpack.c.l.b16 %v6287
  %v7080 = vunpack.c.l.b16 %v6288
  %v7081 = vunpack.c.l.b16 %v6289
  %v7082 = vunpack.c.l.b16 %v6290
  %v7083 = vunpack.c.l.b16 %v6291
  %v7084 = vunpack.c.l.b16 %v6292
  %v7085 = vunpack.c.l.b16 %v6293
  %v7086 = vunpack.c.l.b16 %v6294
  %v7087 = vunpack.c.l.b16 %v6295
  %v7088 = vunpack.c.l.b16 %v6296
  %v7089 = vunpack.c.l.b16 %v6297
  %v7090 = vunpack.c.l.b16 %v6298
  %v7091 = vunpack.c.l.b16 %v6299
  %v7092 = vunpack.c.l.b16 %v6300
  %v7093 = vunpack.c.l.b16 %v6301
  %v7094 = vpack.c.b16 %v7079, %v7078
  %v7095 = vpack.c.b16 %v7081, %v7080
  %v7096 = vpack.c.b16 %v7083, %v7082
  %v7097 = vpack.c.b16 %v7085, %v7084
  %v7098 = vpack.c.b16 %v7087, %v7086
  %v7099 = vpack.c.b16 %v7089, %v7088
  %v7100 = vpack.c.b16 %v7091, %v7090
  %v7101 = vpack.c.b16 %v7093, %v7092
  %7110 = vmatpush.bf16.msra.mxu0 %v7101
  %7111 = vmatpush.bf16.msra.mxu0 %v7100
  %7112 = vmatpush.bf16.msra.mxu0 %v7099
  %7113 = vmatpush.bf16.msra.mxu0 %v7098
  %7114 = vmatpush.bf16.msra.mxu0 %v7097
  %7115 = vmatpush.bf16.msra.mxu0 %v7096
  %7116 = vmatpush.bf16.msra.mxu0 %v7095
  %7117 = vmatpush.bf16.msra.mxu0 %v7094
  %7118 = vmatmul.bf16.gmra.mxu0 %v7061
  %v7119 = vpop.f32.mrf.mxu0
  %v7120 = vadd.f32 0.0, %v7119
  %v7121 = vpop.f32.mrf.mxu0
  %v7122 = vadd.f32 0.0, %v7121
  %7123 = vdwg.mxu0
  %v7124 = vadd.f32 %v6917, %v7120
  %v7125 = vadd.f32 %v6918, %v7122
  %s7126 = scalar_lea.vmem %s13, 1
  %v7127 = vld [vmem:[%s7126] sm:$0x1]
  %v7129 = vperm.slane %v7127, 0
  %v7131 = vadd.f32 %v7124, %v7129
  %v7132 = vadd.f32 %v7125, %v7129
  %v7133 = vadd.f32 %v5972, %v7131
  %v7134 = vadd.f32 %v5973, %v7132
  %7135 = vadd.xlane.f32.xlu0 %v7133
  %v7136 = vpop.xlane.xlu0 %7135
  %7137 = vadd.xlane.f32.xlu0 %v7134
  %v7138 = vpop.xlane.xlu0 %7137
  %v7139 = vmul.f32 %v7136, 0.03125
  %v7140 = vmul.f32 %v7138, 0.03125
  %v7141 = vmul.f32 %v7133, %v7133
  %v7142 = vmul.f32 %v7134, %v7134
  %7143 = vadd.xlane.f32.xlu0 %v7141
  %v7144 = vpop.xlane.xlu0 %7143
  %7145 = vadd.xlane.f32.xlu0 %v7142
  %v7146 = vpop.xlane.xlu0 %7145
  %v7147 = vmul.f32 %v7144, 0.03125
  %v7148 = vmul.f32 %v7146, 0.03125
  %v7149 = vmul.f32 %v7139, %v7139
  %v7150 = vmul.f32 %v7140, %v7140
  %v7151 = vsub.f32 %v7147, %v7149
  %v7152 = vsub.f32 %v7148, %v7150
  %v7153 = vsub.f32 %v7133, %v7139
  %v7154 = vsub.f32 %v7134, %v7140
  %v7155 = vadd.f32 %v7151, 1e-05
  %v7156 = vadd.f32 %v7152, 1e-05
  %v7157 = vrsqrt.pop %v7155
  %v7158 = vmul.f32 %v7157, %v7155
  %v7159 = vmul.f32 %v7158, %v7157
  %v7160 = vmul.f32 0.5, %v7159
  %v7161 = vsub.f32 1.5, %v7160
  %v7162 = vmul.f32 %v7157, %v7161
  %vm7163 = vweird.f32 %v7155
  %vm7164 = vweird.f32 %v7157
  %vm7165 = vmor %vm7163, %vm7164
  %v7166 = vsel %vm7165, %v7157, %v7162
  %v7167 = vrsqrt.pop %v7156
  %v7168 = vmul.f32 %v7167, %v7156
  %v7169 = vmul.f32 %v7168, %v7167
  %v7170 = vmul.f32 0.5, %v7169
  %v7171 = vsub.f32 1.5, %v7170
  %v7172 = vmul.f32 %v7167, %v7171
  %vm7173 = vweird.f32 %v7156
  %vm7174 = vweird.f32 %v7167
  %vm7175 = vmor %vm7173, %vm7174
  %v7176 = vsel %vm7175, %v7167, %v7172
  %v7177 = vmul.f32 %v7153, %v7166
  %v7178 = vmul.f32 %v7154, %v7176
  %v7179 = vperm.slane %v4331, 1
  %v7180 = vmul.f32 %v7177, %v7179
  %v7181 = vmul.f32 %v7178, %v7179
  %v7182 = vperm.slane %v4333, 1
  %v7183 = vadd.f32 %v7180, %v7182
  %v7184 = vadd.f32 %v7181, %v7182
  %s7185 = scalar_lea.vmem %s18, 64
  %v7186 = vld [vmem:[%s7185] sm:$0xf]
  %v7187 = vld [vmem:[%s7185 + $0x4] sm:$0xf]
  %v7188 = vld [vmem:[%s7185 + $0x8] sm:$0xf]
  %v7189 = vld [vmem:[%s7185 + $0xc] sm:$0xf]
  %v7190 = vld [vmem:[%s7185 + $0x10] sm:$0xf]
  %v7191 = vld [vmem:[%s7185 + $0x14] sm:$0xf]
  %v7192 = vld [vmem:[%s7185 + $0x18] sm:$0xf]
  %v7193 = vld [vmem:[%s7185 + $0x1c] sm:$0xf]
  %v7194 = vld [vmem:[%s7185 + $0x20] sm:$0xf]
  %v7195 = vld [vmem:[%s7185 + $0x24] sm:$0xf]
  %v7196 = vld [vmem:[%s7185 + $0x28] sm:$0xf]
  %v7197 = vld [vmem:[%s7185 + $0x2c] sm:$0xf]
  %v7198 = vld [vmem:[%s7185 + $0x30] sm:$0xf]
  %v7199 = vld [vmem:[%s7185 + $0x34] sm:$0xf]
  %v7200 = vld [vmem:[%s7185 + $0x38] sm:$0xf]
  %v7201 = vld [vmem:[%s7185 + $0x3c] sm:$0xf]
  %v7202 = vpack.c.bf16 %v7184, %v7183
  %s7203 = scalar_lea.vmem %s19, 1
  %v7204 = vld [vmem:[%s7203] sm:$0x1]
  %v7206 = vperm.slane %v7204, 0
  %v7224 = vunpack.c.l.b16 %v7186
  %v7225 = vunpack.c.l.b16 %v7187
  %v7226 = vunpack.c.l.b16 %v7188
  %v7227 = vunpack.c.l.b16 %v7189
  %v7228 = vunpack.c.l.b16 %v7190
  %v7229 = vunpack.c.l.b16 %v7191
  %v7230 = vunpack.c.l.b16 %v7192
  %v7231 = vunpack.c.l.b16 %v7193
  %v7232 = vunpack.c.l.b16 %v7194
  %v7233 = vunpack.c.l.b16 %v7195
  %v7234 = vunpack.c.l.b16 %v7196
  %v7235 = vunpack.c.l.b16 %v7197
  %v7236 = vunpack.c.l.b16 %v7198
  %v7237 = vunpack.c.l.b16 %v7199
  %v7238 = vunpack.c.l.b16 %v7200
  %v7239 = vunpack.c.l.b16 %v7201
  %v7240 = vpack.c.b16 %v7225, %v7224
  %v7241 = vpack.c.b16 %v7227, %v7226
  %v7242 = vpack.c.b16 %v7229, %v7228
  %v7243 = vpack.c.b16 %v7231, %v7230
  %v7244 = vpack.c.b16 %v7233, %v7232
  %v7245 = vpack.c.b16 %v7235, %v7234
  %v7246 = vpack.c.b16 %v7237, %v7236
  %v7247 = vpack.c.b16 %v7239, %v7238
  %7256 = vmatpush.bf16.msra.mxu0 %v7247
  %7257 = vmatpush.bf16.msra.mxu0 %v7246
  %7258 = vmatpush.bf16.msra.mxu0 %v7245
  %7259 = vmatpush.bf16.msra.mxu0 %v7244
  %7260 = vmatpush.bf16.msra.mxu0 %v7243
  %7261 = vmatpush.bf16.msra.mxu0 %v7242
  %7262 = vmatpush.bf16.msra.mxu0 %v7241
  %7263 = vmatpush.bf16.msra.mxu0 %v7240
  %7264 = vmatmul.bf16.gmra.mxu0 %v7202
  %v7265 = vpop.f32.mrf.mxu0
  %v7266 = vadd.f32 %v7206, %v7265
  %v7267 = vpop.f32.mrf.mxu0
  %v7268 = vadd.f32 %v7206, %v7267
  %7269 = vdwg.mxu0
  %v7270 = vmax.f32 %v7266, 0.0
  %v7271 = vmax.f32 %v7268, 0.0
  %s7272 = scalar_lea.vmem %s20, 64
  %v7273 = vld [vmem:[%s7272] sm:$0xf]
  %v7274 = vld [vmem:[%s7272 + $0x4] sm:$0xf]
  %v7275 = vld [vmem:[%s7272 + $0x8] sm:$0xf]
  %v7276 = vld [vmem:[%s7272 + $0xc] sm:$0xf]
  %v7277 = vld [vmem:[%s7272 + $0x10] sm:$0xf]
  %v7278 = vld [vmem:[%s7272 + $0x14] sm:$0xf]
  %v7279 = vld [vmem:[%s7272 + $0x18] sm:$0xf]
  %v7280 = vld [vmem:[%s7272 + $0x1c] sm:$0xf]
  %v7281 = vld [vmem:[%s7272 + $0x20] sm:$0xf]
  %v7282 = vld [vmem:[%s7272 + $0x24] sm:$0xf]
  %v7283 = vld [vmem:[%s7272 + $0x28] sm:$0xf]
  %v7284 = vld [vmem:[%s7272 + $0x2c] sm:$0xf]
  %v7285 = vld [vmem:[%s7272 + $0x30] sm:$0xf]
  %v7286 = vld [vmem:[%s7272 + $0x34] sm:$0xf]
  %v7287 = vld [vmem:[%s7272 + $0x38] sm:$0xf]
  %v7288 = vld [vmem:[%s7272 + $0x3c] sm:$0xf]
  %v7289 = vpack.c.bf16 %v7271, %v7270
  %s7290 = scalar_lea.vmem %s21, 1
  %v7291 = vld [vmem:[%s7290] sm:$0x1]
  %v7293 = vperm.slane %v7291, 0
  %v7311 = vunpack.c.l.b16 %v7273
  %v7312 = vunpack.c.l.b16 %v7274
  %v7313 = vunpack.c.l.b16 %v7275
  %v7314 = vunpack.c.l.b16 %v7276
  %v7315 = vunpack.c.l.b16 %v7277
  %v7316 = vunpack.c.l.b16 %v7278
  %v7317 = vunpack.c.l.b16 %v7279
  %v7318 = vunpack.c.l.b16 %v7280
  %v7319 = vunpack.c.l.b16 %v7281
  %v7320 = vunpack.c.l.b16 %v7282
  %v7321 = vunpack.c.l.b16 %v7283
  %v7322 = vunpack.c.l.b16 %v7284
  %v7323 = vunpack.c.l.b16 %v7285
  %v7324 = vunpack.c.l.b16 %v7286
  %v7325 = vunpack.c.l.b16 %v7287
  %v7326 = vunpack.c.l.b16 %v7288
  %v7327 = vpack.c.b16 %v7312, %v7311
  %v7328 = vpack.c.b16 %v7314, %v7313
  %v7329 = vpack.c.b16 %v7316, %v7315
  %v7330 = vpack.c.b16 %v7318, %v7317
  %v7331 = vpack.c.b16 %v7320, %v7319
  %v7332 = vpack.c.b16 %v7322, %v7321
  %v7333 = vpack.c.b16 %v7324, %v7323
  %v7334 = vpack.c.b16 %v7326, %v7325
  %7343 = vmatpush.bf16.msra.mxu0 %v7334
  %7344 = vmatpush.bf16.msra.mxu0 %v7333
  %7345 = vmatpush.bf16.msra.mxu0 %v7332
  %7346 = vmatpush.bf16.msra.mxu0 %v7331
  %7347 = vmatpush.bf16.msra.mxu0 %v7330
  %7348 = vmatpush.bf16.msra.mxu0 %v7329
  %7349 = vmatpush.bf16.msra.mxu0 %v7328
  %7350 = vmatpush.bf16.msra.mxu0 %v7327
  %7351 = vmatmul.bf16.gmra.mxu0 %v7289
  %v7352 = vpop.f32.mrf.mxu0
  %v7353 = vadd.f32 %v7293, %v7352
  %v7354 = vpop.f32.mrf.mxu0
  %v7355 = vadd.f32 %v7293, %v7354
  %7356 = vdwg.mxu0
  %v7357 = vadd.f32 %v7183, %v7353
  %v7358 = vadd.f32 %v7184, %v7355
  %7359 = vadd.xlane.f32.xlu0 %v7357
  %v7360 = vpop.xlane.xlu0 %7359
  %7361 = vadd.xlane.f32.xlu0 %v7358
  %v7362 = vpop.xlane.xlu0 %7361
  %v7363 = vmul.f32 %v7360, 0.03125
  %v7364 = vmul.f32 %v7362, 0.03125
  %v7365 = vmul.f32 %v7357, %v7357
  %v7366 = vmul.f32 %v7358, %v7358
  %7367 = vadd.xlane.f32.xlu0 %v7365
  %v7368 = vpop.xlane.xlu0 %7367
  %7369 = vadd.xlane.f32.xlu0 %v7366
  %v7370 = vpop.xlane.xlu0 %7369
  %v7371 = vmul.f32 %v7368, 0.03125
  %v7372 = vmul.f32 %v7370, 0.03125
  %v7373 = vmul.f32 %v7363, %v7363
  %v7374 = vmul.f32 %v7364, %v7364
  %v7375 = vsub.f32 %v7371, %v7373
  %v7376 = vsub.f32 %v7372, %v7374
  %v7377 = vsub.f32 %v7357, %v7363
  %v7378 = vsub.f32 %v7358, %v7364
  %v7379 = vadd.f32 %v7375, 1e-05
  %v7380 = vadd.f32 %v7376, 1e-05
  %v7381 = vrsqrt.pop %v7379
  %v7382 = vmul.f32 %v7381, %v7379
  %v7383 = vmul.f32 %v7382, %v7381
  %v7384 = vmul.f32 0.5, %v7383
  %v7385 = vsub.f32 1.5, %v7384
  %v7386 = vmul.f32 %v7381, %v7385
  %vm7387 = vweird.f32 %v7379
  %vm7388 = vweird.f32 %v7381
  %vm7389 = vmor %vm7387, %vm7388
  %v7390 = vsel %vm7389, %v7381, %v7386
  %v7391 = vrsqrt.pop %v7380
  %v7392 = vmul.f32 %v7391, %v7380
  %v7393 = vmul.f32 %v7392, %v7391
  %v7394 = vmul.f32 0.5, %v7393
  %v7395 = vsub.f32 1.5, %v7394
  %v7396 = vmul.f32 %v7391, %v7395
  %vm7397 = vweird.f32 %v7380
  %vm7398 = vweird.f32 %v7391
  %vm7399 = vmor %vm7397, %vm7398
  %v7400 = vsel %vm7399, %v7391, %v7396
  %v7401 = vmul.f32 %v7377, %v7390
  %v7402 = vmul.f32 %v7378, %v7400
  %v7403 = vperm.slane %v4331, 2
  %v7404 = vmul.f32 %v7401, %v7403
  %v7405 = vmul.f32 %v7402, %v7403
  %v7406 = vperm.slane %v4333, 2
  %v7407 = vadd.f32 %v7404, %v7406
  %v7408 = vadd.f32 %v7405, %v7406
  %7409 = vadd.xlane.f32.xlu0 %v7407
  %v7410 = vpop.xlane.xlu0 %7409
  %7411 = vadd.xlane.f32.xlu0 %v7408
  %v7412 = vpop.xlane.xlu0 %7411
  %v7413 = vmul.f32 %v7410, 0.03125
  %v7414 = vmul.f32 %v7412, 0.03125
  %v7415 = vmul.f32 %v7407, %v7407
  %v7416 = vmul.f32 %v7408, %v7408
  %7417 = vadd.xlane.f32.xlu0 %v7415
  %v7418 = vpop.xlane.xlu0 %7417
  %7419 = vadd.xlane.f32.xlu0 %v7416
  %v7420 = vpop.xlane.xlu0 %7419
  %v7421 = vmul.f32 %v7418, 0.03125
  %v7422 = vmul.f32 %v7420, 0.03125
  %v7423 = vmul.f32 %v7413, %v7413
  %v7424 = vmul.f32 %v7414, %v7414
  %v7425 = vsub.f32 %v7421, %v7423
  %v7426 = vsub.f32 %v7422, %v7424
  %v7427 = vsub.f32 %v7407, %v7413
  %v7428 = vsub.f32 %v7408, %v7414
  %v7429 = vadd.f32 %v7425, 1e-05
  %v7430 = vadd.f32 %v7426, 1e-05
  %v7431 = vrsqrt.pop %v7429
  %v7432 = vmul.f32 %v7431, %v7429
  %v7433 = vmul.f32 %v7432, %v7431
  %v7434 = vmul.f32 0.5, %v7433
  %v7435 = vsub.f32 1.5, %v7434
  %v7436 = vmul.f32 %v7431, %v7435
  %vm7437 = vweird.f32 %v7429
  %vm7438 = vweird.f32 %v7431
  %vm7439 = vmor %vm7437, %vm7438
  %v7440 = vsel %vm7439, %v7431, %v7436
  %v7441 = vrsqrt.pop %v7430
  %v7442 = vmul.f32 %v7441, %v7430
  %v7443 = vmul.f32 %v7442, %v7441
  %v7444 = vmul.f32 0.5, %v7443
  %v7445 = vsub.f32 1.5, %v7444
  %v7446 = vmul.f32 %v7441, %v7445
  %vm7447 = vweird.f32 %v7430
  %vm7448 = vweird.f32 %v7441
  %vm7449 = vmor %vm7447, %vm7448
  %v7450 = vsel %vm7449, %v7441, %v7446
  %v7451 = vmul.f32 %v7427, %v7440
  %v7452 = vmul.f32 %v7428, %v7450
  %v7453 = vmul.f32 %v7451, %v4321
  %v7454 = vmul.f32 %v7452, %v4321
  %v7455 = vadd.f32 %v7453, %v4326
  %v7456 = vadd.f32 %v7454, %v4326
  %7457 = vst [vmem:[%s26] sm:$0xff] %v7455
  %7458 = vst [vmem:[%s26 + $0x8] sm:$0xff] %v7456
  // Predicated region
  $region106: #{_lambda_.1} parent=0 // pred_check
    _
  $region107: #{_lambda_.1} parent=0 // pred_check_branch
    %7460 = sbr.rel (0) target = $region109
  $region108: #{_lambda_.1} parent=0 // pred_region
    _
  $region109: #{_lambda_.1} parent=0 // pred_fallthru
    _
  // Predicated region
  $region110: #{_lambda_.1} parent=0 // pred_check
    _
  $region111: #{_lambda_.1} parent=0 // pred_check_branch
    %7462 = sbr.rel (0) target = $region113
  $region112: #{_lambda_.1} parent=0 // pred_region
    _
  $region113: #{_lambda_.1} parent=0 // pred_fallthru
    _

</llo_original>
